<compile_context>
chip_gen: v6e
topology: v6e:2x2x1
jax: 0.10.0
libtpu: 0.0.40
codegen_flags: <defaults>
</compile_context>

<pallas_src>
import functools

import jax
import jax.numpy as jnp
import numpy as np
from jax.experimental import pallas as pl
from jax.experimental.pallas import tpu as pltpu

BN_EPS = 1e-5
LANE = 128                              # output-channel lane padding
MAX_TILE_P = 2048                       # max im2col rows per grid step
TILE_VMEM_BUDGET = 24 * 1024 * 1024     # working-set budget for tile selection
VMEM_LIMIT = 48 * 1024 * 1024           # scoped VMEM limit (v7x-safe)


def _round_up(x, m):
    return (x + m - 1) // m * m


def _pick_tile_p(P, K, Coutp, out_bytes):
    """Largest power-of-two row tile whose double-buffered working set fits."""
    tile = MAX_TILE_P
    while tile > 64:
        need = (2 * tile * K * 2                  # patch tile (bf16, 2 buffers)
                + 2 * tile * Coutp * out_bytes    # output tile (2 buffers)
                + 2 * K * Coutp * 2)              # weight (worst case 2 buffers)
        if need <= TILE_VMEM_BUDGET:
            break
        tile //= 2
    return P if P <= tile else tile


# --------------------------- Pallas kernels --------------------------------

def conv_act_kernel(p_ref, w_ref, b_ref, o_ref, *, act):
    """o = act(patches @ W + b); bf16 MXU operands, f32 accumulate/epilogue."""
    acc = jnp.dot(p_ref[...], w_ref[...],
                  preferred_element_type=jnp.float32) + b_ref[...]
    if act == "relu":
        acc = jnp.maximum(acc, 0.0)
    else:  # "tanh"
        acc = jnp.tanh(acc)
    o_ref[...] = acc.astype(o_ref.dtype)


def conv_stats_kernel(p_ref, w_ref, y_ref, sum_ref, ssq_ref, *, tile_p, p_real):
    """BN pass 1: y = patches @ W (bias absorbed by BN); per-tile sum / sumsq.

    Partial sums are written per grid step, so the grid axis stays "parallel"
    (megacore-shardable); the tiny reduction over tiles happens in JAX glue.
    """
    i = pl.program_id(0)
    acc = jnp.dot(p_ref[...], w_ref[...], preferred_element_type=jnp.float32)
    y_ref[...] = acc.astype(y_ref.dtype)

    # Mask rows added by padding P up to a multiple of tile_p.
    row = i * tile_p + jax.lax.broadcasted_iota(jnp.int32, acc.shape, 0)
    masked = jnp.where(row < p_real, acc, 0.0)
    sum_ref[...] = jnp.sum(masked, axis=0, keepdims=True).reshape(1, 1, -1)
    ssq_ref[...] = jnp.sum(masked * acc, axis=0, keepdims=True).reshape(1, 1, -1)


def bn_relu_kernel(y_ref, scale_ref, shift_ref, o_ref):
    """BN pass 2: o = relu(y * scale + shift); bf16 in/out, f32 math."""
    y = y_ref[...].astype(jnp.float32)
    o_ref[...] = jnp.maximum(y * scale_ref[...] + shift_ref[...],
                             0.0).astype(o_ref.dtype)


# --------------------------- JAX glue ---------------------------------------

def im2col_nhwc(x, k, stride, pad):
    """x: (N, H, W, C) -> (N*Ho*Wo, k*k*C); K-axis ordered (kh, kw, C)."""
    N, H, W, C = x.shape
    if pad:
        x = jnp.pad(x, ((0, 0), (pad, pad), (pad, pad), (0, 0)))
    Ho = (H + 2 * pad - k) // stride + 1
    Wo = (W + 2 * pad - k) // stride + 1
    rows = []
    for i in range(k):
        cols = [x[:, i:i + stride * Ho:stride, j:j + stride * Wo:stride, :]
                for j in range(k)]
        rows.append(jnp.stack(cols, axis=3))          # (N, Ho, Wo, kw, C)
    patches = jnp.stack(rows, axis=3)                 # (N, Ho, Wo, kh, kw, C)
    return patches.reshape(N * Ho * Wo, k * k * C), Ho, Wo


def conv_block(x, wmat, stride, pad, mode, *, k=4, bias=None,
               gamma=None, beta=None):
    """One Conv2d (+train-mode BatchNorm) (+ReLU / tanh).

    x: (N, H, W, C) channels-last; C may still carry the previous layer's
    lane padding, which is sliced off so the contraction dim uses only the
    real input channels.  Returns (N, Ho, Wo, Coutp), Coutp lane-padded
    (padded output channels are exactly zero).
    """
    K, Coutp = wmat.shape
    Cin = K // (k * k)
    N = x.shape[0]
    x = x[..., :Cin].astype(jnp.bfloat16)      # drop carried lane padding

    # TODO(synk): fuse im2col into the conv kernel via windowed manual DMA so
    # the k*k/stride^2-expanded patch array is never materialized in HBM.
    patches, Ho, Wo = im2col_nhwc(x, k, stride, pad)
    P = patches.shape[0]

    out_bytes = 4 if mode == "tanh" else 2
    tile_p = _pick_tile_p(P, K, Coutp, out_bytes)
    Ppad = _round_up(P, tile_p)
    if Ppad != P:
        patches = jnp.pad(patches, ((0, Ppad - P), (0, 0)))
    ntiles = Ppad // tile_p

    patch_spec = pl.BlockSpec((tile_p, K), lambda i: (i, 0))
    w_spec = pl.BlockSpec((K, Coutp), lambda i: (0, 0))       # resident
    vec_spec = pl.BlockSpec((1, Coutp), lambda i: (0, 0))     # resident
    row_spec = pl.BlockSpec((tile_p, Coutp), lambda i: (i, 0))
    stat_spec = pl.BlockSpec((1, 1, Coutp), lambda i: (i, 0, 0))

    mm_flops = 2 * Ppad * K * Coutp
    mm_bytes = Ppad * K * 2 + K * Coutp * 2 + Ppad * Coutp * out_bytes

    if mode in ("relu", "tanh"):
        out_dtype = jnp.float32 if mode == "tanh" else jnp.bfloat16
        out = pl.pallas_call(
            functools.partial(conv_act_kernel, act=mode),
            out_shape=jax.ShapeDtypeStruct((Ppad, Coutp), out_dtype),
            grid=(ntiles,),
            in_specs=[patch_spec, w_spec, vec_spec],
            out_specs=row_spec,
            compiler_params=pltpu.CompilerParams(
                dimension_semantics=("parallel",),
                vmem_limit_bytes=VMEM_LIMIT),
            cost_estimate=pl.CostEstimate(
                flops=mm_flops,
                transcendentals=Ppad * Coutp if mode == "tanh" else 0,
                bytes_accessed=mm_bytes + Coutp * 4),
        )(patches, wmat, bias)

    elif mode == "bn_relu":
        # Pass 1: bias-free conv + per-tile channel stats (parallel over tiles).
        y, psum, pssq = pl.pallas_call(
            functools.partial(conv_stats_kernel, tile_p=tile_p, p_real=P),
            out_shape=(jax.ShapeDtypeStruct((Ppad, Coutp), jnp.bfloat16),
                       jax.ShapeDtypeStruct((ntiles, 1, Coutp), jnp.float32),
                       jax.ShapeDtypeStruct((ntiles, 1, Coutp), jnp.float32)),
            grid=(ntiles,),
            in_specs=[patch_spec, w_spec],
            out_specs=(row_spec, stat_spec, stat_spec),
            compiler_params=pltpu.CompilerParams(
                dimension_semantics=("parallel",),
                vmem_limit_bytes=VMEM_LIMIT),
            cost_estimate=pl.CostEstimate(
                flops=mm_flops + 4 * Ppad * Coutp, transcendentals=0,
                bytes_accessed=mm_bytes + 2 * ntiles * Coutp * 4),
        )(patches, wmat)

        # Per-channel scale/shift: Coutp floats of math -> plain JAX glue.
        # Note: cssq/P - mean^2 is clamped at 0 (cancellation-prone in f32).
        mean = jnp.sum(psum, axis=(0, 1)) / P
        msq = jnp.sum(pssq, axis=(0, 1)) / P
        var = jnp.maximum(msq - mean * mean, 0.0)   # biased (train-mode)
        scale = (gamma * jax.lax.rsqrt(var + BN_EPS)).astype(jnp.float32)
        shift = (beta - mean * scale).astype(jnp.float32)
        scale = scale.reshape(1, Coutp)
        shift = shift.reshape(1, Coutp)

        # Pass 2: normalize + ReLU over bf16 y, tiled over P ("parallel").
        out = pl.pallas_call(
            bn_relu_kernel,
            out_shape=jax.ShapeDtypeStruct((Ppad, Coutp), jnp.bfloat16),
            grid=(ntiles,),
            in_specs=[row_spec, vec_spec, vec_spec],
            out_specs=row_spec,
            compiler_params=pltpu.CompilerParams(
                dimension_semantics=("parallel",),
                vmem_limit_bytes=VMEM_LIMIT),
            cost_estimate=pl.CostEstimate(
                flops=3 * Ppad * Coutp, transcendentals=0,
                bytes_accessed=Ppad * Coutp * 4 + 2 * Coutp * 4),
        )(y, scale, shift)
    else:
        raise ValueError(mode)

    return out[:P].reshape(N, Ho, Wo, Coutp)


def discriminator_forward(x, pp):
    """x: (N, 1, H, W) NCHW -> (N, 1, 1, 1) NCHW (matches the PyTorch module)."""
    h = jnp.transpose(x, (0, 2, 3, 1))                        # to channels-last
    h = conv_block(h, pp["w1"], 2, 1, "relu", bias=pp["b1"])
    h = conv_block(h, pp["w2"], 2, 1, "bn_relu", gamma=pp["g1"], beta=pp["be1"])
    h = conv_block(h, pp["w3"], 2, 1, "bn_relu", gamma=pp["g2"], beta=pp["be2"])
    h = conv_block(h, pp["w4"], 2, 1, "bn_relu", gamma=pp["g3"], beta=pp["be3"])
    h = conv_block(h, pp["w5"], 1, 0, "tanh", bias=pp["b5"])
    h = h[..., :1]                                            # real out channels
    return jnp.transpose(h, (0, 3, 1, 2)).astype(jnp.float32)


# --------------------------- params -----------------------------------------

def init_params(key, d):
    """Deterministic synthetic parameters (same shapes as the PyTorch module)."""
    def conv_w(key, cout, cin, k=4, scale=0.05):
        return jax.random.normal(key, (cout, cin, k, k), jnp.float32) * scale

    ks = jax.random.split(key, 10)
    params = {
        "w1": conv_w(ks[0], d, 1),          "b1": jnp.zeros((d,), jnp.float32),
        "w2": conv_w(ks[1], d * 2, d),      "b2": jnp.zeros((d * 2,), jnp.float32),
        "g1": jnp.ones((d * 2,), jnp.float32), "be1": jnp.zeros((d * 2,), jnp.float32),
        "w3": conv_w(ks[2], d * 4, d * 2),  "b3": jnp.zeros((d * 4,), jnp.float32),
        "g2": jnp.ones((d * 4,), jnp.float32), "be2": jnp.zeros((d * 4,), jnp.float32),
        "w4": conv_w(ks[3], d * 8, d * 4),  "b4": jnp.zeros((d * 8,), jnp.float32),
        "g3": jnp.ones((d * 8,), jnp.float32), "be3": jnp.zeros((d * 8,), jnp.float32),
        "w5": conv_w(ks[4], 1, d * 8),      "b5": jnp.zeros((1,), jnp.float32),
    }
    params["b1"] = jax.random.normal(ks[5], (d,), jnp.float32) * 0.01
    params["b2"] = jax.random.normal(ks[6], (d * 2,), jnp.float32) * 0.01
    params["be1"] = jax.random.normal(ks[7], (d * 2,), jnp.float32) * 0.01
    params["be2"] = jax.random.normal(ks[8], (d * 4,), jnp.float32) * 0.01
    params["be3"] = jax.random.normal(ks[9], (d * 8,), jnp.float32) * 0.01
    return params


def prepare_params(p):
    """Pre-pack once: OIHW -> (k*k*Cin, Coutp) bf16 weights, padded f32 vectors."""
    def prep_w(w):
        cout, cin, k, _ = w.shape
        coutp = _round_up(cout, LANE)
        m = jnp.transpose(w, (2, 3, 1, 0)).reshape(k * k * cin, cout)
        return jnp.pad(m, ((0, 0), (0, coutp - cout))).astype(jnp.bfloat16)

    def prep_v(v):
        n = v.shape[0]
        return jnp.pad(v, (0, _round_up(n, LANE) - n)).astype(jnp.float32)

    return {
        "w1": prep_w(p["w1"]), "b1": prep_v(p["b1"]).reshape(1, -1),
        # b2/b3/b4 are intentionally dropped: a conv bias followed by
        # train-mode BatchNorm is exactly absorbed by the mean subtraction.
        "w2": prep_w(p["w2"]), "g1": prep_v(p["g1"]), "be1": prep_v(p["be1"]),
        "w3": prep_w(p["w3"]), "g2": prep_v(p["g2"]), "be2": prep_v(p["be2"]),
        "w4": prep_w(p["w4"]), "g3": prep_v(p["g3"]), "be3": prep_v(p["be3"]),
        "w5": prep_w(p["w5"]), "b5": prep_v(p["b5"]).reshape(1, -1),
    }


# --------------------------- pure-JAX reference ------------------------------

def _ref_conv(x, w, b, stride, pad):
    y = jax.lax.conv_general_dilated(
        x, w, (stride, stride), ((pad, pad), (pad, pad)),
        dimension_numbers=("NCHW", "OIHW", "NCHW"),
        precision=jax.lax.Precision.HIGHEST)
    return y + b.reshape(1, -1, 1, 1)


def _ref_bn(x, g, be):
    mean = jnp.mean(x, axis=(0, 2, 3), keepdims=True)
    var = jnp.mean((x - mean) ** 2, axis=(0, 2, 3), keepdims=True)
    return (x - mean) * jax.lax.rsqrt(var + BN_EPS) * g.reshape(1, -1, 1, 1) \
        + be.reshape(1, -1, 1, 1)


def discriminator_ref(x, p):
    x = jax.nn.relu(_ref_conv(x, p["w1"], p["b1"], 2, 1))
    x = jax.nn.relu(_ref_bn(_ref_conv(x, p["w2"], p["b2"], 2, 1), p["g1"], p["be1"]))
    x = jax.nn.relu(_ref_bn(_ref_conv(x, p["w3"], p["b3"], 2, 1), p["g2"], p["be2"]))
    x = jax.nn.relu(_ref_bn(_ref_conv(x, p["w4"], p["b4"], 2, 1), p["g3"], p["be3"]))
    x = jnp.tanh(_ref_conv(x, p["w5"], p["b5"], 1, 0))
    return x


# --------------------------- main --------------------------------------------

if __name__ == "__main__":
    d = 4          # feature-map multiplier (kept small for a quick test)
    N = 2
    # Input must be 64x64 so the final 4x4/stride-1/pad-0 conv is valid (DCGAN).
    key = jax.random.PRNGKey(0)
    kx, kp = jax.random.split(key)
    x = jax.random.normal(kx, (N, 1, 64, 64), jnp.float32)
    params = init_params(kp, d)
    prepped = prepare_params(params)

    fwd = jax.jit(discriminator_forward)
    out = jax.block_until_ready(fwd(x, prepped))
    assert out.shape == (N, 1, 1, 1), out.shape

    ref = jax.block_until_ready(discriminator_ref(x, params))
    np.testing.assert_allclose(np.asarray(out), np.asarray(ref),
                               rtol=5e-2, atol=5e-2)

    print("KERNEL_OK")
</pallas_src>

<mosaic_0001>
module attributes {stable_mosaic.version = 11 : i64} {
  func.func @conv_act_kernel(%arg0: i32, %arg1: memref<2048x16xbf16, #tpu.memory_space<vmem>>, %arg2: memref<16x128xbf16, #tpu.memory_space<vmem>>, %arg3: memref<1x128xf32, #tpu.memory_space<vmem>>, %arg4: memref<2048x128xbf16, #tpu.memory_space<vmem>>) attributes {dimension_semantics = [#tpu.dimension_semantics<parallel>], iteration_bounds = array<i64: 1>, scalar_prefetch = 0 : i64, scratch_operands = 0 : i64, tpu.core_type = #tpu.core_type<tc>, window_params = [{transform_indices = @transform_0, window_bounds = array<i64: 2048, 16>}, {pipeline_mode = #tpu.pipeline_mode<synchronous>, transform_indices = @transform_1, window_bounds = array<i64: 16, 128>}, {pipeline_mode = #tpu.pipeline_mode<synchronous>, transform_indices = @transform_2, window_bounds = array<i64: 1, 128>}, {transform_indices = @transform_3, window_bounds = array<i64: 2048, 128>}]} {
    %c0 = arith.constant 0 : index
    %c0_0 = arith.constant 0 : index
    %0 = vector.load %arg1[%c0, %c0_0] : memref<2048x16xbf16, #tpu.memory_space<vmem>>, vector<2048x16xbf16>
    %c0_1 = arith.constant 0 : index
    %c0_2 = arith.constant 0 : index
    %1 = vector.load %arg2[%c0_1, %c0_2] : memref<16x128xbf16, #tpu.memory_space<vmem>>, vector<16x128xbf16>
    %cst = arith.constant dense<0.000000e+00> : vector<2048x128xf32>
    %2 = tpu.matmul %0, %1, %cst {dimension_numbers = #tpu.dot_dimension_numbers<[1], [0], [0], [1], [0, 0, 1, 1], [], []>} : vector<2048x16xbf16>, vector<16x128xbf16>, vector<2048x128xf32> -> vector<2048x128xf32>
    %c0_3 = arith.constant 0 : index
    %c0_4 = arith.constant 0 : index
    %3 = vector.load %arg3[%c0_3, %c0_4] : memref<1x128xf32, #tpu.memory_space<vmem>>, vector<1x128xf32>
    %4 = vector.broadcast %3 : vector<1x128xf32> to vector<2048x128xf32>
    %5 = arith.addf %2, %4 : vector<2048x128xf32>
    %cst_5 = arith.constant 0.000000e+00 : f32
    %6 = vector.broadcast %cst_5 : f32 to vector<2048x128xf32>
    %7 = arith.maximumf %5, %6 : vector<2048x128xf32>
    %8 = arith.truncf %7 : vector<2048x128xf32> to vector<2048x128xbf16>
    %c0_6 = arith.constant 0 : index
    %c0_7 = arith.constant 0 : index
    %9 = vector.load %arg4[%c0_6, %c0_7] : memref<2048x128xbf16, #tpu.memory_space<vmem>>, vector<2048x128xbf16>
    tpu.vector_store %arg4[%c0_6, %c0_7], %8 {strides = array<i32>} : memref<2048x128xbf16, #tpu.memory_space<vmem>>, vector<2048x128xbf16>,
    return
  }
  func.func @transform_0(%arg0: i32) -> (i32, i32) {
    %c0_i32 = arith.constant 0 : i32
    %c0_i32_0 = arith.constant 0 : i32
    return %arg0, %c0_i32 : i32, i32
  }
  func.func @transform_1(%arg0: i32) -> (i32, i32) {
    %c0_i32 = arith.constant 0 : i32
    %c0_i32_0 = arith.constant 0 : i32
    %c0_i32_1 = arith.constant 0 : i32
    return %c0_i32, %c0_i32_0 : i32, i32
  }
  func.func @transform_2(%arg0: i32) -> (i32, i32) {
    %c0_i32 = arith.constant 0 : i32
    %c0_i32_0 = arith.constant 0 : i32
    %c0_i32_1 = arith.constant 0 : i32
    return %c0_i32, %c0_i32_0 : i32, i32
  }
  func.func @transform_3(%arg0: i32) -> (i32, i32) {
    %c0_i32 = arith.constant 0 : i32
    %c0_i32_0 = arith.constant 0 : i32
    return %arg0, %c0_i32 : i32, i32
  }
}

module attributes {stable_mosaic.version = 11 : i64} {
  func.func @conv_stats_kernel(%arg0: i32, %arg1: memref<512x64xbf16, #tpu.memory_space<vmem>>, %arg2: memref<64x128xbf16, #tpu.memory_space<vmem>>, %arg3: memref<512x128xbf16, #tpu.memory_space<vmem>>, %arg4: memref<1x1x128xf32, #tpu.memory_space<vmem>>, %arg5: memref<1x1x128xf32, #tpu.memory_space<vmem>>) attributes {dimension_semantics = [#tpu.dimension_semantics<parallel>], iteration_bounds = array<i64: 1>, scalar_prefetch = 0 : i64, scratch_operands = 0 : i64, tpu.core_type = #tpu.core_type<tc>, window_params = [{transform_indices = @transform_0, window_bounds = array<i64: 512, 64>}, {pipeline_mode = #tpu.pipeline_mode<synchronous>, transform_indices = @transform_1, window_bounds = array<i64: 64, 128>}, {transform_indices = @transform_2, window_bounds = array<i64: 512, 128>}, {transform_indices = @transform_3, window_bounds = array<i64: 1, 1, 128>}, {transform_indices = @transform_4, window_bounds = array<i64: 1, 1, 128>}]} {
    %c0 = arith.constant 0 : index
    %c0_0 = arith.constant 0 : index
    %0 = vector.load %arg1[%c0, %c0_0] : memref<512x64xbf16, #tpu.memory_space<vmem>>, vector<512x64xbf16>
    %c0_1 = arith.constant 0 : index
    %c0_2 = arith.constant 0 : index
    %1 = vector.load %arg2[%c0_1, %c0_2] : memref<64x128xbf16, #tpu.memory_space<vmem>>, vector<64x128xbf16>
    %cst = arith.constant dense<0.000000e+00> : vector<512x128xf32>
    %2 = tpu.matmul %0, %1, %cst {dimension_numbers = #tpu.dot_dimension_numbers<[1], [0], [0], [1], [0, 0, 1, 1], [], []>} : vector<512x64xbf16>, vector<64x128xbf16>, vector<512x128xf32> -> vector<512x128xf32>
    %3 = arith.truncf %2 : vector<512x128xf32> to vector<512x128xbf16>
    %c0_3 = arith.constant 0 : index
    %c0_4 = arith.constant 0 : index
    %4 = vector.load %arg3[%c0_3, %c0_4] : memref<512x128xbf16, #tpu.memory_space<vmem>>, vector<512x128xbf16>
    tpu.vector_store %arg3[%c0_3, %c0_4], %3 {strides = array<i32>} : memref<512x128xbf16, #tpu.memory_space<vmem>>, vector<512x128xbf16>,
    %c512_i32 = arith.constant 512 : i32
    %5 = arith.muli %arg0, %c512_i32 : i32
    %6 = tpu.iota {dimensions = array<i32: 0>} : vector<512x128xi32>
    %7 = vector.broadcast %5 : i32 to vector<512x128xi32>
    %8 = arith.addi %7, %6 : vector<512x128xi32>
    %c512_i32_5 = arith.constant 512 : i32
    %9 = vector.broadcast %c512_i32_5 : i32 to vector<512x128xi32>
    %10 = arith.cmpi slt, %8, %9 : vector<512x128xi32>
    %cst_6 = arith.constant 0.000000e+00 : f32
    %11 = vector.broadcast %cst_6 : f32 to vector<512x128xf32>
    %12 = arith.select %10, %2, %11 : vector<512x128xi1>, vector<512x128xf32>
    %cst_7 = arith.constant dense<0.000000e+00> : vector<128xf32>
    %13 = vector.multi_reduction <add>, %12, %cst_7 [0] : vector<512x128xf32> to vector<128xf32>
    %14 = vector.shape_cast %13 : vector<128xf32> to vector<1x128xf32>
    %15 = vector.shape_cast %14 : vector<1x128xf32> to vector<1x1x128xf32>
    %c0_8 = arith.constant 0 : index
    %c0_9 = arith.constant 0 : index
    %c0_10 = arith.constant 0 : index
    %16 = vector.load %arg4[%c0_8, %c0_9, %c0_10] : memref<1x1x128xf32, #tpu.memory_space<vmem>>, vector<1x1x128xf32>
    tpu.vector_store %arg4[%c0_8, %c0_9, %c0_10], %15 {strides = array<i32>} : memref<1x1x128xf32, #tpu.memory_space<vmem>>, vector<1x1x128xf32>,
    %17 = arith.mulf %12, %2 : vector<512x128xf32>
    %cst_11 = arith.constant dense<0.000000e+00> : vector<128xf32>
    %18 = vector.multi_reduction <add>, %17, %cst_11 [0] : vector<512x128xf32> to vector<128xf32>
    %19 = vector.shape_cast %18 : vector<128xf32> to vector<1x128xf32>
    %20 = vector.shape_cast %19 : vector<1x128xf32> to vector<1x1x128xf32>
    %c0_12 = arith.constant 0 : index
    %c0_13 = arith.constant 0 : index
    %c0_14 = arith.constant 0 : index
    %21 = vector.load %arg5[%c0_12, %c0_13, %c0_14] : memref<1x1x128xf32, #tpu.memory_space<vmem>>, vector<1x1x128xf32>
    tpu.vector_store %arg5[%c0_12, %c0_13, %c0_14], %20 {strides = array<i32>} : memref<1x1x128xf32, #tpu.memory_space<vmem>>, vector<1x1x128xf32>,
    return
  }
  func.func @transform_0(%arg0: i32) -> (i32, i32) {
    %c0_i32 = arith.constant 0 : i32
    %c0_i32_0 = arith.constant 0 : i32
    return %arg0, %c0_i32 : i32, i32
  }
  func.func @transform_1(%arg0: i32) -> (i32, i32) {
    %c0_i32 = arith.constant 0 : i32
    %c0_i32_0 = arith.constant 0 : i32
    %c0_i32_1 = arith.constant 0 : i32
    return %c0_i32, %c0_i32_0 : i32, i32
  }
  func.func @transform_2(%arg0: i32) -> (i32, i32) {
    %c0_i32 = arith.constant 0 : i32
    %c0_i32_0 = arith.constant 0 : i32
    return %arg0, %c0_i32 : i32, i32
  }
  func.func @transform_3(%arg0: i32) -> (i32, i32, i32) {
    %c0_i32 = arith.constant 0 : i32
    %c0_i32_0 = arith.constant 0 : i32
    %c0_i32_1 = arith.constant 0 : i32
    return %arg0, %c0_i32, %c0_i32_0 : i32, i32, i32
  }
  func.func @transform_4(%arg0: i32) -> (i32, i32, i32) {
    %c0_i32 = arith.constant 0 : i32
    %c0_i32_0 = arith.constant 0 : i32
    %c0_i32_1 = arith.constant 0 : i32
    return %arg0, %c0_i32, %c0_i32_0 : i32, i32, i32
  }
}

module attributes {stable_mosaic.version = 11 : i64} {
  func.func @bn_relu_kernel(%arg0: i32, %arg1: memref<512x128xbf16, #tpu.memory_space<vmem>>, %arg2: memref<1x128xf32, #tpu.memory_space<vmem>>, %arg3: memref<1x128xf32, #tpu.memory_space<vmem>>, %arg4: memref<512x128xbf16, #tpu.memory_space<vmem>>) attributes {dimension_semantics = [#tpu.dimension_semantics<parallel>], iteration_bounds = array<i64: 1>, scalar_prefetch = 0 : i64, scratch_operands = 0 : i64, tpu.core_type = #tpu.core_type<tc>, window_params = [{transform_indices = @transform_0, window_bounds = array<i64: 512, 128>}, {pipeline_mode = #tpu.pipeline_mode<synchronous>, transform_indices = @transform_1, window_bounds = array<i64: 1, 128>}, {pipeline_mode = #tpu.pipeline_mode<synchronous>, transform_indices = @transform_2, window_bounds = array<i64: 1, 128>}, {transform_indices = @transform_3, window_bounds = array<i64: 512, 128>}]} {
    %c0 = arith.constant 0 : index
    %c0_0 = arith.constant 0 : index
    %0 = vector.load %arg1[%c0, %c0_0] : memref<512x128xbf16, #tpu.memory_space<vmem>>, vector<512x128xbf16>
    %1 = arith.extf %0 : vector<512x128xbf16> to vector<512x128xf32>
    %c0_1 = arith.constant 0 : index
    %c0_2 = arith.constant 0 : index
    %2 = vector.load %arg2[%c0_1, %c0_2] : memref<1x128xf32, #tpu.memory_space<vmem>>, vector<1x128xf32>
    %3 = vector.broadcast %2 : vector<1x128xf32> to vector<512x128xf32>
    %4 = arith.mulf %1, %3 : vector<512x128xf32>
    %c0_3 = arith.constant 0 : index
    %c0_4 = arith.constant 0 : index
    %5 = vector.load %arg3[%c0_3, %c0_4] : memref<1x128xf32, #tpu.memory_space<vmem>>, vector<1x128xf32>
    %6 = vector.broadcast %5 : vector<1x128xf32> to vector<512x128xf32>
    %7 = arith.addf %4, %6 : vector<512x128xf32>
    %cst = arith.constant 0.000000e+00 : f32
    %8 = vector.broadcast %cst : f32 to vector<512x128xf32>
    %9 = arith.maximumf %7, %8 : vector<512x128xf32>
    %10 = arith.truncf %9 : vector<512x128xf32> to vector<512x128xbf16>
    %c0_5 = arith.constant 0 : index
    %c0_6 = arith.constant 0 : index
    %11 = vector.load %arg4[%c0_5, %c0_6] : memref<512x128xbf16, #tpu.memory_space<vmem>>, vector<512x128xbf16>
    tpu.vector_store %arg4[%c0_5, %c0_6], %10 {strides = array<i32>} : memref<512x128xbf16, #tpu.memory_space<vmem>>, vector<512x128xbf16>,
    return
  }
  func.func @transform_0(%arg0: i32) -> (i32, i32) {
    %c0_i32 = arith.constant 0 : i32
    %c0_i32_0 = arith.constant 0 : i32
    return %arg0, %c0_i32 : i32, i32
  }
  func.func @transform_1(%arg0: i32) -> (i32, i32) {
    %c0_i32 = arith.constant 0 : i32
    %c0_i32_0 = arith.constant 0 : i32
    %c0_i32_1 = arith.constant 0 : i32
    return %c0_i32, %c0_i32_0 : i32, i32
  }
  func.func @transform_2(%arg0: i32) -> (i32, i32) {
    %c0_i32 = arith.constant 0 : i32
    %c0_i32_0 = arith.constant 0 : i32
    %c0_i32_1 = arith.constant 0 : i32
    return %c0_i32, %c0_i32_0 : i32, i32
  }
  func.func @transform_3(%arg0: i32) -> (i32, i32) {
    %c0_i32 = arith.constant 0 : i32
    %c0_i32_0 = arith.constant 0 : i32
    return %arg0, %c0_i32 : i32, i32
  }
}

module attributes {stable_mosaic.version = 11 : i64} {
  func.func @conv_stats_kernel(%arg0: i32, %arg1: memref<128x128xbf16, #tpu.memory_space<vmem>>, %arg2: memref<128x128xbf16, #tpu.memory_space<vmem>>, %arg3: memref<128x128xbf16, #tpu.memory_space<vmem>>, %arg4: memref<1x1x128xf32, #tpu.memory_space<vmem>>, %arg5: memref<1x1x128xf32, #tpu.memory_space<vmem>>) attributes {dimension_semantics = [#tpu.dimension_semantics<parallel>], iteration_bounds = array<i64: 1>, scalar_prefetch = 0 : i64, scratch_operands = 0 : i64, tpu.core_type = #tpu.core_type<tc>, window_params = [{transform_indices = @transform_0, window_bounds = array<i64: 128, 128>}, {pipeline_mode = #tpu.pipeline_mode<synchronous>, transform_indices = @transform_1, window_bounds = array<i64: 128, 128>}, {transform_indices = @transform_2, window_bounds = array<i64: 128, 128>}, {transform_indices = @transform_3, window_bounds = array<i64: 1, 1, 128>}, {transform_indices = @transform_4, window_bounds = array<i64: 1, 1, 128>}]} {
    %c0 = arith.constant 0 : index
    %c0_0 = arith.constant 0 : index
    %0 = vector.load %arg1[%c0, %c0_0] : memref<128x128xbf16, #tpu.memory_space<vmem>>, vector<128x128xbf16>
    %c0_1 = arith.constant 0 : index
    %c0_2 = arith.constant 0 : index
    %1 = vector.load %arg2[%c0_1, %c0_2] : memref<128x128xbf16, #tpu.memory_space<vmem>>, vector<128x128xbf16>
    %cst = arith.constant dense<0.000000e+00> : vector<128x128xf32>
    %2 = tpu.matmul %0, %1, %cst {dimension_numbers = #tpu.dot_dimension_numbers<[1], [0], [0], [1], [0, 0, 1, 1], [], []>} : vector<128x128xbf16>, vector<128x128xbf16>, vector<128x128xf32> -> vector<128x128xf32>
    %3 = arith.truncf %2 : vector<128x128xf32> to vector<128x128xbf16>
    %c0_3 = arith.constant 0 : index
    %c0_4 = arith.constant 0 : index
    %4 = vector.load %arg3[%c0_3, %c0_4] : memref<128x128xbf16, #tpu.memory_space<vmem>>, vector<128x128xbf16>
    tpu.vector_store %arg3[%c0_3, %c0_4], %3 {strides = array<i32>} : memref<128x128xbf16, #tpu.memory_space<vmem>>, vector<128x128xbf16>,
    %c128_i32 = arith.constant 128 : i32
    %5 = arith.muli %arg0, %c128_i32 : i32
    %6 = tpu.iota {dimensions = array<i32: 0>} : vector<128x128xi32>
    %7 = vector.broadcast %5 : i32 to vector<128x128xi32>
    %8 = arith.addi %7, %6 : vector<128x128xi32>
    %c128_i32_5 = arith.constant 128 : i32
    %9 = vector.broadcast %c128_i32_5 : i32 to vector<128x128xi32>
    %10 = arith.cmpi slt, %8, %9 : vector<128x128xi32>
    %cst_6 = arith.constant 0.000000e+00 : f32
    %11 = vector.broadcast %cst_6 : f32 to vector<128x128xf32>
    %12 = arith.select %10, %2, %11 : vector<128x128xi1>, vector<128x128xf32>
    %cst_7 = arith.constant dense<0.000000e+00> : vector<128xf32>
    %13 = vector.multi_reduction <add>, %12, %cst_7 [0] : vector<128x128xf32> to vector<128xf32>
    %14 = vector.shape_cast %13 : vector<128xf32> to vector<1x128xf32>
    %15 = vector.shape_cast %14 : vector<1x128xf32> to vector<1x1x128xf32>
    %c0_8 = arith.constant 0 : index
    %c0_9 = arith.constant 0 : index
    %c0_10 = arith.constant 0 : index
    %16 = vector.load %arg4[%c0_8, %c0_9, %c0_10] : memref<1x1x128xf32, #tpu.memory_space<vmem>>, vector<1x1x128xf32>
    tpu.vector_store %arg4[%c0_8, %c0_9, %c0_10], %15 {strides = array<i32>} : memref<1x1x128xf32, #tpu.memory_space<vmem>>, vector<1x1x128xf32>,
    %17 = arith.mulf %12, %2 : vector<128x128xf32>
    %cst_11 = arith.constant dense<0.000000e+00> : vector<128xf32>
    %18 = vector.multi_reduction <add>, %17, %cst_11 [0] : vector<128x128xf32> to vector<128xf32>
    %19 = vector.shape_cast %18 : vector<128xf32> to vector<1x128xf32>
    %20 = vector.shape_cast %19 : vector<1x128xf32> to vector<1x1x128xf32>
    %c0_12 = arith.constant 0 : index
    %c0_13 = arith.constant 0 : index
    %c0_14 = arith.constant 0 : index
    %21 = vector.load %arg5[%c0_12, %c0_13, %c0_14] : memref<1x1x128xf32, #tpu.memory_space<vmem>>, vector<1x1x128xf32>
    tpu.vector_store %arg5[%c0_12, %c0_13, %c0_14], %20 {strides = array<i32>} : memref<1x1x128xf32, #tpu.memory_space<vmem>>, vector<1x1x128xf32>,
    return
  }
  func.func @transform_0(%arg0: i32) -> (i32, i32) {
    %c0_i32 = arith.constant 0 : i32
    %c0_i32_0 = arith.constant 0 : i32
    return %arg0, %c0_i32 : i32, i32
  }
  func.func @transform_1(%arg0: i32) -> (i32, i32) {
    %c0_i32 = arith.constant 0 : i32
    %c0_i32_0 = arith.constant 0 : i32
    %c0_i32_1 = arith.constant 0 : i32
    return %c0_i32, %c0_i32_0 : i32, i32
  }
  func.func @transform_2(%arg0: i32) -> (i32, i32) {
    %c0_i32 = arith.constant 0 : i32
    %c0_i32_0 = arith.constant 0 : i32
    return %arg0, %c0_i32 : i32, i32
  }
  func.func @transform_3(%arg0: i32) -> (i32, i32, i32) {
    %c0_i32 = arith.constant 0 : i32
    %c0_i32_0 = arith.constant 0 : i32
    %c0_i32_1 = arith.constant 0 : i32
    return %arg0, %c0_i32, %c0_i32_0 : i32, i32, i32
  }
  func.func @transform_4(%arg0: i32) -> (i32, i32, i32) {
    %c0_i32 = arith.constant 0 : i32
    %c0_i32_0 = arith.constant 0 : i32
    %c0_i32_1 = arith.constant 0 : i32
    return %arg0, %c0_i32, %c0_i32_0 : i32, i32, i32
  }
}

module attributes {stable_mosaic.version = 11 : i64} {
  func.func @bn_relu_kernel(%arg0: i32, %arg1: memref<128x128xbf16, #tpu.memory_space<vmem>>, %arg2: memref<1x128xf32, #tpu.memory_space<vmem>>, %arg3: memref<1x128xf32, #tpu.memory_space<vmem>>, %arg4: memref<128x128xbf16, #tpu.memory_space<vmem>>) attributes {dimension_semantics = [#tpu.dimension_semantics<parallel>], iteration_bounds = array<i64: 1>, scalar_prefetch = 0 : i64, scratch_operands = 0 : i64, tpu.core_type = #tpu.core_type<tc>, window_params = [{transform_indices = @transform_0, window_bounds = array<i64: 128, 128>}, {pipeline_mode = #tpu.pipeline_mode<synchronous>, transform_indices = @transform_1, window_bounds = array<i64: 1, 128>}, {pipeline_mode = #tpu.pipeline_mode<synchronous>, transform_indices = @transform_2, window_bounds = array<i64: 1, 128>}, {transform_indices = @transform_3, window_bounds = array<i64: 128, 128>}]} {
    %c0 = arith.constant 0 : index
    %c0_0 = arith.constant 0 : index
    %0 = vector.load %arg1[%c0, %c0_0] : memref<128x128xbf16, #tpu.memory_space<vmem>>, vector<128x128xbf16>
    %1 = arith.extf %0 : vector<128x128xbf16> to vector<128x128xf32>
    %c0_1 = arith.constant 0 : index
    %c0_2 = arith.constant 0 : index
    %2 = vector.load %arg2[%c0_1, %c0_2] : memref<1x128xf32, #tpu.memory_space<vmem>>, vector<1x128xf32>
    %3 = vector.broadcast %2 : vector<1x128xf32> to vector<128x128xf32>
    %4 = arith.mulf %1, %3 : vector<128x128xf32>
    %c0_3 = arith.constant 0 : index
    %c0_4 = arith.constant 0 : index
    %5 = vector.load %arg3[%c0_3, %c0_4] : memref<1x128xf32, #tpu.memory_space<vmem>>, vector<1x128xf32>
    %6 = vector.broadcast %5 : vector<1x128xf32> to vector<128x128xf32>
    %7 = arith.addf %4, %6 : vector<128x128xf32>
    %cst = arith.constant 0.000000e+00 : f32
    %8 = vector.broadcast %cst : f32 to vector<128x128xf32>
    %9 = arith.maximumf %7, %8 : vector<128x128xf32>
    %10 = arith.truncf %9 : vector<128x128xf32> to vector<128x128xbf16>
    %c0_5 = arith.constant 0 : index
    %c0_6 = arith.constant 0 : index
    %11 = vector.load %arg4[%c0_5, %c0_6] : memref<128x128xbf16, #tpu.memory_space<vmem>>, vector<128x128xbf16>
    tpu.vector_store %arg4[%c0_5, %c0_6], %10 {strides = array<i32>} : memref<128x128xbf16, #tpu.memory_space<vmem>>, vector<128x128xbf16>,
    return
  }
  func.func @transform_0(%arg0: i32) -> (i32, i32) {
    %c0_i32 = arith.constant 0 : i32
    %c0_i32_0 = arith.constant 0 : i32
    return %arg0, %c0_i32 : i32, i32
  }
  func.func @transform_1(%arg0: i32) -> (i32, i32) {
    %c0_i32 = arith.constant 0 : i32
    %c0_i32_0 = arith.constant 0 : i32
    %c0_i32_1 = arith.constant 0 : i32
    return %c0_i32, %c0_i32_0 : i32, i32
  }
  func.func @transform_2(%arg0: i32) -> (i32, i32) {
    %c0_i32 = arith.constant 0 : i32
    %c0_i32_0 = arith.constant 0 : i32
    %c0_i32_1 = arith.constant 0 : i32
    return %c0_i32, %c0_i32_0 : i32, i32
  }
  func.func @transform_3(%arg0: i32) -> (i32, i32) {
    %c0_i32 = arith.constant 0 : i32
    %c0_i32_0 = arith.constant 0 : i32
    return %arg0, %c0_i32 : i32, i32
  }
}

module attributes {stable_mosaic.version = 11 : i64} {
  func.func @conv_stats_kernel(%arg0: i32, %arg1: memref<32x256xbf16, #tpu.memory_space<vmem>>, %arg2: memref<256x128xbf16, #tpu.memory_space<vmem>>, %arg3: memref<32x128xbf16, #tpu.memory_space<vmem>>, %arg4: memref<1x1x128xf32, #tpu.memory_space<vmem>>, %arg5: memref<1x1x128xf32, #tpu.memory_space<vmem>>) attributes {dimension_semantics = [#tpu.dimension_semantics<parallel>], iteration_bounds = array<i64: 1>, scalar_prefetch = 0 : i64, scratch_operands = 0 : i64, tpu.core_type = #tpu.core_type<tc>, window_params = [{transform_indices = @transform_0, window_bounds = array<i64: 32, 256>}, {pipeline_mode = #tpu.pipeline_mode<synchronous>, transform_indices = @transform_1, window_bounds = array<i64: 256, 128>}, {transform_indices = @transform_2, window_bounds = array<i64: 32, 128>}, {transform_indices = @transform_3, window_bounds = array<i64: 1, 1, 128>}, {transform_indices = @transform_4, window_bounds = array<i64: 1, 1, 128>}]} {
    %c0 = arith.constant 0 : index
    %c0_0 = arith.constant 0 : index
    %0 = vector.load %arg1[%c0, %c0_0] : memref<32x256xbf16, #tpu.memory_space<vmem>>, vector<32x256xbf16>
    %c0_1 = arith.constant 0 : index
    %c0_2 = arith.constant 0 : index
    %1 = vector.load %arg2[%c0_1, %c0_2] : memref<256x128xbf16, #tpu.memory_space<vmem>>, vector<256x128xbf16>
    %cst = arith.constant dense<0.000000e+00> : vector<32x128xf32>
    %2 = tpu.matmul %0, %1, %cst {dimension_numbers = #tpu.dot_dimension_numbers<[1], [0], [0], [1], [0, 0, 1, 1], [], []>} : vector<32x256xbf16>, vector<256x128xbf16>, vector<32x128xf32> -> vector<32x128xf32>
    %3 = arith.truncf %2 : vector<32x128xf32> to vector<32x128xbf16>
    %c0_3 = arith.constant 0 : index
    %c0_4 = arith.constant 0 : index
    %4 = vector.load %arg3[%c0_3, %c0_4] : memref<32x128xbf16, #tpu.memory_space<vmem>>, vector<32x128xbf16>
    tpu.vector_store %arg3[%c0_3, %c0_4], %3 {strides = array<i32>} : memref<32x128xbf16, #tpu.memory_space<vmem>>, vector<32x128xbf16>,
    %c32_i32 = arith.constant 32 : i32
    %5 = arith.muli %arg0, %c32_i32 : i32
    %6 = tpu.iota {dimensions = array<i32: 0>} : vector<32x128xi32>
    %7 = vector.broadcast %5 : i32 to vector<32x128xi32>
    %8 = arith.addi %7, %6 : vector<32x128xi32>
    %c32_i32_5 = arith.constant 32 : i32
    %9 = vector.broadcast %c32_i32_5 : i32 to vector<32x128xi32>
    %10 = arith.cmpi slt, %8, %9 : vector<32x128xi32>
    %cst_6 = arith.constant 0.000000e+00 : f32
    %11 = vector.broadcast %cst_6 : f32 to vector<32x128xf32>
    %12 = arith.select %10, %2, %11 : vector<32x128xi1>, vector<32x128xf32>
    %cst_7 = arith.constant dense<0.000000e+00> : vector<128xf32>
    %13 = vector.multi_reduction <add>, %12, %cst_7 [0] : vector<32x128xf32> to vector<128xf32>
    %14 = vector.shape_cast %13 : vector<128xf32> to vector<1x128xf32>
    %15 = vector.shape_cast %14 : vector<1x128xf32> to vector<1x1x128xf32>
    %c0_8 = arith.constant 0 : index
    %c0_9 = arith.constant 0 : index
    %c0_10 = arith.constant 0 : index
    %16 = vector.load %arg4[%c0_8, %c0_9, %c0_10] : memref<1x1x128xf32, #tpu.memory_space<vmem>>, vector<1x1x128xf32>
    tpu.vector_store %arg4[%c0_8, %c0_9, %c0_10], %15 {strides = array<i32>} : memref<1x1x128xf32, #tpu.memory_space<vmem>>, vector<1x1x128xf32>,
    %17 = arith.mulf %12, %2 : vector<32x128xf32>
    %cst_11 = arith.constant dense<0.000000e+00> : vector<128xf32>
    %18 = vector.multi_reduction <add>, %17, %cst_11 [0] : vector<32x128xf32> to vector<128xf32>
    %19 = vector.shape_cast %18 : vector<128xf32> to vector<1x128xf32>
    %20 = vector.shape_cast %19 : vector<1x128xf32> to vector<1x1x128xf32>
    %c0_12 = arith.constant 0 : index
    %c0_13 = arith.constant 0 : index
    %c0_14 = arith.constant 0 : index
    %21 = vector.load %arg5[%c0_12, %c0_13, %c0_14] : memref<1x1x128xf32, #tpu.memory_space<vmem>>, vector<1x1x128xf32>
    tpu.vector_store %arg5[%c0_12, %c0_13, %c0_14], %20 {strides = array<i32>} : memref<1x1x128xf32, #tpu.memory_space<vmem>>, vector<1x1x128xf32>,
    return
  }
  func.func @transform_0(%arg0: i32) -> (i32, i32) {
    %c0_i32 = arith.constant 0 : i32
    %c0_i32_0 = arith.constant 0 : i32
    return %arg0, %c0_i32 : i32, i32
  }
  func.func @transform_1(%arg0: i32) -> (i32, i32) {
    %c0_i32 = arith.constant 0 : i32
    %c0_i32_0 = arith.constant 0 : i32
    %c0_i32_1 = arith.constant 0 : i32
    return %c0_i32, %c0_i32_0 : i32, i32
  }
  func.func @transform_2(%arg0: i32) -> (i32, i32) {
    %c0_i32 = arith.constant 0 : i32
    %c0_i32_0 = arith.constant 0 : i32
    return %arg0, %c0_i32 : i32, i32
  }
  func.func @transform_3(%arg0: i32) -> (i32, i32, i32) {
    %c0_i32 = arith.constant 0 : i32
    %c0_i32_0 = arith.constant 0 : i32
    %c0_i32_1 = arith.constant 0 : i32
    return %arg0, %c0_i32, %c0_i32_0 : i32, i32, i32
  }
  func.func @transform_4(%arg0: i32) -> (i32, i32, i32) {
    %c0_i32 = arith.constant 0 : i32
    %c0_i32_0 = arith.constant 0 : i32
    %c0_i32_1 = arith.constant 0 : i32
    return %arg0, %c0_i32, %c0_i32_0 : i32, i32, i32
  }
}

module attributes {stable_mosaic.version = 11 : i64} {
  func.func @bn_relu_kernel(%arg0: i32, %arg1: memref<32x128xbf16, #tpu.memory_space<vmem>>, %arg2: memref<1x128xf32, #tpu.memory_space<vmem>>, %arg3: memref<1x128xf32, #tpu.memory_space<vmem>>, %arg4: memref<32x128xbf16, #tpu.memory_space<vmem>>) attributes {dimension_semantics = [#tpu.dimension_semantics<parallel>], iteration_bounds = array<i64: 1>, scalar_prefetch = 0 : i64, scratch_operands = 0 : i64, tpu.core_type = #tpu.core_type<tc>, window_params = [{transform_indices = @transform_0, window_bounds = array<i64: 32, 128>}, {pipeline_mode = #tpu.pipeline_mode<synchronous>, transform_indices = @transform_1, window_bounds = array<i64: 1, 128>}, {pipeline_mode = #tpu.pipeline_mode<synchronous>, transform_indices = @transform_2, window_bounds = array<i64: 1, 128>}, {transform_indices = @transform_3, window_bounds = array<i64: 32, 128>}]} {
    %c0 = arith.constant 0 : index
    %c0_0 = arith.constant 0 : index
    %0 = vector.load %arg1[%c0, %c0_0] : memref<32x128xbf16, #tpu.memory_space<vmem>>, vector<32x128xbf16>
    %1 = arith.extf %0 : vector<32x128xbf16> to vector<32x128xf32>
    %c0_1 = arith.constant 0 : index
    %c0_2 = arith.constant 0 : index
    %2 = vector.load %arg2[%c0_1, %c0_2] : memref<1x128xf32, #tpu.memory_space<vmem>>, vector<1x128xf32>
    %3 = vector.broadcast %2 : vector<1x128xf32> to vector<32x128xf32>
    %4 = arith.mulf %1, %3 : vector<32x128xf32>
    %c0_3 = arith.constant 0 : index
    %c0_4 = arith.constant 0 : index
    %5 = vector.load %arg3[%c0_3, %c0_4] : memref<1x128xf32, #tpu.memory_space<vmem>>, vector<1x128xf32>
    %6 = vector.broadcast %5 : vector<1x128xf32> to vector<32x128xf32>
    %7 = arith.addf %4, %6 : vector<32x128xf32>
    %cst = arith.constant 0.000000e+00 : f32
    %8 = vector.broadcast %cst : f32 to vector<32x128xf32>
    %9 = arith.maximumf %7, %8 : vector<32x128xf32>
    %10 = arith.truncf %9 : vector<32x128xf32> to vector<32x128xbf16>
    %c0_5 = arith.constant 0 : index
    %c0_6 = arith.constant 0 : index
    %11 = vector.load %arg4[%c0_5, %c0_6] : memref<32x128xbf16, #tpu.memory_space<vmem>>, vector<32x128xbf16>
    tpu.vector_store %arg4[%c0_5, %c0_6], %10 {strides = array<i32>} : memref<32x128xbf16, #tpu.memory_space<vmem>>, vector<32x128xbf16>,
    return
  }
  func.func @transform_0(%arg0: i32) -> (i32, i32) {
    %c0_i32 = arith.constant 0 : i32
    %c0_i32_0 = arith.constant 0 : i32
    return %arg0, %c0_i32 : i32, i32
  }
  func.func @transform_1(%arg0: i32) -> (i32, i32) {
    %c0_i32 = arith.constant 0 : i32
    %c0_i32_0 = arith.constant 0 : i32
    %c0_i32_1 = arith.constant 0 : i32
    return %c0_i32, %c0_i32_0 : i32, i32
  }
  func.func @transform_2(%arg0: i32) -> (i32, i32) {
    %c0_i32 = arith.constant 0 : i32
    %c0_i32_0 = arith.constant 0 : i32
    %c0_i32_1 = arith.constant 0 : i32
    return %c0_i32, %c0_i32_0 : i32, i32
  }
  func.func @transform_3(%arg0: i32) -> (i32, i32) {
    %c0_i32 = arith.constant 0 : i32
    %c0_i32_0 = arith.constant 0 : i32
    return %arg0, %c0_i32 : i32, i32
  }
}

module attributes {stable_mosaic.version = 11 : i64} {
  func.func @conv_act_kernel(%arg0: i32, %arg1: memref<2x512xbf16, #tpu.memory_space<vmem>>, %arg2: memref<512x128xbf16, #tpu.memory_space<vmem>>, %arg3: memref<1x128xf32, #tpu.memory_space<vmem>>, %arg4: memref<2x128xf32, #tpu.memory_space<vmem>>) attributes {dimension_semantics = [#tpu.dimension_semantics<parallel>], iteration_bounds = array<i64: 1>, scalar_prefetch = 0 : i64, scratch_operands = 0 : i64, tpu.core_type = #tpu.core_type<tc>, window_params = [{transform_indices = @transform_0, window_bounds = array<i64: 2, 512>}, {pipeline_mode = #tpu.pipeline_mode<synchronous>, transform_indices = @transform_1, window_bounds = array<i64: 512, 128>}, {pipeline_mode = #tpu.pipeline_mode<synchronous>, transform_indices = @transform_2, window_bounds = array<i64: 1, 128>}, {transform_indices = @transform_3, window_bounds = array<i64: 2, 128>}]} {
    %c0 = arith.constant 0 : index
    %c0_0 = arith.constant 0 : index
    %0 = vector.load %arg1[%c0, %c0_0] : memref<2x512xbf16, #tpu.memory_space<vmem>>, vector<2x512xbf16>
    %c0_1 = arith.constant 0 : index
    %c0_2 = arith.constant 0 : index
    %1 = vector.load %arg2[%c0_1, %c0_2] : memref<512x128xbf16, #tpu.memory_space<vmem>>, vector<512x128xbf16>
    %cst = arith.constant dense<0.000000e+00> : vector<2x128xf32>
    %2 = tpu.matmul %0, %1, %cst {dimension_numbers = #tpu.dot_dimension_numbers<[1], [0], [0], [1], [0, 0, 1, 1], [], []>} : vector<2x512xbf16>, vector<512x128xbf16>, vector<2x128xf32> -> vector<2x128xf32>
    %c0_3 = arith.constant 0 : index
    %c0_4 = arith.constant 0 : index
    %3 = vector.load %arg3[%c0_3, %c0_4] : memref<1x128xf32, #tpu.memory_space<vmem>>, vector<1x128xf32>
    %4 = vector.broadcast %3 : vector<1x128xf32> to vector<2x128xf32>
    %5 = arith.addf %2, %4 : vector<2x128xf32>
    %6 = math.tanh %5 : vector<2x128xf32>
    %c0_5 = arith.constant 0 : index
    %c0_6 = arith.constant 0 : index
    %7 = vector.load %arg4[%c0_5, %c0_6] : memref<2x128xf32, #tpu.memory_space<vmem>>, vector<2x128xf32>
    tpu.vector_store %arg4[%c0_5, %c0_6], %6 {strides = array<i32>} : memref<2x128xf32, #tpu.memory_space<vmem>>, vector<2x128xf32>,
    return
  }
  func.func @transform_0(%arg0: i32) -> (i32, i32) {
    %c0_i32 = arith.constant 0 : i32
    %c0_i32_0 = arith.constant 0 : i32
    return %arg0, %c0_i32 : i32, i32
  }
  func.func @transform_1(%arg0: i32) -> (i32, i32) {
    %c0_i32 = arith.constant 0 : i32
    %c0_i32_0 = arith.constant 0 : i32
    %c0_i32_1 = arith.constant 0 : i32
    return %c0_i32, %c0_i32_0 : i32, i32
  }
  func.func @transform_2(%arg0: i32) -> (i32, i32) {
    %c0_i32 = arith.constant 0 : i32
    %c0_i32_0 = arith.constant 0 : i32
    %c0_i32_1 = arith.constant 0 : i32
    return %c0_i32, %c0_i32_0 : i32, i32
  }
  func.func @transform_3(%arg0: i32) -> (i32, i32) {
    %c0_i32 = arith.constant 0 : i32
    %c0_i32_0 = arith.constant 0 : i32
    return %arg0, %c0_i32 : i32, i32
  }
}

</mosaic_0001>

<llo_original>
// kernel: discriminator_forward.8
$region0: #{discriminator_forward.8}
  #allocation0 [shape = 'u32[]', space=smem, size = 0x4, offset = 0x4, fixed_abs, tag = 'smem constant byte address 0x4 - core index']
  #allocation1 [shape = 'u32[144,128]{1,0:T(1,128)}', space=vmem, size = 0x12000, scoped, tag = 'internal scratch']
  %s0 = inlined_call_operand.vmem [shape: bf16[2048,16], index: 0, kind: input, shape index: {}]
  %s1 = inlined_call_operand.vmem [shape: bf16[16,128], index: 1, kind: input, shape index: {}]
  %s2 = inlined_call_operand.vmem [shape: f32[1,128], index: 2, kind: input, shape index: {}]
  %s3 = inlined_call_operand.vmem [shape: bf16[2048,128], index: 3, kind: output, shape index: {}]
  %s4 = sld [smem:[#allocation0]]
  $region22: #{discriminator_forward.8} parent=0
    _
  %s6 = ssub.s32 1, %s4
  %s7 = scalar_select 0, %s6, %s4
  // Predicated region
  $region2: #{discriminator_forward.8} parent=0 // pred_check
    _
  $region3: #{discriminator_forward.8} parent=0 // pred_check_branch
    %9 = sbr.rel (0) target = $region5
  $region4: #{discriminator_forward.8} parent=0 // pred_region
    _
  $region5: #{discriminator_forward.8} parent=0 // pred_fallthru
    _
  // Predicated region
  $region6: #{discriminator_forward.8} parent=0 // pred_check
    _
  $region7: #{discriminator_forward.8} parent=0 // pred_check_branch
    %11 = sbr.rel (0) target = $region9
  $region8: #{discriminator_forward.8} parent=0 // pred_region
    _
  $region9: #{discriminator_forward.8} parent=0 // pred_fallthru
    _
  // Predicated region
  $region10: #{discriminator_forward.8} parent=0 // pred_check
    _
  $region11: #{discriminator_forward.8} parent=0 // pred_check_branch
    %13 = sbr.rel (0) target = $region13
  $region12: #{discriminator_forward.8} parent=0 // pred_region
    _
  $region13: #{discriminator_forward.8} parent=0 // pred_fallthru
    _
  %v15 = vld [vmem:[%s0] sm:$0xf]
  %v16 = vld [vmem:[%s0 + $0x4] sm:$0xf]
  %v17 = vld [vmem:[%s0 + $0x8] sm:$0xf]
  %v18 = vld [vmem:[%s0 + $0xc] sm:$0xf]
  %v19 = vld [vmem:[%s0 + $0x10] sm:$0xf]
  %v20 = vld [vmem:[%s0 + $0x14] sm:$0xf]
  %v21 = vld [vmem:[%s0 + $0x18] sm:$0xf]
  %v22 = vld [vmem:[%s0 + $0x1c] sm:$0xf]
  %v23 = vld [vmem:[%s0 + $0x20] sm:$0xf]
  %v24 = vld [vmem:[%s0 + $0x24] sm:$0xf]
  %v25 = vld [vmem:[%s0 + $0x28] sm:$0xf]
  %v26 = vld [vmem:[%s0 + $0x2c] sm:$0xf]
  %v27 = vld [vmem:[%s0 + $0x30] sm:$0xf]
  %v28 = vld [vmem:[%s0 + $0x34] sm:$0xf]
  %v29 = vld [vmem:[%s0 + $0x38] sm:$0xf]
  %v30 = vld [vmem:[%s0 + $0x3c] sm:$0xf]
  %v31 = vld [vmem:[%s0 + $0x40] sm:$0xf]
  %v32 = vld [vmem:[%s0 + $0x44] sm:$0xf]
  %v33 = vld [vmem:[%s0 + $0x48] sm:$0xf]
  %v34 = vld [vmem:[%s0 + $0x4c] sm:$0xf]
  %v35 = vld [vmem:[%s0 + $0x50] sm:$0xf]
  %v36 = vld [vmem:[%s0 + $0x54] sm:$0xf]
  %v37 = vld [vmem:[%s0 + $0x58] sm:$0xf]
  %v38 = vld [vmem:[%s0 + $0x5c] sm:$0xf]
  %v39 = vld [vmem:[%s0 + $0x60] sm:$0xf]
  %v40 = vld [vmem:[%s0 + $0x64] sm:$0xf]
  %v41 = vld [vmem:[%s0 + $0x68] sm:$0xf]
  %v42 = vld [vmem:[%s0 + $0x6c] sm:$0xf]
  %v43 = vld [vmem:[%s0 + $0x70] sm:$0xf]
  %v44 = vld [vmem:[%s0 + $0x74] sm:$0xf]
  %v45 = vld [vmem:[%s0 + $0x78] sm:$0xf]
  %v46 = vld [vmem:[%s0 + $0x7c] sm:$0xf]
  %v47 = vld [vmem:[%s0 + $0x80] sm:$0xf]
  %v48 = vld [vmem:[%s0 + $0x84] sm:$0xf]
  %v49 = vld [vmem:[%s0 + $0x88] sm:$0xf]
  %v50 = vld [vmem:[%s0 + $0x8c] sm:$0xf]
  %v51 = vld [vmem:[%s0 + $0x90] sm:$0xf]
  %v52 = vld [vmem:[%s0 + $0x94] sm:$0xf]
  %v53 = vld [vmem:[%s0 + $0x98] sm:$0xf]
  %v54 = vld [vmem:[%s0 + $0x9c] sm:$0xf]
  %v55 = vld [vmem:[%s0 + $0xa0] sm:$0xf]
  %v56 = vld [vmem:[%s0 + $0xa4] sm:$0xf]
  %v57 = vld [vmem:[%s0 + $0xa8] sm:$0xf]
  %v58 = vld [vmem:[%s0 + $0xac] sm:$0xf]
  %v59 = vld [vmem:[%s0 + $0xb0] sm:$0xf]
  %v60 = vld [vmem:[%s0 + $0xb4] sm:$0xf]
  %v61 = vld [vmem:[%s0 + $0xb8] sm:$0xf]
  %v62 = vld [vmem:[%s0 + $0xbc] sm:$0xf]
  %v63 = vld [vmem:[%s0 + $0xc0] sm:$0xf]
  %v64 = vld [vmem:[%s0 + $0xc4] sm:$0xf]
  %v65 = vld [vmem:[%s0 + $0xc8] sm:$0xf]
  %v66 = vld [vmem:[%s0 + $0xcc] sm:$0xf]
  %v67 = vld [vmem:[%s0 + $0xd0] sm:$0xf]
  %v68 = vld [vmem:[%s0 + $0xd4] sm:$0xf]
  %v69 = vld [vmem:[%s0 + $0xd8] sm:$0xf]
  %v70 = vld [vmem:[%s0 + $0xdc] sm:$0xf]
  %v71 = vld [vmem:[%s0 + $0xe0] sm:$0xf]
  %v72 = vld [vmem:[%s0 + $0xe4] sm:$0xf]
  %v73 = vld [vmem:[%s0 + $0xe8] sm:$0xf]
  %v74 = vld [vmem:[%s0 + $0xec] sm:$0xf]
  %v75 = vld [vmem:[%s0 + $0xf0] sm:$0xf]
  %v76 = vld [vmem:[%s0 + $0xf4] sm:$0xf]
  %v77 = vld [vmem:[%s0 + $0xf8] sm:$0xf]
  %v78 = vld [vmem:[%s0 + $0xfc] sm:$0xf]
  %v79 = vld [vmem:[%s0 + $0x100] sm:$0xf]
  %v80 = vld [vmem:[%s0 + $0x104] sm:$0xf]
  %v81 = vld [vmem:[%s0 + $0x108] sm:$0xf]
  %v82 = vld [vmem:[%s0 + $0x10c] sm:$0xf]
  %v83 = vld [vmem:[%s0 + $0x110] sm:$0xf]
  %v84 = vld [vmem:[%s0 + $0x114] sm:$0xf]
  %v85 = vld [vmem:[%s0 + $0x118] sm:$0xf]
  %v86 = vld [vmem:[%s0 + $0x11c] sm:$0xf]
  %v87 = vld [vmem:[%s0 + $0x120] sm:$0xf]
  %v88 = vld [vmem:[%s0 + $0x124] sm:$0xf]
  %v89 = vld [vmem:[%s0 + $0x128] sm:$0xf]
  %v90 = vld [vmem:[%s0 + $0x12c] sm:$0xf]
  %v91 = vld [vmem:[%s0 + $0x130] sm:$0xf]
  %v92 = vld [vmem:[%s0 + $0x134] sm:$0xf]
  %v93 = vld [vmem:[%s0 + $0x138] sm:$0xf]
  %v94 = vld [vmem:[%s0 + $0x13c] sm:$0xf]
  %v95 = vld [vmem:[%s0 + $0x140] sm:$0xf]
  %v96 = vld [vmem:[%s0 + $0x144] sm:$0xf]
  %v97 = vld [vmem:[%s0 + $0x148] sm:$0xf]
  %v98 = vld [vmem:[%s0 + $0x14c] sm:$0xf]
  %v99 = vld [vmem:[%s0 + $0x150] sm:$0xf]
  %v100 = vld [vmem:[%s0 + $0x154] sm:$0xf]
  %v101 = vld [vmem:[%s0 + $0x158] sm:$0xf]
  %v102 = vld [vmem:[%s0 + $0x15c] sm:$0xf]
  %v103 = vld [vmem:[%s0 + $0x160] sm:$0xf]
  %v104 = vld [vmem:[%s0 + $0x164] sm:$0xf]
  %v105 = vld [vmem:[%s0 + $0x168] sm:$0xf]
  %v106 = vld [vmem:[%s0 + $0x16c] sm:$0xf]
  %v107 = vld [vmem:[%s0 + $0x170] sm:$0xf]
  %v108 = vld [vmem:[%s0 + $0x174] sm:$0xf]
  %v109 = vld [vmem:[%s0 + $0x178] sm:$0xf]
  %v110 = vld [vmem:[%s0 + $0x17c] sm:$0xf]
  %v111 = vld [vmem:[%s0 + $0x180] sm:$0xf]
  %v112 = vld [vmem:[%s0 + $0x184] sm:$0xf]
  %v113 = vld [vmem:[%s0 + $0x188] sm:$0xf]
  %v114 = vld [vmem:[%s0 + $0x18c] sm:$0xf]
  %v115 = vld [vmem:[%s0 + $0x190] sm:$0xf]
  %v116 = vld [vmem:[%s0 + $0x194] sm:$0xf]
  %v117 = vld [vmem:[%s0 + $0x198] sm:$0xf]
  %v118 = vld [vmem:[%s0 + $0x19c] sm:$0xf]
  %v119 = vld [vmem:[%s0 + $0x1a0] sm:$0xf]
  %v120 = vld [vmem:[%s0 + $0x1a4] sm:$0xf]
  %v121 = vld [vmem:[%s0 + $0x1a8] sm:$0xf]
  %v122 = vld [vmem:[%s0 + $0x1ac] sm:$0xf]
  %v123 = vld [vmem:[%s0 + $0x1b0] sm:$0xf]
  %v124 = vld [vmem:[%s0 + $0x1b4] sm:$0xf]
  %v125 = vld [vmem:[%s0 + $0x1b8] sm:$0xf]
  %v126 = vld [vmem:[%s0 + $0x1bc] sm:$0xf]
  %v127 = vld [vmem:[%s0 + $0x1c0] sm:$0xf]
  %v128 = vld [vmem:[%s0 + $0x1c4] sm:$0xf]
  %v129 = vld [vmem:[%s0 + $0x1c8] sm:$0xf]
  %v130 = vld [vmem:[%s0 + $0x1cc] sm:$0xf]
  %v131 = vld [vmem:[%s0 + $0x1d0] sm:$0xf]
  %v132 = vld [vmem:[%s0 + $0x1d4] sm:$0xf]
  %v133 = vld [vmem:[%s0 + $0x1d8] sm:$0xf]
  %v134 = vld [vmem:[%s0 + $0x1dc] sm:$0xf]
  %v135 = vld [vmem:[%s0 + $0x1e0] sm:$0xf]
  %v136 = vld [vmem:[%s0 + $0x1e4] sm:$0xf]
  %v137 = vld [vmem:[%s0 + $0x1e8] sm:$0xf]
  %v138 = vld [vmem:[%s0 + $0x1ec] sm:$0xf]
  %v139 = vld [vmem:[%s0 + $0x1f0] sm:$0xf]
  %v140 = vld [vmem:[%s0 + $0x1f4] sm:$0xf]
  %v141 = vld [vmem:[%s0 + $0x1f8] sm:$0xf]
  %v142 = vld [vmem:[%s0 + $0x1fc] sm:$0xf]
  %v143 = vld [vmem:[%s0 + $0x200] sm:$0xf]
  %v144 = vld [vmem:[%s0 + $0x204] sm:$0xf]
  %v145 = vld [vmem:[%s0 + $0x208] sm:$0xf]
  %v146 = vld [vmem:[%s0 + $0x20c] sm:$0xf]
  %v147 = vld [vmem:[%s0 + $0x210] sm:$0xf]
  %v148 = vld [vmem:[%s0 + $0x214] sm:$0xf]
  %v149 = vld [vmem:[%s0 + $0x218] sm:$0xf]
  %v150 = vld [vmem:[%s0 + $0x21c] sm:$0xf]
  %v151 = vld [vmem:[%s0 + $0x220] sm:$0xf]
  %v152 = vld [vmem:[%s0 + $0x224] sm:$0xf]
  %v153 = vld [vmem:[%s0 + $0x228] sm:$0xf]
  %v154 = vld [vmem:[%s0 + $0x22c] sm:$0xf]
  %v155 = vld [vmem:[%s0 + $0x230] sm:$0xf]
  %v156 = vld [vmem:[%s0 + $0x234] sm:$0xf]
  %v157 = vld [vmem:[%s0 + $0x238] sm:$0xf]
  %v158 = vld [vmem:[%s0 + $0x23c] sm:$0xf]
  %v159 = vld [vmem:[%s0 + $0x240] sm:$0xf]
  %v160 = vld [vmem:[%s0 + $0x244] sm:$0xf]
  %v161 = vld [vmem:[%s0 + $0x248] sm:$0xf]
  %v162 = vld [vmem:[%s0 + $0x24c] sm:$0xf]
  %v163 = vld [vmem:[%s0 + $0x250] sm:$0xf]
  %v164 = vld [vmem:[%s0 + $0x254] sm:$0xf]
  %v165 = vld [vmem:[%s0 + $0x258] sm:$0xf]
  %v166 = vld [vmem:[%s0 + $0x25c] sm:$0xf]
  %v167 = vld [vmem:[%s0 + $0x260] sm:$0xf]
  %v168 = vld [vmem:[%s0 + $0x264] sm:$0xf]
  %v169 = vld [vmem:[%s0 + $0x268] sm:$0xf]
  %v170 = vld [vmem:[%s0 + $0x26c] sm:$0xf]
  %v171 = vld [vmem:[%s0 + $0x270] sm:$0xf]
  %v172 = vld [vmem:[%s0 + $0x274] sm:$0xf]
  %v173 = vld [vmem:[%s0 + $0x278] sm:$0xf]
  %v174 = vld [vmem:[%s0 + $0x27c] sm:$0xf]
  %v175 = vld [vmem:[%s0 + $0x280] sm:$0xf]
  %v176 = vld [vmem:[%s0 + $0x284] sm:$0xf]
  %v177 = vld [vmem:[%s0 + $0x288] sm:$0xf]
  %v178 = vld [vmem:[%s0 + $0x28c] sm:$0xf]
  %v179 = vld [vmem:[%s0 + $0x290] sm:$0xf]
  %v180 = vld [vmem:[%s0 + $0x294] sm:$0xf]
  %v181 = vld [vmem:[%s0 + $0x298] sm:$0xf]
  %v182 = vld [vmem:[%s0 + $0x29c] sm:$0xf]
  %v183 = vld [vmem:[%s0 + $0x2a0] sm:$0xf]
  %v184 = vld [vmem:[%s0 + $0x2a4] sm:$0xf]
  %v185 = vld [vmem:[%s0 + $0x2a8] sm:$0xf]
  %v186 = vld [vmem:[%s0 + $0x2ac] sm:$0xf]
  %v187 = vld [vmem:[%s0 + $0x2b0] sm:$0xf]
  %v188 = vld [vmem:[%s0 + $0x2b4] sm:$0xf]
  %v189 = vld [vmem:[%s0 + $0x2b8] sm:$0xf]
  %v190 = vld [vmem:[%s0 + $0x2bc] sm:$0xf]
  %v191 = vld [vmem:[%s0 + $0x2c0] sm:$0xf]
  %v192 = vld [vmem:[%s0 + $0x2c4] sm:$0xf]
  %v193 = vld [vmem:[%s0 + $0x2c8] sm:$0xf]
  %v194 = vld [vmem:[%s0 + $0x2cc] sm:$0xf]
  %v195 = vld [vmem:[%s0 + $0x2d0] sm:$0xf]
  %v196 = vld [vmem:[%s0 + $0x2d4] sm:$0xf]
  %v197 = vld [vmem:[%s0 + $0x2d8] sm:$0xf]
  %v198 = vld [vmem:[%s0 + $0x2dc] sm:$0xf]
  %v199 = vld [vmem:[%s0 + $0x2e0] sm:$0xf]
  %v200 = vld [vmem:[%s0 + $0x2e4] sm:$0xf]
  %v201 = vld [vmem:[%s0 + $0x2e8] sm:$0xf]
  %v202 = vld [vmem:[%s0 + $0x2ec] sm:$0xf]
  %v203 = vld [vmem:[%s0 + $0x2f0] sm:$0xf]
  %v204 = vld [vmem:[%s0 + $0x2f4] sm:$0xf]
  %v205 = vld [vmem:[%s0 + $0x2f8] sm:$0xf]
  %v206 = vld [vmem:[%s0 + $0x2fc] sm:$0xf]
  %v207 = vld [vmem:[%s0 + $0x300] sm:$0xf]
  %v208 = vld [vmem:[%s0 + $0x304] sm:$0xf]
  %v209 = vld [vmem:[%s0 + $0x308] sm:$0xf]
  %v210 = vld [vmem:[%s0 + $0x30c] sm:$0xf]
  %v211 = vld [vmem:[%s0 + $0x310] sm:$0xf]
  %v212 = vld [vmem:[%s0 + $0x314] sm:$0xf]
  %v213 = vld [vmem:[%s0 + $0x318] sm:$0xf]
  %v214 = vld [vmem:[%s0 + $0x31c] sm:$0xf]
  %v215 = vld [vmem:[%s0 + $0x320] sm:$0xf]
  %v216 = vld [vmem:[%s0 + $0x324] sm:$0xf]
  %v217 = vld [vmem:[%s0 + $0x328] sm:$0xf]
  %v218 = vld [vmem:[%s0 + $0x32c] sm:$0xf]
  %v219 = vld [vmem:[%s0 + $0x330] sm:$0xf]
  %v220 = vld [vmem:[%s0 + $0x334] sm:$0xf]
  %v221 = vld [vmem:[%s0 + $0x338] sm:$0xf]
  %v222 = vld [vmem:[%s0 + $0x33c] sm:$0xf]
  %v223 = vld [vmem:[%s0 + $0x340] sm:$0xf]
  %v224 = vld [vmem:[%s0 + $0x344] sm:$0xf]
  %v225 = vld [vmem:[%s0 + $0x348] sm:$0xf]
  %v226 = vld [vmem:[%s0 + $0x34c] sm:$0xf]
  %v227 = vld [vmem:[%s0 + $0x350] sm:$0xf]
  %v228 = vld [vmem:[%s0 + $0x354] sm:$0xf]
  %v229 = vld [vmem:[%s0 + $0x358] sm:$0xf]
  %v230 = vld [vmem:[%s0 + $0x35c] sm:$0xf]
  %v231 = vld [vmem:[%s0 + $0x360] sm:$0xf]
  %v232 = vld [vmem:[%s0 + $0x364] sm:$0xf]
  %v233 = vld [vmem:[%s0 + $0x368] sm:$0xf]
  %v234 = vld [vmem:[%s0 + $0x36c] sm:$0xf]
  %v235 = vld [vmem:[%s0 + $0x370] sm:$0xf]
  %v236 = vld [vmem:[%s0 + $0x374] sm:$0xf]
  %v237 = vld [vmem:[%s0 + $0x378] sm:$0xf]
  %v238 = vld [vmem:[%s0 + $0x37c] sm:$0xf]
  %v239 = vld [vmem:[%s0 + $0x380] sm:$0xf]
  %v240 = vld [vmem:[%s0 + $0x384] sm:$0xf]
  %v241 = vld [vmem:[%s0 + $0x388] sm:$0xf]
  %v242 = vld [vmem:[%s0 + $0x38c] sm:$0xf]
  %v243 = vld [vmem:[%s0 + $0x390] sm:$0xf]
  %v244 = vld [vmem:[%s0 + $0x394] sm:$0xf]
  %v245 = vld [vmem:[%s0 + $0x398] sm:$0xf]
  %v246 = vld [vmem:[%s0 + $0x39c] sm:$0xf]
  %v247 = vld [vmem:[%s0 + $0x3a0] sm:$0xf]
  %v248 = vld [vmem:[%s0 + $0x3a4] sm:$0xf]
  %v249 = vld [vmem:[%s0 + $0x3a8] sm:$0xf]
  %v250 = vld [vmem:[%s0 + $0x3ac] sm:$0xf]
  %v251 = vld [vmem:[%s0 + $0x3b0] sm:$0xf]
  %v252 = vld [vmem:[%s0 + $0x3b4] sm:$0xf]
  %v253 = vld [vmem:[%s0 + $0x3b8] sm:$0xf]
  %v254 = vld [vmem:[%s0 + $0x3bc] sm:$0xf]
  %v255 = vld [vmem:[%s0 + $0x3c0] sm:$0xf]
  %v256 = vld [vmem:[%s0 + $0x3c4] sm:$0xf]
  %v257 = vld [vmem:[%s0 + $0x3c8] sm:$0xf]
  %v258 = vld [vmem:[%s0 + $0x3cc] sm:$0xf]
  %v259 = vld [vmem:[%s0 + $0x3d0] sm:$0xf]
  %v260 = vld [vmem:[%s0 + $0x3d4] sm:$0xf]
  %v261 = vld [vmem:[%s0 + $0x3d8] sm:$0xf]
  %v262 = vld [vmem:[%s0 + $0x3dc] sm:$0xf]
  %v263 = vld [vmem:[%s0 + $0x3e0] sm:$0xf]
  %v264 = vld [vmem:[%s0 + $0x3e4] sm:$0xf]
  %v265 = vld [vmem:[%s0 + $0x3e8] sm:$0xf]
  %v266 = vld [vmem:[%s0 + $0x3ec] sm:$0xf]
  %v267 = vld [vmem:[%s0 + $0x3f0] sm:$0xf]
  %v268 = vld [vmem:[%s0 + $0x3f4] sm:$0xf]
  %v269 = vld [vmem:[%s0 + $0x3f8] sm:$0xf]
  %v270 = vld [vmem:[%s0 + $0x3fc] sm:$0xf]
  %v271 = vld [vmem:[%s1] sm:$0xf]
  %v272 = vld [vmem:[%s1 + $0x4] sm:$0xf]
  %v273 = vld [vmem:[%s2] sm:$0x1]
  %v275 = vlaneseq
  %v276 = vshrl.u32 %v275, 7
  %v277 = vsub.s32 0, %v276
  %v278 = vrot.slane %v273, %v277
  %v536 = vunpack.c.l.b16 %v15
  %v537 = vunpack.c.l.b16 %v16
  %v538 = vunpack.c.l.b16 %v17
  %v539 = vunpack.c.l.b16 %v18
  %v540 = vunpack.c.l.b16 %v19
  %v541 = vunpack.c.l.b16 %v20
  %v542 = vunpack.c.l.b16 %v21
  %v543 = vunpack.c.l.b16 %v22
  %v544 = vunpack.c.l.b16 %v23
  %v545 = vunpack.c.l.b16 %v24
  %v546 = vunpack.c.l.b16 %v25
  %v547 = vunpack.c.l.b16 %v26
  %v548 = vunpack.c.l.b16 %v27
  %v549 = vunpack.c.l.b16 %v28
  %v550 = vunpack.c.l.b16 %v29
  %v551 = vunpack.c.l.b16 %v30
  %v552 = vunpack.c.l.b16 %v31
  %v553 = vunpack.c.l.b16 %v32
  %v554 = vunpack.c.l.b16 %v33
  %v555 = vunpack.c.l.b16 %v34
  %v556 = vunpack.c.l.b16 %v35
  %v557 = vunpack.c.l.b16 %v36
  %v558 = vunpack.c.l.b16 %v37
  %v559 = vunpack.c.l.b16 %v38
  %v560 = vunpack.c.l.b16 %v39
  %v561 = vunpack.c.l.b16 %v40
  %v562 = vunpack.c.l.b16 %v41
  %v563 = vunpack.c.l.b16 %v42
  %v564 = vunpack.c.l.b16 %v43
  %v565 = vunpack.c.l.b16 %v44
  %v566 = vunpack.c.l.b16 %v45
  %v567 = vunpack.c.l.b16 %v46
  %v568 = vunpack.c.l.b16 %v47
  %v569 = vunpack.c.l.b16 %v48
  %v570 = vunpack.c.l.b16 %v49
  %v571 = vunpack.c.l.b16 %v50
  %v572 = vunpack.c.l.b16 %v51
  %v573 = vunpack.c.l.b16 %v52
  %v574 = vunpack.c.l.b16 %v53
  %v575 = vunpack.c.l.b16 %v54
  %v576 = vunpack.c.l.b16 %v55
  %v577 = vunpack.c.l.b16 %v56
  %v578 = vunpack.c.l.b16 %v57
  %v579 = vunpack.c.l.b16 %v58
  %v580 = vunpack.c.l.b16 %v59
  %v581 = vunpack.c.l.b16 %v60
  %v582 = vunpack.c.l.b16 %v61
  %v583 = vunpack.c.l.b16 %v62
  %v584 = vunpack.c.l.b16 %v63
  %v585 = vunpack.c.l.b16 %v64
  %v586 = vunpack.c.l.b16 %v65
  %v587 = vunpack.c.l.b16 %v66
  %v588 = vunpack.c.l.b16 %v67
  %v589 = vunpack.c.l.b16 %v68
  %v590 = vunpack.c.l.b16 %v69
  %v591 = vunpack.c.l.b16 %v70
  %v592 = vunpack.c.l.b16 %v71
  %v593 = vunpack.c.l.b16 %v72
  %v594 = vunpack.c.l.b16 %v73
  %v595 = vunpack.c.l.b16 %v74
  %v596 = vunpack.c.l.b16 %v75
  %v597 = vunpack.c.l.b16 %v76
  %v598 = vunpack.c.l.b16 %v77
  %v599 = vunpack.c.l.b16 %v78
  %v600 = vunpack.c.l.b16 %v79
  %v601 = vunpack.c.l.b16 %v80
  %v602 = vunpack.c.l.b16 %v81
  %v603 = vunpack.c.l.b16 %v82
  %v604 = vunpack.c.l.b16 %v83
  %v605 = vunpack.c.l.b16 %v84
  %v606 = vunpack.c.l.b16 %v85
  %v607 = vunpack.c.l.b16 %v86
  %v608 = vunpack.c.l.b16 %v87
  %v609 = vunpack.c.l.b16 %v88
  %v610 = vunpack.c.l.b16 %v89
  %v611 = vunpack.c.l.b16 %v90
  %v612 = vunpack.c.l.b16 %v91
  %v613 = vunpack.c.l.b16 %v92
  %v614 = vunpack.c.l.b16 %v93
  %v615 = vunpack.c.l.b16 %v94
  %v616 = vunpack.c.l.b16 %v95
  %v617 = vunpack.c.l.b16 %v96
  %v618 = vunpack.c.l.b16 %v97
  %v619 = vunpack.c.l.b16 %v98
  %v620 = vunpack.c.l.b16 %v99
  %v621 = vunpack.c.l.b16 %v100
  %v622 = vunpack.c.l.b16 %v101
  %v623 = vunpack.c.l.b16 %v102
  %v624 = vunpack.c.l.b16 %v103
  %v625 = vunpack.c.l.b16 %v104
  %v626 = vunpack.c.l.b16 %v105
  %v627 = vunpack.c.l.b16 %v106
  %v628 = vunpack.c.l.b16 %v107
  %v629 = vunpack.c.l.b16 %v108
  %v630 = vunpack.c.l.b16 %v109
  %v631 = vunpack.c.l.b16 %v110
  %v632 = vunpack.c.l.b16 %v111
  %v633 = vunpack.c.l.b16 %v112
  %v634 = vunpack.c.l.b16 %v113
  %v635 = vunpack.c.l.b16 %v114
  %v636 = vunpack.c.l.b16 %v115
  %v637 = vunpack.c.l.b16 %v116
  %v638 = vunpack.c.l.b16 %v117
  %v639 = vunpack.c.l.b16 %v118
  %v640 = vunpack.c.l.b16 %v119
  %v641 = vunpack.c.l.b16 %v120
  %v642 = vunpack.c.l.b16 %v121
  %v643 = vunpack.c.l.b16 %v122
  %v644 = vunpack.c.l.b16 %v123
  %v645 = vunpack.c.l.b16 %v124
  %v646 = vunpack.c.l.b16 %v125
  %v647 = vunpack.c.l.b16 %v126
  %v648 = vunpack.c.l.b16 %v127
  %v649 = vunpack.c.l.b16 %v128
  %v650 = vunpack.c.l.b16 %v129
  %v651 = vunpack.c.l.b16 %v130
  %v652 = vunpack.c.l.b16 %v131
  %v653 = vunpack.c.l.b16 %v132
  %v654 = vunpack.c.l.b16 %v133
  %v655 = vunpack.c.l.b16 %v134
  %v656 = vunpack.c.l.b16 %v135
  %v657 = vunpack.c.l.b16 %v136
  %v658 = vunpack.c.l.b16 %v137
  %v659 = vunpack.c.l.b16 %v138
  %v660 = vunpack.c.l.b16 %v139
  %v661 = vunpack.c.l.b16 %v140
  %v662 = vunpack.c.l.b16 %v141
  %v663 = vunpack.c.l.b16 %v142
  %v664 = vunpack.c.l.b16 %v143
  %v665 = vunpack.c.l.b16 %v144
  %v666 = vunpack.c.l.b16 %v145
  %v667 = vunpack.c.l.b16 %v146
  %v668 = vunpack.c.l.b16 %v147
  %v669 = vunpack.c.l.b16 %v148
  %v670 = vunpack.c.l.b16 %v149
  %v671 = vunpack.c.l.b16 %v150
  %v672 = vunpack.c.l.b16 %v151
  %v673 = vunpack.c.l.b16 %v152
  %v674 = vunpack.c.l.b16 %v153
  %v675 = vunpack.c.l.b16 %v154
  %v676 = vunpack.c.l.b16 %v155
  %v677 = vunpack.c.l.b16 %v156
  %v678 = vunpack.c.l.b16 %v157
  %v679 = vunpack.c.l.b16 %v158
  %v680 = vunpack.c.l.b16 %v159
  %v681 = vunpack.c.l.b16 %v160
  %v682 = vunpack.c.l.b16 %v161
  %v683 = vunpack.c.l.b16 %v162
  %v684 = vunpack.c.l.b16 %v163
  %v685 = vunpack.c.l.b16 %v164
  %v686 = vunpack.c.l.b16 %v165
  %v687 = vunpack.c.l.b16 %v166
  %v688 = vunpack.c.l.b16 %v167
  %v689 = vunpack.c.l.b16 %v168
  %v690 = vunpack.c.l.b16 %v169
  %v691 = vunpack.c.l.b16 %v170
  %v692 = vunpack.c.l.b16 %v171
  %v693 = vunpack.c.l.b16 %v172
  %v694 = vunpack.c.l.b16 %v173
  %v695 = vunpack.c.l.b16 %v174
  %v696 = vunpack.c.l.b16 %v175
  %v697 = vunpack.c.l.b16 %v176
  %v698 = vunpack.c.l.b16 %v177
  %v699 = vunpack.c.l.b16 %v178
  %v700 = vunpack.c.l.b16 %v179
  %v701 = vunpack.c.l.b16 %v180
  %v702 = vunpack.c.l.b16 %v181
  %v703 = vunpack.c.l.b16 %v182
  %v704 = vunpack.c.l.b16 %v183
  %v705 = vunpack.c.l.b16 %v184
  %v706 = vunpack.c.l.b16 %v185
  %v707 = vunpack.c.l.b16 %v186
  %v708 = vunpack.c.l.b16 %v187
  %v709 = vunpack.c.l.b16 %v188
  %v710 = vunpack.c.l.b16 %v189
  %v711 = vunpack.c.l.b16 %v190
  %v712 = vunpack.c.l.b16 %v191
  %v713 = vunpack.c.l.b16 %v192
  %v714 = vunpack.c.l.b16 %v193
  %v715 = vunpack.c.l.b16 %v194
  %v716 = vunpack.c.l.b16 %v195
  %v717 = vunpack.c.l.b16 %v196
  %v718 = vunpack.c.l.b16 %v197
  %v719 = vunpack.c.l.b16 %v198
  %v720 = vunpack.c.l.b16 %v199
  %v721 = vunpack.c.l.b16 %v200
  %v722 = vunpack.c.l.b16 %v201
  %v723 = vunpack.c.l.b16 %v202
  %v724 = vunpack.c.l.b16 %v203
  %v725 = vunpack.c.l.b16 %v204
  %v726 = vunpack.c.l.b16 %v205
  %v727 = vunpack.c.l.b16 %v206
  %v728 = vunpack.c.l.b16 %v207
  %v729 = vunpack.c.l.b16 %v208
  %v730 = vunpack.c.l.b16 %v209
  %v731 = vunpack.c.l.b16 %v210
  %v732 = vunpack.c.l.b16 %v211
  %v733 = vunpack.c.l.b16 %v212
  %v734 = vunpack.c.l.b16 %v213
  %v735 = vunpack.c.l.b16 %v214
  %v736 = vunpack.c.l.b16 %v215
  %v737 = vunpack.c.l.b16 %v216
  %v738 = vunpack.c.l.b16 %v217
  %v739 = vunpack.c.l.b16 %v218
  %v740 = vunpack.c.l.b16 %v219
  %v741 = vunpack.c.l.b16 %v220
  %v742 = vunpack.c.l.b16 %v221
  %v743 = vunpack.c.l.b16 %v222
  %v744 = vunpack.c.l.b16 %v223
  %v745 = vunpack.c.l.b16 %v224
  %v746 = vunpack.c.l.b16 %v225
  %v747 = vunpack.c.l.b16 %v226
  %v748 = vunpack.c.l.b16 %v227
  %v749 = vunpack.c.l.b16 %v228
  %v750 = vunpack.c.l.b16 %v229
  %v751 = vunpack.c.l.b16 %v230
  %v752 = vunpack.c.l.b16 %v231
  %v753 = vunpack.c.l.b16 %v232
  %v754 = vunpack.c.l.b16 %v233
  %v755 = vunpack.c.l.b16 %v234
  %v756 = vunpack.c.l.b16 %v235
  %v757 = vunpack.c.l.b16 %v236
  %v758 = vunpack.c.l.b16 %v237
  %v759 = vunpack.c.l.b16 %v238
  %v760 = vunpack.c.l.b16 %v239
  %v761 = vunpack.c.l.b16 %v240
  %v762 = vunpack.c.l.b16 %v241
  %v763 = vunpack.c.l.b16 %v242
  %v764 = vunpack.c.l.b16 %v243
  %v765 = vunpack.c.l.b16 %v244
  %v766 = vunpack.c.l.b16 %v245
  %v767 = vunpack.c.l.b16 %v246
  %v768 = vunpack.c.l.b16 %v247
  %v769 = vunpack.c.l.b16 %v248
  %v770 = vunpack.c.l.b16 %v249
  %v771 = vunpack.c.l.b16 %v250
  %v772 = vunpack.c.l.b16 %v251
  %v773 = vunpack.c.l.b16 %v252
  %v774 = vunpack.c.l.b16 %v253
  %v775 = vunpack.c.l.b16 %v254
  %v776 = vunpack.c.l.b16 %v255
  %v777 = vunpack.c.l.b16 %v256
  %v778 = vunpack.c.l.b16 %v257
  %v779 = vunpack.c.l.b16 %v258
  %v780 = vunpack.c.l.b16 %v259
  %v781 = vunpack.c.l.b16 %v260
  %v782 = vunpack.c.l.b16 %v261
  %v783 = vunpack.c.l.b16 %v262
  %v784 = vunpack.c.l.b16 %v263
  %v785 = vunpack.c.l.b16 %v264
  %v786 = vunpack.c.l.b16 %v265
  %v787 = vunpack.c.l.b16 %v266
  %v788 = vunpack.c.l.b16 %v267
  %v789 = vunpack.c.l.b16 %v268
  %v790 = vunpack.c.l.b16 %v269
  %v791 = vunpack.c.l.b16 %v270
  %v792 = vpack.c.b16 %v537, %v536
  %v793 = vpack.c.b16 %v539, %v538
  %v794 = vpack.c.b16 %v541, %v540
  %v795 = vpack.c.b16 %v543, %v542
  %v796 = vpack.c.b16 %v545, %v544
  %v797 = vpack.c.b16 %v547, %v546
  %v798 = vpack.c.b16 %v549, %v548
  %v799 = vpack.c.b16 %v551, %v550
  %v800 = vpack.c.b16 %v553, %v552
  %v801 = vpack.c.b16 %v555, %v554
  %v802 = vpack.c.b16 %v557, %v556
  %v803 = vpack.c.b16 %v559, %v558
  %v804 = vpack.c.b16 %v561, %v560
  %v805 = vpack.c.b16 %v563, %v562
  %v806 = vpack.c.b16 %v565, %v564
  %v807 = vpack.c.b16 %v567, %v566
  %v808 = vpack.c.b16 %v569, %v568
  %v809 = vpack.c.b16 %v571, %v570
  %v810 = vpack.c.b16 %v573, %v572
  %v811 = vpack.c.b16 %v575, %v574
  %v812 = vpack.c.b16 %v577, %v576
  %v813 = vpack.c.b16 %v579, %v578
  %v814 = vpack.c.b16 %v581, %v580
  %v815 = vpack.c.b16 %v583, %v582
  %v816 = vpack.c.b16 %v585, %v584
  %v817 = vpack.c.b16 %v587, %v586
  %v818 = vpack.c.b16 %v589, %v588
  %v819 = vpack.c.b16 %v591, %v590
  %v820 = vpack.c.b16 %v593, %v592
  %v821 = vpack.c.b16 %v595, %v594
  %v822 = vpack.c.b16 %v597, %v596
  %v823 = vpack.c.b16 %v599, %v598
  %v824 = vpack.c.b16 %v601, %v600
  %v825 = vpack.c.b16 %v603, %v602
  %v826 = vpack.c.b16 %v605, %v604
  %v827 = vpack.c.b16 %v607, %v606
  %v828 = vpack.c.b16 %v609, %v608
  %v829 = vpack.c.b16 %v611, %v610
  %v830 = vpack.c.b16 %v613, %v612
  %v831 = vpack.c.b16 %v615, %v614
  %v832 = vpack.c.b16 %v617, %v616
  %v833 = vpack.c.b16 %v619, %v618
  %v834 = vpack.c.b16 %v621, %v620
  %v835 = vpack.c.b16 %v623, %v622
  %v836 = vpack.c.b16 %v625, %v624
  %v837 = vpack.c.b16 %v627, %v626
  %v838 = vpack.c.b16 %v629, %v628
  %v839 = vpack.c.b16 %v631, %v630
  %v840 = vpack.c.b16 %v633, %v632
  %v841 = vpack.c.b16 %v635, %v634
  %v842 = vpack.c.b16 %v637, %v636
  %v843 = vpack.c.b16 %v639, %v638
  %v844 = vpack.c.b16 %v641, %v640
  %v845 = vpack.c.b16 %v643, %v642
  %v846 = vpack.c.b16 %v645, %v644
  %v847 = vpack.c.b16 %v647, %v646
  %v848 = vpack.c.b16 %v649, %v648
  %v849 = vpack.c.b16 %v651, %v650
  %v850 = vpack.c.b16 %v653, %v652
  %v851 = vpack.c.b16 %v655, %v654
  %v852 = vpack.c.b16 %v657, %v656
  %v853 = vpack.c.b16 %v659, %v658
  %v854 = vpack.c.b16 %v661, %v660
  %v855 = vpack.c.b16 %v663, %v662
  %v856 = vpack.c.b16 %v665, %v664
  %v857 = vpack.c.b16 %v667, %v666
  %v858 = vpack.c.b16 %v669, %v668
  %v859 = vpack.c.b16 %v671, %v670
  %v860 = vpack.c.b16 %v673, %v672
  %v861 = vpack.c.b16 %v675, %v674
  %v862 = vpack.c.b16 %v677, %v676
  %v863 = vpack.c.b16 %v679, %v678
  %v864 = vpack.c.b16 %v681, %v680
  %v865 = vpack.c.b16 %v683, %v682
  %v866 = vpack.c.b16 %v685, %v684
  %v867 = vpack.c.b16 %v687, %v686
  %v868 = vpack.c.b16 %v689, %v688
  %v869 = vpack.c.b16 %v691, %v690
  %v870 = vpack.c.b16 %v693, %v692
  %v871 = vpack.c.b16 %v695, %v694
  %v872 = vpack.c.b16 %v697, %v696
  %v873 = vpack.c.b16 %v699, %v698
  %v874 = vpack.c.b16 %v701, %v700
  %v875 = vpack.c.b16 %v703, %v702
  %v876 = vpack.c.b16 %v705, %v704
  %v877 = vpack.c.b16 %v707, %v706
  %v878 = vpack.c.b16 %v709, %v708
  %v879 = vpack.c.b16 %v711, %v710
  %v880 = vpack.c.b16 %v713, %v712
  %v881 = vpack.c.b16 %v715, %v714
  %v882 = vpack.c.b16 %v717, %v716
  %v883 = vpack.c.b16 %v719, %v718
  %v884 = vpack.c.b16 %v721, %v720
  %v885 = vpack.c.b16 %v723, %v722
  %v886 = vpack.c.b16 %v725, %v724
  %v887 = vpack.c.b16 %v727, %v726
  %v888 = vpack.c.b16 %v729, %v728
  %v889 = vpack.c.b16 %v731, %v730
  %v890 = vpack.c.b16 %v733, %v732
  %v891 = vpack.c.b16 %v735, %v734
  %v892 = vpack.c.b16 %v737, %v736
  %v893 = vpack.c.b16 %v739, %v738
  %v894 = vpack.c.b16 %v741, %v740
  %v895 = vpack.c.b16 %v743, %v742
  %v896 = vpack.c.b16 %v745, %v744
  %v897 = vpack.c.b16 %v747, %v746
  %v898 = vpack.c.b16 %v749, %v748
  %v899 = vpack.c.b16 %v751, %v750
  %v900 = vpack.c.b16 %v753, %v752
  %v901 = vpack.c.b16 %v755, %v754
  %v902 = vpack.c.b16 %v757, %v756
  %v903 = vpack.c.b16 %v759, %v758
  %v904 = vpack.c.b16 %v761, %v760
  %v905 = vpack.c.b16 %v763, %v762
  %v906 = vpack.c.b16 %v765, %v764
  %v907 = vpack.c.b16 %v767, %v766
  %v908 = vpack.c.b16 %v769, %v768
  %v909 = vpack.c.b16 %v771, %v770
  %v910 = vpack.c.b16 %v773, %v772
  %v911 = vpack.c.b16 %v775, %v774
  %v912 = vpack.c.b16 %v777, %v776
  %v913 = vpack.c.b16 %v779, %v778
  %v914 = vpack.c.b16 %v781, %v780
  %v915 = vpack.c.b16 %v783, %v782
  %v916 = vpack.c.b16 %v785, %v784
  %v917 = vpack.c.b16 %v787, %v786
  %v918 = vpack.c.b16 %v789, %v788
  %v919 = vpack.c.b16 %v791, %v790
  %v922 = vunpack.c.l.b16 %v271
  %v923 = vunpack.c.l.b16 %v272
  %v924 = vpack.c.b16 %v923, %v922
  %vm926 = vcmask 130048
  %v928 = vsel %vm926, %v792, 0
  %v931 = vsel %vm926, %v793, 0
  %v934 = vsel %vm926, %v794, 0
  %v937 = vsel %vm926, %v795, 0
  %v940 = vsel %vm926, %v796, 0
  %v943 = vsel %vm926, %v797, 0
  %v946 = vsel %vm926, %v798, 0
  %v949 = vsel %vm926, %v799, 0
  %v952 = vsel %vm926, %v800, 0
  %v955 = vsel %vm926, %v801, 0
  %v958 = vsel %vm926, %v802, 0
  %v961 = vsel %vm926, %v803, 0
  %v964 = vsel %vm926, %v804, 0
  %v967 = vsel %vm926, %v805, 0
  %v970 = vsel %vm926, %v806, 0
  %v973 = vsel %vm926, %v807, 0
  %v976 = vsel %vm926, %v808, 0
  %v979 = vsel %vm926, %v809, 0
  %v982 = vsel %vm926, %v810, 0
  %v985 = vsel %vm926, %v811, 0
  %v988 = vsel %vm926, %v812, 0
  %v991 = vsel %vm926, %v813, 0
  %v994 = vsel %vm926, %v814, 0
  %v997 = vsel %vm926, %v815, 0
  %v1000 = vsel %vm926, %v816, 0
  %v1003 = vsel %vm926, %v817, 0
  %v1006 = vsel %vm926, %v818, 0
  %v1009 = vsel %vm926, %v819, 0
  %v1012 = vsel %vm926, %v820, 0
  %v1015 = vsel %vm926, %v821, 0
  %v1018 = vsel %vm926, %v822, 0
  %v1021 = vsel %vm926, %v823, 0
  %v1024 = vsel %vm926, %v824, 0
  %v1027 = vsel %vm926, %v825, 0
  %v1030 = vsel %vm926, %v826, 0
  %v1033 = vsel %vm926, %v827, 0
  %v1036 = vsel %vm926, %v828, 0
  %v1039 = vsel %vm926, %v829, 0
  %v1042 = vsel %vm926, %v830, 0
  %v1045 = vsel %vm926, %v831, 0
  %v1048 = vsel %vm926, %v832, 0
  %v1051 = vsel %vm926, %v833, 0
  %v1054 = vsel %vm926, %v834, 0
  %v1057 = vsel %vm926, %v835, 0
  %v1060 = vsel %vm926, %v836, 0
  %v1063 = vsel %vm926, %v837, 0
  %v1066 = vsel %vm926, %v838, 0
  %v1069 = vsel %vm926, %v839, 0
  %v1072 = vsel %vm926, %v840, 0
  %v1075 = vsel %vm926, %v841, 0
  %v1078 = vsel %vm926, %v842, 0
  %v1081 = vsel %vm926, %v843, 0
  %v1084 = vsel %vm926, %v844, 0
  %v1087 = vsel %vm926, %v845, 0
  %v1090 = vsel %vm926, %v846, 0
  %v1093 = vsel %vm926, %v847, 0
  %v1096 = vsel %vm926, %v848, 0
  %v1099 = vsel %vm926, %v849, 0
  %v1102 = vsel %vm926, %v850, 0
  %v1105 = vsel %vm926, %v851, 0
  %v1108 = vsel %vm926, %v852, 0
  %v1111 = vsel %vm926, %v853, 0
  %v1114 = vsel %vm926, %v854, 0
  %v1117 = vsel %vm926, %v855, 0
  %v1120 = vsel %vm926, %v856, 0
  %v1123 = vsel %vm926, %v857, 0
  %v1126 = vsel %vm926, %v858, 0
  %v1129 = vsel %vm926, %v859, 0
  %v1132 = vsel %vm926, %v860, 0
  %v1135 = vsel %vm926, %v861, 0
  %v1138 = vsel %vm926, %v862, 0
  %v1141 = vsel %vm926, %v863, 0
  %v1144 = vsel %vm926, %v864, 0
  %v1147 = vsel %vm926, %v865, 0
  %v1150 = vsel %vm926, %v866, 0
  %v1153 = vsel %vm926, %v867, 0
  %v1156 = vsel %vm926, %v868, 0
  %v1159 = vsel %vm926, %v869, 0
  %v1162 = vsel %vm926, %v870, 0
  %v1165 = vsel %vm926, %v871, 0
  %v1168 = vsel %vm926, %v872, 0
  %v1171 = vsel %vm926, %v873, 0
  %v1174 = vsel %vm926, %v874, 0
  %v1177 = vsel %vm926, %v875, 0
  %v1180 = vsel %vm926, %v876, 0
  %v1183 = vsel %vm926, %v877, 0
  %v1186 = vsel %vm926, %v878, 0
  %v1189 = vsel %vm926, %v879, 0
  %v1192 = vsel %vm926, %v880, 0
  %v1195 = vsel %vm926, %v881, 0
  %v1198 = vsel %vm926, %v882, 0
  %v1201 = vsel %vm926, %v883, 0
  %v1204 = vsel %vm926, %v884, 0
  %v1207 = vsel %vm926, %v885, 0
  %v1210 = vsel %vm926, %v886, 0
  %v1213 = vsel %vm926, %v887, 0
  %v1216 = vsel %vm926, %v888, 0
  %v1219 = vsel %vm926, %v889, 0
  %v1222 = vsel %vm926, %v890, 0
  %v1225 = vsel %vm926, %v891, 0
  %v1228 = vsel %vm926, %v892, 0
  %v1231 = vsel %vm926, %v893, 0
  %v1234 = vsel %vm926, %v894, 0
  %v1237 = vsel %vm926, %v895, 0
  %v1240 = vsel %vm926, %v896, 0
  %v1243 = vsel %vm926, %v897, 0
  %v1246 = vsel %vm926, %v898, 0
  %v1249 = vsel %vm926, %v899, 0
  %v1252 = vsel %vm926, %v900, 0
  %v1255 = vsel %vm926, %v901, 0
  %v1258 = vsel %vm926, %v902, 0
  %v1261 = vsel %vm926, %v903, 0
  %v1264 = vsel %vm926, %v904, 0
  %v1267 = vsel %vm926, %v905, 0
  %v1270 = vsel %vm926, %v906, 0
  %v1273 = vsel %vm926, %v907, 0
  %v1276 = vsel %vm926, %v908, 0
  %v1279 = vsel %vm926, %v909, 0
  %v1282 = vsel %vm926, %v910, 0
  %v1285 = vsel %vm926, %v911, 0
  %v1288 = vsel %vm926, %v912, 0
  %v1291 = vsel %vm926, %v913, 0
  %v1294 = vsel %vm926, %v914, 0
  %v1297 = vsel %vm926, %v915, 0
  %v1300 = vsel %vm926, %v916, 0
  %v1303 = vsel %vm926, %v917, 0
  %v1306 = vsel %vm926, %v918, 0
  %v1309 = vsel %vm926, %v919, 0
  %1311 = vmatprep.subr.bf16.mxu0 0
  %1312 = vmatpush1.bf16.msra.mxu0 0
  %1313 = vmatprep.subr.bf16.mxu0 0
  %1314 = vmatpush1.bf16.msra.mxu0 0
  %1315 = vmatprep.subr.bf16.mxu0 0
  %1316 = vmatpush1.bf16.msra.mxu0 0
  %1317 = vmatprep.subr.bf16.mxu0 0
  %1318 = vmatpush1.bf16.msra.mxu0 0
  %1319 = vmatprep.subr.bf16.mxu0 0
  %1320 = vmatpush1.bf16.msra.mxu0 0
  %1321 = vmatprep.subr.bf16.mxu0 0
  %1322 = vmatpush1.bf16.msra.mxu0 0
  %1323 = vmatprep.subr.bf16.mxu0 0
  %1324 = vmatpush1.bf16.msra.mxu0 0
  %1325 = vmatprep.subr.bf16.mxu0 0
  %1326 = vmatpush1.bf16.msra.mxu0 %v924
  %1327 = vmatprep.subr.bf16.mxu0 0
  %1328 = vmatpush2.bf16.msra.mxu0 0
  %1329 = vmatprep.subr.bf16.mxu0 0
  %1330 = vmatpush2.bf16.msra.mxu0 0
  %1331 = vmatprep.subr.bf16.mxu0 0
  %1332 = vmatpush2.bf16.msra.mxu0 0
  %1333 = vmatprep.subr.bf16.mxu0 0
  %1334 = vmatpush2.bf16.msra.mxu0 0
  %1335 = vmatprep.subr.bf16.mxu0 0
  %1336 = vmatpush2.bf16.msra.mxu0 0
  %1337 = vmatprep.subr.bf16.mxu0 0
  %1338 = vmatpush2.bf16.msra.mxu0 0
  %1339 = vmatprep.subr.bf16.mxu0 0
  %1340 = vmatpush2.bf16.msra.mxu0 0
  %1341 = vmatprep.subr.bf16.mxu0 0
  %1342 = vmatpush2.bf16.msra.mxu0 0
  %1343 = vmatprep.mubr.bf16.mxu0 0
  %1344 = vmatmul.mubr.bf16.gmra.mxu0 %v928
  %v1345 = vpop.f32.mrf.mxu0
  %v1346 = vadd.f32 %v278, %v1345
  %v1347 = vpop.f32.mrf.mxu0
  %v1348 = vpop.f32.mrf.mxu0
  %v1349 = vadd.f32 %v278, %v1348
  %v1350 = vpop.f32.mrf.mxu0
  %1351 = vmatprep.mubr.bf16.mxu0 0
  %1352 = vmatmul.mubr.bf16.gmra.mxu0 %v931
  %v1353 = vpop.f32.mrf.mxu0
  %v1354 = vadd.f32 %v278, %v1353
  %v1355 = vpop.f32.mrf.mxu0
  %v1356 = vpop.f32.mrf.mxu0
  %v1357 = vadd.f32 %v278, %v1356
  %v1358 = vpop.f32.mrf.mxu0
  %1359 = vmatprep.mubr.bf16.mxu0 0
  %1360 = vmatmul.mubr.bf16.gmra.mxu0 %v934
  %v1361 = vpop.f32.mrf.mxu0
  %v1362 = vadd.f32 %v278, %v1361
  %v1363 = vpop.f32.mrf.mxu0
  %v1364 = vpop.f32.mrf.mxu0
  %v1365 = vadd.f32 %v278, %v1364
  %v1366 = vpop.f32.mrf.mxu0
  %1367 = vmatprep.mubr.bf16.mxu0 0
  %1368 = vmatmul.mubr.bf16.gmra.mxu0 %v937
  %v1369 = vpop.f32.mrf.mxu0
  %v1370 = vadd.f32 %v278, %v1369
  %v1371 = vpop.f32.mrf.mxu0
  %v1372 = vpop.f32.mrf.mxu0
  %v1373 = vadd.f32 %v278, %v1372
  %v1374 = vpop.f32.mrf.mxu0
  %1375 = vmatprep.mubr.bf16.mxu0 0
  %1376 = vmatmul.mubr.bf16.gmra.mxu0 %v940
  %v1377 = vpop.f32.mrf.mxu0
  %v1378 = vadd.f32 %v278, %v1377
  %v1379 = vpop.f32.mrf.mxu0
  %v1380 = vpop.f32.mrf.mxu0
  %v1381 = vadd.f32 %v278, %v1380
  %v1382 = vpop.f32.mrf.mxu0
  %1383 = vmatprep.mubr.bf16.mxu0 0
  %1384 = vmatmul.mubr.bf16.gmra.mxu0 %v943
  %v1385 = vpop.f32.mrf.mxu0
  %v1386 = vadd.f32 %v278, %v1385
  %v1387 = vpop.f32.mrf.mxu0
  %v1388 = vpop.f32.mrf.mxu0
  %v1389 = vadd.f32 %v278, %v1388
  %v1390 = vpop.f32.mrf.mxu0
  %1391 = vmatprep.mubr.bf16.mxu0 0
  %1392 = vmatmul.mubr.bf16.gmra.mxu0 %v946
  %v1393 = vpop.f32.mrf.mxu0
  %v1394 = vadd.f32 %v278, %v1393
  %v1395 = vpop.f32.mrf.mxu0
  %v1396 = vpop.f32.mrf.mxu0
  %v1397 = vadd.f32 %v278, %v1396
  %v1398 = vpop.f32.mrf.mxu0
  %1399 = vmatprep.mubr.bf16.mxu0 0
  %1400 = vmatmul.mubr.bf16.gmra.mxu0 %v949
  %v1401 = vpop.f32.mrf.mxu0
  %v1402 = vadd.f32 %v278, %v1401
  %v1403 = vpop.f32.mrf.mxu0
  %v1404 = vpop.f32.mrf.mxu0
  %v1405 = vadd.f32 %v278, %v1404
  %v1406 = vpop.f32.mrf.mxu0
  %1407 = vmatprep.mubr.bf16.mxu0 0
  %1408 = vmatmul.mubr.bf16.gmra.mxu0 %v952
  %v1409 = vpop.f32.mrf.mxu0
  %v1410 = vadd.f32 %v278, %v1409
  %v1411 = vpop.f32.mrf.mxu0
  %v1412 = vpop.f32.mrf.mxu0
  %v1413 = vadd.f32 %v278, %v1412
  %v1414 = vpop.f32.mrf.mxu0
  %1415 = vmatprep.mubr.bf16.mxu0 0
  %1416 = vmatmul.mubr.bf16.gmra.mxu0 %v955
  %v1417 = vpop.f32.mrf.mxu0
  %v1418 = vadd.f32 %v278, %v1417
  %v1419 = vpop.f32.mrf.mxu0
  %v1420 = vpop.f32.mrf.mxu0
  %v1421 = vadd.f32 %v278, %v1420
  %v1422 = vpop.f32.mrf.mxu0
  %1423 = vmatprep.mubr.bf16.mxu0 0
  %1424 = vmatmul.mubr.bf16.gmra.mxu0 %v958
  %v1425 = vpop.f32.mrf.mxu0
  %v1426 = vadd.f32 %v278, %v1425
  %v1427 = vpop.f32.mrf.mxu0
  %v1428 = vpop.f32.mrf.mxu0
  %v1429 = vadd.f32 %v278, %v1428
  %v1430 = vpop.f32.mrf.mxu0
  %1431 = vmatprep.mubr.bf16.mxu0 0
  %1432 = vmatmul.mubr.bf16.gmra.mxu0 %v961
  %v1433 = vpop.f32.mrf.mxu0
  %v1434 = vadd.f32 %v278, %v1433
  %v1435 = vpop.f32.mrf.mxu0
  %v1436 = vpop.f32.mrf.mxu0
  %v1437 = vadd.f32 %v278, %v1436
  %v1438 = vpop.f32.mrf.mxu0
  %1439 = vmatprep.mubr.bf16.mxu0 0
  %1440 = vmatmul.mubr.bf16.gmra.mxu0 %v964
  %v1441 = vpop.f32.mrf.mxu0
  %v1442 = vadd.f32 %v278, %v1441
  %v1443 = vpop.f32.mrf.mxu0
  %v1444 = vpop.f32.mrf.mxu0
  %v1445 = vadd.f32 %v278, %v1444
  %v1446 = vpop.f32.mrf.mxu0
  %1447 = vmatprep.mubr.bf16.mxu0 0
  %1448 = vmatmul.mubr.bf16.gmra.mxu0 %v967
  %v1449 = vpop.f32.mrf.mxu0
  %v1450 = vadd.f32 %v278, %v1449
  %v1451 = vpop.f32.mrf.mxu0
  %v1452 = vpop.f32.mrf.mxu0
  %v1453 = vadd.f32 %v278, %v1452
  %v1454 = vpop.f32.mrf.mxu0
  %1455 = vmatprep.mubr.bf16.mxu0 0
  %1456 = vmatmul.mubr.bf16.gmra.mxu0 %v970
  %v1457 = vpop.f32.mrf.mxu0
  %v1458 = vadd.f32 %v278, %v1457
  %v1459 = vpop.f32.mrf.mxu0
  %v1460 = vpop.f32.mrf.mxu0
  %v1461 = vadd.f32 %v278, %v1460
  %v1462 = vpop.f32.mrf.mxu0
  %1463 = vmatprep.mubr.bf16.mxu0 0
  %1464 = vmatmul.mubr.bf16.gmra.mxu0 %v973
  %v1465 = vpop.f32.mrf.mxu0
  %v1466 = vadd.f32 %v278, %v1465
  %v1467 = vpop.f32.mrf.mxu0
  %v1468 = vpop.f32.mrf.mxu0
  %v1469 = vadd.f32 %v278, %v1468
  %v1470 = vpop.f32.mrf.mxu0
  %1471 = vmatprep.mubr.bf16.mxu0 0
  %1472 = vmatmul.mubr.bf16.gmra.mxu0 %v976
  %v1473 = vpop.f32.mrf.mxu0
  %v1474 = vadd.f32 %v278, %v1473
  %v1475 = vpop.f32.mrf.mxu0
  %v1476 = vpop.f32.mrf.mxu0
  %v1477 = vadd.f32 %v278, %v1476
  %v1478 = vpop.f32.mrf.mxu0
  %1479 = vmatprep.mubr.bf16.mxu0 0
  %1480 = vmatmul.mubr.bf16.gmra.mxu0 %v979
  %v1481 = vpop.f32.mrf.mxu0
  %v1482 = vadd.f32 %v278, %v1481
  %v1483 = vpop.f32.mrf.mxu0
  %v1484 = vpop.f32.mrf.mxu0
  %v1485 = vadd.f32 %v278, %v1484
  %v1486 = vpop.f32.mrf.mxu0
  %1487 = vmatprep.mubr.bf16.mxu0 0
  %1488 = vmatmul.mubr.bf16.gmra.mxu0 %v982
  %v1489 = vpop.f32.mrf.mxu0
  %v1490 = vadd.f32 %v278, %v1489
  %v1491 = vpop.f32.mrf.mxu0
  %v1492 = vpop.f32.mrf.mxu0
  %v1493 = vadd.f32 %v278, %v1492
  %v1494 = vpop.f32.mrf.mxu0
  %1495 = vmatprep.mubr.bf16.mxu0 0
  %1496 = vmatmul.mubr.bf16.gmra.mxu0 %v985
  %v1497 = vpop.f32.mrf.mxu0
  %v1498 = vadd.f32 %v278, %v1497
  %v1499 = vpop.f32.mrf.mxu0
  %v1500 = vpop.f32.mrf.mxu0
  %v1501 = vadd.f32 %v278, %v1500
  %v1502 = vpop.f32.mrf.mxu0
  %1503 = vmatprep.mubr.bf16.mxu0 0
  %1504 = vmatmul.mubr.bf16.gmra.mxu0 %v988
  %v1505 = vpop.f32.mrf.mxu0
  %v1506 = vadd.f32 %v278, %v1505
  %v1507 = vpop.f32.mrf.mxu0
  %v1508 = vpop.f32.mrf.mxu0
  %v1509 = vadd.f32 %v278, %v1508
  %v1510 = vpop.f32.mrf.mxu0
  %1511 = vmatprep.mubr.bf16.mxu0 0
  %1512 = vmatmul.mubr.bf16.gmra.mxu0 %v991
  %v1513 = vpop.f32.mrf.mxu0
  %v1514 = vadd.f32 %v278, %v1513
  %v1515 = vpop.f32.mrf.mxu0
  %v1516 = vpop.f32.mrf.mxu0
  %v1517 = vadd.f32 %v278, %v1516
  %v1518 = vpop.f32.mrf.mxu0
  %1519 = vmatprep.mubr.bf16.mxu0 0
  %1520 = vmatmul.mubr.bf16.gmra.mxu0 %v994
  %v1521 = vpop.f32.mrf.mxu0
  %v1522 = vadd.f32 %v278, %v1521
  %v1523 = vpop.f32.mrf.mxu0
  %v1524 = vpop.f32.mrf.mxu0
  %v1525 = vadd.f32 %v278, %v1524
  %v1526 = vpop.f32.mrf.mxu0
  %1527 = vmatprep.mubr.bf16.mxu0 0
  %1528 = vmatmul.mubr.bf16.gmra.mxu0 %v997
  %v1529 = vpop.f32.mrf.mxu0
  %v1530 = vadd.f32 %v278, %v1529
  %v1531 = vpop.f32.mrf.mxu0
  %v1532 = vpop.f32.mrf.mxu0
  %v1533 = vadd.f32 %v278, %v1532
  %v1534 = vpop.f32.mrf.mxu0
  %1535 = vmatprep.mubr.bf16.mxu0 0
  %1536 = vmatmul.mubr.bf16.gmra.mxu0 %v1000
  %v1537 = vpop.f32.mrf.mxu0
  %v1538 = vadd.f32 %v278, %v1537
  %v1539 = vpop.f32.mrf.mxu0
  %v1540 = vpop.f32.mrf.mxu0
  %v1541 = vadd.f32 %v278, %v1540
  %v1542 = vpop.f32.mrf.mxu0
  %1543 = vmatprep.mubr.bf16.mxu0 0
  %1544 = vmatmul.mubr.bf16.gmra.mxu0 %v1003
  %v1545 = vpop.f32.mrf.mxu0
  %v1546 = vadd.f32 %v278, %v1545
  %v1547 = vpop.f32.mrf.mxu0
  %v1548 = vpop.f32.mrf.mxu0
  %v1549 = vadd.f32 %v278, %v1548
  %v1550 = vpop.f32.mrf.mxu0
  %1551 = vmatprep.mubr.bf16.mxu0 0
  %1552 = vmatmul.mubr.bf16.gmra.mxu0 %v1006
  %v1553 = vpop.f32.mrf.mxu0
  %v1554 = vadd.f32 %v278, %v1553
  %v1555 = vpop.f32.mrf.mxu0
  %v1556 = vpop.f32.mrf.mxu0
  %v1557 = vadd.f32 %v278, %v1556
  %v1558 = vpop.f32.mrf.mxu0
  %1559 = vmatprep.mubr.bf16.mxu0 0
  %1560 = vmatmul.mubr.bf16.gmra.mxu0 %v1009
  %v1561 = vpop.f32.mrf.mxu0
  %v1562 = vadd.f32 %v278, %v1561
  %v1563 = vpop.f32.mrf.mxu0
  %v1564 = vpop.f32.mrf.mxu0
  %v1565 = vadd.f32 %v278, %v1564
  %v1566 = vpop.f32.mrf.mxu0
  %1567 = vmatprep.mubr.bf16.mxu0 0
  %1568 = vmatmul.mubr.bf16.gmra.mxu0 %v1012
  %v1569 = vpop.f32.mrf.mxu0
  %v1570 = vadd.f32 %v278, %v1569
  %v1571 = vpop.f32.mrf.mxu0
  %v1572 = vpop.f32.mrf.mxu0
  %v1573 = vadd.f32 %v278, %v1572
  %v1574 = vpop.f32.mrf.mxu0
  %1575 = vmatprep.mubr.bf16.mxu0 0
  %1576 = vmatmul.mubr.bf16.gmra.mxu0 %v1015
  %v1577 = vpop.f32.mrf.mxu0
  %v1578 = vadd.f32 %v278, %v1577
  %v1579 = vpop.f32.mrf.mxu0
  %v1580 = vpop.f32.mrf.mxu0
  %v1581 = vadd.f32 %v278, %v1580
  %v1582 = vpop.f32.mrf.mxu0
  %1583 = vmatprep.mubr.bf16.mxu0 0
  %1584 = vmatmul.mubr.bf16.gmra.mxu0 %v1018
  %v1585 = vpop.f32.mrf.mxu0
  %v1586 = vadd.f32 %v278, %v1585
  %v1587 = vpop.f32.mrf.mxu0
  %v1588 = vpop.f32.mrf.mxu0
  %v1589 = vadd.f32 %v278, %v1588
  %v1590 = vpop.f32.mrf.mxu0
  %1591 = vmatprep.mubr.bf16.mxu0 0
  %1592 = vmatmul.mubr.bf16.gmra.mxu0 %v1021
  %v1593 = vpop.f32.mrf.mxu0
  %v1594 = vadd.f32 %v278, %v1593
  %v1595 = vpop.f32.mrf.mxu0
  %v1596 = vpop.f32.mrf.mxu0
  %v1597 = vadd.f32 %v278, %v1596
  %v1598 = vpop.f32.mrf.mxu0
  %1599 = vmatprep.mubr.bf16.mxu0 0
  %1600 = vmatmul.mubr.bf16.gmra.mxu0 %v1024
  %v1601 = vpop.f32.mrf.mxu0
  %v1602 = vadd.f32 %v278, %v1601
  %v1603 = vpop.f32.mrf.mxu0
  %v1604 = vpop.f32.mrf.mxu0
  %v1605 = vadd.f32 %v278, %v1604
  %v1606 = vpop.f32.mrf.mxu0
  %1607 = vmatprep.mubr.bf16.mxu0 0
  %1608 = vmatmul.mubr.bf16.gmra.mxu0 %v1027
  %v1609 = vpop.f32.mrf.mxu0
  %v1610 = vadd.f32 %v278, %v1609
  %v1611 = vpop.f32.mrf.mxu0
  %v1612 = vpop.f32.mrf.mxu0
  %v1613 = vadd.f32 %v278, %v1612
  %v1614 = vpop.f32.mrf.mxu0
  %1615 = vmatprep.mubr.bf16.mxu0 0
  %1616 = vmatmul.mubr.bf16.gmra.mxu0 %v1030
  %v1617 = vpop.f32.mrf.mxu0
  %v1618 = vadd.f32 %v278, %v1617
  %v1619 = vpop.f32.mrf.mxu0
  %v1620 = vpop.f32.mrf.mxu0
  %v1621 = vadd.f32 %v278, %v1620
  %v1622 = vpop.f32.mrf.mxu0
  %1623 = vmatprep.mubr.bf16.mxu0 0
  %1624 = vmatmul.mubr.bf16.gmra.mxu0 %v1033
  %v1625 = vpop.f32.mrf.mxu0
  %v1626 = vadd.f32 %v278, %v1625
  %v1627 = vpop.f32.mrf.mxu0
  %v1628 = vpop.f32.mrf.mxu0
  %v1629 = vadd.f32 %v278, %v1628
  %v1630 = vpop.f32.mrf.mxu0
  %1631 = vmatprep.mubr.bf16.mxu0 0
  %1632 = vmatmul.mubr.bf16.gmra.mxu0 %v1036
  %v1633 = vpop.f32.mrf.mxu0
  %v1634 = vadd.f32 %v278, %v1633
  %v1635 = vpop.f32.mrf.mxu0
  %v1636 = vpop.f32.mrf.mxu0
  %v1637 = vadd.f32 %v278, %v1636
  %v1638 = vpop.f32.mrf.mxu0
  %1639 = vmatprep.mubr.bf16.mxu0 0
  %1640 = vmatmul.mubr.bf16.gmra.mxu0 %v1039
  %v1641 = vpop.f32.mrf.mxu0
  %v1642 = vadd.f32 %v278, %v1641
  %v1643 = vpop.f32.mrf.mxu0
  %v1644 = vpop.f32.mrf.mxu0
  %v1645 = vadd.f32 %v278, %v1644
  %v1646 = vpop.f32.mrf.mxu0
  %1647 = vmatprep.mubr.bf16.mxu0 0
  %1648 = vmatmul.mubr.bf16.gmra.mxu0 %v1042
  %v1649 = vpop.f32.mrf.mxu0
  %v1650 = vadd.f32 %v278, %v1649
  %v1651 = vpop.f32.mrf.mxu0
  %v1652 = vpop.f32.mrf.mxu0
  %v1653 = vadd.f32 %v278, %v1652
  %v1654 = vpop.f32.mrf.mxu0
  %1655 = vmatprep.mubr.bf16.mxu0 0
  %1656 = vmatmul.mubr.bf16.gmra.mxu0 %v1045
  %v1657 = vpop.f32.mrf.mxu0
  %v1658 = vadd.f32 %v278, %v1657
  %v1659 = vpop.f32.mrf.mxu0
  %v1660 = vpop.f32.mrf.mxu0
  %v1661 = vadd.f32 %v278, %v1660
  %v1662 = vpop.f32.mrf.mxu0
  %1663 = vmatprep.mubr.bf16.mxu0 0
  %1664 = vmatmul.mubr.bf16.gmra.mxu0 %v1048
  %v1665 = vpop.f32.mrf.mxu0
  %v1666 = vadd.f32 %v278, %v1665
  %v1667 = vpop.f32.mrf.mxu0
  %v1668 = vpop.f32.mrf.mxu0
  %v1669 = vadd.f32 %v278, %v1668
  %v1670 = vpop.f32.mrf.mxu0
  %1671 = vmatprep.mubr.bf16.mxu0 0
  %1672 = vmatmul.mubr.bf16.gmra.mxu0 %v1051
  %v1673 = vpop.f32.mrf.mxu0
  %v1674 = vadd.f32 %v278, %v1673
  %v1675 = vpop.f32.mrf.mxu0
  %v1676 = vpop.f32.mrf.mxu0
  %v1677 = vadd.f32 %v278, %v1676
  %v1678 = vpop.f32.mrf.mxu0
  %1679 = vmatprep.mubr.bf16.mxu0 0
  %1680 = vmatmul.mubr.bf16.gmra.mxu0 %v1054
  %v1681 = vpop.f32.mrf.mxu0
  %v1682 = vadd.f32 %v278, %v1681
  %v1683 = vpop.f32.mrf.mxu0
  %v1684 = vpop.f32.mrf.mxu0
  %v1685 = vadd.f32 %v278, %v1684
  %v1686 = vpop.f32.mrf.mxu0
  %1687 = vmatprep.mubr.bf16.mxu0 0
  %1688 = vmatmul.mubr.bf16.gmra.mxu0 %v1057
  %v1689 = vpop.f32.mrf.mxu0
  %v1690 = vadd.f32 %v278, %v1689
  %v1691 = vpop.f32.mrf.mxu0
  %v1692 = vpop.f32.mrf.mxu0
  %v1693 = vadd.f32 %v278, %v1692
  %v1694 = vpop.f32.mrf.mxu0
  %1695 = vmatprep.mubr.bf16.mxu0 0
  %1696 = vmatmul.mubr.bf16.gmra.mxu0 %v1060
  %v1697 = vpop.f32.mrf.mxu0
  %v1698 = vadd.f32 %v278, %v1697
  %v1699 = vpop.f32.mrf.mxu0
  %v1700 = vpop.f32.mrf.mxu0
  %v1701 = vadd.f32 %v278, %v1700
  %v1702 = vpop.f32.mrf.mxu0
  %1703 = vmatprep.mubr.bf16.mxu0 0
  %1704 = vmatmul.mubr.bf16.gmra.mxu0 %v1063
  %v1705 = vpop.f32.mrf.mxu0
  %v1706 = vadd.f32 %v278, %v1705
  %v1707 = vpop.f32.mrf.mxu0
  %v1708 = vpop.f32.mrf.mxu0
  %v1709 = vadd.f32 %v278, %v1708
  %v1710 = vpop.f32.mrf.mxu0
  %1711 = vmatprep.mubr.bf16.mxu0 0
  %1712 = vmatmul.mubr.bf16.gmra.mxu0 %v1066
  %v1713 = vpop.f32.mrf.mxu0
  %v1714 = vadd.f32 %v278, %v1713
  %v1715 = vpop.f32.mrf.mxu0
  %v1716 = vpop.f32.mrf.mxu0
  %v1717 = vadd.f32 %v278, %v1716
  %v1718 = vpop.f32.mrf.mxu0
  %1719 = vmatprep.mubr.bf16.mxu0 0
  %1720 = vmatmul.mubr.bf16.gmra.mxu0 %v1069
  %v1721 = vpop.f32.mrf.mxu0
  %v1722 = vadd.f32 %v278, %v1721
  %v1723 = vpop.f32.mrf.mxu0
  %v1724 = vpop.f32.mrf.mxu0
  %v1725 = vadd.f32 %v278, %v1724
  %v1726 = vpop.f32.mrf.mxu0
  %1727 = vmatprep.mubr.bf16.mxu0 0
  %1728 = vmatmul.mubr.bf16.gmra.mxu0 %v1072
  %v1729 = vpop.f32.mrf.mxu0
  %v1730 = vadd.f32 %v278, %v1729
  %v1731 = vpop.f32.mrf.mxu0
  %v1732 = vpop.f32.mrf.mxu0
  %v1733 = vadd.f32 %v278, %v1732
  %v1734 = vpop.f32.mrf.mxu0
  %1735 = vmatprep.mubr.bf16.mxu0 0
  %1736 = vmatmul.mubr.bf16.gmra.mxu0 %v1075
  %v1737 = vpop.f32.mrf.mxu0
  %v1738 = vadd.f32 %v278, %v1737
  %v1739 = vpop.f32.mrf.mxu0
  %v1740 = vpop.f32.mrf.mxu0
  %v1741 = vadd.f32 %v278, %v1740
  %v1742 = vpop.f32.mrf.mxu0
  %1743 = vmatprep.mubr.bf16.mxu0 0
  %1744 = vmatmul.mubr.bf16.gmra.mxu0 %v1078
  %v1745 = vpop.f32.mrf.mxu0
  %v1746 = vadd.f32 %v278, %v1745
  %v1747 = vpop.f32.mrf.mxu0
  %v1748 = vpop.f32.mrf.mxu0
  %v1749 = vadd.f32 %v278, %v1748
  %v1750 = vpop.f32.mrf.mxu0
  %1751 = vmatprep.mubr.bf16.mxu0 0
  %1752 = vmatmul.mubr.bf16.gmra.mxu0 %v1081
  %v1753 = vpop.f32.mrf.mxu0
  %v1754 = vadd.f32 %v278, %v1753
  %v1755 = vpop.f32.mrf.mxu0
  %v1756 = vpop.f32.mrf.mxu0
  %v1757 = vadd.f32 %v278, %v1756
  %v1758 = vpop.f32.mrf.mxu0
  %1759 = vmatprep.mubr.bf16.mxu0 0
  %1760 = vmatmul.mubr.bf16.gmra.mxu0 %v1084
  %v1761 = vpop.f32.mrf.mxu0
  %v1762 = vadd.f32 %v278, %v1761
  %v1763 = vpop.f32.mrf.mxu0
  %v1764 = vpop.f32.mrf.mxu0
  %v1765 = vadd.f32 %v278, %v1764
  %v1766 = vpop.f32.mrf.mxu0
  %1767 = vmatprep.mubr.bf16.mxu0 0
  %1768 = vmatmul.mubr.bf16.gmra.mxu0 %v1087
  %v1769 = vpop.f32.mrf.mxu0
  %v1770 = vadd.f32 %v278, %v1769
  %v1771 = vpop.f32.mrf.mxu0
  %v1772 = vpop.f32.mrf.mxu0
  %v1773 = vadd.f32 %v278, %v1772
  %v1774 = vpop.f32.mrf.mxu0
  %1775 = vmatprep.mubr.bf16.mxu0 0
  %1776 = vmatmul.mubr.bf16.gmra.mxu0 %v1090
  %v1777 = vpop.f32.mrf.mxu0
  %v1778 = vadd.f32 %v278, %v1777
  %v1779 = vpop.f32.mrf.mxu0
  %v1780 = vpop.f32.mrf.mxu0
  %v1781 = vadd.f32 %v278, %v1780
  %v1782 = vpop.f32.mrf.mxu0
  %1783 = vmatprep.mubr.bf16.mxu0 0
  %1784 = vmatmul.mubr.bf16.gmra.mxu0 %v1093
  %v1785 = vpop.f32.mrf.mxu0
  %v1786 = vadd.f32 %v278, %v1785
  %v1787 = vpop.f32.mrf.mxu0
  %v1788 = vpop.f32.mrf.mxu0
  %v1789 = vadd.f32 %v278, %v1788
  %v1790 = vpop.f32.mrf.mxu0
  %1791 = vmatprep.mubr.bf16.mxu0 0
  %1792 = vmatmul.mubr.bf16.gmra.mxu0 %v1096
  %v1793 = vpop.f32.mrf.mxu0
  %v1794 = vadd.f32 %v278, %v1793
  %v1795 = vpop.f32.mrf.mxu0
  %v1796 = vpop.f32.mrf.mxu0
  %v1797 = vadd.f32 %v278, %v1796
  %v1798 = vpop.f32.mrf.mxu0
  %1799 = vmatprep.mubr.bf16.mxu0 0
  %1800 = vmatmul.mubr.bf16.gmra.mxu0 %v1099
  %v1801 = vpop.f32.mrf.mxu0
  %v1802 = vadd.f32 %v278, %v1801
  %v1803 = vpop.f32.mrf.mxu0
  %v1804 = vpop.f32.mrf.mxu0
  %v1805 = vadd.f32 %v278, %v1804
  %v1806 = vpop.f32.mrf.mxu0
  %1807 = vmatprep.mubr.bf16.mxu0 0
  %1808 = vmatmul.mubr.bf16.gmra.mxu0 %v1102
  %v1809 = vpop.f32.mrf.mxu0
  %v1810 = vadd.f32 %v278, %v1809
  %v1811 = vpop.f32.mrf.mxu0
  %v1812 = vpop.f32.mrf.mxu0
  %v1813 = vadd.f32 %v278, %v1812
  %v1814 = vpop.f32.mrf.mxu0
  %1815 = vmatprep.mubr.bf16.mxu0 0
  %1816 = vmatmul.mubr.bf16.gmra.mxu0 %v1105
  %v1817 = vpop.f32.mrf.mxu0
  %v1818 = vadd.f32 %v278, %v1817
  %v1819 = vpop.f32.mrf.mxu0
  %v1820 = vpop.f32.mrf.mxu0
  %v1821 = vadd.f32 %v278, %v1820
  %v1822 = vpop.f32.mrf.mxu0
  %1823 = vmatprep.mubr.bf16.mxu0 0
  %1824 = vmatmul.mubr.bf16.gmra.mxu0 %v1108
  %v1825 = vpop.f32.mrf.mxu0
  %v1826 = vadd.f32 %v278, %v1825
  %v1827 = vpop.f32.mrf.mxu0
  %v1828 = vpop.f32.mrf.mxu0
  %v1829 = vadd.f32 %v278, %v1828
  %v1830 = vpop.f32.mrf.mxu0
  %1831 = vmatprep.mubr.bf16.mxu0 0
  %1832 = vmatmul.mubr.bf16.gmra.mxu0 %v1111
  %v1833 = vpop.f32.mrf.mxu0
  %v1834 = vadd.f32 %v278, %v1833
  %v1835 = vpop.f32.mrf.mxu0
  %v1836 = vpop.f32.mrf.mxu0
  %v1837 = vadd.f32 %v278, %v1836
  %v1838 = vpop.f32.mrf.mxu0
  %1839 = vmatprep.mubr.bf16.mxu0 0
  %1840 = vmatmul.mubr.bf16.gmra.mxu0 %v1114
  %v1841 = vpop.f32.mrf.mxu0
  %v1842 = vadd.f32 %v278, %v1841
  %v1843 = vpop.f32.mrf.mxu0
  %v1844 = vpop.f32.mrf.mxu0
  %v1845 = vadd.f32 %v278, %v1844
  %v1846 = vpop.f32.mrf.mxu0
  %1847 = vmatprep.mubr.bf16.mxu0 0
  %1848 = vmatmul.mubr.bf16.gmra.mxu0 %v1117
  %v1849 = vpop.f32.mrf.mxu0
  %v1850 = vadd.f32 %v278, %v1849
  %v1851 = vpop.f32.mrf.mxu0
  %v1852 = vpop.f32.mrf.mxu0
  %v1853 = vadd.f32 %v278, %v1852
  %v1854 = vpop.f32.mrf.mxu0
  %1855 = vmatprep.mubr.bf16.mxu0 0
  %1856 = vmatmul.mubr.bf16.gmra.mxu0 %v1120
  %v1857 = vpop.f32.mrf.mxu0
  %v1858 = vadd.f32 %v278, %v1857
  %v1859 = vpop.f32.mrf.mxu0
  %v1860 = vpop.f32.mrf.mxu0
  %v1861 = vadd.f32 %v278, %v1860
  %v1862 = vpop.f32.mrf.mxu0
  %1863 = vmatprep.mubr.bf16.mxu0 0
  %1864 = vmatmul.mubr.bf16.gmra.mxu0 %v1123
  %v1865 = vpop.f32.mrf.mxu0
  %v1866 = vadd.f32 %v278, %v1865
  %v1867 = vpop.f32.mrf.mxu0
  %v1868 = vpop.f32.mrf.mxu0
  %v1869 = vadd.f32 %v278, %v1868
  %v1870 = vpop.f32.mrf.mxu0
  %1871 = vmatprep.mubr.bf16.mxu0 0
  %1872 = vmatmul.mubr.bf16.gmra.mxu0 %v1126
  %v1873 = vpop.f32.mrf.mxu0
  %v1874 = vadd.f32 %v278, %v1873
  %v1875 = vpop.f32.mrf.mxu0
  %v1876 = vpop.f32.mrf.mxu0
  %v1877 = vadd.f32 %v278, %v1876
  %v1878 = vpop.f32.mrf.mxu0
  %1879 = vmatprep.mubr.bf16.mxu0 0
  %1880 = vmatmul.mubr.bf16.gmra.mxu0 %v1129
  %v1881 = vpop.f32.mrf.mxu0
  %v1882 = vadd.f32 %v278, %v1881
  %v1883 = vpop.f32.mrf.mxu0
  %v1884 = vpop.f32.mrf.mxu0
  %v1885 = vadd.f32 %v278, %v1884
  %v1886 = vpop.f32.mrf.mxu0
  %1887 = vmatprep.mubr.bf16.mxu0 0
  %1888 = vmatmul.mubr.bf16.gmra.mxu0 %v1132
  %v1889 = vpop.f32.mrf.mxu0
  %v1890 = vadd.f32 %v278, %v1889
  %v1891 = vpop.f32.mrf.mxu0
  %v1892 = vpop.f32.mrf.mxu0
  %v1893 = vadd.f32 %v278, %v1892
  %v1894 = vpop.f32.mrf.mxu0
  %1895 = vmatprep.mubr.bf16.mxu0 0
  %1896 = vmatmul.mubr.bf16.gmra.mxu0 %v1135
  %v1897 = vpop.f32.mrf.mxu0
  %v1898 = vadd.f32 %v278, %v1897
  %v1899 = vpop.f32.mrf.mxu0
  %v1900 = vpop.f32.mrf.mxu0
  %v1901 = vadd.f32 %v278, %v1900
  %v1902 = vpop.f32.mrf.mxu0
  %1903 = vmatprep.mubr.bf16.mxu0 0
  %1904 = vmatmul.mubr.bf16.gmra.mxu0 %v1138
  %v1905 = vpop.f32.mrf.mxu0
  %v1906 = vadd.f32 %v278, %v1905
  %v1907 = vpop.f32.mrf.mxu0
  %v1908 = vpop.f32.mrf.mxu0
  %v1909 = vadd.f32 %v278, %v1908
  %v1910 = vpop.f32.mrf.mxu0
  %1911 = vmatprep.mubr.bf16.mxu0 0
  %1912 = vmatmul.mubr.bf16.gmra.mxu0 %v1141
  %v1913 = vpop.f32.mrf.mxu0
  %v1914 = vadd.f32 %v278, %v1913
  %v1915 = vpop.f32.mrf.mxu0
  %v1916 = vpop.f32.mrf.mxu0
  %v1917 = vadd.f32 %v278, %v1916
  %v1918 = vpop.f32.mrf.mxu0
  %1919 = vmatprep.mubr.bf16.mxu0 0
  %1920 = vmatmul.mubr.bf16.gmra.mxu0 %v1144
  %v1921 = vpop.f32.mrf.mxu0
  %v1922 = vadd.f32 %v278, %v1921
  %v1923 = vpop.f32.mrf.mxu0
  %v1924 = vpop.f32.mrf.mxu0
  %v1925 = vadd.f32 %v278, %v1924
  %v1926 = vpop.f32.mrf.mxu0
  %1927 = vmatprep.mubr.bf16.mxu0 0
  %1928 = vmatmul.mubr.bf16.gmra.mxu0 %v1147
  %v1929 = vpop.f32.mrf.mxu0
  %v1930 = vadd.f32 %v278, %v1929
  %v1931 = vpop.f32.mrf.mxu0
  %v1932 = vpop.f32.mrf.mxu0
  %v1933 = vadd.f32 %v278, %v1932
  %v1934 = vpop.f32.mrf.mxu0
  %1935 = vmatprep.mubr.bf16.mxu0 0
  %1936 = vmatmul.mubr.bf16.gmra.mxu0 %v1150
  %v1937 = vpop.f32.mrf.mxu0
  %v1938 = vadd.f32 %v278, %v1937
  %v1939 = vpop.f32.mrf.mxu0
  %v1940 = vpop.f32.mrf.mxu0
  %v1941 = vadd.f32 %v278, %v1940
  %v1942 = vpop.f32.mrf.mxu0
  %1943 = vmatprep.mubr.bf16.mxu0 0
  %1944 = vmatmul.mubr.bf16.gmra.mxu0 %v1153
  %v1945 = vpop.f32.mrf.mxu0
  %v1946 = vadd.f32 %v278, %v1945
  %v1947 = vpop.f32.mrf.mxu0
  %v1948 = vpop.f32.mrf.mxu0
  %v1949 = vadd.f32 %v278, %v1948
  %v1950 = vpop.f32.mrf.mxu0
  %1951 = vmatprep.mubr.bf16.mxu0 0
  %1952 = vmatmul.mubr.bf16.gmra.mxu0 %v1156
  %v1953 = vpop.f32.mrf.mxu0
  %v1954 = vadd.f32 %v278, %v1953
  %v1955 = vpop.f32.mrf.mxu0
  %v1956 = vpop.f32.mrf.mxu0
  %v1957 = vadd.f32 %v278, %v1956
  %v1958 = vpop.f32.mrf.mxu0
  %1959 = vmatprep.mubr.bf16.mxu0 0
  %1960 = vmatmul.mubr.bf16.gmra.mxu0 %v1159
  %v1961 = vpop.f32.mrf.mxu0
  %v1962 = vadd.f32 %v278, %v1961
  %v1963 = vpop.f32.mrf.mxu0
  %v1964 = vpop.f32.mrf.mxu0
  %v1965 = vadd.f32 %v278, %v1964
  %v1966 = vpop.f32.mrf.mxu0
  %1967 = vmatprep.mubr.bf16.mxu0 0
  %1968 = vmatmul.mubr.bf16.gmra.mxu0 %v1162
  %v1969 = vpop.f32.mrf.mxu0
  %v1970 = vadd.f32 %v278, %v1969
  %v1971 = vpop.f32.mrf.mxu0
  %v1972 = vpop.f32.mrf.mxu0
  %v1973 = vadd.f32 %v278, %v1972
  %v1974 = vpop.f32.mrf.mxu0
  %1975 = vmatprep.mubr.bf16.mxu0 0
  %1976 = vmatmul.mubr.bf16.gmra.mxu0 %v1165
  %v1977 = vpop.f32.mrf.mxu0
  %v1978 = vadd.f32 %v278, %v1977
  %v1979 = vpop.f32.mrf.mxu0
  %v1980 = vpop.f32.mrf.mxu0
  %v1981 = vadd.f32 %v278, %v1980
  %v1982 = vpop.f32.mrf.mxu0
  %1983 = vmatprep.mubr.bf16.mxu0 0
  %1984 = vmatmul.mubr.bf16.gmra.mxu0 %v1168
  %v1985 = vpop.f32.mrf.mxu0
  %v1986 = vadd.f32 %v278, %v1985
  %v1987 = vpop.f32.mrf.mxu0
  %v1988 = vpop.f32.mrf.mxu0
  %v1989 = vadd.f32 %v278, %v1988
  %v1990 = vpop.f32.mrf.mxu0
  %1991 = vmatprep.mubr.bf16.mxu0 0
  %1992 = vmatmul.mubr.bf16.gmra.mxu0 %v1171
  %v1993 = vpop.f32.mrf.mxu0
  %v1994 = vadd.f32 %v278, %v1993
  %v1995 = vpop.f32.mrf.mxu0
  %v1996 = vpop.f32.mrf.mxu0
  %v1997 = vadd.f32 %v278, %v1996
  %v1998 = vpop.f32.mrf.mxu0
  %1999 = vmatprep.mubr.bf16.mxu0 0
  %2000 = vmatmul.mubr.bf16.gmra.mxu0 %v1174
  %v2001 = vpop.f32.mrf.mxu0
  %v2002 = vadd.f32 %v278, %v2001
  %v2003 = vpop.f32.mrf.mxu0
  %v2004 = vpop.f32.mrf.mxu0
  %v2005 = vadd.f32 %v278, %v2004
  %v2006 = vpop.f32.mrf.mxu0
  %2007 = vmatprep.mubr.bf16.mxu0 0
  %2008 = vmatmul.mubr.bf16.gmra.mxu0 %v1177
  %v2009 = vpop.f32.mrf.mxu0
  %v2010 = vadd.f32 %v278, %v2009
  %v2011 = vpop.f32.mrf.mxu0
  %v2012 = vpop.f32.mrf.mxu0
  %v2013 = vadd.f32 %v278, %v2012
  %v2014 = vpop.f32.mrf.mxu0
  %2015 = vmatprep.mubr.bf16.mxu0 0
  %2016 = vmatmul.mubr.bf16.gmra.mxu0 %v1180
  %v2017 = vpop.f32.mrf.mxu0
  %v2018 = vadd.f32 %v278, %v2017
  %v2019 = vpop.f32.mrf.mxu0
  %v2020 = vpop.f32.mrf.mxu0
  %v2021 = vadd.f32 %v278, %v2020
  %v2022 = vpop.f32.mrf.mxu0
  %2023 = vmatprep.mubr.bf16.mxu0 0
  %2024 = vmatmul.mubr.bf16.gmra.mxu0 %v1183
  %v2025 = vpop.f32.mrf.mxu0
  %v2026 = vadd.f32 %v278, %v2025
  %v2027 = vpop.f32.mrf.mxu0
  %v2028 = vpop.f32.mrf.mxu0
  %v2029 = vadd.f32 %v278, %v2028
  %v2030 = vpop.f32.mrf.mxu0
  %2031 = vmatprep.mubr.bf16.mxu0 0
  %2032 = vmatmul.mubr.bf16.gmra.mxu0 %v1186
  %v2033 = vpop.f32.mrf.mxu0
  %v2034 = vadd.f32 %v278, %v2033
  %v2035 = vpop.f32.mrf.mxu0
  %v2036 = vpop.f32.mrf.mxu0
  %v2037 = vadd.f32 %v278, %v2036
  %v2038 = vpop.f32.mrf.mxu0
  %2039 = vmatprep.mubr.bf16.mxu0 0
  %2040 = vmatmul.mubr.bf16.gmra.mxu0 %v1189
  %v2041 = vpop.f32.mrf.mxu0
  %v2042 = vadd.f32 %v278, %v2041
  %v2043 = vpop.f32.mrf.mxu0
  %v2044 = vpop.f32.mrf.mxu0
  %v2045 = vadd.f32 %v278, %v2044
  %v2046 = vpop.f32.mrf.mxu0
  %2047 = vmatprep.mubr.bf16.mxu0 0
  %2048 = vmatmul.mubr.bf16.gmra.mxu0 %v1192
  %v2049 = vpop.f32.mrf.mxu0
  %v2050 = vadd.f32 %v278, %v2049
  %v2051 = vpop.f32.mrf.mxu0
  %v2052 = vpop.f32.mrf.mxu0
  %v2053 = vadd.f32 %v278, %v2052
  %v2054 = vpop.f32.mrf.mxu0
  %2055 = vmatprep.mubr.bf16.mxu0 0
  %2056 = vmatmul.mubr.bf16.gmra.mxu0 %v1195
  %v2057 = vpop.f32.mrf.mxu0
  %v2058 = vadd.f32 %v278, %v2057
  %v2059 = vpop.f32.mrf.mxu0
  %v2060 = vpop.f32.mrf.mxu0
  %v2061 = vadd.f32 %v278, %v2060
  %v2062 = vpop.f32.mrf.mxu0
  %2063 = vmatprep.mubr.bf16.mxu0 0
  %2064 = vmatmul.mubr.bf16.gmra.mxu0 %v1198
  %v2065 = vpop.f32.mrf.mxu0
  %v2066 = vadd.f32 %v278, %v2065
  %v2067 = vpop.f32.mrf.mxu0
  %v2068 = vpop.f32.mrf.mxu0
  %v2069 = vadd.f32 %v278, %v2068
  %v2070 = vpop.f32.mrf.mxu0
  %2071 = vmatprep.mubr.bf16.mxu0 0
  %2072 = vmatmul.mubr.bf16.gmra.mxu0 %v1201
  %v2073 = vpop.f32.mrf.mxu0
  %v2074 = vadd.f32 %v278, %v2073
  %v2075 = vpop.f32.mrf.mxu0
  %v2076 = vpop.f32.mrf.mxu0
  %v2077 = vadd.f32 %v278, %v2076
  %v2078 = vpop.f32.mrf.mxu0
  %2079 = vmatprep.mubr.bf16.mxu0 0
  %2080 = vmatmul.mubr.bf16.gmra.mxu0 %v1204
  %v2081 = vpop.f32.mrf.mxu0
  %v2082 = vadd.f32 %v278, %v2081
  %v2083 = vpop.f32.mrf.mxu0
  %v2084 = vpop.f32.mrf.mxu0
  %v2085 = vadd.f32 %v278, %v2084
  %v2086 = vpop.f32.mrf.mxu0
  %2087 = vmatprep.mubr.bf16.mxu0 0
  %2088 = vmatmul.mubr.bf16.gmra.mxu0 %v1207
  %v2089 = vpop.f32.mrf.mxu0
  %v2090 = vadd.f32 %v278, %v2089
  %v2091 = vpop.f32.mrf.mxu0
  %v2092 = vpop.f32.mrf.mxu0
  %v2093 = vadd.f32 %v278, %v2092
  %v2094 = vpop.f32.mrf.mxu0
  %2095 = vmatprep.mubr.bf16.mxu0 0
  %2096 = vmatmul.mubr.bf16.gmra.mxu0 %v1210
  %v2097 = vpop.f32.mrf.mxu0
  %v2098 = vadd.f32 %v278, %v2097
  %v2099 = vpop.f32.mrf.mxu0
  %v2100 = vpop.f32.mrf.mxu0
  %v2101 = vadd.f32 %v278, %v2100
  %v2102 = vpop.f32.mrf.mxu0
  %2103 = vmatprep.mubr.bf16.mxu0 0
  %2104 = vmatmul.mubr.bf16.gmra.mxu0 %v1213
  %v2105 = vpop.f32.mrf.mxu0
  %v2106 = vadd.f32 %v278, %v2105
  %v2107 = vpop.f32.mrf.mxu0
  %v2108 = vpop.f32.mrf.mxu0
  %v2109 = vadd.f32 %v278, %v2108
  %v2110 = vpop.f32.mrf.mxu0
  %2111 = vmatprep.mubr.bf16.mxu0 0
  %2112 = vmatmul.mubr.bf16.gmra.mxu0 %v1216
  %v2113 = vpop.f32.mrf.mxu0
  %v2114 = vadd.f32 %v278, %v2113
  %v2115 = vpop.f32.mrf.mxu0
  %v2116 = vpop.f32.mrf.mxu0
  %v2117 = vadd.f32 %v278, %v2116
  %v2118 = vpop.f32.mrf.mxu0
  %2119 = vmatprep.mubr.bf16.mxu0 0
  %2120 = vmatmul.mubr.bf16.gmra.mxu0 %v1219
  %v2121 = vpop.f32.mrf.mxu0
  %v2122 = vadd.f32 %v278, %v2121
  %v2123 = vpop.f32.mrf.mxu0
  %v2124 = vpop.f32.mrf.mxu0
  %v2125 = vadd.f32 %v278, %v2124
  %v2126 = vpop.f32.mrf.mxu0
  %2127 = vmatprep.mubr.bf16.mxu0 0
  %2128 = vmatmul.mubr.bf16.gmra.mxu0 %v1222
  %v2129 = vpop.f32.mrf.mxu0
  %v2130 = vadd.f32 %v278, %v2129
  %v2131 = vpop.f32.mrf.mxu0
  %v2132 = vpop.f32.mrf.mxu0
  %v2133 = vadd.f32 %v278, %v2132
  %v2134 = vpop.f32.mrf.mxu0
  %2135 = vmatprep.mubr.bf16.mxu0 0
  %2136 = vmatmul.mubr.bf16.gmra.mxu0 %v1225
  %v2137 = vpop.f32.mrf.mxu0
  %v2138 = vadd.f32 %v278, %v2137
  %v2139 = vpop.f32.mrf.mxu0
  %v2140 = vpop.f32.mrf.mxu0
  %v2141 = vadd.f32 %v278, %v2140
  %v2142 = vpop.f32.mrf.mxu0
  %2143 = vmatprep.mubr.bf16.mxu0 0
  %2144 = vmatmul.mubr.bf16.gmra.mxu0 %v1228
  %v2145 = vpop.f32.mrf.mxu0
  %v2146 = vadd.f32 %v278, %v2145
  %v2147 = vpop.f32.mrf.mxu0
  %v2148 = vpop.f32.mrf.mxu0
  %v2149 = vadd.f32 %v278, %v2148
  %v2150 = vpop.f32.mrf.mxu0
  %2151 = vmatprep.mubr.bf16.mxu0 0
  %2152 = vmatmul.mubr.bf16.gmra.mxu0 %v1231
  %v2153 = vpop.f32.mrf.mxu0
  %v2154 = vadd.f32 %v278, %v2153
  %v2155 = vpop.f32.mrf.mxu0
  %v2156 = vpop.f32.mrf.mxu0
  %v2157 = vadd.f32 %v278, %v2156
  %v2158 = vpop.f32.mrf.mxu0
  %2159 = vmatprep.mubr.bf16.mxu0 0
  %2160 = vmatmul.mubr.bf16.gmra.mxu0 %v1234
  %v2161 = vpop.f32.mrf.mxu0
  %v2162 = vadd.f32 %v278, %v2161
  %v2163 = vpop.f32.mrf.mxu0
  %v2164 = vpop.f32.mrf.mxu0
  %v2165 = vadd.f32 %v278, %v2164
  %v2166 = vpop.f32.mrf.mxu0
  %2167 = vmatprep.mubr.bf16.mxu0 0
  %2168 = vmatmul.mubr.bf16.gmra.mxu0 %v1237
  %v2169 = vpop.f32.mrf.mxu0
  %v2170 = vadd.f32 %v278, %v2169
  %v2171 = vpop.f32.mrf.mxu0
  %v2172 = vpop.f32.mrf.mxu0
  %v2173 = vadd.f32 %v278, %v2172
  %v2174 = vpop.f32.mrf.mxu0
  %2175 = vmatprep.mubr.bf16.mxu0 0
  %2176 = vmatmul.mubr.bf16.gmra.mxu0 %v1240
  %v2177 = vpop.f32.mrf.mxu0
  %v2178 = vadd.f32 %v278, %v2177
  %v2179 = vpop.f32.mrf.mxu0
  %v2180 = vpop.f32.mrf.mxu0
  %v2181 = vadd.f32 %v278, %v2180
  %v2182 = vpop.f32.mrf.mxu0
  %2183 = vmatprep.mubr.bf16.mxu0 0
  %2184 = vmatmul.mubr.bf16.gmra.mxu0 %v1243
  %v2185 = vpop.f32.mrf.mxu0
  %v2186 = vadd.f32 %v278, %v2185
  %v2187 = vpop.f32.mrf.mxu0
  %v2188 = vpop.f32.mrf.mxu0
  %v2189 = vadd.f32 %v278, %v2188
  %v2190 = vpop.f32.mrf.mxu0
  %2191 = vmatprep.mubr.bf16.mxu0 0
  %2192 = vmatmul.mubr.bf16.gmra.mxu0 %v1246
  %v2193 = vpop.f32.mrf.mxu0
  %v2194 = vadd.f32 %v278, %v2193
  %v2195 = vpop.f32.mrf.mxu0
  %v2196 = vpop.f32.mrf.mxu0
  %v2197 = vadd.f32 %v278, %v2196
  %v2198 = vpop.f32.mrf.mxu0
  %2199 = vmatprep.mubr.bf16.mxu0 0
  %2200 = vmatmul.mubr.bf16.gmra.mxu0 %v1249
  %v2201 = vpop.f32.mrf.mxu0
  %v2202 = vadd.f32 %v278, %v2201
  %v2203 = vpop.f32.mrf.mxu0
  %v2204 = vpop.f32.mrf.mxu0
  %v2205 = vadd.f32 %v278, %v2204
  %v2206 = vpop.f32.mrf.mxu0
  %2207 = vmatprep.mubr.bf16.mxu0 0
  %2208 = vmatmul.mubr.bf16.gmra.mxu0 %v1252
  %v2209 = vpop.f32.mrf.mxu0
  %v2210 = vadd.f32 %v278, %v2209
  %v2211 = vpop.f32.mrf.mxu0
  %v2212 = vpop.f32.mrf.mxu0
  %v2213 = vadd.f32 %v278, %v2212
  %v2214 = vpop.f32.mrf.mxu0
  %2215 = vmatprep.mubr.bf16.mxu0 0
  %2216 = vmatmul.mubr.bf16.gmra.mxu0 %v1255
  %v2217 = vpop.f32.mrf.mxu0
  %v2218 = vadd.f32 %v278, %v2217
  %v2219 = vpop.f32.mrf.mxu0
  %v2220 = vpop.f32.mrf.mxu0
  %v2221 = vadd.f32 %v278, %v2220
  %v2222 = vpop.f32.mrf.mxu0
  %2223 = vmatprep.mubr.bf16.mxu0 0
  %2224 = vmatmul.mubr.bf16.gmra.mxu0 %v1258
  %v2225 = vpop.f32.mrf.mxu0
  %v2226 = vadd.f32 %v278, %v2225
  %v2227 = vpop.f32.mrf.mxu0
  %v2228 = vpop.f32.mrf.mxu0
  %v2229 = vadd.f32 %v278, %v2228
  %v2230 = vpop.f32.mrf.mxu0
  %2231 = vmatprep.mubr.bf16.mxu0 0
  %2232 = vmatmul.mubr.bf16.gmra.mxu0 %v1261
  %v2233 = vpop.f32.mrf.mxu0
  %v2234 = vadd.f32 %v278, %v2233
  %v2235 = vpop.f32.mrf.mxu0
  %v2236 = vpop.f32.mrf.mxu0
  %v2237 = vadd.f32 %v278, %v2236
  %v2238 = vpop.f32.mrf.mxu0
  %2239 = vmatprep.mubr.bf16.mxu0 0
  %2240 = vmatmul.mubr.bf16.gmra.mxu0 %v1264
  %v2241 = vpop.f32.mrf.mxu0
  %v2242 = vadd.f32 %v278, %v2241
  %v2243 = vpop.f32.mrf.mxu0
  %v2244 = vpop.f32.mrf.mxu0
  %v2245 = vadd.f32 %v278, %v2244
  %v2246 = vpop.f32.mrf.mxu0
  %2247 = vmatprep.mubr.bf16.mxu0 0
  %2248 = vmatmul.mubr.bf16.gmra.mxu0 %v1267
  %v2249 = vpop.f32.mrf.mxu0
  %v2250 = vadd.f32 %v278, %v2249
  %v2251 = vpop.f32.mrf.mxu0
  %v2252 = vpop.f32.mrf.mxu0
  %v2253 = vadd.f32 %v278, %v2252
  %v2254 = vpop.f32.mrf.mxu0
  %2255 = vmatprep.mubr.bf16.mxu0 0
  %2256 = vmatmul.mubr.bf16.gmra.mxu0 %v1270
  %v2257 = vpop.f32.mrf.mxu0
  %v2258 = vadd.f32 %v278, %v2257
  %v2259 = vpop.f32.mrf.mxu0
  %v2260 = vpop.f32.mrf.mxu0
  %v2261 = vadd.f32 %v278, %v2260
  %v2262 = vpop.f32.mrf.mxu0
  %2263 = vmatprep.mubr.bf16.mxu0 0
  %2264 = vmatmul.mubr.bf16.gmra.mxu0 %v1273
  %v2265 = vpop.f32.mrf.mxu0
  %v2266 = vadd.f32 %v278, %v2265
  %v2267 = vpop.f32.mrf.mxu0
  %v2268 = vpop.f32.mrf.mxu0
  %v2269 = vadd.f32 %v278, %v2268
  %v2270 = vpop.f32.mrf.mxu0
  %2271 = vmatprep.mubr.bf16.mxu0 0
  %2272 = vmatmul.mubr.bf16.gmra.mxu0 %v1276
  %v2273 = vpop.f32.mrf.mxu0
  %v2274 = vadd.f32 %v278, %v2273
  %v2275 = vpop.f32.mrf.mxu0
  %v2276 = vpop.f32.mrf.mxu0
  %v2277 = vadd.f32 %v278, %v2276
  %v2278 = vpop.f32.mrf.mxu0
  %2279 = vmatprep.mubr.bf16.mxu0 0
  %2280 = vmatmul.mubr.bf16.gmra.mxu0 %v1279
  %v2281 = vpop.f32.mrf.mxu0
  %v2282 = vadd.f32 %v278, %v2281
  %v2283 = vpop.f32.mrf.mxu0
  %v2284 = vpop.f32.mrf.mxu0
  %v2285 = vadd.f32 %v278, %v2284
  %v2286 = vpop.f32.mrf.mxu0
  %2287 = vmatprep.mubr.bf16.mxu0 0
  %2288 = vmatmul.mubr.bf16.gmra.mxu0 %v1282
  %v2289 = vpop.f32.mrf.mxu0
  %v2290 = vadd.f32 %v278, %v2289
  %v2291 = vpop.f32.mrf.mxu0
  %v2292 = vpop.f32.mrf.mxu0
  %v2293 = vadd.f32 %v278, %v2292
  %v2294 = vpop.f32.mrf.mxu0
  %2295 = vmatprep.mubr.bf16.mxu0 0
  %2296 = vmatmul.mubr.bf16.gmra.mxu0 %v1285
  %v2297 = vpop.f32.mrf.mxu0
  %v2298 = vadd.f32 %v278, %v2297
  %v2299 = vpop.f32.mrf.mxu0
  %v2300 = vpop.f32.mrf.mxu0
  %v2301 = vadd.f32 %v278, %v2300
  %v2302 = vpop.f32.mrf.mxu0
  %2303 = vmatprep.mubr.bf16.mxu0 0
  %2304 = vmatmul.mubr.bf16.gmra.mxu0 %v1288
  %v2305 = vpop.f32.mrf.mxu0
  %v2306 = vadd.f32 %v278, %v2305
  %v2307 = vpop.f32.mrf.mxu0
  %v2308 = vpop.f32.mrf.mxu0
  %v2309 = vadd.f32 %v278, %v2308
  %v2310 = vpop.f32.mrf.mxu0
  %2311 = vmatprep.mubr.bf16.mxu0 0
  %2312 = vmatmul.mubr.bf16.gmra.mxu0 %v1291
  %v2313 = vpop.f32.mrf.mxu0
  %v2314 = vadd.f32 %v278, %v2313
  %v2315 = vpop.f32.mrf.mxu0
  %v2316 = vpop.f32.mrf.mxu0
  %v2317 = vadd.f32 %v278, %v2316
  %v2318 = vpop.f32.mrf.mxu0
  %2319 = vmatprep.mubr.bf16.mxu0 0
  %2320 = vmatmul.mubr.bf16.gmra.mxu0 %v1294
  %v2321 = vpop.f32.mrf.mxu0
  %v2322 = vadd.f32 %v278, %v2321
  %v2323 = vpop.f32.mrf.mxu0
  %v2324 = vpop.f32.mrf.mxu0
  %v2325 = vadd.f32 %v278, %v2324
  %v2326 = vpop.f32.mrf.mxu0
  %2327 = vmatprep.mubr.bf16.mxu0 0
  %2328 = vmatmul.mubr.bf16.gmra.mxu0 %v1297
  %v2329 = vpop.f32.mrf.mxu0
  %v2330 = vadd.f32 %v278, %v2329
  %v2331 = vpop.f32.mrf.mxu0
  %v2332 = vpop.f32.mrf.mxu0
  %v2333 = vadd.f32 %v278, %v2332
  %v2334 = vpop.f32.mrf.mxu0
  %2335 = vmatprep.mubr.bf16.mxu0 0
  %2336 = vmatmul.mubr.bf16.gmra.mxu0 %v1300
  %v2337 = vpop.f32.mrf.mxu0
  %v2338 = vadd.f32 %v278, %v2337
  %v2339 = vpop.f32.mrf.mxu0
  %v2340 = vpop.f32.mrf.mxu0
  %v2341 = vadd.f32 %v278, %v2340
  %v2342 = vpop.f32.mrf.mxu0
  %2343 = vmatprep.mubr.bf16.mxu0 0
  %2344 = vmatmul.mubr.bf16.gmra.mxu0 %v1303
  %v2345 = vpop.f32.mrf.mxu0
  %v2346 = vadd.f32 %v278, %v2345
  %v2347 = vpop.f32.mrf.mxu0
  %v2348 = vpop.f32.mrf.mxu0
  %v2349 = vadd.f32 %v278, %v2348
  %v2350 = vpop.f32.mrf.mxu0
  %2351 = vmatprep.mubr.bf16.mxu0 0
  %2352 = vmatmul.mubr.bf16.gmra.mxu0 %v1306
  %v2353 = vpop.f32.mrf.mxu0
  %v2354 = vadd.f32 %v278, %v2353
  %v2355 = vpop.f32.mrf.mxu0
  %v2356 = vpop.f32.mrf.mxu0
  %v2357 = vadd.f32 %v278, %v2356
  %v2358 = vpop.f32.mrf.mxu0
  %2359 = vmatprep.mubr.bf16.mxu0 0
  %2360 = vmatmul.mubr.bf16.gmra.mxu0 %v1309
  %v2361 = vpop.f32.mrf.mxu0
  %v2362 = vadd.f32 %v278, %v2361
  %v2363 = vpop.f32.mrf.mxu0
  %v2364 = vpop.f32.mrf.mxu0
  %v2365 = vadd.f32 %v278, %v2364
  %v2366 = vpop.f32.mrf.mxu0
  %2367 = vdwg.mxu0
  %v2368 = vmax.f32 %v1346, 0.0
  %v2369 = vmax.f32 %v1349, 0.0
  %v2370 = vmax.f32 %v1354, 0.0
  %v2371 = vmax.f32 %v1357, 0.0
  %v2372 = vmax.f32 %v1362, 0.0
  %v2373 = vmax.f32 %v1365, 0.0
  %v2374 = vmax.f32 %v1370, 0.0
  %v2375 = vmax.f32 %v1373, 0.0
  %v2376 = vmax.f32 %v1378, 0.0
  %v2377 = vmax.f32 %v1381, 0.0
  %v2378 = vmax.f32 %v1386, 0.0
  %v2379 = vmax.f32 %v1389, 0.0
  %v2380 = vmax.f32 %v1394, 0.0
  %v2381 = vmax.f32 %v1397, 0.0
  %v2382 = vmax.f32 %v1402, 0.0
  %v2383 = vmax.f32 %v1405, 0.0
  %v2384 = vmax.f32 %v1410, 0.0
  %v2385 = vmax.f32 %v1413, 0.0
  %v2386 = vmax.f32 %v1418, 0.0
  %v2387 = vmax.f32 %v1421, 0.0
  %v2388 = vmax.f32 %v1426, 0.0
  %v2389 = vmax.f32 %v1429, 0.0
  %v2390 = vmax.f32 %v1434, 0.0
  %v2391 = vmax.f32 %v1437, 0.0
  %v2392 = vmax.f32 %v1442, 0.0
  %v2393 = vmax.f32 %v1445, 0.0
  %v2394 = vmax.f32 %v1450, 0.0
  %v2395 = vmax.f32 %v1453, 0.0
  %v2396 = vmax.f32 %v1458, 0.0
  %v2397 = vmax.f32 %v1461, 0.0
  %v2398 = vmax.f32 %v1466, 0.0
  %v2399 = vmax.f32 %v1469, 0.0
  %v2400 = vmax.f32 %v1474, 0.0
  %v2401 = vmax.f32 %v1477, 0.0
  %v2402 = vmax.f32 %v1482, 0.0
  %v2403 = vmax.f32 %v1485, 0.0
  %v2404 = vmax.f32 %v1490, 0.0
  %v2405 = vmax.f32 %v1493, 0.0
  %v2406 = vmax.f32 %v1498, 0.0
  %v2407 = vmax.f32 %v1501, 0.0
  %v2408 = vmax.f32 %v1506, 0.0
  %v2409 = vmax.f32 %v1509, 0.0
  %v2410 = vmax.f32 %v1514, 0.0
  %v2411 = vmax.f32 %v1517, 0.0
  %v2412 = vmax.f32 %v1522, 0.0
  %v2413 = vmax.f32 %v1525, 0.0
  %v2414 = vmax.f32 %v1530, 0.0
  %v2415 = vmax.f32 %v1533, 0.0
  %v2416 = vmax.f32 %v1538, 0.0
  %v2417 = vmax.f32 %v1541, 0.0
  %v2418 = vmax.f32 %v1546, 0.0
  %v2419 = vmax.f32 %v1549, 0.0
  %v2420 = vmax.f32 %v1554, 0.0
  %v2421 = vmax.f32 %v1557, 0.0
  %v2422 = vmax.f32 %v1562, 0.0
  %v2423 = vmax.f32 %v1565, 0.0
  %v2424 = vmax.f32 %v1570, 0.0
  %v2425 = vmax.f32 %v1573, 0.0
  %v2426 = vmax.f32 %v1578, 0.0
  %v2427 = vmax.f32 %v1581, 0.0
  %v2428 = vmax.f32 %v1586, 0.0
  %v2429 = vmax.f32 %v1589, 0.0
  %v2430 = vmax.f32 %v1594, 0.0
  %v2431 = vmax.f32 %v1597, 0.0
  %v2432 = vmax.f32 %v1602, 0.0
  %v2433 = vmax.f32 %v1605, 0.0
  %v2434 = vmax.f32 %v1610, 0.0
  %v2435 = vmax.f32 %v1613, 0.0
  %v2436 = vmax.f32 %v1618, 0.0
  %v2437 = vmax.f32 %v1621, 0.0
  %v2438 = vmax.f32 %v1626, 0.0
  %v2439 = vmax.f32 %v1629, 0.0
  %v2440 = vmax.f32 %v1634, 0.0
  %v2441 = vmax.f32 %v1637, 0.0
  %v2442 = vmax.f32 %v1642, 0.0
  %v2443 = vmax.f32 %v1645, 0.0
  %v2444 = vmax.f32 %v1650, 0.0
  %v2445 = vmax.f32 %v1653, 0.0
  %v2446 = vmax.f32 %v1658, 0.0
  %v2447 = vmax.f32 %v1661, 0.0
  %v2448 = vmax.f32 %v1666, 0.0
  %v2449 = vmax.f32 %v1669, 0.0
  %v2450 = vmax.f32 %v1674, 0.0
  %v2451 = vmax.f32 %v1677, 0.0
  %v2452 = vmax.f32 %v1682, 0.0
  %v2453 = vmax.f32 %v1685, 0.0
  %v2454 = vmax.f32 %v1690, 0.0
  %v2455 = vmax.f32 %v1693, 0.0
  %v2456 = vmax.f32 %v1698, 0.0
  %v2457 = vmax.f32 %v1701, 0.0
  %v2458 = vmax.f32 %v1706, 0.0
  %v2459 = vmax.f32 %v1709, 0.0
  %v2460 = vmax.f32 %v1714, 0.0
  %v2461 = vmax.f32 %v1717, 0.0
  %v2462 = vmax.f32 %v1722, 0.0
  %v2463 = vmax.f32 %v1725, 0.0
  %v2464 = vmax.f32 %v1730, 0.0
  %v2465 = vmax.f32 %v1733, 0.0
  %v2466 = vmax.f32 %v1738, 0.0
  %v2467 = vmax.f32 %v1741, 0.0
  %v2468 = vmax.f32 %v1746, 0.0
  %v2469 = vmax.f32 %v1749, 0.0
  %v2470 = vmax.f32 %v1754, 0.0
  %v2471 = vmax.f32 %v1757, 0.0
  %v2472 = vmax.f32 %v1762, 0.0
  %v2473 = vmax.f32 %v1765, 0.0
  %v2474 = vmax.f32 %v1770, 0.0
  %v2475 = vmax.f32 %v1773, 0.0
  %v2476 = vmax.f32 %v1778, 0.0
  %v2477 = vmax.f32 %v1781, 0.0
  %v2478 = vmax.f32 %v1786, 0.0
  %v2479 = vmax.f32 %v1789, 0.0
  %v2480 = vmax.f32 %v1794, 0.0
  %v2481 = vmax.f32 %v1797, 0.0
  %v2482 = vmax.f32 %v1802, 0.0
  %v2483 = vmax.f32 %v1805, 0.0
  %v2484 = vmax.f32 %v1810, 0.0
  %v2485 = vmax.f32 %v1813, 0.0
  %v2486 = vmax.f32 %v1818, 0.0
  %v2487 = vmax.f32 %v1821, 0.0
  %v2488 = vmax.f32 %v1826, 0.0
  %v2489 = vmax.f32 %v1829, 0.0
  %v2490 = vmax.f32 %v1834, 0.0
  %v2491 = vmax.f32 %v1837, 0.0
  %v2492 = vmax.f32 %v1842, 0.0
  %v2493 = vmax.f32 %v1845, 0.0
  %v2494 = vmax.f32 %v1850, 0.0
  %v2495 = vmax.f32 %v1853, 0.0
  %v2496 = vmax.f32 %v1858, 0.0
  %v2497 = vmax.f32 %v1861, 0.0
  %v2498 = vmax.f32 %v1866, 0.0
  %v2499 = vmax.f32 %v1869, 0.0
  %v2500 = vmax.f32 %v1874, 0.0
  %v2501 = vmax.f32 %v1877, 0.0
  %v2502 = vmax.f32 %v1882, 0.0
  %v2503 = vmax.f32 %v1885, 0.0
  %v2504 = vmax.f32 %v1890, 0.0
  %v2505 = vmax.f32 %v1893, 0.0
  %v2506 = vmax.f32 %v1898, 0.0
  %v2507 = vmax.f32 %v1901, 0.0
  %v2508 = vmax.f32 %v1906, 0.0
  %v2509 = vmax.f32 %v1909, 0.0
  %v2510 = vmax.f32 %v1914, 0.0
  %v2511 = vmax.f32 %v1917, 0.0
  %v2512 = vmax.f32 %v1922, 0.0
  %v2513 = vmax.f32 %v1925, 0.0
  %v2514 = vmax.f32 %v1930, 0.0
  %v2515 = vmax.f32 %v1933, 0.0
  %v2516 = vmax.f32 %v1938, 0.0
  %v2517 = vmax.f32 %v1941, 0.0
  %v2518 = vmax.f32 %v1946, 0.0
  %v2519 = vmax.f32 %v1949, 0.0
  %v2520 = vmax.f32 %v1954, 0.0
  %v2521 = vmax.f32 %v1957, 0.0
  %v2522 = vmax.f32 %v1962, 0.0
  %v2523 = vmax.f32 %v1965, 0.0
  %v2524 = vmax.f32 %v1970, 0.0
  %v2525 = vmax.f32 %v1973, 0.0
  %v2526 = vmax.f32 %v1978, 0.0
  %v2527 = vmax.f32 %v1981, 0.0
  %v2528 = vmax.f32 %v1986, 0.0
  %v2529 = vmax.f32 %v1989, 0.0
  %v2530 = vmax.f32 %v1994, 0.0
  %v2531 = vmax.f32 %v1997, 0.0
  %v2532 = vmax.f32 %v2002, 0.0
  %v2533 = vmax.f32 %v2005, 0.0
  %v2534 = vmax.f32 %v2010, 0.0
  %v2535 = vmax.f32 %v2013, 0.0
  %v2536 = vmax.f32 %v2018, 0.0
  %v2537 = vmax.f32 %v2021, 0.0
  %v2538 = vmax.f32 %v2026, 0.0
  %v2539 = vmax.f32 %v2029, 0.0
  %v2540 = vmax.f32 %v2034, 0.0
  %v2541 = vmax.f32 %v2037, 0.0
  %v2542 = vmax.f32 %v2042, 0.0
  %v2543 = vmax.f32 %v2045, 0.0
  %v2544 = vmax.f32 %v2050, 0.0
  %v2545 = vmax.f32 %v2053, 0.0
  %v2546 = vmax.f32 %v2058, 0.0
  %v2547 = vmax.f32 %v2061, 0.0
  %v2548 = vmax.f32 %v2066, 0.0
  %v2549 = vmax.f32 %v2069, 0.0
  %v2550 = vmax.f32 %v2074, 0.0
  %v2551 = vmax.f32 %v2077, 0.0
  %v2552 = vmax.f32 %v2082, 0.0
  %v2553 = vmax.f32 %v2085, 0.0
  %v2554 = vmax.f32 %v2090, 0.0
  %v2555 = vmax.f32 %v2093, 0.0
  %v2556 = vmax.f32 %v2098, 0.0
  %v2557 = vmax.f32 %v2101, 0.0
  %v2558 = vmax.f32 %v2106, 0.0
  %v2559 = vmax.f32 %v2109, 0.0
  %v2560 = vmax.f32 %v2114, 0.0
  %v2561 = vmax.f32 %v2117, 0.0
  %v2562 = vmax.f32 %v2122, 0.0
  %v2563 = vmax.f32 %v2125, 0.0
  %v2564 = vmax.f32 %v2130, 0.0
  %v2565 = vmax.f32 %v2133, 0.0
  %v2566 = vmax.f32 %v2138, 0.0
  %v2567 = vmax.f32 %v2141, 0.0
  %v2568 = vmax.f32 %v2146, 0.0
  %v2569 = vmax.f32 %v2149, 0.0
  %v2570 = vmax.f32 %v2154, 0.0
  %v2571 = vmax.f32 %v2157, 0.0
  %v2572 = vmax.f32 %v2162, 0.0
  %v2573 = vmax.f32 %v2165, 0.0
  %v2574 = vmax.f32 %v2170, 0.0
  %v2575 = vmax.f32 %v2173, 0.0
  %v2576 = vmax.f32 %v2178, 0.0
  %v2577 = vmax.f32 %v2181, 0.0
  %v2578 = vmax.f32 %v2186, 0.0
  %v2579 = vmax.f32 %v2189, 0.0
  %v2580 = vmax.f32 %v2194, 0.0
  %v2581 = vmax.f32 %v2197, 0.0
  %v2582 = vmax.f32 %v2202, 0.0
  %v2583 = vmax.f32 %v2205, 0.0
  %v2584 = vmax.f32 %v2210, 0.0
  %v2585 = vmax.f32 %v2213, 0.0
  %v2586 = vmax.f32 %v2218, 0.0
  %v2587 = vmax.f32 %v2221, 0.0
  %v2588 = vmax.f32 %v2226, 0.0
  %v2589 = vmax.f32 %v2229, 0.0
  %v2590 = vmax.f32 %v2234, 0.0
  %v2591 = vmax.f32 %v2237, 0.0
  %v2592 = vmax.f32 %v2242, 0.0
  %v2593 = vmax.f32 %v2245, 0.0
  %v2594 = vmax.f32 %v2250, 0.0
  %v2595 = vmax.f32 %v2253, 0.0
  %v2596 = vmax.f32 %v2258, 0.0
  %v2597 = vmax.f32 %v2261, 0.0
  %v2598 = vmax.f32 %v2266, 0.0
  %v2599 = vmax.f32 %v2269, 0.0
  %v2600 = vmax.f32 %v2274, 0.0
  %v2601 = vmax.f32 %v2277, 0.0
  %v2602 = vmax.f32 %v2282, 0.0
  %v2603 = vmax.f32 %v2285, 0.0
  %v2604 = vmax.f32 %v2290, 0.0
  %v2605 = vmax.f32 %v2293, 0.0
  %v2606 = vmax.f32 %v2298, 0.0
  %v2607 = vmax.f32 %v2301, 0.0
  %v2608 = vmax.f32 %v2306, 0.0
  %v2609 = vmax.f32 %v2309, 0.0
  %v2610 = vmax.f32 %v2314, 0.0
  %v2611 = vmax.f32 %v2317, 0.0
  %v2612 = vmax.f32 %v2322, 0.0
  %v2613 = vmax.f32 %v2325, 0.0
  %v2614 = vmax.f32 %v2330, 0.0
  %v2615 = vmax.f32 %v2333, 0.0
  %v2616 = vmax.f32 %v2338, 0.0
  %v2617 = vmax.f32 %v2341, 0.0
  %v2618 = vmax.f32 %v2346, 0.0
  %v2619 = vmax.f32 %v2349, 0.0
  %v2620 = vmax.f32 %v2354, 0.0
  %v2621 = vmax.f32 %v2357, 0.0
  %v2622 = vmax.f32 %v2362, 0.0
  %v2623 = vmax.f32 %v2365, 0.0
  %v2624 = vpack.c.bf16 %v2369, %v2368
  %v2625 = vpack.c.bf16 %v2371, %v2370
  %v2626 = vpack.c.bf16 %v2373, %v2372
  %v2627 = vpack.c.bf16 %v2375, %v2374
  %v2628 = vpack.c.bf16 %v2377, %v2376
  %v2629 = vpack.c.bf16 %v2379, %v2378
  %v2630 = vpack.c.bf16 %v2381, %v2380
  %v2631 = vpack.c.bf16 %v2383, %v2382
  %v2632 = vpack.c.bf16 %v2385, %v2384
  %v2633 = vpack.c.bf16 %v2387, %v2386
  %v2634 = vpack.c.bf16 %v2389, %v2388
  %v2635 = vpack.c.bf16 %v2391, %v2390
  %v2636 = vpack.c.bf16 %v2393, %v2392
  %v2637 = vpack.c.bf16 %v2395, %v2394
  %v2638 = vpack.c.bf16 %v2397, %v2396
  %v2639 = vpack.c.bf16 %v2399, %v2398
  %v2640 = vpack.c.bf16 %v2401, %v2400
  %v2641 = vpack.c.bf16 %v2403, %v2402
  %v2642 = vpack.c.bf16 %v2405, %v2404
  %v2643 = vpack.c.bf16 %v2407, %v2406
  %v2644 = vpack.c.bf16 %v2409, %v2408
  %v2645 = vpack.c.bf16 %v2411, %v2410
  %v2646 = vpack.c.bf16 %v2413, %v2412
  %v2647 = vpack.c.bf16 %v2415, %v2414
  %v2648 = vpack.c.bf16 %v2417, %v2416
  %v2649 = vpack.c.bf16 %v2419, %v2418
  %v2650 = vpack.c.bf16 %v2421, %v2420
  %v2651 = vpack.c.bf16 %v2423, %v2422
  %v2652 = vpack.c.bf16 %v2425, %v2424
  %v2653 = vpack.c.bf16 %v2427, %v2426
  %v2654 = vpack.c.bf16 %v2429, %v2428
  %v2655 = vpack.c.bf16 %v2431, %v2430
  %v2656 = vpack.c.bf16 %v2433, %v2432
  %v2657 = vpack.c.bf16 %v2435, %v2434
  %v2658 = vpack.c.bf16 %v2437, %v2436
  %v2659 = vpack.c.bf16 %v2439, %v2438
  %v2660 = vpack.c.bf16 %v2441, %v2440
  %v2661 = vpack.c.bf16 %v2443, %v2442
  %v2662 = vpack.c.bf16 %v2445, %v2444
  %v2663 = vpack.c.bf16 %v2447, %v2446
  %v2664 = vpack.c.bf16 %v2449, %v2448
  %v2665 = vpack.c.bf16 %v2451, %v2450
  %v2666 = vpack.c.bf16 %v2453, %v2452
  %v2667 = vpack.c.bf16 %v2455, %v2454
  %v2668 = vpack.c.bf16 %v2457, %v2456
  %v2669 = vpack.c.bf16 %v2459, %v2458
  %v2670 = vpack.c.bf16 %v2461, %v2460
  %v2671 = vpack.c.bf16 %v2463, %v2462
  %v2672 = vpack.c.bf16 %v2465, %v2464
  %v2673 = vpack.c.bf16 %v2467, %v2466
  %v2674 = vpack.c.bf16 %v2469, %v2468
  %v2675 = vpack.c.bf16 %v2471, %v2470
  %v2676 = vpack.c.bf16 %v2473, %v2472
  %v2677 = vpack.c.bf16 %v2475, %v2474
  %v2678 = vpack.c.bf16 %v2477, %v2476
  %v2679 = vpack.c.bf16 %v2479, %v2478
  %v2680 = vpack.c.bf16 %v2481, %v2480
  %v2681 = vpack.c.bf16 %v2483, %v2482
  %v2682 = vpack.c.bf16 %v2485, %v2484
  %v2683 = vpack.c.bf16 %v2487, %v2486
  %v2684 = vpack.c.bf16 %v2489, %v2488
  %v2685 = vpack.c.bf16 %v2491, %v2490
  %v2686 = vpack.c.bf16 %v2493, %v2492
  %v2687 = vpack.c.bf16 %v2495, %v2494
  %v2688 = vpack.c.bf16 %v2497, %v2496
  %v2689 = vpack.c.bf16 %v2499, %v2498
  %v2690 = vpack.c.bf16 %v2501, %v2500
  %v2691 = vpack.c.bf16 %v2503, %v2502
  %v2692 = vpack.c.bf16 %v2505, %v2504
  %v2693 = vpack.c.bf16 %v2507, %v2506
  %v2694 = vpack.c.bf16 %v2509, %v2508
  %v2695 = vpack.c.bf16 %v2511, %v2510
  %v2696 = vpack.c.bf16 %v2513, %v2512
  %v2697 = vpack.c.bf16 %v2515, %v2514
  %v2698 = vpack.c.bf16 %v2517, %v2516
  %v2699 = vpack.c.bf16 %v2519, %v2518
  %v2700 = vpack.c.bf16 %v2521, %v2520
  %v2701 = vpack.c.bf16 %v2523, %v2522
  %v2702 = vpack.c.bf16 %v2525, %v2524
  %v2703 = vpack.c.bf16 %v2527, %v2526
  %v2704 = vpack.c.bf16 %v2529, %v2528
  %v2705 = vpack.c.bf16 %v2531, %v2530
  %v2706 = vpack.c.bf16 %v2533, %v2532
  %v2707 = vpack.c.bf16 %v2535, %v2534
  %v2708 = vpack.c.bf16 %v2537, %v2536
  %v2709 = vpack.c.bf16 %v2539, %v2538
  %v2710 = vpack.c.bf16 %v2541, %v2540
  %v2711 = vpack.c.bf16 %v2543, %v2542
  %v2712 = vpack.c.bf16 %v2545, %v2544
  %v2713 = vpack.c.bf16 %v2547, %v2546
  %v2714 = vpack.c.bf16 %v2549, %v2548
  %v2715 = vpack.c.bf16 %v2551, %v2550
  %v2716 = vpack.c.bf16 %v2553, %v2552
  %v2717 = vpack.c.bf16 %v2555, %v2554
  %v2718 = vpack.c.bf16 %v2557, %v2556
  %v2719 = vpack.c.bf16 %v2559, %v2558
  %v2720 = vpack.c.bf16 %v2561, %v2560
  %v2721 = vpack.c.bf16 %v2563, %v2562
  %v2722 = vpack.c.bf16 %v2565, %v2564
  %v2723 = vpack.c.bf16 %v2567, %v2566
  %v2724 = vpack.c.bf16 %v2569, %v2568
  %v2725 = vpack.c.bf16 %v2571, %v2570
  %v2726 = vpack.c.bf16 %v2573, %v2572
  %v2727 = vpack.c.bf16 %v2575, %v2574
  %v2728 = vpack.c.bf16 %v2577, %v2576
  %v2729 = vpack.c.bf16 %v2579, %v2578
  %v2730 = vpack.c.bf16 %v2581, %v2580
  %v2731 = vpack.c.bf16 %v2583, %v2582
  %v2732 = vpack.c.bf16 %v2585, %v2584
  %v2733 = vpack.c.bf16 %v2587, %v2586
  %v2734 = vpack.c.bf16 %v2589, %v2588
  %v2735 = vpack.c.bf16 %v2591, %v2590
  %v2736 = vpack.c.bf16 %v2593, %v2592
  %v2737 = vpack.c.bf16 %v2595, %v2594
  %v2738 = vpack.c.bf16 %v2597, %v2596
  %v2739 = vpack.c.bf16 %v2599, %v2598
  %v2740 = vpack.c.bf16 %v2601, %v2600
  %v2741 = vpack.c.bf16 %v2603, %v2602
  %v2742 = vpack.c.bf16 %v2605, %v2604
  %v2743 = vpack.c.bf16 %v2607, %v2606
  %v2744 = vpack.c.bf16 %v2609, %v2608
  %v2745 = vpack.c.bf16 %v2611, %v2610
  %v2746 = vpack.c.bf16 %v2613, %v2612
  %v2747 = vpack.c.bf16 %v2615, %v2614
  %v2748 = vpack.c.bf16 %v2617, %v2616
  %v2749 = vpack.c.bf16 %v2619, %v2618
  %v2750 = vpack.c.bf16 %v2621, %v2620
  %v2751 = vpack.c.bf16 %v2623, %v2622
  %v2880 = vunpack.c.l.b16 %v2624
  %v2881 = vunpack.c.h.b16 %v2624
  %v2882 = vunpack.c.l.b16 %v2625
  %v2883 = vunpack.c.h.b16 %v2625
  %v2884 = vunpack.c.l.b16 %v2626
  %v2885 = vunpack.c.h.b16 %v2626
  %v2886 = vunpack.c.l.b16 %v2627
  %v2887 = vunpack.c.h.b16 %v2627
  %v2888 = vunpack.c.l.b16 %v2628
  %v2889 = vunpack.c.h.b16 %v2628
  %v2890 = vunpack.c.l.b16 %v2629
  %v2891 = vunpack.c.h.b16 %v2629
  %v2892 = vunpack.c.l.b16 %v2630
  %v2893 = vunpack.c.h.b16 %v2630
  %v2894 = vunpack.c.l.b16 %v2631
  %v2895 = vunpack.c.h.b16 %v2631
  %v2896 = vunpack.c.l.b16 %v2632
  %v2897 = vunpack.c.h.b16 %v2632
  %v2898 = vunpack.c.l.b16 %v2633
  %v2899 = vunpack.c.h.b16 %v2633
  %v2900 = vunpack.c.l.b16 %v2634
  %v2901 = vunpack.c.h.b16 %v2634
  %v2902 = vunpack.c.l.b16 %v2635
  %v2903 = vunpack.c.h.b16 %v2635
  %v2904 = vunpack.c.l.b16 %v2636
  %v2905 = vunpack.c.h.b16 %v2636
  %v2906 = vunpack.c.l.b16 %v2637
  %v2907 = vunpack.c.h.b16 %v2637
  %v2908 = vunpack.c.l.b16 %v2638
  %v2909 = vunpack.c.h.b16 %v2638
  %v2910 = vunpack.c.l.b16 %v2639
  %v2911 = vunpack.c.h.b16 %v2639
  %v2912 = vunpack.c.l.b16 %v2640
  %v2913 = vunpack.c.h.b16 %v2640
  %v2914 = vunpack.c.l.b16 %v2641
  %v2915 = vunpack.c.h.b16 %v2641
  %v2916 = vunpack.c.l.b16 %v2642
  %v2917 = vunpack.c.h.b16 %v2642
  %v2918 = vunpack.c.l.b16 %v2643
  %v2919 = vunpack.c.h.b16 %v2643
  %v2920 = vunpack.c.l.b16 %v2644
  %v2921 = vunpack.c.h.b16 %v2644
  %v2922 = vunpack.c.l.b16 %v2645
  %v2923 = vunpack.c.h.b16 %v2645
  %v2924 = vunpack.c.l.b16 %v2646
  %v2925 = vunpack.c.h.b16 %v2646
  %v2926 = vunpack.c.l.b16 %v2647
  %v2927 = vunpack.c.h.b16 %v2647
  %v2928 = vunpack.c.l.b16 %v2648
  %v2929 = vunpack.c.h.b16 %v2648
  %v2930 = vunpack.c.l.b16 %v2649
  %v2931 = vunpack.c.h.b16 %v2649
  %v2932 = vunpack.c.l.b16 %v2650
  %v2933 = vunpack.c.h.b16 %v2650
  %v2934 = vunpack.c.l.b16 %v2651
  %v2935 = vunpack.c.h.b16 %v2651
  %v2936 = vunpack.c.l.b16 %v2652
  %v2937 = vunpack.c.h.b16 %v2652
  %v2938 = vunpack.c.l.b16 %v2653
  %v2939 = vunpack.c.h.b16 %v2653
  %v2940 = vunpack.c.l.b16 %v2654
  %v2941 = vunpack.c.h.b16 %v2654
  %v2942 = vunpack.c.l.b16 %v2655
  %v2943 = vunpack.c.h.b16 %v2655
  %v2944 = vunpack.c.l.b16 %v2656
  %v2945 = vunpack.c.h.b16 %v2656
  %v2946 = vunpack.c.l.b16 %v2657
  %v2947 = vunpack.c.h.b16 %v2657
  %v2948 = vunpack.c.l.b16 %v2658
  %v2949 = vunpack.c.h.b16 %v2658
  %v2950 = vunpack.c.l.b16 %v2659
  %v2951 = vunpack.c.h.b16 %v2659
  %v2952 = vunpack.c.l.b16 %v2660
  %v2953 = vunpack.c.h.b16 %v2660
  %v2954 = vunpack.c.l.b16 %v2661
  %v2955 = vunpack.c.h.b16 %v2661
  %v2956 = vunpack.c.l.b16 %v2662
  %v2957 = vunpack.c.h.b16 %v2662
  %v2958 = vunpack.c.l.b16 %v2663
  %v2959 = vunpack.c.h.b16 %v2663
  %v2960 = vunpack.c.l.b16 %v2664
  %v2961 = vunpack.c.h.b16 %v2664
  %v2962 = vunpack.c.l.b16 %v2665
  %v2963 = vunpack.c.h.b16 %v2665
  %v2964 = vunpack.c.l.b16 %v2666
  %v2965 = vunpack.c.h.b16 %v2666
  %v2966 = vunpack.c.l.b16 %v2667
  %v2967 = vunpack.c.h.b16 %v2667
  %v2968 = vunpack.c.l.b16 %v2668
  %v2969 = vunpack.c.h.b16 %v2668
  %v2970 = vunpack.c.l.b16 %v2669
  %v2971 = vunpack.c.h.b16 %v2669
  %v2972 = vunpack.c.l.b16 %v2670
  %v2973 = vunpack.c.h.b16 %v2670
  %v2974 = vunpack.c.l.b16 %v2671
  %v2975 = vunpack.c.h.b16 %v2671
  %v2976 = vunpack.c.l.b16 %v2672
  %v2977 = vunpack.c.h.b16 %v2672
  %v2978 = vunpack.c.l.b16 %v2673
  %v2979 = vunpack.c.h.b16 %v2673
  %v2980 = vunpack.c.l.b16 %v2674
  %v2981 = vunpack.c.h.b16 %v2674
  %v2982 = vunpack.c.l.b16 %v2675
  %v2983 = vunpack.c.h.b16 %v2675
  %v2984 = vunpack.c.l.b16 %v2676
  %v2985 = vunpack.c.h.b16 %v2676
  %v2986 = vunpack.c.l.b16 %v2677
  %v2987 = vunpack.c.h.b16 %v2677
  %v2988 = vunpack.c.l.b16 %v2678
  %v2989 = vunpack.c.h.b16 %v2678
  %v2990 = vunpack.c.l.b16 %v2679
  %v2991 = vunpack.c.h.b16 %v2679
  %v2992 = vunpack.c.l.b16 %v2680
  %v2993 = vunpack.c.h.b16 %v2680
  %v2994 = vunpack.c.l.b16 %v2681
  %v2995 = vunpack.c.h.b16 %v2681
  %v2996 = vunpack.c.l.b16 %v2682
  %v2997 = vunpack.c.h.b16 %v2682
  %v2998 = vunpack.c.l.b16 %v2683
  %v2999 = vunpack.c.h.b16 %v2683
  %v3000 = vunpack.c.l.b16 %v2684
  %v3001 = vunpack.c.h.b16 %v2684
  %v3002 = vunpack.c.l.b16 %v2685
  %v3003 = vunpack.c.h.b16 %v2685
  %v3004 = vunpack.c.l.b16 %v2686
  %v3005 = vunpack.c.h.b16 %v2686
  %v3006 = vunpack.c.l.b16 %v2687
  %v3007 = vunpack.c.h.b16 %v2687
  %v3008 = vunpack.c.l.b16 %v2688
  %v3009 = vunpack.c.h.b16 %v2688
  %v3010 = vunpack.c.l.b16 %v2689
  %v3011 = vunpack.c.h.b16 %v2689
  %v3012 = vunpack.c.l.b16 %v2690
  %v3013 = vunpack.c.h.b16 %v2690
  %v3014 = vunpack.c.l.b16 %v2691
  %v3015 = vunpack.c.h.b16 %v2691
  %v3016 = vunpack.c.l.b16 %v2692
  %v3017 = vunpack.c.h.b16 %v2692
  %v3018 = vunpack.c.l.b16 %v2693
  %v3019 = vunpack.c.h.b16 %v2693
  %v3020 = vunpack.c.l.b16 %v2694
  %v3021 = vunpack.c.h.b16 %v2694
  %v3022 = vunpack.c.l.b16 %v2695
  %v3023 = vunpack.c.h.b16 %v2695
  %v3024 = vunpack.c.l.b16 %v2696
  %v3025 = vunpack.c.h.b16 %v2696
  %v3026 = vunpack.c.l.b16 %v2697
  %v3027 = vunpack.c.h.b16 %v2697
  %v3028 = vunpack.c.l.b16 %v2698
  %v3029 = vunpack.c.h.b16 %v2698
  %v3030 = vunpack.c.l.b16 %v2699
  %v3031 = vunpack.c.h.b16 %v2699
  %v3032 = vunpack.c.l.b16 %v2700
  %v3033 = vunpack.c.h.b16 %v2700
  %v3034 = vunpack.c.l.b16 %v2701
  %v3035 = vunpack.c.h.b16 %v2701
  %v3036 = vunpack.c.l.b16 %v2702
  %v3037 = vunpack.c.h.b16 %v2702
  %v3038 = vunpack.c.l.b16 %v2703
  %v3039 = vunpack.c.h.b16 %v2703
  %v3040 = vunpack.c.l.b16 %v2704
  %v3041 = vunpack.c.h.b16 %v2704
  %v3042 = vunpack.c.l.b16 %v2705
  %v3043 = vunpack.c.h.b16 %v2705
  %v3044 = vunpack.c.l.b16 %v2706
  %v3045 = vunpack.c.h.b16 %v2706
  %v3046 = vunpack.c.l.b16 %v2707
  %v3047 = vunpack.c.h.b16 %v2707
  %v3048 = vunpack.c.l.b16 %v2708
  %v3049 = vunpack.c.h.b16 %v2708
  %v3050 = vunpack.c.l.b16 %v2709
  %v3051 = vunpack.c.h.b16 %v2709
  %v3052 = vunpack.c.l.b16 %v2710
  %v3053 = vunpack.c.h.b16 %v2710
  %v3054 = vunpack.c.l.b16 %v2711
  %v3055 = vunpack.c.h.b16 %v2711
  %v3056 = vunpack.c.l.b16 %v2712
  %v3057 = vunpack.c.h.b16 %v2712
  %v3058 = vunpack.c.l.b16 %v2713
  %v3059 = vunpack.c.h.b16 %v2713
  %v3060 = vunpack.c.l.b16 %v2714
  %v3061 = vunpack.c.h.b16 %v2714
  %v3062 = vunpack.c.l.b16 %v2715
  %v3063 = vunpack.c.h.b16 %v2715
  %v3064 = vunpack.c.l.b16 %v2716
  %v3065 = vunpack.c.h.b16 %v2716
  %v3066 = vunpack.c.l.b16 %v2717
  %v3067 = vunpack.c.h.b16 %v2717
  %v3068 = vunpack.c.l.b16 %v2718
  %v3069 = vunpack.c.h.b16 %v2718
  %v3070 = vunpack.c.l.b16 %v2719
  %v3071 = vunpack.c.h.b16 %v2719
  %v3072 = vunpack.c.l.b16 %v2720
  %v3073 = vunpack.c.h.b16 %v2720
  %v3074 = vunpack.c.l.b16 %v2721
  %v3075 = vunpack.c.h.b16 %v2721
  %v3076 = vunpack.c.l.b16 %v2722
  %v3077 = vunpack.c.h.b16 %v2722
  %v3078 = vunpack.c.l.b16 %v2723
  %v3079 = vunpack.c.h.b16 %v2723
  %v3080 = vunpack.c.l.b16 %v2724
  %v3081 = vunpack.c.h.b16 %v2724
  %v3082 = vunpack.c.l.b16 %v2725
  %v3083 = vunpack.c.h.b16 %v2725
  %v3084 = vunpack.c.l.b16 %v2726
  %v3085 = vunpack.c.h.b16 %v2726
  %v3086 = vunpack.c.l.b16 %v2727
  %v3087 = vunpack.c.h.b16 %v2727
  %v3088 = vunpack.c.l.b16 %v2728
  %v3089 = vunpack.c.h.b16 %v2728
  %v3090 = vunpack.c.l.b16 %v2729
  %v3091 = vunpack.c.h.b16 %v2729
  %v3092 = vunpack.c.l.b16 %v2730
  %v3093 = vunpack.c.h.b16 %v2730
  %v3094 = vunpack.c.l.b16 %v2731
  %v3095 = vunpack.c.h.b16 %v2731
  %v3096 = vunpack.c.l.b16 %v2732
  %v3097 = vunpack.c.h.b16 %v2732
  %v3098 = vunpack.c.l.b16 %v2733
  %v3099 = vunpack.c.h.b16 %v2733
  %v3100 = vunpack.c.l.b16 %v2734
  %v3101 = vunpack.c.h.b16 %v2734
  %v3102 = vunpack.c.l.b16 %v2735
  %v3103 = vunpack.c.h.b16 %v2735
  %v3104 = vunpack.c.l.b16 %v2736
  %v3105 = vunpack.c.h.b16 %v2736
  %v3106 = vunpack.c.l.b16 %v2737
  %v3107 = vunpack.c.h.b16 %v2737
  %v3108 = vunpack.c.l.b16 %v2738
  %v3109 = vunpack.c.h.b16 %v2738
  %v3110 = vunpack.c.l.b16 %v2739
  %v3111 = vunpack.c.h.b16 %v2739
  %v3112 = vunpack.c.l.b16 %v2740
  %v3113 = vunpack.c.h.b16 %v2740
  %v3114 = vunpack.c.l.b16 %v2741
  %v3115 = vunpack.c.h.b16 %v2741
  %v3116 = vunpack.c.l.b16 %v2742
  %v3117 = vunpack.c.h.b16 %v2742
  %v3118 = vunpack.c.l.b16 %v2743
  %v3119 = vunpack.c.h.b16 %v2743
  %v3120 = vunpack.c.l.b16 %v2744
  %v3121 = vunpack.c.h.b16 %v2744
  %v3122 = vunpack.c.l.b16 %v2745
  %v3123 = vunpack.c.h.b16 %v2745
  %v3124 = vunpack.c.l.b16 %v2746
  %v3125 = vunpack.c.h.b16 %v2746
  %v3126 = vunpack.c.l.b16 %v2747
  %v3127 = vunpack.c.h.b16 %v2747
  %v3128 = vunpack.c.l.b16 %v2748
  %v3129 = vunpack.c.h.b16 %v2748
  %v3130 = vunpack.c.l.b16 %v2749
  %v3131 = vunpack.c.h.b16 %v2749
  %v3132 = vunpack.c.l.b16 %v2750
  %v3133 = vunpack.c.h.b16 %v2750
  %v3134 = vunpack.c.l.b16 %v2751
  %v3135 = vunpack.c.h.b16 %v2751
  %v3136 = vpack.c.b16 %v2880, %v2880
  %v3137 = vpack.c.b16 %v2881, %v2881
  %v3138 = vpack.c.b16 %v2882, %v2882
  %v3139 = vpack.c.b16 %v2883, %v2883
  %v3140 = vpack.c.b16 %v2884, %v2884
  %v3141 = vpack.c.b16 %v2885, %v2885
  %v3142 = vpack.c.b16 %v2886, %v2886
  %v3143 = vpack.c.b16 %v2887, %v2887
  %v3144 = vpack.c.b16 %v2888, %v2888
  %v3145 = vpack.c.b16 %v2889, %v2889
  %v3146 = vpack.c.b16 %v2890, %v2890
  %v3147 = vpack.c.b16 %v2891, %v2891
  %v3148 = vpack.c.b16 %v2892, %v2892
  %v3149 = vpack.c.b16 %v2893, %v2893
  %v3150 = vpack.c.b16 %v2894, %v2894
  %v3151 = vpack.c.b16 %v2895, %v2895
  %v3152 = vpack.c.b16 %v2896, %v2896
  %v3153 = vpack.c.b16 %v2897, %v2897
  %v3154 = vpack.c.b16 %v2898, %v2898
  %v3155 = vpack.c.b16 %v2899, %v2899
  %v3156 = vpack.c.b16 %v2900, %v2900
  %v3157 = vpack.c.b16 %v2901, %v2901
  %v3158 = vpack.c.b16 %v2902, %v2902
  %v3159 = vpack.c.b16 %v2903, %v2903
  %v3160 = vpack.c.b16 %v2904, %v2904
  %v3161 = vpack.c.b16 %v2905, %v2905
  %v3162 = vpack.c.b16 %v2906, %v2906
  %v3163 = vpack.c.b16 %v2907, %v2907
  %v3164 = vpack.c.b16 %v2908, %v2908
  %v3165 = vpack.c.b16 %v2909, %v2909
  %v3166 = vpack.c.b16 %v2910, %v2910
  %v3167 = vpack.c.b16 %v2911, %v2911
  %v3168 = vpack.c.b16 %v2912, %v2912
  %v3169 = vpack.c.b16 %v2913, %v2913
  %v3170 = vpack.c.b16 %v2914, %v2914
  %v3171 = vpack.c.b16 %v2915, %v2915
  %v3172 = vpack.c.b16 %v2916, %v2916
  %v3173 = vpack.c.b16 %v2917, %v2917
  %v3174 = vpack.c.b16 %v2918, %v2918
  %v3175 = vpack.c.b16 %v2919, %v2919
  %v3176 = vpack.c.b16 %v2920, %v2920
  %v3177 = vpack.c.b16 %v2921, %v2921
  %v3178 = vpack.c.b16 %v2922, %v2922
  %v3179 = vpack.c.b16 %v2923, %v2923
  %v3180 = vpack.c.b16 %v2924, %v2924
  %v3181 = vpack.c.b16 %v2925, %v2925
  %v3182 = vpack.c.b16 %v2926, %v2926
  %v3183 = vpack.c.b16 %v2927, %v2927
  %v3184 = vpack.c.b16 %v2928, %v2928
  %v3185 = vpack.c.b16 %v2929, %v2929
  %v3186 = vpack.c.b16 %v2930, %v2930
  %v3187 = vpack.c.b16 %v2931, %v2931
  %v3188 = vpack.c.b16 %v2932, %v2932
  %v3189 = vpack.c.b16 %v2933, %v2933
  %v3190 = vpack.c.b16 %v2934, %v2934
  %v3191 = vpack.c.b16 %v2935, %v2935
  %v3192 = vpack.c.b16 %v2936, %v2936
  %v3193 = vpack.c.b16 %v2937, %v2937
  %v3194 = vpack.c.b16 %v2938, %v2938
  %v3195 = vpack.c.b16 %v2939, %v2939
  %v3196 = vpack.c.b16 %v2940, %v2940
  %v3197 = vpack.c.b16 %v2941, %v2941
  %v3198 = vpack.c.b16 %v2942, %v2942
  %v3199 = vpack.c.b16 %v2943, %v2943
  %v3200 = vpack.c.b16 %v2944, %v2944
  %v3201 = vpack.c.b16 %v2945, %v2945
  %v3202 = vpack.c.b16 %v2946, %v2946
  %v3203 = vpack.c.b16 %v2947, %v2947
  %v3204 = vpack.c.b16 %v2948, %v2948
  %v3205 = vpack.c.b16 %v2949, %v2949
  %v3206 = vpack.c.b16 %v2950, %v2950
  %v3207 = vpack.c.b16 %v2951, %v2951
  %v3208 = vpack.c.b16 %v2952, %v2952
  %v3209 = vpack.c.b16 %v2953, %v2953
  %v3210 = vpack.c.b16 %v2954, %v2954
  %v3211 = vpack.c.b16 %v2955, %v2955
  %v3212 = vpack.c.b16 %v2956, %v2956
  %v3213 = vpack.c.b16 %v2957, %v2957
  %v3214 = vpack.c.b16 %v2958, %v2958
  %v3215 = vpack.c.b16 %v2959, %v2959
  %v3216 = vpack.c.b16 %v2960, %v2960
  %v3217 = vpack.c.b16 %v2961, %v2961
  %v3218 = vpack.c.b16 %v2962, %v2962
  %v3219 = vpack.c.b16 %v2963, %v2963
  %v3220 = vpack.c.b16 %v2964, %v2964
  %v3221 = vpack.c.b16 %v2965, %v2965
  %v3222 = vpack.c.b16 %v2966, %v2966
  %v3223 = vpack.c.b16 %v2967, %v2967
  %v3224 = vpack.c.b16 %v2968, %v2968
  %v3225 = vpack.c.b16 %v2969, %v2969
  %v3226 = vpack.c.b16 %v2970, %v2970
  %v3227 = vpack.c.b16 %v2971, %v2971
  %v3228 = vpack.c.b16 %v2972, %v2972
  %v3229 = vpack.c.b16 %v2973, %v2973
  %v3230 = vpack.c.b16 %v2974, %v2974
  %v3231 = vpack.c.b16 %v2975, %v2975
  %v3232 = vpack.c.b16 %v2976, %v2976
  %v3233 = vpack.c.b16 %v2977, %v2977
  %v3234 = vpack.c.b16 %v2978, %v2978
  %v3235 = vpack.c.b16 %v2979, %v2979
  %v3236 = vpack.c.b16 %v2980, %v2980
  %v3237 = vpack.c.b16 %v2981, %v2981
  %v3238 = vpack.c.b16 %v2982, %v2982
  %v3239 = vpack.c.b16 %v2983, %v2983
  %v3240 = vpack.c.b16 %v2984, %v2984
  %v3241 = vpack.c.b16 %v2985, %v2985
  %v3242 = vpack.c.b16 %v2986, %v2986
  %v3243 = vpack.c.b16 %v2987, %v2987
  %v3244 = vpack.c.b16 %v2988, %v2988
  %v3245 = vpack.c.b16 %v2989, %v2989
  %v3246 = vpack.c.b16 %v2990, %v2990
  %v3247 = vpack.c.b16 %v2991, %v2991
  %v3248 = vpack.c.b16 %v2992, %v2992
  %v3249 = vpack.c.b16 %v2993, %v2993
  %v3250 = vpack.c.b16 %v2994, %v2994
  %v3251 = vpack.c.b16 %v2995, %v2995
  %v3252 = vpack.c.b16 %v2996, %v2996
  %v3253 = vpack.c.b16 %v2997, %v2997
  %v3254 = vpack.c.b16 %v2998, %v2998
  %v3255 = vpack.c.b16 %v2999, %v2999
  %v3256 = vpack.c.b16 %v3000, %v3000
  %v3257 = vpack.c.b16 %v3001, %v3001
  %v3258 = vpack.c.b16 %v3002, %v3002
  %v3259 = vpack.c.b16 %v3003, %v3003
  %v3260 = vpack.c.b16 %v3004, %v3004
  %v3261 = vpack.c.b16 %v3005, %v3005
  %v3262 = vpack.c.b16 %v3006, %v3006
  %v3263 = vpack.c.b16 %v3007, %v3007
  %v3264 = vpack.c.b16 %v3008, %v3008
  %v3265 = vpack.c.b16 %v3009, %v3009
  %v3266 = vpack.c.b16 %v3010, %v3010
  %v3267 = vpack.c.b16 %v3011, %v3011
  %v3268 = vpack.c.b16 %v3012, %v3012
  %v3269 = vpack.c.b16 %v3013, %v3013
  %v3270 = vpack.c.b16 %v3014, %v3014
  %v3271 = vpack.c.b16 %v3015, %v3015
  %v3272 = vpack.c.b16 %v3016, %v3016
  %v3273 = vpack.c.b16 %v3017, %v3017
  %v3274 = vpack.c.b16 %v3018, %v3018
  %v3275 = vpack.c.b16 %v3019, %v3019
  %v3276 = vpack.c.b16 %v3020, %v3020
  %v3277 = vpack.c.b16 %v3021, %v3021
  %v3278 = vpack.c.b16 %v3022, %v3022
  %v3279 = vpack.c.b16 %v3023, %v3023
  %v3280 = vpack.c.b16 %v3024, %v3024
  %v3281 = vpack.c.b16 %v3025, %v3025
  %v3282 = vpack.c.b16 %v3026, %v3026
  %v3283 = vpack.c.b16 %v3027, %v3027
  %v3284 = vpack.c.b16 %v3028, %v3028
  %v3285 = vpack.c.b16 %v3029, %v3029
  %v3286 = vpack.c.b16 %v3030, %v3030
  %v3287 = vpack.c.b16 %v3031, %v3031
  %v3288 = vpack.c.b16 %v3032, %v3032
  %v3289 = vpack.c.b16 %v3033, %v3033
  %v3290 = vpack.c.b16 %v3034, %v3034
  %v3291 = vpack.c.b16 %v3035, %v3035
  %v3292 = vpack.c.b16 %v3036, %v3036
  %v3293 = vpack.c.b16 %v3037, %v3037
  %v3294 = vpack.c.b16 %v3038, %v3038
  %v3295 = vpack.c.b16 %v3039, %v3039
  %v3296 = vpack.c.b16 %v3040, %v3040
  %v3297 = vpack.c.b16 %v3041, %v3041
  %v3298 = vpack.c.b16 %v3042, %v3042
  %v3299 = vpack.c.b16 %v3043, %v3043
  %v3300 = vpack.c.b16 %v3044, %v3044
  %v3301 = vpack.c.b16 %v3045, %v3045
  %v3302 = vpack.c.b16 %v3046, %v3046
  %v3303 = vpack.c.b16 %v3047, %v3047
  %v3304 = vpack.c.b16 %v3048, %v3048
  %v3305 = vpack.c.b16 %v3049, %v3049
  %v3306 = vpack.c.b16 %v3050, %v3050
  %v3307 = vpack.c.b16 %v3051, %v3051
  %v3308 = vpack.c.b16 %v3052, %v3052
  %v3309 = vpack.c.b16 %v3053, %v3053
  %v3310 = vpack.c.b16 %v3054, %v3054
  %v3311 = vpack.c.b16 %v3055, %v3055
  %v3312 = vpack.c.b16 %v3056, %v3056
  %v3313 = vpack.c.b16 %v3057, %v3057
  %v3314 = vpack.c.b16 %v3058, %v3058
  %v3315 = vpack.c.b16 %v3059, %v3059
  %v3316 = vpack.c.b16 %v3060, %v3060
  %v3317 = vpack.c.b16 %v3061, %v3061
  %v3318 = vpack.c.b16 %v3062, %v3062
  %v3319 = vpack.c.b16 %v3063, %v3063
  %v3320 = vpack.c.b16 %v3064, %v3064
  %v3321 = vpack.c.b16 %v3065, %v3065
  %v3322 = vpack.c.b16 %v3066, %v3066
  %v3323 = vpack.c.b16 %v3067, %v3067
  %v3324 = vpack.c.b16 %v3068, %v3068
  %v3325 = vpack.c.b16 %v3069, %v3069
  %v3326 = vpack.c.b16 %v3070, %v3070
  %v3327 = vpack.c.b16 %v3071, %v3071
  %v3328 = vpack.c.b16 %v3072, %v3072
  %v3329 = vpack.c.b16 %v3073, %v3073
  %v3330 = vpack.c.b16 %v3074, %v3074
  %v3331 = vpack.c.b16 %v3075, %v3075
  %v3332 = vpack.c.b16 %v3076, %v3076
  %v3333 = vpack.c.b16 %v3077, %v3077
  %v3334 = vpack.c.b16 %v3078, %v3078
  %v3335 = vpack.c.b16 %v3079, %v3079
  %v3336 = vpack.c.b16 %v3080, %v3080
  %v3337 = vpack.c.b16 %v3081, %v3081
  %v3338 = vpack.c.b16 %v3082, %v3082
  %v3339 = vpack.c.b16 %v3083, %v3083
  %v3340 = vpack.c.b16 %v3084, %v3084
  %v3341 = vpack.c.b16 %v3085, %v3085
  %v3342 = vpack.c.b16 %v3086, %v3086
  %v3343 = vpack.c.b16 %v3087, %v3087
  %v3344 = vpack.c.b16 %v3088, %v3088
  %v3345 = vpack.c.b16 %v3089, %v3089
  %v3346 = vpack.c.b16 %v3090, %v3090
  %v3347 = vpack.c.b16 %v3091, %v3091
  %v3348 = vpack.c.b16 %v3092, %v3092
  %v3349 = vpack.c.b16 %v3093, %v3093
  %v3350 = vpack.c.b16 %v3094, %v3094
  %v3351 = vpack.c.b16 %v3095, %v3095
  %v3352 = vpack.c.b16 %v3096, %v3096
  %v3353 = vpack.c.b16 %v3097, %v3097
  %v3354 = vpack.c.b16 %v3098, %v3098
  %v3355 = vpack.c.b16 %v3099, %v3099
  %v3356 = vpack.c.b16 %v3100, %v3100
  %v3357 = vpack.c.b16 %v3101, %v3101
  %v3358 = vpack.c.b16 %v3102, %v3102
  %v3359 = vpack.c.b16 %v3103, %v3103
  %v3360 = vpack.c.b16 %v3104, %v3104
  %v3361 = vpack.c.b16 %v3105, %v3105
  %v3362 = vpack.c.b16 %v3106, %v3106
  %v3363 = vpack.c.b16 %v3107, %v3107
  %v3364 = vpack.c.b16 %v3108, %v3108
  %v3365 = vpack.c.b16 %v3109, %v3109
  %v3366 = vpack.c.b16 %v3110, %v3110
  %v3367 = vpack.c.b16 %v3111, %v3111
  %v3368 = vpack.c.b16 %v3112, %v3112
  %v3369 = vpack.c.b16 %v3113, %v3113
  %v3370 = vpack.c.b16 %v3114, %v3114
  %v3371 = vpack.c.b16 %v3115, %v3115
  %v3372 = vpack.c.b16 %v3116, %v3116
  %v3373 = vpack.c.b16 %v3117, %v3117
  %v3374 = vpack.c.b16 %v3118, %v3118
  %v3375 = vpack.c.b16 %v3119, %v3119
  %v3376 = vpack.c.b16 %v3120, %v3120
  %v3377 = vpack.c.b16 %v3121, %v3121
  %v3378 = vpack.c.b16 %v3122, %v3122
  %v3379 = vpack.c.b16 %v3123, %v3123
  %v3380 = vpack.c.b16 %v3124, %v3124
  %v3381 = vpack.c.b16 %v3125, %v3125
  %v3382 = vpack.c.b16 %v3126, %v3126
  %v3383 = vpack.c.b16 %v3127, %v3127
  %v3384 = vpack.c.b16 %v3128, %v3128
  %v3385 = vpack.c.b16 %v3129, %v3129
  %v3386 = vpack.c.b16 %v3130, %v3130
  %v3387 = vpack.c.b16 %v3131, %v3131
  %v3388 = vpack.c.b16 %v3132, %v3132
  %v3389 = vpack.c.b16 %v3133, %v3133
  %v3390 = vpack.c.b16 %v3134, %v3134
  %v3391 = vpack.c.b16 %v3135, %v3135
  %3648 = vst [vmem:[%s3] sm:$0xf] %v3136
  %3649 = vst [vmem:[%s3 + $0x4] sm:$0xf] %v3137
  %3650 = vst [vmem:[%s3 + $0x8] sm:$0xf] %v3138
  %3651 = vst [vmem:[%s3 + $0xc] sm:$0xf] %v3139
  %3652 = vst [vmem:[%s3 + $0x10] sm:$0xf] %v3140
  %3653 = vst [vmem:[%s3 + $0x14] sm:$0xf] %v3141
  %3654 = vst [vmem:[%s3 + $0x18] sm:$0xf] %v3142
  %3655 = vst [vmem:[%s3 + $0x1c] sm:$0xf] %v3143
  %3656 = vst [vmem:[%s3 + $0x20] sm:$0xf] %v3144
  %3657 = vst [vmem:[%s3 + $0x24] sm:$0xf] %v3145
  %3658 = vst [vmem:[%s3 + $0x28] sm:$0xf] %v3146
  %3659 = vst [vmem:[%s3 + $0x2c] sm:$0xf] %v3147
  %3660 = vst [vmem:[%s3 + $0x30] sm:$0xf] %v3148
  %3661 = vst [vmem:[%s3 + $0x34] sm:$0xf] %v3149
  %3662 = vst [vmem:[%s3 + $0x38] sm:$0xf] %v3150
  %3663 = vst [vmem:[%s3 + $0x3c] sm:$0xf] %v3151
  %3664 = vst [vmem:[%s3 + $0x40] sm:$0xf] %v3152
  %3665 = vst [vmem:[%s3 + $0x44] sm:$0xf] %v3153
  %3666 = vst [vmem:[%s3 + $0x48] sm:$0xf] %v3154
  %3667 = vst [vmem:[%s3 + $0x4c] sm:$0xf] %v3155
  %3668 = vst [vmem:[%s3 + $0x50] sm:$0xf] %v3156
  %3669 = vst [vmem:[%s3 + $0x54] sm:$0xf] %v3157
  %3670 = vst [vmem:[%s3 + $0x58] sm:$0xf] %v3158
  %3671 = vst [vmem:[%s3 + $0x5c] sm:$0xf] %v3159
  %3672 = vst [vmem:[%s3 + $0x60] sm:$0xf] %v3160
  %3673 = vst [vmem:[%s3 + $0x64] sm:$0xf] %v3161
  %3674 = vst [vmem:[%s3 + $0x68] sm:$0xf] %v3162
  %3675 = vst [vmem:[%s3 + $0x6c] sm:$0xf] %v3163
  %3676 = vst [vmem:[%s3 + $0x70] sm:$0xf] %v3164
  %3677 = vst [vmem:[%s3 + $0x74] sm:$0xf] %v3165
  %3678 = vst [vmem:[%s3 + $0x78] sm:$0xf] %v3166
  %3679 = vst [vmem:[%s3 + $0x7c] sm:$0xf] %v3167
  %3680 = vst [vmem:[%s3 + $0x80] sm:$0xf] %v3168
  %3681 = vst [vmem:[%s3 + $0x84] sm:$0xf] %v3169
  %3682 = vst [vmem:[%s3 + $0x88] sm:$0xf] %v3170
  %3683 = vst [vmem:[%s3 + $0x8c] sm:$0xf] %v3171
  %3684 = vst [vmem:[%s3 + $0x90] sm:$0xf] %v3172
  %3685 = vst [vmem:[%s3 + $0x94] sm:$0xf] %v3173
  %3686 = vst [vmem:[%s3 + $0x98] sm:$0xf] %v3174
  %3687 = vst [vmem:[%s3 + $0x9c] sm:$0xf] %v3175
  %3688 = vst [vmem:[%s3 + $0xa0] sm:$0xf] %v3176
  %3689 = vst [vmem:[%s3 + $0xa4] sm:$0xf] %v3177
  %3690 = vst [vmem:[%s3 + $0xa8] sm:$0xf] %v3178
  %3691 = vst [vmem:[%s3 + $0xac] sm:$0xf] %v3179
  %3692 = vst [vmem:[%s3 + $0xb0] sm:$0xf] %v3180
  %3693 = vst [vmem:[%s3 + $0xb4] sm:$0xf] %v3181
  %3694 = vst [vmem:[%s3 + $0xb8] sm:$0xf] %v3182
  %3695 = vst [vmem:[%s3 + $0xbc] sm:$0xf] %v3183
  %3696 = vst [vmem:[%s3 + $0xc0] sm:$0xf] %v3184
  %3697 = vst [vmem:[%s3 + $0xc4] sm:$0xf] %v3185
  %3698 = vst [vmem:[%s3 + $0xc8] sm:$0xf] %v3186
  %3699 = vst [vmem:[%s3 + $0xcc] sm:$0xf] %v3187
  %3700 = vst [vmem:[%s3 + $0xd0] sm:$0xf] %v3188
  %3701 = vst [vmem:[%s3 + $0xd4] sm:$0xf] %v3189
  %3702 = vst [vmem:[%s3 + $0xd8] sm:$0xf] %v3190
  %3703 = vst [vmem:[%s3 + $0xdc] sm:$0xf] %v3191
  %3704 = vst [vmem:[%s3 + $0xe0] sm:$0xf] %v3192
  %3705 = vst [vmem:[%s3 + $0xe4] sm:$0xf] %v3193
  %3706 = vst [vmem:[%s3 + $0xe8] sm:$0xf] %v3194
  %3707 = vst [vmem:[%s3 + $0xec] sm:$0xf] %v3195
  %3708 = vst [vmem:[%s3 + $0xf0] sm:$0xf] %v3196
  %3709 = vst [vmem:[%s3 + $0xf4] sm:$0xf] %v3197
  %3710 = vst [vmem:[%s3 + $0xf8] sm:$0xf] %v3198
  %3711 = vst [vmem:[%s3 + $0xfc] sm:$0xf] %v3199
  %3712 = vst [vmem:[%s3 + $0x100] sm:$0xf] %v3200
  %3713 = vst [vmem:[%s3 + $0x104] sm:$0xf] %v3201
  %3714 = vst [vmem:[%s3 + $0x108] sm:$0xf] %v3202
  %3715 = vst [vmem:[%s3 + $0x10c] sm:$0xf] %v3203
  %3716 = vst [vmem:[%s3 + $0x110] sm:$0xf] %v3204
  %3717 = vst [vmem:[%s3 + $0x114] sm:$0xf] %v3205
  %3718 = vst [vmem:[%s3 + $0x118] sm:$0xf] %v3206
  %3719 = vst [vmem:[%s3 + $0x11c] sm:$0xf] %v3207
  %3720 = vst [vmem:[%s3 + $0x120] sm:$0xf] %v3208
  %3721 = vst [vmem:[%s3 + $0x124] sm:$0xf] %v3209
  %3722 = vst [vmem:[%s3 + $0x128] sm:$0xf] %v3210
  %3723 = vst [vmem:[%s3 + $0x12c] sm:$0xf] %v3211
  %3724 = vst [vmem:[%s3 + $0x130] sm:$0xf] %v3212
  %3725 = vst [vmem:[%s3 + $0x134] sm:$0xf] %v3213
  %3726 = vst [vmem:[%s3 + $0x138] sm:$0xf] %v3214
  %3727 = vst [vmem:[%s3 + $0x13c] sm:$0xf] %v3215
  %3728 = vst [vmem:[%s3 + $0x140] sm:$0xf] %v3216
  %3729 = vst [vmem:[%s3 + $0x144] sm:$0xf] %v3217
  %3730 = vst [vmem:[%s3 + $0x148] sm:$0xf] %v3218
  %3731 = vst [vmem:[%s3 + $0x14c] sm:$0xf] %v3219
  %3732 = vst [vmem:[%s3 + $0x150] sm:$0xf] %v3220
  %3733 = vst [vmem:[%s3 + $0x154] sm:$0xf] %v3221
  %3734 = vst [vmem:[%s3 + $0x158] sm:$0xf] %v3222
  %3735 = vst [vmem:[%s3 + $0x15c] sm:$0xf] %v3223
  %3736 = vst [vmem:[%s3 + $0x160] sm:$0xf] %v3224
  %3737 = vst [vmem:[%s3 + $0x164] sm:$0xf] %v3225
  %3738 = vst [vmem:[%s3 + $0x168] sm:$0xf] %v3226
  %3739 = vst [vmem:[%s3 + $0x16c] sm:$0xf] %v3227
  %3740 = vst [vmem:[%s3 + $0x170] sm:$0xf] %v3228
  %3741 = vst [vmem:[%s3 + $0x174] sm:$0xf] %v3229
  %3742 = vst [vmem:[%s3 + $0x178] sm:$0xf] %v3230
  %3743 = vst [vmem:[%s3 + $0x17c] sm:$0xf] %v3231
  %3744 = vst [vmem:[%s3 + $0x180] sm:$0xf] %v3232
  %3745 = vst [vmem:[%s3 + $0x184] sm:$0xf] %v3233
  %3746 = vst [vmem:[%s3 + $0x188] sm:$0xf] %v3234
  %3747 = vst [vmem:[%s3 + $0x18c] sm:$0xf] %v3235
  %3748 = vst [vmem:[%s3 + $0x190] sm:$0xf] %v3236
  %3749 = vst [vmem:[%s3 + $0x194] sm:$0xf] %v3237
  %3750 = vst [vmem:[%s3 + $0x198] sm:$0xf] %v3238
  %3751 = vst [vmem:[%s3 + $0x19c] sm:$0xf] %v3239
  %3752 = vst [vmem:[%s3 + $0x1a0] sm:$0xf] %v3240
  %3753 = vst [vmem:[%s3 + $0x1a4] sm:$0xf] %v3241
  %3754 = vst [vmem:[%s3 + $0x1a8] sm:$0xf] %v3242
  %3755 = vst [vmem:[%s3 + $0x1ac] sm:$0xf] %v3243
  %3756 = vst [vmem:[%s3 + $0x1b0] sm:$0xf] %v3244
  %3757 = vst [vmem:[%s3 + $0x1b4] sm:$0xf] %v3245
  %3758 = vst [vmem:[%s3 + $0x1b8] sm:$0xf] %v3246
  %3759 = vst [vmem:[%s3 + $0x1bc] sm:$0xf] %v3247
  %3760 = vst [vmem:[%s3 + $0x1c0] sm:$0xf] %v3248
  %3761 = vst [vmem:[%s3 + $0x1c4] sm:$0xf] %v3249
  %3762 = vst [vmem:[%s3 + $0x1c8] sm:$0xf] %v3250
  %3763 = vst [vmem:[%s3 + $0x1cc] sm:$0xf] %v3251
  %3764 = vst [vmem:[%s3 + $0x1d0] sm:$0xf] %v3252
  %3765 = vst [vmem:[%s3 + $0x1d4] sm:$0xf] %v3253
  %3766 = vst [vmem:[%s3 + $0x1d8] sm:$0xf] %v3254
  %3767 = vst [vmem:[%s3 + $0x1dc] sm:$0xf] %v3255
  %3768 = vst [vmem:[%s3 + $0x1e0] sm:$0xf] %v3256
  %3769 = vst [vmem:[%s3 + $0x1e4] sm:$0xf] %v3257
  %3770 = vst [vmem:[%s3 + $0x1e8] sm:$0xf] %v3258
  %3771 = vst [vmem:[%s3 + $0x1ec] sm:$0xf] %v3259
  %3772 = vst [vmem:[%s3 + $0x1f0] sm:$0xf] %v3260
  %3773 = vst [vmem:[%s3 + $0x1f4] sm:$0xf] %v3261
  %3774 = vst [vmem:[%s3 + $0x1f8] sm:$0xf] %v3262
  %3775 = vst [vmem:[%s3 + $0x1fc] sm:$0xf] %v3263
  %3776 = vst [vmem:[%s3 + $0x200] sm:$0xf] %v3264
  %3777 = vst [vmem:[%s3 + $0x204] sm:$0xf] %v3265
  %3778 = vst [vmem:[%s3 + $0x208] sm:$0xf] %v3266
  %3779 = vst [vmem:[%s3 + $0x20c] sm:$0xf] %v3267
  %3780 = vst [vmem:[%s3 + $0x210] sm:$0xf] %v3268
  %3781 = vst [vmem:[%s3 + $0x214] sm:$0xf] %v3269
  %3782 = vst [vmem:[%s3 + $0x218] sm:$0xf] %v3270
  %3783 = vst [vmem:[%s3 + $0x21c] sm:$0xf] %v3271
  %3784 = vst [vmem:[%s3 + $0x220] sm:$0xf] %v3272
  %3785 = vst [vmem:[%s3 + $0x224] sm:$0xf] %v3273
  %3786 = vst [vmem:[%s3 + $0x228] sm:$0xf] %v3274
  %3787 = vst [vmem:[%s3 + $0x22c] sm:$0xf] %v3275
  %3788 = vst [vmem:[%s3 + $0x230] sm:$0xf] %v3276
  %3789 = vst [vmem:[%s3 + $0x234] sm:$0xf] %v3277
  %3790 = vst [vmem:[%s3 + $0x238] sm:$0xf] %v3278
  %3791 = vst [vmem:[%s3 + $0x23c] sm:$0xf] %v3279
  %3792 = vst [vmem:[%s3 + $0x240] sm:$0xf] %v3280
  %3793 = vst [vmem:[%s3 + $0x244] sm:$0xf] %v3281
  %3794 = vst [vmem:[%s3 + $0x248] sm:$0xf] %v3282
  %3795 = vst [vmem:[%s3 + $0x24c] sm:$0xf] %v3283
  %3796 = vst [vmem:[%s3 + $0x250] sm:$0xf] %v3284
  %3797 = vst [vmem:[%s3 + $0x254] sm:$0xf] %v3285
  %3798 = vst [vmem:[%s3 + $0x258] sm:$0xf] %v3286
  %3799 = vst [vmem:[%s3 + $0x25c] sm:$0xf] %v3287
  %3800 = vst [vmem:[%s3 + $0x260] sm:$0xf] %v3288
  %3801 = vst [vmem:[%s3 + $0x264] sm:$0xf] %v3289
  %3802 = vst [vmem:[%s3 + $0x268] sm:$0xf] %v3290
  %3803 = vst [vmem:[%s3 + $0x26c] sm:$0xf] %v3291
  %3804 = vst [vmem:[%s3 + $0x270] sm:$0xf] %v3292
  %3805 = vst [vmem:[%s3 + $0x274] sm:$0xf] %v3293
  %3806 = vst [vmem:[%s3 + $0x278] sm:$0xf] %v3294
  %3807 = vst [vmem:[%s3 + $0x27c] sm:$0xf] %v3295
  %3808 = vst [vmem:[%s3 + $0x280] sm:$0xf] %v3296
  %3809 = vst [vmem:[%s3 + $0x284] sm:$0xf] %v3297
  %3810 = vst [vmem:[%s3 + $0x288] sm:$0xf] %v3298
  %3811 = vst [vmem:[%s3 + $0x28c] sm:$0xf] %v3299
  %3812 = vst [vmem:[%s3 + $0x290] sm:$0xf] %v3300
  %3813 = vst [vmem:[%s3 + $0x294] sm:$0xf] %v3301
  %3814 = vst [vmem:[%s3 + $0x298] sm:$0xf] %v3302
  %3815 = vst [vmem:[%s3 + $0x29c] sm:$0xf] %v3303
  %3816 = vst [vmem:[%s3 + $0x2a0] sm:$0xf] %v3304
  %3817 = vst [vmem:[%s3 + $0x2a4] sm:$0xf] %v3305
  %3818 = vst [vmem:[%s3 + $0x2a8] sm:$0xf] %v3306
  %3819 = vst [vmem:[%s3 + $0x2ac] sm:$0xf] %v3307
  %3820 = vst [vmem:[%s3 + $0x2b0] sm:$0xf] %v3308
  %3821 = vst [vmem:[%s3 + $0x2b4] sm:$0xf] %v3309
  %3822 = vst [vmem:[%s3 + $0x2b8] sm:$0xf] %v3310
  %3823 = vst [vmem:[%s3 + $0x2bc] sm:$0xf] %v3311
  %3824 = vst [vmem:[%s3 + $0x2c0] sm:$0xf] %v3312
  %3825 = vst [vmem:[%s3 + $0x2c4] sm:$0xf] %v3313
  %3826 = vst [vmem:[%s3 + $0x2c8] sm:$0xf] %v3314
  %3827 = vst [vmem:[%s3 + $0x2cc] sm:$0xf] %v3315
  %3828 = vst [vmem:[%s3 + $0x2d0] sm:$0xf] %v3316
  %3829 = vst [vmem:[%s3 + $0x2d4] sm:$0xf] %v3317
  %3830 = vst [vmem:[%s3 + $0x2d8] sm:$0xf] %v3318
  %3831 = vst [vmem:[%s3 + $0x2dc] sm:$0xf] %v3319
  %3832 = vst [vmem:[%s3 + $0x2e0] sm:$0xf] %v3320
  %3833 = vst [vmem:[%s3 + $0x2e4] sm:$0xf] %v3321
  %3834 = vst [vmem:[%s3 + $0x2e8] sm:$0xf] %v3322
  %3835 = vst [vmem:[%s3 + $0x2ec] sm:$0xf] %v3323
  %3836 = vst [vmem:[%s3 + $0x2f0] sm:$0xf] %v3324
  %3837 = vst [vmem:[%s3 + $0x2f4] sm:$0xf] %v3325
  %3838 = vst [vmem:[%s3 + $0x2f8] sm:$0xf] %v3326
  %3839 = vst [vmem:[%s3 + $0x2fc] sm:$0xf] %v3327
  %3840 = vst [vmem:[%s3 + $0x300] sm:$0xf] %v3328
  %3841 = vst [vmem:[%s3 + $0x304] sm:$0xf] %v3329
  %3842 = vst [vmem:[%s3 + $0x308] sm:$0xf] %v3330
  %3843 = vst [vmem:[%s3 + $0x30c] sm:$0xf] %v3331
  %3844 = vst [vmem:[%s3 + $0x310] sm:$0xf] %v3332
  %3845 = vst [vmem:[%s3 + $0x314] sm:$0xf] %v3333
  %3846 = vst [vmem:[%s3 + $0x318] sm:$0xf] %v3334
  %3847 = vst [vmem:[%s3 + $0x31c] sm:$0xf] %v3335
  %3848 = vst [vmem:[%s3 + $0x320] sm:$0xf] %v3336
  %3849 = vst [vmem:[%s3 + $0x324] sm:$0xf] %v3337
  %3850 = vst [vmem:[%s3 + $0x328] sm:$0xf] %v3338
  %3851 = vst [vmem:[%s3 + $0x32c] sm:$0xf] %v3339
  %3852 = vst [vmem:[%s3 + $0x330] sm:$0xf] %v3340
  %3853 = vst [vmem:[%s3 + $0x334] sm:$0xf] %v3341
  %3854 = vst [vmem:[%s3 + $0x338] sm:$0xf] %v3342
  %3855 = vst [vmem:[%s3 + $0x33c] sm:$0xf] %v3343
  %3856 = vst [vmem:[%s3 + $0x340] sm:$0xf] %v3344
  %3857 = vst [vmem:[%s3 + $0x344] sm:$0xf] %v3345
  %3858 = vst [vmem:[%s3 + $0x348] sm:$0xf] %v3346
  %3859 = vst [vmem:[%s3 + $0x34c] sm:$0xf] %v3347
  %3860 = vst [vmem:[%s3 + $0x350] sm:$0xf] %v3348
  %3861 = vst [vmem:[%s3 + $0x354] sm:$0xf] %v3349
  %3862 = vst [vmem:[%s3 + $0x358] sm:$0xf] %v3350
  %3863 = vst [vmem:[%s3 + $0x35c] sm:$0xf] %v3351
  %3864 = vst [vmem:[%s3 + $0x360] sm:$0xf] %v3352
  %3865 = vst [vmem:[%s3 + $0x364] sm:$0xf] %v3353
  %3866 = vst [vmem:[%s3 + $0x368] sm:$0xf] %v3354
  %3867 = vst [vmem:[%s3 + $0x36c] sm:$0xf] %v3355
  %3868 = vst [vmem:[%s3 + $0x370] sm:$0xf] %v3356
  %3869 = vst [vmem:[%s3 + $0x374] sm:$0xf] %v3357
  %3870 = vst [vmem:[%s3 + $0x378] sm:$0xf] %v3358
  %3871 = vst [vmem:[%s3 + $0x37c] sm:$0xf] %v3359
  %3872 = vst [vmem:[%s3 + $0x380] sm:$0xf] %v3360
  %3873 = vst [vmem:[%s3 + $0x384] sm:$0xf] %v3361
  %3874 = vst [vmem:[%s3 + $0x388] sm:$0xf] %v3362
  %3875 = vst [vmem:[%s3 + $0x38c] sm:$0xf] %v3363
  %3876 = vst [vmem:[%s3 + $0x390] sm:$0xf] %v3364
  %3877 = vst [vmem:[%s3 + $0x394] sm:$0xf] %v3365
  %3878 = vst [vmem:[%s3 + $0x398] sm:$0xf] %v3366
  %3879 = vst [vmem:[%s3 + $0x39c] sm:$0xf] %v3367
  %3880 = vst [vmem:[%s3 + $0x3a0] sm:$0xf] %v3368
  %3881 = vst [vmem:[%s3 + $0x3a4] sm:$0xf] %v3369
  %3882 = vst [vmem:[%s3 + $0x3a8] sm:$0xf] %v3370
  %3883 = vst [vmem:[%s3 + $0x3ac] sm:$0xf] %v3371
  %3884 = vst [vmem:[%s3 + $0x3b0] sm:$0xf] %v3372
  %3885 = vst [vmem:[%s3 + $0x3b4] sm:$0xf] %v3373
  %3886 = vst [vmem:[%s3 + $0x3b8] sm:$0xf] %v3374
  %3887 = vst [vmem:[%s3 + $0x3bc] sm:$0xf] %v3375
  %3888 = vst [vmem:[%s3 + $0x3c0] sm:$0xf] %v3376
  %3889 = vst [vmem:[%s3 + $0x3c4] sm:$0xf] %v3377
  %3890 = vst [vmem:[%s3 + $0x3c8] sm:$0xf] %v3378
  %3891 = vst [vmem:[%s3 + $0x3cc] sm:$0xf] %v3379
  %3892 = vst [vmem:[%s3 + $0x3d0] sm:$0xf] %v3380
  %3893 = vst [vmem:[%s3 + $0x3d4] sm:$0xf] %v3381
  %3894 = vst [vmem:[%s3 + $0x3d8] sm:$0xf] %v3382
  %3895 = vst [vmem:[%s3 + $0x3dc] sm:$0xf] %v3383
  %3896 = vst [vmem:[%s3 + $0x3e0] sm:$0xf] %v3384
  %3897 = vst [vmem:[%s3 + $0x3e4] sm:$0xf] %v3385
  %3898 = vst [vmem:[%s3 + $0x3e8] sm:$0xf] %v3386
  %3899 = vst [vmem:[%s3 + $0x3ec] sm:$0xf] %v3387
  %3900 = vst [vmem:[%s3 + $0x3f0] sm:$0xf] %v3388
  %3901 = vst [vmem:[%s3 + $0x3f4] sm:$0xf] %v3389
  %3902 = vst [vmem:[%s3 + $0x3f8] sm:$0xf] %v3390
  %3903 = vst [vmem:[%s3 + $0x3fc] sm:$0xf] %v3391
  // Predicated region
  $region14: #{discriminator_forward.8} parent=0 // pred_check
    _
  $region15: #{discriminator_forward.8} parent=0 // pred_check_branch
    %3905 = sbr.rel (0) target = $region17
  $region16: #{discriminator_forward.8} parent=0 // pred_region
    _
  $region17: #{discriminator_forward.8} parent=0 // pred_fallthru
    _
  // Predicated region
  $region18: #{discriminator_forward.8} parent=0 // pred_check
    _
  $region19: #{discriminator_forward.8} parent=0 // pred_check_branch
    %3907 = sbr.rel (0) target = $region21
  $region20: #{discriminator_forward.8} parent=0 // pred_region
    _
  $region21: #{discriminator_forward.8} parent=0 // pred_fallthru
    _

// kernel: discriminator_forward.10
$region0: #{discriminator_forward.10}
  #allocation0 [shape = 'u32[]', space=smem, size = 0x4, offset = 0x4, fixed_abs, tag = 'smem constant byte address 0x4 - core index']
  #allocation1 [shape = 'u32[144,128]{1,0:T(1,128)}', space=vmem, size = 0x12000, scoped, tag = 'internal scratch']
  %s0 = inlined_call_operand.vmem [shape: bf16[512,128], index: 0, kind: input, shape index: {}]
  %s1 = inlined_call_operand.vmem [shape: f32[1,128], index: 1, kind: input, shape index: {}]
  %s2 = inlined_call_operand.vmem [shape: f32[1,128], index: 2, kind: input, shape index: {}]
  %s3 = inlined_call_operand.vmem [shape: bf16[512,128], index: 3, kind: output, shape index: {}]
  %s4 = sld [smem:[#allocation0]]
  $region22: #{discriminator_forward.10} parent=0
    _
  %s6 = ssub.s32 1, %s4
  %s7 = scalar_select 0, %s6, %s4
  // Predicated region
  $region2: #{discriminator_forward.10} parent=0 // pred_check
    _
  $region3: #{discriminator_forward.10} parent=0 // pred_check_branch
    %9 = sbr.rel (0) target = $region5
  $region4: #{discriminator_forward.10} parent=0 // pred_region
    _
  $region5: #{discriminator_forward.10} parent=0 // pred_fallthru
    _
  // Predicated region
  $region6: #{discriminator_forward.10} parent=0 // pred_check
    _
  $region7: #{discriminator_forward.10} parent=0 // pred_check_branch
    %11 = sbr.rel (0) target = $region9
  $region8: #{discriminator_forward.10} parent=0 // pred_region
    _
  $region9: #{discriminator_forward.10} parent=0 // pred_fallthru
    _
  // Predicated region
  $region10: #{discriminator_forward.10} parent=0 // pred_check
    _
  $region11: #{discriminator_forward.10} parent=0 // pred_check_branch
    %13 = sbr.rel (0) target = $region13
  $region12: #{discriminator_forward.10} parent=0 // pred_region
    _
  $region13: #{discriminator_forward.10} parent=0 // pred_fallthru
    _
  %v14 = vld [vmem:[%s0] sm:$0xf]
  %v15 = vld [vmem:[%s0 + $0x4] sm:$0xf]
  %v16 = vld [vmem:[%s0 + $0x8] sm:$0xf]
  %v17 = vld [vmem:[%s0 + $0xc] sm:$0xf]
  %v18 = vld [vmem:[%s0 + $0x10] sm:$0xf]
  %v19 = vld [vmem:[%s0 + $0x14] sm:$0xf]
  %v20 = vld [vmem:[%s0 + $0x18] sm:$0xf]
  %v21 = vld [vmem:[%s0 + $0x1c] sm:$0xf]
  %v22 = vld [vmem:[%s0 + $0x20] sm:$0xf]
  %v23 = vld [vmem:[%s0 + $0x24] sm:$0xf]
  %v24 = vld [vmem:[%s0 + $0x28] sm:$0xf]
  %v25 = vld [vmem:[%s0 + $0x2c] sm:$0xf]
  %v26 = vld [vmem:[%s0 + $0x30] sm:$0xf]
  %v27 = vld [vmem:[%s0 + $0x34] sm:$0xf]
  %v28 = vld [vmem:[%s0 + $0x38] sm:$0xf]
  %v29 = vld [vmem:[%s0 + $0x3c] sm:$0xf]
  %v30 = vld [vmem:[%s0 + $0x40] sm:$0xf]
  %v31 = vld [vmem:[%s0 + $0x44] sm:$0xf]
  %v32 = vld [vmem:[%s0 + $0x48] sm:$0xf]
  %v33 = vld [vmem:[%s0 + $0x4c] sm:$0xf]
  %v34 = vld [vmem:[%s0 + $0x50] sm:$0xf]
  %v35 = vld [vmem:[%s0 + $0x54] sm:$0xf]
  %v36 = vld [vmem:[%s0 + $0x58] sm:$0xf]
  %v37 = vld [vmem:[%s0 + $0x5c] sm:$0xf]
  %v38 = vld [vmem:[%s0 + $0x60] sm:$0xf]
  %v39 = vld [vmem:[%s0 + $0x64] sm:$0xf]
  %v40 = vld [vmem:[%s0 + $0x68] sm:$0xf]
  %v41 = vld [vmem:[%s0 + $0x6c] sm:$0xf]
  %v42 = vld [vmem:[%s0 + $0x70] sm:$0xf]
  %v43 = vld [vmem:[%s0 + $0x74] sm:$0xf]
  %v44 = vld [vmem:[%s0 + $0x78] sm:$0xf]
  %v45 = vld [vmem:[%s0 + $0x7c] sm:$0xf]
  %v46 = vld [vmem:[%s0 + $0x80] sm:$0xf]
  %v47 = vld [vmem:[%s0 + $0x84] sm:$0xf]
  %v48 = vld [vmem:[%s0 + $0x88] sm:$0xf]
  %v49 = vld [vmem:[%s0 + $0x8c] sm:$0xf]
  %v50 = vld [vmem:[%s0 + $0x90] sm:$0xf]
  %v51 = vld [vmem:[%s0 + $0x94] sm:$0xf]
  %v52 = vld [vmem:[%s0 + $0x98] sm:$0xf]
  %v53 = vld [vmem:[%s0 + $0x9c] sm:$0xf]
  %v54 = vld [vmem:[%s0 + $0xa0] sm:$0xf]
  %v55 = vld [vmem:[%s0 + $0xa4] sm:$0xf]
  %v56 = vld [vmem:[%s0 + $0xa8] sm:$0xf]
  %v57 = vld [vmem:[%s0 + $0xac] sm:$0xf]
  %v58 = vld [vmem:[%s0 + $0xb0] sm:$0xf]
  %v59 = vld [vmem:[%s0 + $0xb4] sm:$0xf]
  %v60 = vld [vmem:[%s0 + $0xb8] sm:$0xf]
  %v61 = vld [vmem:[%s0 + $0xbc] sm:$0xf]
  %v62 = vld [vmem:[%s0 + $0xc0] sm:$0xf]
  %v63 = vld [vmem:[%s0 + $0xc4] sm:$0xf]
  %v64 = vld [vmem:[%s0 + $0xc8] sm:$0xf]
  %v65 = vld [vmem:[%s0 + $0xcc] sm:$0xf]
  %v66 = vld [vmem:[%s0 + $0xd0] sm:$0xf]
  %v67 = vld [vmem:[%s0 + $0xd4] sm:$0xf]
  %v68 = vld [vmem:[%s0 + $0xd8] sm:$0xf]
  %v69 = vld [vmem:[%s0 + $0xdc] sm:$0xf]
  %v70 = vld [vmem:[%s0 + $0xe0] sm:$0xf]
  %v71 = vld [vmem:[%s0 + $0xe4] sm:$0xf]
  %v72 = vld [vmem:[%s0 + $0xe8] sm:$0xf]
  %v73 = vld [vmem:[%s0 + $0xec] sm:$0xf]
  %v74 = vld [vmem:[%s0 + $0xf0] sm:$0xf]
  %v75 = vld [vmem:[%s0 + $0xf4] sm:$0xf]
  %v76 = vld [vmem:[%s0 + $0xf8] sm:$0xf]
  %v77 = vld [vmem:[%s0 + $0xfc] sm:$0xf]
  %v78 = vunpack.c.l.bf16 %v14
  %v79 = vunpack.c.l.bf16 %v15
  %v80 = vunpack.c.l.bf16 %v16
  %v81 = vunpack.c.l.bf16 %v17
  %v82 = vunpack.c.l.bf16 %v18
  %v83 = vunpack.c.l.bf16 %v19
  %v84 = vunpack.c.l.bf16 %v20
  %v85 = vunpack.c.l.bf16 %v21
  %v86 = vunpack.c.l.bf16 %v22
  %v87 = vunpack.c.l.bf16 %v23
  %v88 = vunpack.c.l.bf16 %v24
  %v89 = vunpack.c.l.bf16 %v25
  %v90 = vunpack.c.l.bf16 %v26
  %v91 = vunpack.c.l.bf16 %v27
  %v92 = vunpack.c.l.bf16 %v28
  %v93 = vunpack.c.l.bf16 %v29
  %v94 = vunpack.c.l.bf16 %v30
  %v95 = vunpack.c.l.bf16 %v31
  %v96 = vunpack.c.l.bf16 %v32
  %v97 = vunpack.c.l.bf16 %v33
  %v98 = vunpack.c.l.bf16 %v34
  %v99 = vunpack.c.l.bf16 %v35
  %v100 = vunpack.c.l.bf16 %v36
  %v101 = vunpack.c.l.bf16 %v37
  %v102 = vunpack.c.l.bf16 %v38
  %v103 = vunpack.c.l.bf16 %v39
  %v104 = vunpack.c.l.bf16 %v40
  %v105 = vunpack.c.l.bf16 %v41
  %v106 = vunpack.c.l.bf16 %v42
  %v107 = vunpack.c.l.bf16 %v43
  %v108 = vunpack.c.l.bf16 %v44
  %v109 = vunpack.c.l.bf16 %v45
  %v110 = vunpack.c.l.bf16 %v46
  %v111 = vunpack.c.l.bf16 %v47
  %v112 = vunpack.c.l.bf16 %v48
  %v113 = vunpack.c.l.bf16 %v49
  %v114 = vunpack.c.l.bf16 %v50
  %v115 = vunpack.c.l.bf16 %v51
  %v116 = vunpack.c.l.bf16 %v52
  %v117 = vunpack.c.l.bf16 %v53
  %v118 = vunpack.c.l.bf16 %v54
  %v119 = vunpack.c.l.bf16 %v55
  %v120 = vunpack.c.l.bf16 %v56
  %v121 = vunpack.c.l.bf16 %v57
  %v122 = vunpack.c.l.bf16 %v58
  %v123 = vunpack.c.l.bf16 %v59
  %v124 = vunpack.c.l.bf16 %v60
  %v125 = vunpack.c.l.bf16 %v61
  %v126 = vunpack.c.l.bf16 %v62
  %v127 = vunpack.c.l.bf16 %v63
  %v128 = vunpack.c.l.bf16 %v64
  %v129 = vunpack.c.l.bf16 %v65
  %v130 = vunpack.c.l.bf16 %v66
  %v131 = vunpack.c.l.bf16 %v67
  %v132 = vunpack.c.l.bf16 %v68
  %v133 = vunpack.c.l.bf16 %v69
  %v134 = vunpack.c.l.bf16 %v70
  %v135 = vunpack.c.l.bf16 %v71
  %v136 = vunpack.c.l.bf16 %v72
  %v137 = vunpack.c.l.bf16 %v73
  %v138 = vunpack.c.l.bf16 %v74
  %v139 = vunpack.c.l.bf16 %v75
  %v140 = vunpack.c.l.bf16 %v76
  %v141 = vunpack.c.l.bf16 %v77
  %v142 = vld [vmem:[%s1] sm:$0x1]
  %v144 = vlaneseq
  %v145 = vshrl.u32 %v144, 7
  %v146 = vsub.s32 0, %v145
  %v147 = vrot.slane %v142, %v146
  %v149 = vmul.f32 %v78, %v147
  %v150 = vmul.f32 %v79, %v147
  %v151 = vmul.f32 %v80, %v147
  %v152 = vmul.f32 %v81, %v147
  %v153 = vmul.f32 %v82, %v147
  %v154 = vmul.f32 %v83, %v147
  %v155 = vmul.f32 %v84, %v147
  %v156 = vmul.f32 %v85, %v147
  %v157 = vmul.f32 %v86, %v147
  %v158 = vmul.f32 %v87, %v147
  %v159 = vmul.f32 %v88, %v147
  %v160 = vmul.f32 %v89, %v147
  %v161 = vmul.f32 %v90, %v147
  %v162 = vmul.f32 %v91, %v147
  %v163 = vmul.f32 %v92, %v147
  %v164 = vmul.f32 %v93, %v147
  %v165 = vmul.f32 %v94, %v147
  %v166 = vmul.f32 %v95, %v147
  %v167 = vmul.f32 %v96, %v147
  %v168 = vmul.f32 %v97, %v147
  %v169 = vmul.f32 %v98, %v147
  %v170 = vmul.f32 %v99, %v147
  %v171 = vmul.f32 %v100, %v147
  %v172 = vmul.f32 %v101, %v147
  %v173 = vmul.f32 %v102, %v147
  %v174 = vmul.f32 %v103, %v147
  %v175 = vmul.f32 %v104, %v147
  %v176 = vmul.f32 %v105, %v147
  %v177 = vmul.f32 %v106, %v147
  %v178 = vmul.f32 %v107, %v147
  %v179 = vmul.f32 %v108, %v147
  %v180 = vmul.f32 %v109, %v147
  %v181 = vmul.f32 %v110, %v147
  %v182 = vmul.f32 %v111, %v147
  %v183 = vmul.f32 %v112, %v147
  %v184 = vmul.f32 %v113, %v147
  %v185 = vmul.f32 %v114, %v147
  %v186 = vmul.f32 %v115, %v147
  %v187 = vmul.f32 %v116, %v147
  %v188 = vmul.f32 %v117, %v147
  %v189 = vmul.f32 %v118, %v147
  %v190 = vmul.f32 %v119, %v147
  %v191 = vmul.f32 %v120, %v147
  %v192 = vmul.f32 %v121, %v147
  %v193 = vmul.f32 %v122, %v147
  %v194 = vmul.f32 %v123, %v147
  %v195 = vmul.f32 %v124, %v147
  %v196 = vmul.f32 %v125, %v147
  %v197 = vmul.f32 %v126, %v147
  %v198 = vmul.f32 %v127, %v147
  %v199 = vmul.f32 %v128, %v147
  %v200 = vmul.f32 %v129, %v147
  %v201 = vmul.f32 %v130, %v147
  %v202 = vmul.f32 %v131, %v147
  %v203 = vmul.f32 %v132, %v147
  %v204 = vmul.f32 %v133, %v147
  %v205 = vmul.f32 %v134, %v147
  %v206 = vmul.f32 %v135, %v147
  %v207 = vmul.f32 %v136, %v147
  %v208 = vmul.f32 %v137, %v147
  %v209 = vmul.f32 %v138, %v147
  %v210 = vmul.f32 %v139, %v147
  %v211 = vmul.f32 %v140, %v147
  %v212 = vmul.f32 %v141, %v147
  %v213 = vld [vmem:[%s2] sm:$0x1]
  %v215 = vlaneseq
  %v216 = vshrl.u32 %v215, 7
  %v217 = vsub.s32 0, %v216
  %v218 = vrot.slane %v213, %v217
  %v220 = vadd.f32 %v149, %v218
  %v221 = vadd.f32 %v150, %v218
  %v222 = vadd.f32 %v151, %v218
  %v223 = vadd.f32 %v152, %v218
  %v224 = vadd.f32 %v153, %v218
  %v225 = vadd.f32 %v154, %v218
  %v226 = vadd.f32 %v155, %v218
  %v227 = vadd.f32 %v156, %v218
  %v228 = vadd.f32 %v157, %v218
  %v229 = vadd.f32 %v158, %v218
  %v230 = vadd.f32 %v159, %v218
  %v231 = vadd.f32 %v160, %v218
  %v232 = vadd.f32 %v161, %v218
  %v233 = vadd.f32 %v162, %v218
  %v234 = vadd.f32 %v163, %v218
  %v235 = vadd.f32 %v164, %v218
  %v236 = vadd.f32 %v165, %v218
  %v237 = vadd.f32 %v166, %v218
  %v238 = vadd.f32 %v167, %v218
  %v239 = vadd.f32 %v168, %v218
  %v240 = vadd.f32 %v169, %v218
  %v241 = vadd.f32 %v170, %v218
  %v242 = vadd.f32 %v171, %v218
  %v243 = vadd.f32 %v172, %v218
  %v244 = vadd.f32 %v173, %v218
  %v245 = vadd.f32 %v174, %v218
  %v246 = vadd.f32 %v175, %v218
  %v247 = vadd.f32 %v176, %v218
  %v248 = vadd.f32 %v177, %v218
  %v249 = vadd.f32 %v178, %v218
  %v250 = vadd.f32 %v179, %v218
  %v251 = vadd.f32 %v180, %v218
  %v252 = vadd.f32 %v181, %v218
  %v253 = vadd.f32 %v182, %v218
  %v254 = vadd.f32 %v183, %v218
  %v255 = vadd.f32 %v184, %v218
  %v256 = vadd.f32 %v185, %v218
  %v257 = vadd.f32 %v186, %v218
  %v258 = vadd.f32 %v187, %v218
  %v259 = vadd.f32 %v188, %v218
  %v260 = vadd.f32 %v189, %v218
  %v261 = vadd.f32 %v190, %v218
  %v262 = vadd.f32 %v191, %v218
  %v263 = vadd.f32 %v192, %v218
  %v264 = vadd.f32 %v193, %v218
  %v265 = vadd.f32 %v194, %v218
  %v266 = vadd.f32 %v195, %v218
  %v267 = vadd.f32 %v196, %v218
  %v268 = vadd.f32 %v197, %v218
  %v269 = vadd.f32 %v198, %v218
  %v270 = vadd.f32 %v199, %v218
  %v271 = vadd.f32 %v200, %v218
  %v272 = vadd.f32 %v201, %v218
  %v273 = vadd.f32 %v202, %v218
  %v274 = vadd.f32 %v203, %v218
  %v275 = vadd.f32 %v204, %v218
  %v276 = vadd.f32 %v205, %v218
  %v277 = vadd.f32 %v206, %v218
  %v278 = vadd.f32 %v207, %v218
  %v279 = vadd.f32 %v208, %v218
  %v280 = vadd.f32 %v209, %v218
  %v281 = vadd.f32 %v210, %v218
  %v282 = vadd.f32 %v211, %v218
  %v283 = vadd.f32 %v212, %v218
  %v284 = vmax.f32 %v220, 0.0
  %v285 = vmax.f32 %v221, 0.0
  %v286 = vmax.f32 %v222, 0.0
  %v287 = vmax.f32 %v223, 0.0
  %v288 = vmax.f32 %v224, 0.0
  %v289 = vmax.f32 %v225, 0.0
  %v290 = vmax.f32 %v226, 0.0
  %v291 = vmax.f32 %v227, 0.0
  %v292 = vmax.f32 %v228, 0.0
  %v293 = vmax.f32 %v229, 0.0
  %v294 = vmax.f32 %v230, 0.0
  %v295 = vmax.f32 %v231, 0.0
  %v296 = vmax.f32 %v232, 0.0
  %v297 = vmax.f32 %v233, 0.0
  %v298 = vmax.f32 %v234, 0.0
  %v299 = vmax.f32 %v235, 0.0
  %v300 = vmax.f32 %v236, 0.0
  %v301 = vmax.f32 %v237, 0.0
  %v302 = vmax.f32 %v238, 0.0
  %v303 = vmax.f32 %v239, 0.0
  %v304 = vmax.f32 %v240, 0.0
  %v305 = vmax.f32 %v241, 0.0
  %v306 = vmax.f32 %v242, 0.0
  %v307 = vmax.f32 %v243, 0.0
  %v308 = vmax.f32 %v244, 0.0
  %v309 = vmax.f32 %v245, 0.0
  %v310 = vmax.f32 %v246, 0.0
  %v311 = vmax.f32 %v247, 0.0
  %v312 = vmax.f32 %v248, 0.0
  %v313 = vmax.f32 %v249, 0.0
  %v314 = vmax.f32 %v250, 0.0
  %v315 = vmax.f32 %v251, 0.0
  %v316 = vmax.f32 %v252, 0.0
  %v317 = vmax.f32 %v253, 0.0
  %v318 = vmax.f32 %v254, 0.0
  %v319 = vmax.f32 %v255, 0.0
  %v320 = vmax.f32 %v256, 0.0
  %v321 = vmax.f32 %v257, 0.0
  %v322 = vmax.f32 %v258, 0.0
  %v323 = vmax.f32 %v259, 0.0
  %v324 = vmax.f32 %v260, 0.0
  %v325 = vmax.f32 %v261, 0.0
  %v326 = vmax.f32 %v262, 0.0
  %v327 = vmax.f32 %v263, 0.0
  %v328 = vmax.f32 %v264, 0.0
  %v329 = vmax.f32 %v265, 0.0
  %v330 = vmax.f32 %v266, 0.0
  %v331 = vmax.f32 %v267, 0.0
  %v332 = vmax.f32 %v268, 0.0
  %v333 = vmax.f32 %v269, 0.0
  %v334 = vmax.f32 %v270, 0.0
  %v335 = vmax.f32 %v271, 0.0
  %v336 = vmax.f32 %v272, 0.0
  %v337 = vmax.f32 %v273, 0.0
  %v338 = vmax.f32 %v274, 0.0
  %v339 = vmax.f32 %v275, 0.0
  %v340 = vmax.f32 %v276, 0.0
  %v341 = vmax.f32 %v277, 0.0
  %v342 = vmax.f32 %v278, 0.0
  %v343 = vmax.f32 %v279, 0.0
  %v344 = vmax.f32 %v280, 0.0
  %v345 = vmax.f32 %v281, 0.0
  %v346 = vmax.f32 %v282, 0.0
  %v347 = vmax.f32 %v283, 0.0
  %v348 = vpack.c.bf16 %v285, %v284
  %v349 = vpack.c.bf16 %v287, %v286
  %v350 = vpack.c.bf16 %v289, %v288
  %v351 = vpack.c.bf16 %v291, %v290
  %v352 = vpack.c.bf16 %v293, %v292
  %v353 = vpack.c.bf16 %v295, %v294
  %v354 = vpack.c.bf16 %v297, %v296
  %v355 = vpack.c.bf16 %v299, %v298
  %v356 = vpack.c.bf16 %v301, %v300
  %v357 = vpack.c.bf16 %v303, %v302
  %v358 = vpack.c.bf16 %v305, %v304
  %v359 = vpack.c.bf16 %v307, %v306
  %v360 = vpack.c.bf16 %v309, %v308
  %v361 = vpack.c.bf16 %v311, %v310
  %v362 = vpack.c.bf16 %v313, %v312
  %v363 = vpack.c.bf16 %v315, %v314
  %v364 = vpack.c.bf16 %v317, %v316
  %v365 = vpack.c.bf16 %v319, %v318
  %v366 = vpack.c.bf16 %v321, %v320
  %v367 = vpack.c.bf16 %v323, %v322
  %v368 = vpack.c.bf16 %v325, %v324
  %v369 = vpack.c.bf16 %v327, %v326
  %v370 = vpack.c.bf16 %v329, %v328
  %v371 = vpack.c.bf16 %v331, %v330
  %v372 = vpack.c.bf16 %v333, %v332
  %v373 = vpack.c.bf16 %v335, %v334
  %v374 = vpack.c.bf16 %v337, %v336
  %v375 = vpack.c.bf16 %v339, %v338
  %v376 = vpack.c.bf16 %v341, %v340
  %v377 = vpack.c.bf16 %v343, %v342
  %v378 = vpack.c.bf16 %v345, %v344
  %v379 = vpack.c.bf16 %v347, %v346
  %v412 = vunpack.c.l.b16 %v348
  %v413 = vunpack.c.h.b16 %v348
  %v414 = vunpack.c.l.b16 %v349
  %v415 = vunpack.c.h.b16 %v349
  %v416 = vunpack.c.l.b16 %v350
  %v417 = vunpack.c.h.b16 %v350
  %v418 = vunpack.c.l.b16 %v351
  %v419 = vunpack.c.h.b16 %v351
  %v420 = vunpack.c.l.b16 %v352
  %v421 = vunpack.c.h.b16 %v352
  %v422 = vunpack.c.l.b16 %v353
  %v423 = vunpack.c.h.b16 %v353
  %v424 = vunpack.c.l.b16 %v354
  %v425 = vunpack.c.h.b16 %v354
  %v426 = vunpack.c.l.b16 %v355
  %v427 = vunpack.c.h.b16 %v355
  %v428 = vunpack.c.l.b16 %v356
  %v429 = vunpack.c.h.b16 %v356
  %v430 = vunpack.c.l.b16 %v357
  %v431 = vunpack.c.h.b16 %v357
  %v432 = vunpack.c.l.b16 %v358
  %v433 = vunpack.c.h.b16 %v358
  %v434 = vunpack.c.l.b16 %v359
  %v435 = vunpack.c.h.b16 %v359
  %v436 = vunpack.c.l.b16 %v360
  %v437 = vunpack.c.h.b16 %v360
  %v438 = vunpack.c.l.b16 %v361
  %v439 = vunpack.c.h.b16 %v361
  %v440 = vunpack.c.l.b16 %v362
  %v441 = vunpack.c.h.b16 %v362
  %v442 = vunpack.c.l.b16 %v363
  %v443 = vunpack.c.h.b16 %v363
  %v444 = vunpack.c.l.b16 %v364
  %v445 = vunpack.c.h.b16 %v364
  %v446 = vunpack.c.l.b16 %v365
  %v447 = vunpack.c.h.b16 %v365
  %v448 = vunpack.c.l.b16 %v366
  %v449 = vunpack.c.h.b16 %v366
  %v450 = vunpack.c.l.b16 %v367
  %v451 = vunpack.c.h.b16 %v367
  %v452 = vunpack.c.l.b16 %v368
  %v453 = vunpack.c.h.b16 %v368
  %v454 = vunpack.c.l.b16 %v369
  %v455 = vunpack.c.h.b16 %v369
  %v456 = vunpack.c.l.b16 %v370
  %v457 = vunpack.c.h.b16 %v370
  %v458 = vunpack.c.l.b16 %v371
  %v459 = vunpack.c.h.b16 %v371
  %v460 = vunpack.c.l.b16 %v372
  %v461 = vunpack.c.h.b16 %v372
  %v462 = vunpack.c.l.b16 %v373
  %v463 = vunpack.c.h.b16 %v373
  %v464 = vunpack.c.l.b16 %v374
  %v465 = vunpack.c.h.b16 %v374
  %v466 = vunpack.c.l.b16 %v375
  %v467 = vunpack.c.h.b16 %v375
  %v468 = vunpack.c.l.b16 %v376
  %v469 = vunpack.c.h.b16 %v376
  %v470 = vunpack.c.l.b16 %v377
  %v471 = vunpack.c.h.b16 %v377
  %v472 = vunpack.c.l.b16 %v378
  %v473 = vunpack.c.h.b16 %v378
  %v474 = vunpack.c.l.b16 %v379
  %v475 = vunpack.c.h.b16 %v379
  %v476 = vpack.c.b16 %v412, %v412
  %v477 = vpack.c.b16 %v413, %v413
  %v478 = vpack.c.b16 %v414, %v414
  %v479 = vpack.c.b16 %v415, %v415
  %v480 = vpack.c.b16 %v416, %v416
  %v481 = vpack.c.b16 %v417, %v417
  %v482 = vpack.c.b16 %v418, %v418
  %v483 = vpack.c.b16 %v419, %v419
  %v484 = vpack.c.b16 %v420, %v420
  %v485 = vpack.c.b16 %v421, %v421
  %v486 = vpack.c.b16 %v422, %v422
  %v487 = vpack.c.b16 %v423, %v423
  %v488 = vpack.c.b16 %v424, %v424
  %v489 = vpack.c.b16 %v425, %v425
  %v490 = vpack.c.b16 %v426, %v426
  %v491 = vpack.c.b16 %v427, %v427
  %v492 = vpack.c.b16 %v428, %v428
  %v493 = vpack.c.b16 %v429, %v429
  %v494 = vpack.c.b16 %v430, %v430
  %v495 = vpack.c.b16 %v431, %v431
  %v496 = vpack.c.b16 %v432, %v432
  %v497 = vpack.c.b16 %v433, %v433
  %v498 = vpack.c.b16 %v434, %v434
  %v499 = vpack.c.b16 %v435, %v435
  %v500 = vpack.c.b16 %v436, %v436
  %v501 = vpack.c.b16 %v437, %v437
  %v502 = vpack.c.b16 %v438, %v438
  %v503 = vpack.c.b16 %v439, %v439
  %v504 = vpack.c.b16 %v440, %v440
  %v505 = vpack.c.b16 %v441, %v441
  %v506 = vpack.c.b16 %v442, %v442
  %v507 = vpack.c.b16 %v443, %v443
  %v508 = vpack.c.b16 %v444, %v444
  %v509 = vpack.c.b16 %v445, %v445
  %v510 = vpack.c.b16 %v446, %v446
  %v511 = vpack.c.b16 %v447, %v447
  %v512 = vpack.c.b16 %v448, %v448
  %v513 = vpack.c.b16 %v449, %v449
  %v514 = vpack.c.b16 %v450, %v450
  %v515 = vpack.c.b16 %v451, %v451
  %v516 = vpack.c.b16 %v452, %v452
  %v517 = vpack.c.b16 %v453, %v453
  %v518 = vpack.c.b16 %v454, %v454
  %v519 = vpack.c.b16 %v455, %v455
  %v520 = vpack.c.b16 %v456, %v456
  %v521 = vpack.c.b16 %v457, %v457
  %v522 = vpack.c.b16 %v458, %v458
  %v523 = vpack.c.b16 %v459, %v459
  %v524 = vpack.c.b16 %v460, %v460
  %v525 = vpack.c.b16 %v461, %v461
  %v526 = vpack.c.b16 %v462, %v462
  %v527 = vpack.c.b16 %v463, %v463
  %v528 = vpack.c.b16 %v464, %v464
  %v529 = vpack.c.b16 %v465, %v465
  %v530 = vpack.c.b16 %v466, %v466
  %v531 = vpack.c.b16 %v467, %v467
  %v532 = vpack.c.b16 %v468, %v468
  %v533 = vpack.c.b16 %v469, %v469
  %v534 = vpack.c.b16 %v470, %v470
  %v535 = vpack.c.b16 %v471, %v471
  %v536 = vpack.c.b16 %v472, %v472
  %v537 = vpack.c.b16 %v473, %v473
  %v538 = vpack.c.b16 %v474, %v474
  %v539 = vpack.c.b16 %v475, %v475
  %604 = vst [vmem:[%s3] sm:$0xf] %v476
  %605 = vst [vmem:[%s3 + $0x4] sm:$0xf] %v477
  %606 = vst [vmem:[%s3 + $0x8] sm:$0xf] %v478
  %607 = vst [vmem:[%s3 + $0xc] sm:$0xf] %v479
  %608 = vst [vmem:[%s3 + $0x10] sm:$0xf] %v480
  %609 = vst [vmem:[%s3 + $0x14] sm:$0xf] %v481
  %610 = vst [vmem:[%s3 + $0x18] sm:$0xf] %v482
  %611 = vst [vmem:[%s3 + $0x1c] sm:$0xf] %v483
  %612 = vst [vmem:[%s3 + $0x20] sm:$0xf] %v484
  %613 = vst [vmem:[%s3 + $0x24] sm:$0xf] %v485
  %614 = vst [vmem:[%s3 + $0x28] sm:$0xf] %v486
  %615 = vst [vmem:[%s3 + $0x2c] sm:$0xf] %v487
  %616 = vst [vmem:[%s3 + $0x30] sm:$0xf] %v488
  %617 = vst [vmem:[%s3 + $0x34] sm:$0xf] %v489
  %618 = vst [vmem:[%s3 + $0x38] sm:$0xf] %v490
  %619 = vst [vmem:[%s3 + $0x3c] sm:$0xf] %v491
  %620 = vst [vmem:[%s3 + $0x40] sm:$0xf] %v492
  %621 = vst [vmem:[%s3 + $0x44] sm:$0xf] %v493
  %622 = vst [vmem:[%s3 + $0x48] sm:$0xf] %v494
  %623 = vst [vmem:[%s3 + $0x4c] sm:$0xf] %v495
  %624 = vst [vmem:[%s3 + $0x50] sm:$0xf] %v496
  %625 = vst [vmem:[%s3 + $0x54] sm:$0xf] %v497
  %626 = vst [vmem:[%s3 + $0x58] sm:$0xf] %v498
  %627 = vst [vmem:[%s3 + $0x5c] sm:$0xf] %v499
  %628 = vst [vmem:[%s3 + $0x60] sm:$0xf] %v500
  %629 = vst [vmem:[%s3 + $0x64] sm:$0xf] %v501
  %630 = vst [vmem:[%s3 + $0x68] sm:$0xf] %v502
  %631 = vst [vmem:[%s3 + $0x6c] sm:$0xf] %v503
  %632 = vst [vmem:[%s3 + $0x70] sm:$0xf] %v504
  %633 = vst [vmem:[%s3 + $0x74] sm:$0xf] %v505
  %634 = vst [vmem:[%s3 + $0x78] sm:$0xf] %v506
  %635 = vst [vmem:[%s3 + $0x7c] sm:$0xf] %v507
  %636 = vst [vmem:[%s3 + $0x80] sm:$0xf] %v508
  %637 = vst [vmem:[%s3 + $0x84] sm:$0xf] %v509
  %638 = vst [vmem:[%s3 + $0x88] sm:$0xf] %v510
  %639 = vst [vmem:[%s3 + $0x8c] sm:$0xf] %v511
  %640 = vst [vmem:[%s3 + $0x90] sm:$0xf] %v512
  %641 = vst [vmem:[%s3 + $0x94] sm:$0xf] %v513
  %642 = vst [vmem:[%s3 + $0x98] sm:$0xf] %v514
  %643 = vst [vmem:[%s3 + $0x9c] sm:$0xf] %v515
  %644 = vst [vmem:[%s3 + $0xa0] sm:$0xf] %v516
  %645 = vst [vmem:[%s3 + $0xa4] sm:$0xf] %v517
  %646 = vst [vmem:[%s3 + $0xa8] sm:$0xf] %v518
  %647 = vst [vmem:[%s3 + $0xac] sm:$0xf] %v519
  %648 = vst [vmem:[%s3 + $0xb0] sm:$0xf] %v520
  %649 = vst [vmem:[%s3 + $0xb4] sm:$0xf] %v521
  %650 = vst [vmem:[%s3 + $0xb8] sm:$0xf] %v522
  %651 = vst [vmem:[%s3 + $0xbc] sm:$0xf] %v523
  %652 = vst [vmem:[%s3 + $0xc0] sm:$0xf] %v524
  %653 = vst [vmem:[%s3 + $0xc4] sm:$0xf] %v525
  %654 = vst [vmem:[%s3 + $0xc8] sm:$0xf] %v526
  %655 = vst [vmem:[%s3 + $0xcc] sm:$0xf] %v527
  %656 = vst [vmem:[%s3 + $0xd0] sm:$0xf] %v528
  %657 = vst [vmem:[%s3 + $0xd4] sm:$0xf] %v529
  %658 = vst [vmem:[%s3 + $0xd8] sm:$0xf] %v530
  %659 = vst [vmem:[%s3 + $0xdc] sm:$0xf] %v531
  %660 = vst [vmem:[%s3 + $0xe0] sm:$0xf] %v532
  %661 = vst [vmem:[%s3 + $0xe4] sm:$0xf] %v533
  %662 = vst [vmem:[%s3 + $0xe8] sm:$0xf] %v534
  %663 = vst [vmem:[%s3 + $0xec] sm:$0xf] %v535
  %664 = vst [vmem:[%s3 + $0xf0] sm:$0xf] %v536
  %665 = vst [vmem:[%s3 + $0xf4] sm:$0xf] %v537
  %666 = vst [vmem:[%s3 + $0xf8] sm:$0xf] %v538
  %667 = vst [vmem:[%s3 + $0xfc] sm:$0xf] %v539
  // Predicated region
  $region14: #{discriminator_forward.10} parent=0 // pred_check
    _
  $region15: #{discriminator_forward.10} parent=0 // pred_check_branch
    %669 = sbr.rel (0) target = $region17
  $region16: #{discriminator_forward.10} parent=0 // pred_region
    _
  $region17: #{discriminator_forward.10} parent=0 // pred_fallthru
    _
  // Predicated region
  $region18: #{discriminator_forward.10} parent=0 // pred_check
    _
  $region19: #{discriminator_forward.10} parent=0 // pred_check_branch
    %671 = sbr.rel (0) target = $region21
  $region20: #{discriminator_forward.10} parent=0 // pred_region
    _
  $region21: #{discriminator_forward.10} parent=0 // pred_fallthru
    _

// kernel: discriminator_forward.9
$region0: #{discriminator_forward.9}
  #allocation0 [shape = 'u32[]', space=smem, size = 0x4, offset = 0x4, fixed_abs, tag = 'smem constant byte address 0x4 - core index']
  #allocation1 [shape = 'u32[144,128]{1,0:T(1,128)}', space=vmem, size = 0x12000, scoped, tag = 'internal scratch']
  %s0 = inlined_call_operand.vmem [shape: bf16[512,64], index: 0, kind: input, shape index: {}]
  %s1 = inlined_call_operand.vmem [shape: bf16[64,128], index: 1, kind: input, shape index: {}]
  %s2 = inlined_call_operand.vmem [shape: bf16[512,128], index: 2, kind: output, shape index: {0}]
  %s3 = inlined_call_operand.vmem [shape: f32[1,1,128], index: 3, kind: output, shape index: {1}]
  %s4 = inlined_call_operand.vmem [shape: f32[1,1,128], index: 4, kind: output, shape index: {2}]
  %5 = xla_tuple %s2, %s3, %s4
  %s6 = sld [smem:[#allocation0]]
  $region34: #{discriminator_forward.9} parent=0
    _
  %s8 = ssub.s32 1, %s6
  %s9 = scalar_select 0, %s8, %s6
  // Predicated region
  $region2: #{discriminator_forward.9} parent=0 // pred_check
    _
  $region3: #{discriminator_forward.9} parent=0 // pred_check_branch
    %11 = sbr.rel (0) target = $region5
  $region4: #{discriminator_forward.9} parent=0 // pred_region
    _
  $region5: #{discriminator_forward.9} parent=0 // pred_fallthru
    _
  // Predicated region
  $region6: #{discriminator_forward.9} parent=0 // pred_check
    _
  $region7: #{discriminator_forward.9} parent=0 // pred_check_branch
    %13 = sbr.rel (0) target = $region9
  $region8: #{discriminator_forward.9} parent=0 // pred_region
    _
  $region9: #{discriminator_forward.9} parent=0 // pred_fallthru
    _
  %v15 = vld [vmem:[%s0] sm:$0xf]
  %v16 = vld [vmem:[%s0 + $0x4] sm:$0xf]
  %v17 = vld [vmem:[%s0 + $0x8] sm:$0xf]
  %v18 = vld [vmem:[%s0 + $0xc] sm:$0xf]
  %v19 = vld [vmem:[%s0 + $0x10] sm:$0xf]
  %v20 = vld [vmem:[%s0 + $0x14] sm:$0xf]
  %v21 = vld [vmem:[%s0 + $0x18] sm:$0xf]
  %v22 = vld [vmem:[%s0 + $0x1c] sm:$0xf]
  %v23 = vld [vmem:[%s0 + $0x20] sm:$0xf]
  %v24 = vld [vmem:[%s0 + $0x24] sm:$0xf]
  %v25 = vld [vmem:[%s0 + $0x28] sm:$0xf]
  %v26 = vld [vmem:[%s0 + $0x2c] sm:$0xf]
  %v27 = vld [vmem:[%s0 + $0x30] sm:$0xf]
  %v28 = vld [vmem:[%s0 + $0x34] sm:$0xf]
  %v29 = vld [vmem:[%s0 + $0x38] sm:$0xf]
  %v30 = vld [vmem:[%s0 + $0x3c] sm:$0xf]
  %v31 = vld [vmem:[%s0 + $0x40] sm:$0xf]
  %v32 = vld [vmem:[%s0 + $0x44] sm:$0xf]
  %v33 = vld [vmem:[%s0 + $0x48] sm:$0xf]
  %v34 = vld [vmem:[%s0 + $0x4c] sm:$0xf]
  %v35 = vld [vmem:[%s0 + $0x50] sm:$0xf]
  %v36 = vld [vmem:[%s0 + $0x54] sm:$0xf]
  %v37 = vld [vmem:[%s0 + $0x58] sm:$0xf]
  %v38 = vld [vmem:[%s0 + $0x5c] sm:$0xf]
  %v39 = vld [vmem:[%s0 + $0x60] sm:$0xf]
  %v40 = vld [vmem:[%s0 + $0x64] sm:$0xf]
  %v41 = vld [vmem:[%s0 + $0x68] sm:$0xf]
  %v42 = vld [vmem:[%s0 + $0x6c] sm:$0xf]
  %v43 = vld [vmem:[%s0 + $0x70] sm:$0xf]
  %v44 = vld [vmem:[%s0 + $0x74] sm:$0xf]
  %v45 = vld [vmem:[%s0 + $0x78] sm:$0xf]
  %v46 = vld [vmem:[%s0 + $0x7c] sm:$0xf]
  %v47 = vld [vmem:[%s0 + $0x80] sm:$0xf]
  %v48 = vld [vmem:[%s0 + $0x84] sm:$0xf]
  %v49 = vld [vmem:[%s0 + $0x88] sm:$0xf]
  %v50 = vld [vmem:[%s0 + $0x8c] sm:$0xf]
  %v51 = vld [vmem:[%s0 + $0x90] sm:$0xf]
  %v52 = vld [vmem:[%s0 + $0x94] sm:$0xf]
  %v53 = vld [vmem:[%s0 + $0x98] sm:$0xf]
  %v54 = vld [vmem:[%s0 + $0x9c] sm:$0xf]
  %v55 = vld [vmem:[%s0 + $0xa0] sm:$0xf]
  %v56 = vld [vmem:[%s0 + $0xa4] sm:$0xf]
  %v57 = vld [vmem:[%s0 + $0xa8] sm:$0xf]
  %v58 = vld [vmem:[%s0 + $0xac] sm:$0xf]
  %v59 = vld [vmem:[%s0 + $0xb0] sm:$0xf]
  %v60 = vld [vmem:[%s0 + $0xb4] sm:$0xf]
  %v61 = vld [vmem:[%s0 + $0xb8] sm:$0xf]
  %v62 = vld [vmem:[%s0 + $0xbc] sm:$0xf]
  %v63 = vld [vmem:[%s0 + $0xc0] sm:$0xf]
  %v64 = vld [vmem:[%s0 + $0xc4] sm:$0xf]
  %v65 = vld [vmem:[%s0 + $0xc8] sm:$0xf]
  %v66 = vld [vmem:[%s0 + $0xcc] sm:$0xf]
  %v67 = vld [vmem:[%s0 + $0xd0] sm:$0xf]
  %v68 = vld [vmem:[%s0 + $0xd4] sm:$0xf]
  %v69 = vld [vmem:[%s0 + $0xd8] sm:$0xf]
  %v70 = vld [vmem:[%s0 + $0xdc] sm:$0xf]
  %v71 = vld [vmem:[%s0 + $0xe0] sm:$0xf]
  %v72 = vld [vmem:[%s0 + $0xe4] sm:$0xf]
  %v73 = vld [vmem:[%s0 + $0xe8] sm:$0xf]
  %v74 = vld [vmem:[%s0 + $0xec] sm:$0xf]
  %v75 = vld [vmem:[%s0 + $0xf0] sm:$0xf]
  %v76 = vld [vmem:[%s0 + $0xf4] sm:$0xf]
  %v77 = vld [vmem:[%s0 + $0xf8] sm:$0xf]
  %v78 = vld [vmem:[%s0 + $0xfc] sm:$0xf]
  %v79 = vld [vmem:[%s1] sm:$0xf]
  %v80 = vld [vmem:[%s1 + $0x4] sm:$0xf]
  %v81 = vld [vmem:[%s1 + $0x8] sm:$0xf]
  %v82 = vld [vmem:[%s1 + $0xc] sm:$0xf]
  %v83 = vld [vmem:[%s1 + $0x10] sm:$0xf]
  %v84 = vld [vmem:[%s1 + $0x14] sm:$0xf]
  %v85 = vld [vmem:[%s1 + $0x18] sm:$0xf]
  %v86 = vld [vmem:[%s1 + $0x1c] sm:$0xf]
  %v151 = vunpack.c.l.b16 %v15
  %v152 = vunpack.c.l.b16 %v16
  %v153 = vunpack.c.l.b16 %v17
  %v154 = vunpack.c.l.b16 %v18
  %v155 = vunpack.c.l.b16 %v19
  %v156 = vunpack.c.l.b16 %v20
  %v157 = vunpack.c.l.b16 %v21
  %v158 = vunpack.c.l.b16 %v22
  %v159 = vunpack.c.l.b16 %v23
  %v160 = vunpack.c.l.b16 %v24
  %v161 = vunpack.c.l.b16 %v25
  %v162 = vunpack.c.l.b16 %v26
  %v163 = vunpack.c.l.b16 %v27
  %v164 = vunpack.c.l.b16 %v28
  %v165 = vunpack.c.l.b16 %v29
  %v166 = vunpack.c.l.b16 %v30
  %v167 = vunpack.c.l.b16 %v31
  %v168 = vunpack.c.l.b16 %v32
  %v169 = vunpack.c.l.b16 %v33
  %v170 = vunpack.c.l.b16 %v34
  %v171 = vunpack.c.l.b16 %v35
  %v172 = vunpack.c.l.b16 %v36
  %v173 = vunpack.c.l.b16 %v37
  %v174 = vunpack.c.l.b16 %v38
  %v175 = vunpack.c.l.b16 %v39
  %v176 = vunpack.c.l.b16 %v40
  %v177 = vunpack.c.l.b16 %v41
  %v178 = vunpack.c.l.b16 %v42
  %v179 = vunpack.c.l.b16 %v43
  %v180 = vunpack.c.l.b16 %v44
  %v181 = vunpack.c.l.b16 %v45
  %v182 = vunpack.c.l.b16 %v46
  %v183 = vunpack.c.l.b16 %v47
  %v184 = vunpack.c.l.b16 %v48
  %v185 = vunpack.c.l.b16 %v49
  %v186 = vunpack.c.l.b16 %v50
  %v187 = vunpack.c.l.b16 %v51
  %v188 = vunpack.c.l.b16 %v52
  %v189 = vunpack.c.l.b16 %v53
  %v190 = vunpack.c.l.b16 %v54
  %v191 = vunpack.c.l.b16 %v55
  %v192 = vunpack.c.l.b16 %v56
  %v193 = vunpack.c.l.b16 %v57
  %v194 = vunpack.c.l.b16 %v58
  %v195 = vunpack.c.l.b16 %v59
  %v196 = vunpack.c.l.b16 %v60
  %v197 = vunpack.c.l.b16 %v61
  %v198 = vunpack.c.l.b16 %v62
  %v199 = vunpack.c.l.b16 %v63
  %v200 = vunpack.c.l.b16 %v64
  %v201 = vunpack.c.l.b16 %v65
  %v202 = vunpack.c.l.b16 %v66
  %v203 = vunpack.c.l.b16 %v67
  %v204 = vunpack.c.l.b16 %v68
  %v205 = vunpack.c.l.b16 %v69
  %v206 = vunpack.c.l.b16 %v70
  %v207 = vunpack.c.l.b16 %v71
  %v208 = vunpack.c.l.b16 %v72
  %v209 = vunpack.c.l.b16 %v73
  %v210 = vunpack.c.l.b16 %v74
  %v211 = vunpack.c.l.b16 %v75
  %v212 = vunpack.c.l.b16 %v76
  %v213 = vunpack.c.l.b16 %v77
  %v214 = vunpack.c.l.b16 %v78
  %v215 = vpack.c.b16 %v152, %v151
  %v216 = vpack.c.b16 %v154, %v153
  %v217 = vpack.c.b16 %v156, %v155
  %v218 = vpack.c.b16 %v158, %v157
  %v219 = vpack.c.b16 %v160, %v159
  %v220 = vpack.c.b16 %v162, %v161
  %v221 = vpack.c.b16 %v164, %v163
  %v222 = vpack.c.b16 %v166, %v165
  %v223 = vpack.c.b16 %v168, %v167
  %v224 = vpack.c.b16 %v170, %v169
  %v225 = vpack.c.b16 %v172, %v171
  %v226 = vpack.c.b16 %v174, %v173
  %v227 = vpack.c.b16 %v176, %v175
  %v228 = vpack.c.b16 %v178, %v177
  %v229 = vpack.c.b16 %v180, %v179
  %v230 = vpack.c.b16 %v182, %v181
  %v231 = vpack.c.b16 %v184, %v183
  %v232 = vpack.c.b16 %v186, %v185
  %v233 = vpack.c.b16 %v188, %v187
  %v234 = vpack.c.b16 %v190, %v189
  %v235 = vpack.c.b16 %v192, %v191
  %v236 = vpack.c.b16 %v194, %v193
  %v237 = vpack.c.b16 %v196, %v195
  %v238 = vpack.c.b16 %v198, %v197
  %v239 = vpack.c.b16 %v200, %v199
  %v240 = vpack.c.b16 %v202, %v201
  %v241 = vpack.c.b16 %v204, %v203
  %v242 = vpack.c.b16 %v206, %v205
  %v243 = vpack.c.b16 %v208, %v207
  %v244 = vpack.c.b16 %v210, %v209
  %v245 = vpack.c.b16 %v212, %v211
  %v246 = vpack.c.b16 %v214, %v213
  %v255 = vunpack.c.l.b16 %v79
  %v256 = vunpack.c.l.b16 %v80
  %v257 = vunpack.c.l.b16 %v81
  %v258 = vunpack.c.l.b16 %v82
  %v259 = vunpack.c.l.b16 %v83
  %v260 = vunpack.c.l.b16 %v84
  %v261 = vunpack.c.l.b16 %v85
  %v262 = vunpack.c.l.b16 %v86
  %v263 = vpack.c.b16 %v256, %v255
  %v264 = vpack.c.b16 %v258, %v257
  %v265 = vpack.c.b16 %v260, %v259
  %v266 = vpack.c.b16 %v262, %v261
  %vm271 = vcmask 523264
  %v273 = vsel %vm271, %v215, 0
  %v276 = vsel %vm271, %v216, 0
  %v279 = vsel %vm271, %v217, 0
  %v282 = vsel %vm271, %v218, 0
  %v285 = vsel %vm271, %v219, 0
  %v288 = vsel %vm271, %v220, 0
  %v291 = vsel %vm271, %v221, 0
  %v294 = vsel %vm271, %v222, 0
  %v297 = vsel %vm271, %v223, 0
  %v300 = vsel %vm271, %v224, 0
  %v303 = vsel %vm271, %v225, 0
  %v306 = vsel %vm271, %v226, 0
  %v309 = vsel %vm271, %v227, 0
  %v312 = vsel %vm271, %v228, 0
  %v315 = vsel %vm271, %v229, 0
  %v318 = vsel %vm271, %v230, 0
  %v321 = vsel %vm271, %v231, 0
  %v324 = vsel %vm271, %v232, 0
  %v327 = vsel %vm271, %v233, 0
  %v330 = vsel %vm271, %v234, 0
  %v333 = vsel %vm271, %v235, 0
  %v336 = vsel %vm271, %v236, 0
  %v339 = vsel %vm271, %v237, 0
  %v342 = vsel %vm271, %v238, 0
  %v345 = vsel %vm271, %v239, 0
  %v348 = vsel %vm271, %v240, 0
  %v351 = vsel %vm271, %v241, 0
  %v354 = vsel %vm271, %v242, 0
  %v357 = vsel %vm271, %v243, 0
  %v360 = vsel %vm271, %v244, 0
  %v363 = vsel %vm271, %v245, 0
  %v366 = vsel %vm271, %v246, 0
  %368 = vmatprep.subr.bf16.mxu0 0
  %369 = vmatpush1.bf16.msra.mxu0 0
  %370 = vmatprep.subr.bf16.mxu0 0
  %371 = vmatpush1.bf16.msra.mxu0 0
  %372 = vmatprep.subr.bf16.mxu0 0
  %373 = vmatpush1.bf16.msra.mxu0 0
  %374 = vmatprep.subr.bf16.mxu0 0
  %375 = vmatpush1.bf16.msra.mxu0 0
  %376 = vmatprep.subr.bf16.mxu0 0
  %377 = vmatpush1.bf16.msra.mxu0 %v266
  %378 = vmatprep.subr.bf16.mxu0 0
  %379 = vmatpush1.bf16.msra.mxu0 %v265
  %380 = vmatprep.subr.bf16.mxu0 0
  %381 = vmatpush1.bf16.msra.mxu0 %v264
  %382 = vmatprep.subr.bf16.mxu0 0
  %383 = vmatpush1.bf16.msra.mxu0 %v263
  %384 = vmatprep.subr.bf16.mxu0 0
  %385 = vmatpush2.bf16.msra.mxu0 0
  %386 = vmatprep.subr.bf16.mxu0 0
  %387 = vmatpush2.bf16.msra.mxu0 0
  %388 = vmatprep.subr.bf16.mxu0 0
  %389 = vmatpush2.bf16.msra.mxu0 0
  %390 = vmatprep.subr.bf16.mxu0 0
  %391 = vmatpush2.bf16.msra.mxu0 0
  %392 = vmatprep.subr.bf16.mxu0 0
  %393 = vmatpush2.bf16.msra.mxu0 0
  %394 = vmatprep.subr.bf16.mxu0 0
  %395 = vmatpush2.bf16.msra.mxu0 0
  %396 = vmatprep.subr.bf16.mxu0 0
  %397 = vmatpush2.bf16.msra.mxu0 0
  %398 = vmatprep.subr.bf16.mxu0 0
  %399 = vmatpush2.bf16.msra.mxu0 0
  %400 = vmatprep.mubr.bf16.mxu0 0
  %401 = vmatmul.mubr.bf16.gmra.mxu0 %v273
  %v402 = vpop.f32.mrf.mxu0
  %v403 = vadd.f32 0.0, %v402
  %v404 = vpop.f32.mrf.mxu0
  %v405 = vpop.f32.mrf.mxu0
  %v406 = vadd.f32 0.0, %v405
  %v407 = vpop.f32.mrf.mxu0
  %408 = vmatprep.mubr.bf16.mxu0 0
  %409 = vmatmul.mubr.bf16.gmra.mxu0 %v276
  %v410 = vpop.f32.mrf.mxu0
  %v411 = vadd.f32 0.0, %v410
  %v412 = vpop.f32.mrf.mxu0
  %v413 = vpop.f32.mrf.mxu0
  %v414 = vadd.f32 0.0, %v413
  %v415 = vpop.f32.mrf.mxu0
  %416 = vmatprep.mubr.bf16.mxu0 0
  %417 = vmatmul.mubr.bf16.gmra.mxu0 %v279
  %v418 = vpop.f32.mrf.mxu0
  %v419 = vadd.f32 0.0, %v418
  %v420 = vpop.f32.mrf.mxu0
  %v421 = vpop.f32.mrf.mxu0
  %v422 = vadd.f32 0.0, %v421
  %v423 = vpop.f32.mrf.mxu0
  %424 = vmatprep.mubr.bf16.mxu0 0
  %425 = vmatmul.mubr.bf16.gmra.mxu0 %v282
  %v426 = vpop.f32.mrf.mxu0
  %v427 = vadd.f32 0.0, %v426
  %v428 = vpop.f32.mrf.mxu0
  %v429 = vpop.f32.mrf.mxu0
  %v430 = vadd.f32 0.0, %v429
  %v431 = vpop.f32.mrf.mxu0
  %432 = vmatprep.mubr.bf16.mxu0 0
  %433 = vmatmul.mubr.bf16.gmra.mxu0 %v285
  %v434 = vpop.f32.mrf.mxu0
  %v435 = vadd.f32 0.0, %v434
  %v436 = vpop.f32.mrf.mxu0
  %v437 = vpop.f32.mrf.mxu0
  %v438 = vadd.f32 0.0, %v437
  %v439 = vpop.f32.mrf.mxu0
  %440 = vmatprep.mubr.bf16.mxu0 0
  %441 = vmatmul.mubr.bf16.gmra.mxu0 %v288
  %v442 = vpop.f32.mrf.mxu0
  %v443 = vadd.f32 0.0, %v442
  %v444 = vpop.f32.mrf.mxu0
  %v445 = vpop.f32.mrf.mxu0
  %v446 = vadd.f32 0.0, %v445
  %v447 = vpop.f32.mrf.mxu0
  %448 = vmatprep.mubr.bf16.mxu0 0
  %449 = vmatmul.mubr.bf16.gmra.mxu0 %v291
  %v450 = vpop.f32.mrf.mxu0
  %v451 = vadd.f32 0.0, %v450
  %v452 = vpop.f32.mrf.mxu0
  %v453 = vpop.f32.mrf.mxu0
  %v454 = vadd.f32 0.0, %v453
  %v455 = vpop.f32.mrf.mxu0
  %456 = vmatprep.mubr.bf16.mxu0 0
  %457 = vmatmul.mubr.bf16.gmra.mxu0 %v294
  %v458 = vpop.f32.mrf.mxu0
  %v459 = vadd.f32 0.0, %v458
  %v460 = vpop.f32.mrf.mxu0
  %v461 = vpop.f32.mrf.mxu0
  %v462 = vadd.f32 0.0, %v461
  %v463 = vpop.f32.mrf.mxu0
  %464 = vmatprep.mubr.bf16.mxu0 0
  %465 = vmatmul.mubr.bf16.gmra.mxu0 %v297
  %v466 = vpop.f32.mrf.mxu0
  %v467 = vadd.f32 0.0, %v466
  %v468 = vpop.f32.mrf.mxu0
  %v469 = vpop.f32.mrf.mxu0
  %v470 = vadd.f32 0.0, %v469
  %v471 = vpop.f32.mrf.mxu0
  %472 = vmatprep.mubr.bf16.mxu0 0
  %473 = vmatmul.mubr.bf16.gmra.mxu0 %v300
  %v474 = vpop.f32.mrf.mxu0
  %v475 = vadd.f32 0.0, %v474
  %v476 = vpop.f32.mrf.mxu0
  %v477 = vpop.f32.mrf.mxu0
  %v478 = vadd.f32 0.0, %v477
  %v479 = vpop.f32.mrf.mxu0
  %480 = vmatprep.mubr.bf16.mxu0 0
  %481 = vmatmul.mubr.bf16.gmra.mxu0 %v303
  %v482 = vpop.f32.mrf.mxu0
  %v483 = vadd.f32 0.0, %v482
  %v484 = vpop.f32.mrf.mxu0
  %v485 = vpop.f32.mrf.mxu0
  %v486 = vadd.f32 0.0, %v485
  %v487 = vpop.f32.mrf.mxu0
  %488 = vmatprep.mubr.bf16.mxu0 0
  %489 = vmatmul.mubr.bf16.gmra.mxu0 %v306
  %v490 = vpop.f32.mrf.mxu0
  %v491 = vadd.f32 0.0, %v490
  %v492 = vpop.f32.mrf.mxu0
  %v493 = vpop.f32.mrf.mxu0
  %v494 = vadd.f32 0.0, %v493
  %v495 = vpop.f32.mrf.mxu0
  %496 = vmatprep.mubr.bf16.mxu0 0
  %497 = vmatmul.mubr.bf16.gmra.mxu0 %v309
  %v498 = vpop.f32.mrf.mxu0
  %v499 = vadd.f32 0.0, %v498
  %v500 = vpop.f32.mrf.mxu0
  %v501 = vpop.f32.mrf.mxu0
  %v502 = vadd.f32 0.0, %v501
  %v503 = vpop.f32.mrf.mxu0
  %504 = vmatprep.mubr.bf16.mxu0 0
  %505 = vmatmul.mubr.bf16.gmra.mxu0 %v312
  %v506 = vpop.f32.mrf.mxu0
  %v507 = vadd.f32 0.0, %v506
  %v508 = vpop.f32.mrf.mxu0
  %v509 = vpop.f32.mrf.mxu0
  %v510 = vadd.f32 0.0, %v509
  %v511 = vpop.f32.mrf.mxu0
  %512 = vmatprep.mubr.bf16.mxu0 0
  %513 = vmatmul.mubr.bf16.gmra.mxu0 %v315
  %v514 = vpop.f32.mrf.mxu0
  %v515 = vadd.f32 0.0, %v514
  %v516 = vpop.f32.mrf.mxu0
  %v517 = vpop.f32.mrf.mxu0
  %v518 = vadd.f32 0.0, %v517
  %v519 = vpop.f32.mrf.mxu0
  %520 = vmatprep.mubr.bf16.mxu0 0
  %521 = vmatmul.mubr.bf16.gmra.mxu0 %v318
  %v522 = vpop.f32.mrf.mxu0
  %v523 = vadd.f32 0.0, %v522
  %v524 = vpop.f32.mrf.mxu0
  %v525 = vpop.f32.mrf.mxu0
  %v526 = vadd.f32 0.0, %v525
  %v527 = vpop.f32.mrf.mxu0
  %528 = vmatprep.mubr.bf16.mxu0 0
  %529 = vmatmul.mubr.bf16.gmra.mxu0 %v321
  %v530 = vpop.f32.mrf.mxu0
  %v531 = vadd.f32 0.0, %v530
  %v532 = vpop.f32.mrf.mxu0
  %v533 = vpop.f32.mrf.mxu0
  %v534 = vadd.f32 0.0, %v533
  %v535 = vpop.f32.mrf.mxu0
  %536 = vmatprep.mubr.bf16.mxu0 0
  %537 = vmatmul.mubr.bf16.gmra.mxu0 %v324
  %v538 = vpop.f32.mrf.mxu0
  %v539 = vadd.f32 0.0, %v538
  %v540 = vpop.f32.mrf.mxu0
  %v541 = vpop.f32.mrf.mxu0
  %v542 = vadd.f32 0.0, %v541
  %v543 = vpop.f32.mrf.mxu0
  %544 = vmatprep.mubr.bf16.mxu0 0
  %545 = vmatmul.mubr.bf16.gmra.mxu0 %v327
  %v546 = vpop.f32.mrf.mxu0
  %v547 = vadd.f32 0.0, %v546
  %v548 = vpop.f32.mrf.mxu0
  %v549 = vpop.f32.mrf.mxu0
  %v550 = vadd.f32 0.0, %v549
  %v551 = vpop.f32.mrf.mxu0
  %552 = vmatprep.mubr.bf16.mxu0 0
  %553 = vmatmul.mubr.bf16.gmra.mxu0 %v330
  %v554 = vpop.f32.mrf.mxu0
  %v555 = vadd.f32 0.0, %v554
  %v556 = vpop.f32.mrf.mxu0
  %v557 = vpop.f32.mrf.mxu0
  %v558 = vadd.f32 0.0, %v557
  %v559 = vpop.f32.mrf.mxu0
  %560 = vmatprep.mubr.bf16.mxu0 0
  %561 = vmatmul.mubr.bf16.gmra.mxu0 %v333
  %v562 = vpop.f32.mrf.mxu0
  %v563 = vadd.f32 0.0, %v562
  %v564 = vpop.f32.mrf.mxu0
  %v565 = vpop.f32.mrf.mxu0
  %v566 = vadd.f32 0.0, %v565
  %v567 = vpop.f32.mrf.mxu0
  %568 = vmatprep.mubr.bf16.mxu0 0
  %569 = vmatmul.mubr.bf16.gmra.mxu0 %v336
  %v570 = vpop.f32.mrf.mxu0
  %v571 = vadd.f32 0.0, %v570
  %v572 = vpop.f32.mrf.mxu0
  %v573 = vpop.f32.mrf.mxu0
  %v574 = vadd.f32 0.0, %v573
  %v575 = vpop.f32.mrf.mxu0
  %576 = vmatprep.mubr.bf16.mxu0 0
  %577 = vmatmul.mubr.bf16.gmra.mxu0 %v339
  %v578 = vpop.f32.mrf.mxu0
  %v579 = vadd.f32 0.0, %v578
  %v580 = vpop.f32.mrf.mxu0
  %v581 = vpop.f32.mrf.mxu0
  %v582 = vadd.f32 0.0, %v581
  %v583 = vpop.f32.mrf.mxu0
  %584 = vmatprep.mubr.bf16.mxu0 0
  %585 = vmatmul.mubr.bf16.gmra.mxu0 %v342
  %v586 = vpop.f32.mrf.mxu0
  %v587 = vadd.f32 0.0, %v586
  %v588 = vpop.f32.mrf.mxu0
  %v589 = vpop.f32.mrf.mxu0
  %v590 = vadd.f32 0.0, %v589
  %v591 = vpop.f32.mrf.mxu0
  %592 = vmatprep.mubr.bf16.mxu0 0
  %593 = vmatmul.mubr.bf16.gmra.mxu0 %v345
  %v594 = vpop.f32.mrf.mxu0
  %v595 = vadd.f32 0.0, %v594
  %v596 = vpop.f32.mrf.mxu0
  %v597 = vpop.f32.mrf.mxu0
  %v598 = vadd.f32 0.0, %v597
  %v599 = vpop.f32.mrf.mxu0
  %600 = vmatprep.mubr.bf16.mxu0 0
  %601 = vmatmul.mubr.bf16.gmra.mxu0 %v348
  %v602 = vpop.f32.mrf.mxu0
  %v603 = vadd.f32 0.0, %v602
  %v604 = vpop.f32.mrf.mxu0
  %v605 = vpop.f32.mrf.mxu0
  %v606 = vadd.f32 0.0, %v605
  %v607 = vpop.f32.mrf.mxu0
  %608 = vmatprep.mubr.bf16.mxu0 0
  %609 = vmatmul.mubr.bf16.gmra.mxu0 %v351
  %v610 = vpop.f32.mrf.mxu0
  %v611 = vadd.f32 0.0, %v610
  %v612 = vpop.f32.mrf.mxu0
  %v613 = vpop.f32.mrf.mxu0
  %v614 = vadd.f32 0.0, %v613
  %v615 = vpop.f32.mrf.mxu0
  %616 = vmatprep.mubr.bf16.mxu0 0
  %617 = vmatmul.mubr.bf16.gmra.mxu0 %v354
  %v618 = vpop.f32.mrf.mxu0
  %v619 = vadd.f32 0.0, %v618
  %v620 = vpop.f32.mrf.mxu0
  %v621 = vpop.f32.mrf.mxu0
  %v622 = vadd.f32 0.0, %v621
  %v623 = vpop.f32.mrf.mxu0
  %624 = vmatprep.mubr.bf16.mxu0 0
  %625 = vmatmul.mubr.bf16.gmra.mxu0 %v357
  %v626 = vpop.f32.mrf.mxu0
  %v627 = vadd.f32 0.0, %v626
  %v628 = vpop.f32.mrf.mxu0
  %v629 = vpop.f32.mrf.mxu0
  %v630 = vadd.f32 0.0, %v629
  %v631 = vpop.f32.mrf.mxu0
  %632 = vmatprep.mubr.bf16.mxu0 0
  %633 = vmatmul.mubr.bf16.gmra.mxu0 %v360
  %v634 = vpop.f32.mrf.mxu0
  %v635 = vadd.f32 0.0, %v634
  %v636 = vpop.f32.mrf.mxu0
  %v637 = vpop.f32.mrf.mxu0
  %v638 = vadd.f32 0.0, %v637
  %v639 = vpop.f32.mrf.mxu0
  %640 = vmatprep.mubr.bf16.mxu0 0
  %641 = vmatmul.mubr.bf16.gmra.mxu0 %v363
  %v642 = vpop.f32.mrf.mxu0
  %v643 = vadd.f32 0.0, %v642
  %v644 = vpop.f32.mrf.mxu0
  %v645 = vpop.f32.mrf.mxu0
  %v646 = vadd.f32 0.0, %v645
  %v647 = vpop.f32.mrf.mxu0
  %648 = vmatprep.mubr.bf16.mxu0 0
  %649 = vmatmul.mubr.bf16.gmra.mxu0 %v366
  %v650 = vpop.f32.mrf.mxu0
  %v651 = vadd.f32 0.0, %v650
  %v652 = vpop.f32.mrf.mxu0
  %v653 = vpop.f32.mrf.mxu0
  %v654 = vadd.f32 0.0, %v653
  %v655 = vpop.f32.mrf.mxu0
  %656 = vdwg.mxu0
  %v657 = vpack.c.bf16 %v406, %v403
  %v658 = vpack.c.bf16 %v414, %v411
  %v659 = vpack.c.bf16 %v422, %v419
  %v660 = vpack.c.bf16 %v430, %v427
  %v661 = vpack.c.bf16 %v438, %v435
  %v662 = vpack.c.bf16 %v446, %v443
  %v663 = vpack.c.bf16 %v454, %v451
  %v664 = vpack.c.bf16 %v462, %v459
  %v665 = vpack.c.bf16 %v470, %v467
  %v666 = vpack.c.bf16 %v478, %v475
  %v667 = vpack.c.bf16 %v486, %v483
  %v668 = vpack.c.bf16 %v494, %v491
  %v669 = vpack.c.bf16 %v502, %v499
  %v670 = vpack.c.bf16 %v510, %v507
  %v671 = vpack.c.bf16 %v518, %v515
  %v672 = vpack.c.bf16 %v526, %v523
  %v673 = vpack.c.bf16 %v534, %v531
  %v674 = vpack.c.bf16 %v542, %v539
  %v675 = vpack.c.bf16 %v550, %v547
  %v676 = vpack.c.bf16 %v558, %v555
  %v677 = vpack.c.bf16 %v566, %v563
  %v678 = vpack.c.bf16 %v574, %v571
  %v679 = vpack.c.bf16 %v582, %v579
  %v680 = vpack.c.bf16 %v590, %v587
  %v681 = vpack.c.bf16 %v598, %v595
  %v682 = vpack.c.bf16 %v606, %v603
  %v683 = vpack.c.bf16 %v614, %v611
  %v684 = vpack.c.bf16 %v622, %v619
  %v685 = vpack.c.bf16 %v630, %v627
  %v686 = vpack.c.bf16 %v638, %v635
  %v687 = vpack.c.bf16 %v646, %v643
  %v688 = vpack.c.bf16 %v654, %v651
  %v721 = vunpack.c.l.b16 %v657
  %v722 = vunpack.c.h.b16 %v657
  %v723 = vunpack.c.l.b16 %v658
  %v724 = vunpack.c.h.b16 %v658
  %v725 = vunpack.c.l.b16 %v659
  %v726 = vunpack.c.h.b16 %v659
  %v727 = vunpack.c.l.b16 %v660
  %v728 = vunpack.c.h.b16 %v660
  %v729 = vunpack.c.l.b16 %v661
  %v730 = vunpack.c.h.b16 %v661
  %v731 = vunpack.c.l.b16 %v662
  %v732 = vunpack.c.h.b16 %v662
  %v733 = vunpack.c.l.b16 %v663
  %v734 = vunpack.c.h.b16 %v663
  %v735 = vunpack.c.l.b16 %v664
  %v736 = vunpack.c.h.b16 %v664
  %v737 = vunpack.c.l.b16 %v665
  %v738 = vunpack.c.h.b16 %v665
  %v739 = vunpack.c.l.b16 %v666
  %v740 = vunpack.c.h.b16 %v666
  %v741 = vunpack.c.l.b16 %v667
  %v742 = vunpack.c.h.b16 %v667
  %v743 = vunpack.c.l.b16 %v668
  %v744 = vunpack.c.h.b16 %v668
  %v745 = vunpack.c.l.b16 %v669
  %v746 = vunpack.c.h.b16 %v669
  %v747 = vunpack.c.l.b16 %v670
  %v748 = vunpack.c.h.b16 %v670
  %v749 = vunpack.c.l.b16 %v671
  %v750 = vunpack.c.h.b16 %v671
  %v751 = vunpack.c.l.b16 %v672
  %v752 = vunpack.c.h.b16 %v672
  %v753 = vunpack.c.l.b16 %v673
  %v754 = vunpack.c.h.b16 %v673
  %v755 = vunpack.c.l.b16 %v674
  %v756 = vunpack.c.h.b16 %v674
  %v757 = vunpack.c.l.b16 %v675
  %v758 = vunpack.c.h.b16 %v675
  %v759 = vunpack.c.l.b16 %v676
  %v760 = vunpack.c.h.b16 %v676
  %v761 = vunpack.c.l.b16 %v677
  %v762 = vunpack.c.h.b16 %v677
  %v763 = vunpack.c.l.b16 %v678
  %v764 = vunpack.c.h.b16 %v678
  %v765 = vunpack.c.l.b16 %v679
  %v766 = vunpack.c.h.b16 %v679
  %v767 = vunpack.c.l.b16 %v680
  %v768 = vunpack.c.h.b16 %v680
  %v769 = vunpack.c.l.b16 %v681
  %v770 = vunpack.c.h.b16 %v681
  %v771 = vunpack.c.l.b16 %v682
  %v772 = vunpack.c.h.b16 %v682
  %v773 = vunpack.c.l.b16 %v683
  %v774 = vunpack.c.h.b16 %v683
  %v775 = vunpack.c.l.b16 %v684
  %v776 = vunpack.c.h.b16 %v684
  %v777 = vunpack.c.l.b16 %v685
  %v778 = vunpack.c.h.b16 %v685
  %v779 = vunpack.c.l.b16 %v686
  %v780 = vunpack.c.h.b16 %v686
  %v781 = vunpack.c.l.b16 %v687
  %v782 = vunpack.c.h.b16 %v687
  %v783 = vunpack.c.l.b16 %v688
  %v784 = vunpack.c.h.b16 %v688
  %v785 = vpack.c.b16 %v721, %v721
  %v786 = vpack.c.b16 %v722, %v722
  %v787 = vpack.c.b16 %v723, %v723
  %v788 = vpack.c.b16 %v724, %v724
  %v789 = vpack.c.b16 %v725, %v725
  %v790 = vpack.c.b16 %v726, %v726
  %v791 = vpack.c.b16 %v727, %v727
  %v792 = vpack.c.b16 %v728, %v728
  %v793 = vpack.c.b16 %v729, %v729
  %v794 = vpack.c.b16 %v730, %v730
  %v795 = vpack.c.b16 %v731, %v731
  %v796 = vpack.c.b16 %v732, %v732
  %v797 = vpack.c.b16 %v733, %v733
  %v798 = vpack.c.b16 %v734, %v734
  %v799 = vpack.c.b16 %v735, %v735
  %v800 = vpack.c.b16 %v736, %v736
  %v801 = vpack.c.b16 %v737, %v737
  %v802 = vpack.c.b16 %v738, %v738
  %v803 = vpack.c.b16 %v739, %v739
  %v804 = vpack.c.b16 %v740, %v740
  %v805 = vpack.c.b16 %v741, %v741
  %v806 = vpack.c.b16 %v742, %v742
  %v807 = vpack.c.b16 %v743, %v743
  %v808 = vpack.c.b16 %v744, %v744
  %v809 = vpack.c.b16 %v745, %v745
  %v810 = vpack.c.b16 %v746, %v746
  %v811 = vpack.c.b16 %v747, %v747
  %v812 = vpack.c.b16 %v748, %v748
  %v813 = vpack.c.b16 %v749, %v749
  %v814 = vpack.c.b16 %v750, %v750
  %v815 = vpack.c.b16 %v751, %v751
  %v816 = vpack.c.b16 %v752, %v752
  %v817 = vpack.c.b16 %v753, %v753
  %v818 = vpack.c.b16 %v754, %v754
  %v819 = vpack.c.b16 %v755, %v755
  %v820 = vpack.c.b16 %v756, %v756
  %v821 = vpack.c.b16 %v757, %v757
  %v822 = vpack.c.b16 %v758, %v758
  %v823 = vpack.c.b16 %v759, %v759
  %v824 = vpack.c.b16 %v760, %v760
  %v825 = vpack.c.b16 %v761, %v761
  %v826 = vpack.c.b16 %v762, %v762
  %v827 = vpack.c.b16 %v763, %v763
  %v828 = vpack.c.b16 %v764, %v764
  %v829 = vpack.c.b16 %v765, %v765
  %v830 = vpack.c.b16 %v766, %v766
  %v831 = vpack.c.b16 %v767, %v767
  %v832 = vpack.c.b16 %v768, %v768
  %v833 = vpack.c.b16 %v769, %v769
  %v834 = vpack.c.b16 %v770, %v770
  %v835 = vpack.c.b16 %v771, %v771
  %v836 = vpack.c.b16 %v772, %v772
  %v837 = vpack.c.b16 %v773, %v773
  %v838 = vpack.c.b16 %v774, %v774
  %v839 = vpack.c.b16 %v775, %v775
  %v840 = vpack.c.b16 %v776, %v776
  %v841 = vpack.c.b16 %v777, %v777
  %v842 = vpack.c.b16 %v778, %v778
  %v843 = vpack.c.b16 %v779, %v779
  %v844 = vpack.c.b16 %v780, %v780
  %v845 = vpack.c.b16 %v781, %v781
  %v846 = vpack.c.b16 %v782, %v782
  %v847 = vpack.c.b16 %v783, %v783
  %v848 = vpack.c.b16 %v784, %v784
  %913 = vst [vmem:[%s2] sm:$0xf] %v785
  %914 = vst [vmem:[%s2 + $0x4] sm:$0xf] %v786
  %915 = vst [vmem:[%s2 + $0x8] sm:$0xf] %v787
  %916 = vst [vmem:[%s2 + $0xc] sm:$0xf] %v788
  %917 = vst [vmem:[%s2 + $0x10] sm:$0xf] %v789
  %918 = vst [vmem:[%s2 + $0x14] sm:$0xf] %v790
  %919 = vst [vmem:[%s2 + $0x18] sm:$0xf] %v791
  %920 = vst [vmem:[%s2 + $0x1c] sm:$0xf] %v792
  %921 = vst [vmem:[%s2 + $0x20] sm:$0xf] %v793
  %922 = vst [vmem:[%s2 + $0x24] sm:$0xf] %v794
  %923 = vst [vmem:[%s2 + $0x28] sm:$0xf] %v795
  %924 = vst [vmem:[%s2 + $0x2c] sm:$0xf] %v796
  %925 = vst [vmem:[%s2 + $0x30] sm:$0xf] %v797
  %926 = vst [vmem:[%s2 + $0x34] sm:$0xf] %v798
  %927 = vst [vmem:[%s2 + $0x38] sm:$0xf] %v799
  %928 = vst [vmem:[%s2 + $0x3c] sm:$0xf] %v800
  %929 = vst [vmem:[%s2 + $0x40] sm:$0xf] %v801
  %930 = vst [vmem:[%s2 + $0x44] sm:$0xf] %v802
  %931 = vst [vmem:[%s2 + $0x48] sm:$0xf] %v803
  %932 = vst [vmem:[%s2 + $0x4c] sm:$0xf] %v804
  %933 = vst [vmem:[%s2 + $0x50] sm:$0xf] %v805
  %934 = vst [vmem:[%s2 + $0x54] sm:$0xf] %v806
  %935 = vst [vmem:[%s2 + $0x58] sm:$0xf] %v807
  %936 = vst [vmem:[%s2 + $0x5c] sm:$0xf] %v808
  %937 = vst [vmem:[%s2 + $0x60] sm:$0xf] %v809
  %938 = vst [vmem:[%s2 + $0x64] sm:$0xf] %v810
  %939 = vst [vmem:[%s2 + $0x68] sm:$0xf] %v811
  %940 = vst [vmem:[%s2 + $0x6c] sm:$0xf] %v812
  %941 = vst [vmem:[%s2 + $0x70] sm:$0xf] %v813
  %942 = vst [vmem:[%s2 + $0x74] sm:$0xf] %v814
  %943 = vst [vmem:[%s2 + $0x78] sm:$0xf] %v815
  %944 = vst [vmem:[%s2 + $0x7c] sm:$0xf] %v816
  %945 = vst [vmem:[%s2 + $0x80] sm:$0xf] %v817
  %946 = vst [vmem:[%s2 + $0x84] sm:$0xf] %v818
  %947 = vst [vmem:[%s2 + $0x88] sm:$0xf] %v819
  %948 = vst [vmem:[%s2 + $0x8c] sm:$0xf] %v820
  %949 = vst [vmem:[%s2 + $0x90] sm:$0xf] %v821
  %950 = vst [vmem:[%s2 + $0x94] sm:$0xf] %v822
  %951 = vst [vmem:[%s2 + $0x98] sm:$0xf] %v823
  %952 = vst [vmem:[%s2 + $0x9c] sm:$0xf] %v824
  %953 = vst [vmem:[%s2 + $0xa0] sm:$0xf] %v825
  %954 = vst [vmem:[%s2 + $0xa4] sm:$0xf] %v826
  %955 = vst [vmem:[%s2 + $0xa8] sm:$0xf] %v827
  %956 = vst [vmem:[%s2 + $0xac] sm:$0xf] %v828
  %957 = vst [vmem:[%s2 + $0xb0] sm:$0xf] %v829
  %958 = vst [vmem:[%s2 + $0xb4] sm:$0xf] %v830
  %959 = vst [vmem:[%s2 + $0xb8] sm:$0xf] %v831
  %960 = vst [vmem:[%s2 + $0xbc] sm:$0xf] %v832
  %961 = vst [vmem:[%s2 + $0xc0] sm:$0xf] %v833
  %962 = vst [vmem:[%s2 + $0xc4] sm:$0xf] %v834
  %963 = vst [vmem:[%s2 + $0xc8] sm:$0xf] %v835
  %964 = vst [vmem:[%s2 + $0xcc] sm:$0xf] %v836
  %965 = vst [vmem:[%s2 + $0xd0] sm:$0xf] %v837
  %966 = vst [vmem:[%s2 + $0xd4] sm:$0xf] %v838
  %967 = vst [vmem:[%s2 + $0xd8] sm:$0xf] %v839
  %968 = vst [vmem:[%s2 + $0xdc] sm:$0xf] %v840
  %969 = vst [vmem:[%s2 + $0xe0] sm:$0xf] %v841
  %970 = vst [vmem:[%s2 + $0xe4] sm:$0xf] %v842
  %971 = vst [vmem:[%s2 + $0xe8] sm:$0xf] %v843
  %972 = vst [vmem:[%s2 + $0xec] sm:$0xf] %v844
  %973 = vst [vmem:[%s2 + $0xf0] sm:$0xf] %v845
  %974 = vst [vmem:[%s2 + $0xf4] sm:$0xf] %v846
  %975 = vst [vmem:[%s2 + $0xf8] sm:$0xf] %v847
  %976 = vst [vmem:[%s2 + $0xfc] sm:$0xf] %v848
  %s977 = smul.u32 0, 512
  %v978 = vlaneseq
  %v979 = vshrl.u32 %v978, 7
  %v980 = vadd.s32 %v979, 8
  %v981 = vadd.s32 %v979, 16
  %v982 = vadd.s32 %v979, 24
  %v983 = vadd.s32 %v979, 32
  %v984 = vadd.s32 %v979, 40
  %v985 = vadd.s32 %v979, 48
  %v986 = vadd.s32 %v979, 56
  %v987 = vadd.s32 %v979, 64
  %v988 = vadd.s32 %v979, 72
  %v989 = vadd.s32 %v979, 80
  %v990 = vadd.s32 %v979, 88
  %v991 = vadd.s32 %v979, 96
  %v992 = vadd.s32 %v979, 104
  %v993 = vadd.s32 %v979, 112
  %v994 = vadd.s32 %v979, 120
  %v995 = vadd.s32 %v979, 128
  %v996 = vadd.s32 %v979, 136
  %v997 = vadd.s32 %v979, 144
  %v998 = vadd.s32 %v979, 152
  %v999 = vadd.s32 %v979, 160
  %v1000 = vadd.s32 %v979, 168
  %v1001 = vadd.s32 %v979, 176
  %v1002 = vadd.s32 %v979, 184
  %v1003 = vadd.s32 %v979, 192
  %v1004 = vadd.s32 %v979, 200
  %v1005 = vadd.s32 %v979, 208
  %v1006 = vadd.s32 %v979, 216
  %v1007 = vadd.s32 %v979, 224
  %v1008 = vadd.s32 %v979, 232
  %v1009 = vadd.s32 %v979, 240
  %v1010 = vadd.s32 %v979, 248
  %v1011 = vadd.s32 %v979, 256
  %v1012 = vadd.s32 %v979, 264
  %v1013 = vadd.s32 %v979, 272
  %v1014 = vadd.s32 %v979, 280
  %v1015 = vadd.s32 %v979, 288
  %v1016 = vadd.s32 %v979, 296
  %v1017 = vadd.s32 %v979, 304
  %v1018 = vadd.s32 %v979, 312
  %v1019 = vadd.s32 %v979, 320
  %v1020 = vadd.s32 %v979, 328
  %v1021 = vadd.s32 %v979, 336
  %v1022 = vadd.s32 %v979, 344
  %v1023 = vadd.s32 %v979, 352
  %v1024 = vadd.s32 %v979, 360
  %v1025 = vadd.s32 %v979, 368
  %v1026 = vadd.s32 %v979, 376
  %v1027 = vadd.s32 %v979, 384
  %v1028 = vadd.s32 %v979, 392
  %v1029 = vadd.s32 %v979, 400
  %v1030 = vadd.s32 %v979, 408
  %v1031 = vadd.s32 %v979, 416
  %v1032 = vadd.s32 %v979, 424
  %v1033 = vadd.s32 %v979, 432
  %v1034 = vadd.s32 %v979, 440
  %v1035 = vadd.s32 %v979, 448
  %v1036 = vadd.s32 %v979, 456
  %v1037 = vadd.s32 %v979, 464
  %v1038 = vadd.s32 %v979, 472
  %v1039 = vadd.s32 %v979, 480
  %v1040 = vadd.s32 %v979, 488
  %v1041 = vadd.s32 %v979, 496
  %v1042 = vadd.s32 %v979, 504
  %v1043 = vstv %s977
  %v1044 = vadd.s32 %v1043, %v979
  %v1045 = vadd.s32 %v1043, %v980
  %v1046 = vadd.s32 %v1043, %v981
  %v1047 = vadd.s32 %v1043, %v982
  %v1048 = vadd.s32 %v1043, %v983
  %v1049 = vadd.s32 %v1043, %v984
  %v1050 = vadd.s32 %v1043, %v985
  %v1051 = vadd.s32 %v1043, %v986
  %v1052 = vadd.s32 %v1043, %v987
  %v1053 = vadd.s32 %v1043, %v988
  %v1054 = vadd.s32 %v1043, %v989
  %v1055 = vadd.s32 %v1043, %v990
  %v1056 = vadd.s32 %v1043, %v991
  %v1057 = vadd.s32 %v1043, %v992
  %v1058 = vadd.s32 %v1043, %v993
  %v1059 = vadd.s32 %v1043, %v994
  %v1060 = vadd.s32 %v1043, %v995
  %v1061 = vadd.s32 %v1043, %v996
  %v1062 = vadd.s32 %v1043, %v997
  %v1063 = vadd.s32 %v1043, %v998
  %v1064 = vadd.s32 %v1043, %v999
  %v1065 = vadd.s32 %v1043, %v1000
  %v1066 = vadd.s32 %v1043, %v1001
  %v1067 = vadd.s32 %v1043, %v1002
  %v1068 = vadd.s32 %v1043, %v1003
  %v1069 = vadd.s32 %v1043, %v1004
  %v1070 = vadd.s32 %v1043, %v1005
  %v1071 = vadd.s32 %v1043, %v1006
  %v1072 = vadd.s32 %v1043, %v1007
  %v1073 = vadd.s32 %v1043, %v1008
  %v1074 = vadd.s32 %v1043, %v1009
  %v1075 = vadd.s32 %v1043, %v1010
  %v1076 = vadd.s32 %v1043, %v1011
  %v1077 = vadd.s32 %v1043, %v1012
  %v1078 = vadd.s32 %v1043, %v1013
  %v1079 = vadd.s32 %v1043, %v1014
  %v1080 = vadd.s32 %v1043, %v1015
  %v1081 = vadd.s32 %v1043, %v1016
  %v1082 = vadd.s32 %v1043, %v1017
  %v1083 = vadd.s32 %v1043, %v1018
  %v1084 = vadd.s32 %v1043, %v1019
  %v1085 = vadd.s32 %v1043, %v1020
  %v1086 = vadd.s32 %v1043, %v1021
  %v1087 = vadd.s32 %v1043, %v1022
  %v1088 = vadd.s32 %v1043, %v1023
  %v1089 = vadd.s32 %v1043, %v1024
  %v1090 = vadd.s32 %v1043, %v1025
  %v1091 = vadd.s32 %v1043, %v1026
  %v1092 = vadd.s32 %v1043, %v1027
  %v1093 = vadd.s32 %v1043, %v1028
  %v1094 = vadd.s32 %v1043, %v1029
  %v1095 = vadd.s32 %v1043, %v1030
  %v1096 = vadd.s32 %v1043, %v1031
  %v1097 = vadd.s32 %v1043, %v1032
  %v1098 = vadd.s32 %v1043, %v1033
  %v1099 = vadd.s32 %v1043, %v1034
  %v1100 = vadd.s32 %v1043, %v1035
  %v1101 = vadd.s32 %v1043, %v1036
  %v1102 = vadd.s32 %v1043, %v1037
  %v1103 = vadd.s32 %v1043, %v1038
  %v1104 = vadd.s32 %v1043, %v1039
  %v1105 = vadd.s32 %v1043, %v1040
  %v1106 = vadd.s32 %v1043, %v1041
  %v1107 = vadd.s32 %v1043, %v1042
  %vm1108 = vcmp.lt.s32.totalorder %v1044, 512
  %vm1109 = vcmp.lt.s32.totalorder %v1045, 512
  %vm1110 = vcmp.lt.s32.totalorder %v1046, 512
  %vm1111 = vcmp.lt.s32.totalorder %v1047, 512
  %vm1112 = vcmp.lt.s32.totalorder %v1048, 512
  %vm1113 = vcmp.lt.s32.totalorder %v1049, 512
  %vm1114 = vcmp.lt.s32.totalorder %v1050, 512
  %vm1115 = vcmp.lt.s32.totalorder %v1051, 512
  %vm1116 = vcmp.lt.s32.totalorder %v1052, 512
  %vm1117 = vcmp.lt.s32.totalorder %v1053, 512
  %vm1118 = vcmp.lt.s32.totalorder %v1054, 512
  %vm1119 = vcmp.lt.s32.totalorder %v1055, 512
  %vm1120 = vcmp.lt.s32.totalorder %v1056, 512
  %vm1121 = vcmp.lt.s32.totalorder %v1057, 512
  %vm1122 = vcmp.lt.s32.totalorder %v1058, 512
  %vm1123 = vcmp.lt.s32.totalorder %v1059, 512
  %vm1124 = vcmp.lt.s32.totalorder %v1060, 512
  %vm1125 = vcmp.lt.s32.totalorder %v1061, 512
  %vm1126 = vcmp.lt.s32.totalorder %v1062, 512
  %vm1127 = vcmp.lt.s32.totalorder %v1063, 512
  %vm1128 = vcmp.lt.s32.totalorder %v1064, 512
  %vm1129 = vcmp.lt.s32.totalorder %v1065, 512
  %vm1130 = vcmp.lt.s32.totalorder %v1066, 512
  %vm1131 = vcmp.lt.s32.totalorder %v1067, 512
  %vm1132 = vcmp.lt.s32.totalorder %v1068, 512
  %vm1133 = vcmp.lt.s32.totalorder %v1069, 512
  %vm1134 = vcmp.lt.s32.totalorder %v1070, 512
  %vm1135 = vcmp.lt.s32.totalorder %v1071, 512
  %vm1136 = vcmp.lt.s32.totalorder %v1072, 512
  %vm1137 = vcmp.lt.s32.totalorder %v1073, 512
  %vm1138 = vcmp.lt.s32.totalorder %v1074, 512
  %vm1139 = vcmp.lt.s32.totalorder %v1075, 512
  %vm1140 = vcmp.lt.s32.totalorder %v1076, 512
  %vm1141 = vcmp.lt.s32.totalorder %v1077, 512
  %vm1142 = vcmp.lt.s32.totalorder %v1078, 512
  %vm1143 = vcmp.lt.s32.totalorder %v1079, 512
  %vm1144 = vcmp.lt.s32.totalorder %v1080, 512
  %vm1145 = vcmp.lt.s32.totalorder %v1081, 512
  %vm1146 = vcmp.lt.s32.totalorder %v1082, 512
  %vm1147 = vcmp.lt.s32.totalorder %v1083, 512
  %vm1148 = vcmp.lt.s32.totalorder %v1084, 512
  %vm1149 = vcmp.lt.s32.totalorder %v1085, 512
  %vm1150 = vcmp.lt.s32.totalorder %v1086, 512
  %vm1151 = vcmp.lt.s32.totalorder %v1087, 512
  %vm1152 = vcmp.lt.s32.totalorder %v1088, 512
  %vm1153 = vcmp.lt.s32.totalorder %v1089, 512
  %vm1154 = vcmp.lt.s32.totalorder %v1090, 512
  %vm1155 = vcmp.lt.s32.totalorder %v1091, 512
  %vm1156 = vcmp.lt.s32.totalorder %v1092, 512
  %vm1157 = vcmp.lt.s32.totalorder %v1093, 512
  %vm1158 = vcmp.lt.s32.totalorder %v1094, 512
  %vm1159 = vcmp.lt.s32.totalorder %v1095, 512
  %vm1160 = vcmp.lt.s32.totalorder %v1096, 512
  %vm1161 = vcmp.lt.s32.totalorder %v1097, 512
  %vm1162 = vcmp.lt.s32.totalorder %v1098, 512
  %vm1163 = vcmp.lt.s32.totalorder %v1099, 512
  %vm1164 = vcmp.lt.s32.totalorder %v1100, 512
  %vm1165 = vcmp.lt.s32.totalorder %v1101, 512
  %vm1166 = vcmp.lt.s32.totalorder %v1102, 512
  %vm1167 = vcmp.lt.s32.totalorder %v1103, 512
  %vm1168 = vcmp.lt.s32.totalorder %v1104, 512
  %vm1169 = vcmp.lt.s32.totalorder %v1105, 512
  %vm1170 = vcmp.lt.s32.totalorder %v1106, 512
  %vm1171 = vcmp.lt.s32.totalorder %v1107, 512
  %v1172 = vsel %vm1108, %v403, 0.0
  %v1173 = vsel %vm1109, %v406, 0.0
  %v1174 = vsel %vm1110, %v411, 0.0
  %v1175 = vsel %vm1111, %v414, 0.0
  %v1176 = vsel %vm1112, %v419, 0.0
  %v1177 = vsel %vm1113, %v422, 0.0
  %v1178 = vsel %vm1114, %v427, 0.0
  %v1179 = vsel %vm1115, %v430, 0.0
  %v1180 = vsel %vm1116, %v435, 0.0
  %v1181 = vsel %vm1117, %v438, 0.0
  %v1182 = vsel %vm1118, %v443, 0.0
  %v1183 = vsel %vm1119, %v446, 0.0
  %v1184 = vsel %vm1120, %v451, 0.0
  %v1185 = vsel %vm1121, %v454, 0.0
  %v1186 = vsel %vm1122, %v459, 0.0
  %v1187 = vsel %vm1123, %v462, 0.0
  %v1188 = vsel %vm1124, %v467, 0.0
  %v1189 = vsel %vm1125, %v470, 0.0
  %v1190 = vsel %vm1126, %v475, 0.0
  %v1191 = vsel %vm1127, %v478, 0.0
  %v1192 = vsel %vm1128, %v483, 0.0
  %v1193 = vsel %vm1129, %v486, 0.0
  %v1194 = vsel %vm1130, %v491, 0.0
  %v1195 = vsel %vm1131, %v494, 0.0
  %v1196 = vsel %vm1132, %v499, 0.0
  %v1197 = vsel %vm1133, %v502, 0.0
  %v1198 = vsel %vm1134, %v507, 0.0
  %v1199 = vsel %vm1135, %v510, 0.0
  %v1200 = vsel %vm1136, %v515, 0.0
  %v1201 = vsel %vm1137, %v518, 0.0
  %v1202 = vsel %vm1138, %v523, 0.0
  %v1203 = vsel %vm1139, %v526, 0.0
  %v1204 = vsel %vm1140, %v531, 0.0
  %v1205 = vsel %vm1141, %v534, 0.0
  %v1206 = vsel %vm1142, %v539, 0.0
  %v1207 = vsel %vm1143, %v542, 0.0
  %v1208 = vsel %vm1144, %v547, 0.0
  %v1209 = vsel %vm1145, %v550, 0.0
  %v1210 = vsel %vm1146, %v555, 0.0
  %v1211 = vsel %vm1147, %v558, 0.0
  %v1212 = vsel %vm1148, %v563, 0.0
  %v1213 = vsel %vm1149, %v566, 0.0
  %v1214 = vsel %vm1150, %v571, 0.0
  %v1215 = vsel %vm1151, %v574, 0.0
  %v1216 = vsel %vm1152, %v579, 0.0
  %v1217 = vsel %vm1153, %v582, 0.0
  %v1218 = vsel %vm1154, %v587, 0.0
  %v1219 = vsel %vm1155, %v590, 0.0
  %v1220 = vsel %vm1156, %v595, 0.0
  %v1221 = vsel %vm1157, %v598, 0.0
  %v1222 = vsel %vm1158, %v603, 0.0
  %v1223 = vsel %vm1159, %v606, 0.0
  %v1224 = vsel %vm1160, %v611, 0.0
  %v1225 = vsel %vm1161, %v614, 0.0
  %v1226 = vsel %vm1162, %v619, 0.0
  %v1227 = vsel %vm1163, %v622, 0.0
  %v1228 = vsel %vm1164, %v627, 0.0
  %v1229 = vsel %vm1165, %v630, 0.0
  %v1230 = vsel %vm1166, %v635, 0.0
  %v1231 = vsel %vm1167, %v638, 0.0
  %v1232 = vsel %vm1168, %v643, 0.0
  %v1233 = vsel %vm1169, %v646, 0.0
  %v1234 = vsel %vm1170, %v651, 0.0
  %v1235 = vsel %vm1171, %v654, 0.0
  %v1236 = vadd.f32 %v1172, %v1173
  %v1237 = vadd.f32 %v1236, %v1174
  %v1238 = vadd.f32 %v1237, %v1175
  %v1239 = vadd.f32 %v1238, %v1176
  %v1240 = vadd.f32 %v1239, %v1177
  %v1241 = vadd.f32 %v1240, %v1178
  %v1242 = vadd.f32 %v1241, %v1179
  %v1243 = vadd.f32 %v1242, %v1180
  %v1244 = vadd.f32 %v1243, %v1181
  %v1245 = vadd.f32 %v1244, %v1182
  %v1246 = vadd.f32 %v1245, %v1183
  %v1247 = vadd.f32 %v1246, %v1184
  %v1248 = vadd.f32 %v1247, %v1185
  %v1249 = vadd.f32 %v1248, %v1186
  %v1250 = vadd.f32 %v1249, %v1187
  %v1251 = vadd.f32 %v1250, %v1188
  %v1252 = vadd.f32 %v1251, %v1189
  %v1253 = vadd.f32 %v1252, %v1190
  %v1254 = vadd.f32 %v1253, %v1191
  %v1255 = vadd.f32 %v1254, %v1192
  %v1256 = vadd.f32 %v1255, %v1193
  %v1257 = vadd.f32 %v1256, %v1194
  %v1258 = vadd.f32 %v1257, %v1195
  %v1259 = vadd.f32 %v1258, %v1196
  %v1260 = vadd.f32 %v1259, %v1197
  %v1261 = vadd.f32 %v1260, %v1198
  %v1262 = vadd.f32 %v1261, %v1199
  %v1263 = vadd.f32 %v1262, %v1200
  %v1264 = vadd.f32 %v1263, %v1201
  %v1265 = vadd.f32 %v1264, %v1202
  %v1266 = vadd.f32 %v1265, %v1203
  %v1267 = vadd.f32 %v1266, %v1204
  %v1268 = vadd.f32 %v1267, %v1205
  %v1269 = vadd.f32 %v1268, %v1206
  %v1270 = vadd.f32 %v1269, %v1207
  %v1271 = vadd.f32 %v1270, %v1208
  %v1272 = vadd.f32 %v1271, %v1209
  %v1273 = vadd.f32 %v1272, %v1210
  %v1274 = vadd.f32 %v1273, %v1211
  %v1275 = vadd.f32 %v1274, %v1212
  %v1276 = vadd.f32 %v1275, %v1213
  %v1277 = vadd.f32 %v1276, %v1214
  %v1278 = vadd.f32 %v1277, %v1215
  %v1279 = vadd.f32 %v1278, %v1216
  %v1280 = vadd.f32 %v1279, %v1217
  %v1281 = vadd.f32 %v1280, %v1218
  %v1282 = vadd.f32 %v1281, %v1219
  %v1283 = vadd.f32 %v1282, %v1220
  %v1284 = vadd.f32 %v1283, %v1221
  %v1285 = vadd.f32 %v1284, %v1222
  %v1286 = vadd.f32 %v1285, %v1223
  %v1287 = vadd.f32 %v1286, %v1224
  %v1288 = vadd.f32 %v1287, %v1225
  %v1289 = vadd.f32 %v1288, %v1226
  %v1290 = vadd.f32 %v1289, %v1227
  %v1291 = vadd.f32 %v1290, %v1228
  %v1292 = vadd.f32 %v1291, %v1229
  %v1293 = vadd.f32 %v1292, %v1230
  %v1294 = vadd.f32 %v1293, %v1231
  %v1295 = vadd.f32 %v1294, %v1232
  %v1296 = vadd.f32 %v1295, %v1233
  %v1297 = vadd.f32 %v1296, %v1234
  %v1298 = vadd.f32 %v1297, %v1235
  %v1299 = vrot.slane %v1298, 4
  %v1300 = vadd.f32 %v1298, %v1299
  %v1301 = vrot.slane %v1300, 2
  %v1302 = vadd.f32 %v1300, %v1301
  %v1303 = vrot.slane %v1302, 1
  %v1304 = vadd.f32 %v1302, %v1303
  %1305 = vst [vmem:[%s3] sm:$0x1] %v1304
  %v1306 = vmul.f32 %v1172, %v403
  %v1307 = vmul.f32 %v1173, %v406
  %v1308 = vmul.f32 %v1174, %v411
  %v1309 = vmul.f32 %v1175, %v414
  %v1310 = vmul.f32 %v1176, %v419
  %v1311 = vmul.f32 %v1177, %v422
  %v1312 = vmul.f32 %v1178, %v427
  %v1313 = vmul.f32 %v1179, %v430
  %v1314 = vmul.f32 %v1180, %v435
  %v1315 = vmul.f32 %v1181, %v438
  %v1316 = vmul.f32 %v1182, %v443
  %v1317 = vmul.f32 %v1183, %v446
  %v1318 = vmul.f32 %v1184, %v451
  %v1319 = vmul.f32 %v1185, %v454
  %v1320 = vmul.f32 %v1186, %v459
  %v1321 = vmul.f32 %v1187, %v462
  %v1322 = vmul.f32 %v1188, %v467
  %v1323 = vmul.f32 %v1189, %v470
  %v1324 = vmul.f32 %v1190, %v475
  %v1325 = vmul.f32 %v1191, %v478
  %v1326 = vmul.f32 %v1192, %v483
  %v1327 = vmul.f32 %v1193, %v486
  %v1328 = vmul.f32 %v1194, %v491
  %v1329 = vmul.f32 %v1195, %v494
  %v1330 = vmul.f32 %v1196, %v499
  %v1331 = vmul.f32 %v1197, %v502
  %v1332 = vmul.f32 %v1198, %v507
  %v1333 = vmul.f32 %v1199, %v510
  %v1334 = vmul.f32 %v1200, %v515
  %v1335 = vmul.f32 %v1201, %v518
  %v1336 = vmul.f32 %v1202, %v523
  %v1337 = vmul.f32 %v1203, %v526
  %v1338 = vmul.f32 %v1204, %v531
  %v1339 = vmul.f32 %v1205, %v534
  %v1340 = vmul.f32 %v1206, %v539
  %v1341 = vmul.f32 %v1207, %v542
  %v1342 = vmul.f32 %v1208, %v547
  %v1343 = vmul.f32 %v1209, %v550
  %v1344 = vmul.f32 %v1210, %v555
  %v1345 = vmul.f32 %v1211, %v558
  %v1346 = vmul.f32 %v1212, %v563
  %v1347 = vmul.f32 %v1213, %v566
  %v1348 = vmul.f32 %v1214, %v571
  %v1349 = vmul.f32 %v1215, %v574
  %v1350 = vmul.f32 %v1216, %v579
  %v1351 = vmul.f32 %v1217, %v582
  %v1352 = vmul.f32 %v1218, %v587
  %v1353 = vmul.f32 %v1219, %v590
  %v1354 = vmul.f32 %v1220, %v595
  %v1355 = vmul.f32 %v1221, %v598
  %v1356 = vmul.f32 %v1222, %v603
  %v1357 = vmul.f32 %v1223, %v606
  %v1358 = vmul.f32 %v1224, %v611
  %v1359 = vmul.f32 %v1225, %v614
  %v1360 = vmul.f32 %v1226, %v619
  %v1361 = vmul.f32 %v1227, %v622
  %v1362 = vmul.f32 %v1228, %v627
  %v1363 = vmul.f32 %v1229, %v630
  %v1364 = vmul.f32 %v1230, %v635
  %v1365 = vmul.f32 %v1231, %v638
  %v1366 = vmul.f32 %v1232, %v643
  %v1367 = vmul.f32 %v1233, %v646
  %v1368 = vmul.f32 %v1234, %v651
  %v1369 = vmul.f32 %v1235, %v654
  %v1370 = vadd.f32 %v1306, %v1307
  %v1371 = vadd.f32 %v1370, %v1308
  %v1372 = vadd.f32 %v1371, %v1309
  %v1373 = vadd.f32 %v1372, %v1310
  %v1374 = vadd.f32 %v1373, %v1311
  %v1375 = vadd.f32 %v1374, %v1312
  %v1376 = vadd.f32 %v1375, %v1313
  %v1377 = vadd.f32 %v1376, %v1314
  %v1378 = vadd.f32 %v1377, %v1315
  %v1379 = vadd.f32 %v1378, %v1316
  %v1380 = vadd.f32 %v1379, %v1317
  %v1381 = vadd.f32 %v1380, %v1318
  %v1382 = vadd.f32 %v1381, %v1319
  %v1383 = vadd.f32 %v1382, %v1320
  %v1384 = vadd.f32 %v1383, %v1321
  %v1385 = vadd.f32 %v1384, %v1322
  %v1386 = vadd.f32 %v1385, %v1323
  %v1387 = vadd.f32 %v1386, %v1324
  %v1388 = vadd.f32 %v1387, %v1325
  %v1389 = vadd.f32 %v1388, %v1326
  %v1390 = vadd.f32 %v1389, %v1327
  %v1391 = vadd.f32 %v1390, %v1328
  %v1392 = vadd.f32 %v1391, %v1329
  %v1393 = vadd.f32 %v1392, %v1330
  %v1394 = vadd.f32 %v1393, %v1331
  %v1395 = vadd.f32 %v1394, %v1332
  %v1396 = vadd.f32 %v1395, %v1333
  %v1397 = vadd.f32 %v1396, %v1334
  %v1398 = vadd.f32 %v1397, %v1335
  %v1399 = vadd.f32 %v1398, %v1336
  %v1400 = vadd.f32 %v1399, %v1337
  %v1401 = vadd.f32 %v1400, %v1338
  %v1402 = vadd.f32 %v1401, %v1339
  %v1403 = vadd.f32 %v1402, %v1340
  %v1404 = vadd.f32 %v1403, %v1341
  %v1405 = vadd.f32 %v1404, %v1342
  %v1406 = vadd.f32 %v1405, %v1343
  %v1407 = vadd.f32 %v1406, %v1344
  %v1408 = vadd.f32 %v1407, %v1345
  %v1409 = vadd.f32 %v1408, %v1346
  %v1410 = vadd.f32 %v1409, %v1347
  %v1411 = vadd.f32 %v1410, %v1348
  %v1412 = vadd.f32 %v1411, %v1349
  %v1413 = vadd.f32 %v1412, %v1350
  %v1414 = vadd.f32 %v1413, %v1351
  %v1415 = vadd.f32 %v1414, %v1352
  %v1416 = vadd.f32 %v1415, %v1353
  %v1417 = vadd.f32 %v1416, %v1354
  %v1418 = vadd.f32 %v1417, %v1355
  %v1419 = vadd.f32 %v1418, %v1356
  %v1420 = vadd.f32 %v1419, %v1357
  %v1421 = vadd.f32 %v1420, %v1358
  %v1422 = vadd.f32 %v1421, %v1359
  %v1423 = vadd.f32 %v1422, %v1360
  %v1424 = vadd.f32 %v1423, %v1361
  %v1425 = vadd.f32 %v1424, %v1362
  %v1426 = vadd.f32 %v1425, %v1363
  %v1427 = vadd.f32 %v1426, %v1364
  %v1428 = vadd.f32 %v1427, %v1365
  %v1429 = vadd.f32 %v1428, %v1366
  %v1430 = vadd.f32 %v1429, %v1367
  %v1431 = vadd.f32 %v1430, %v1368
  %v1432 = vadd.f32 %v1431, %v1369
  %v1433 = vrot.slane %v1432, 4
  %v1434 = vadd.f32 %v1432, %v1433
  %v1435 = vrot.slane %v1434, 2
  %v1436 = vadd.f32 %v1434, %v1435
  %v1437 = vrot.slane %v1436, 1
  %v1438 = vadd.f32 %v1436, %v1437
  %1439 = vst [vmem:[%s4] sm:$0x1] %v1438
  // Predicated region
  $region10: #{discriminator_forward.9} parent=0 // pred_check
    _
  $region11: #{discriminator_forward.9} parent=0 // pred_check_branch
    %1441 = sbr.rel (0) target = $region13
  $region12: #{discriminator_forward.9} parent=0 // pred_region
    _
  $region13: #{discriminator_forward.9} parent=0 // pred_fallthru
    _
  // Predicated region
  $region14: #{discriminator_forward.9} parent=0 // pred_check
    _
  $region15: #{discriminator_forward.9} parent=0 // pred_check_branch
    %1443 = sbr.rel (0) target = $region17
  $region16: #{discriminator_forward.9} parent=0 // pred_region
    _
  $region17: #{discriminator_forward.9} parent=0 // pred_fallthru
    _
  // Predicated region
  $region18: #{discriminator_forward.9} parent=0 // pred_check
    _
  $region19: #{discriminator_forward.9} parent=0 // pred_check_branch
    %1445 = sbr.rel (0) target = $region21
  $region20: #{discriminator_forward.9} parent=0 // pred_region
    _
  $region21: #{discriminator_forward.9} parent=0 // pred_fallthru
    _
  // Predicated region
  $region22: #{discriminator_forward.9} parent=0 // pred_check
    _
  $region23: #{discriminator_forward.9} parent=0 // pred_check_branch
    %1447 = sbr.rel (0) target = $region25
  $region24: #{discriminator_forward.9} parent=0 // pred_region
    _
  $region25: #{discriminator_forward.9} parent=0 // pred_fallthru
    _
  // Predicated region
  $region26: #{discriminator_forward.9} parent=0 // pred_check
    _
  $region27: #{discriminator_forward.9} parent=0 // pred_check_branch
    %1449 = sbr.rel (0) target = $region29
  $region28: #{discriminator_forward.9} parent=0 // pred_region
    _
  $region29: #{discriminator_forward.9} parent=0 // pred_fallthru
    _
  // Predicated region
  $region30: #{discriminator_forward.9} parent=0 // pred_check
    _
  $region31: #{discriminator_forward.9} parent=0 // pred_check_branch
    %1451 = sbr.rel (0) target = $region33
  $region32: #{discriminator_forward.9} parent=0 // pred_region
    _
  $region33: #{discriminator_forward.9} parent=0 // pred_fallthru
    _

// kernel: discriminator_forward.11
$region0: #{discriminator_forward.11}
  #allocation0 [shape = 'u32[]', space=smem, size = 0x4, offset = 0x4, fixed_abs, tag = 'smem constant byte address 0x4 - core index']
  #allocation1 [shape = 'u32[144,128]{1,0:T(1,128)}', space=vmem, size = 0x12000, scoped, tag = 'internal scratch']
  %s0 = inlined_call_operand.vmem [shape: bf16[128,128], index: 0, kind: input, shape index: {}]
  %s1 = inlined_call_operand.vmem [shape: bf16[128,128], index: 1, kind: input, shape index: {}]
  %s2 = inlined_call_operand.vmem [shape: bf16[128,128], index: 2, kind: output, shape index: {0}]
  %s3 = inlined_call_operand.vmem [shape: f32[1,1,128], index: 3, kind: output, shape index: {1}]
  %s4 = inlined_call_operand.vmem [shape: f32[1,1,128], index: 4, kind: output, shape index: {2}]
  %5 = xla_tuple %s2, %s3, %s4
  %s6 = sld [smem:[#allocation0]]
  $region34: #{discriminator_forward.11} parent=0
    _
  %s8 = ssub.s32 1, %s6
  %s9 = scalar_select 0, %s8, %s6
  // Predicated region
  $region2: #{discriminator_forward.11} parent=0 // pred_check
    _
  $region3: #{discriminator_forward.11} parent=0 // pred_check_branch
    %11 = sbr.rel (0) target = $region5
  $region4: #{discriminator_forward.11} parent=0 // pred_region
    _
  $region5: #{discriminator_forward.11} parent=0 // pred_fallthru
    _
  // Predicated region
  $region6: #{discriminator_forward.11} parent=0 // pred_check
    _
  $region7: #{discriminator_forward.11} parent=0 // pred_check_branch
    %13 = sbr.rel (0) target = $region9
  $region8: #{discriminator_forward.11} parent=0 // pred_region
    _
  $region9: #{discriminator_forward.11} parent=0 // pred_fallthru
    _
  %v15 = vld [vmem:[%s0] sm:$0xf]
  %v16 = vld [vmem:[%s0 + $0x4] sm:$0xf]
  %v17 = vld [vmem:[%s0 + $0x8] sm:$0xf]
  %v18 = vld [vmem:[%s0 + $0xc] sm:$0xf]
  %v19 = vld [vmem:[%s0 + $0x10] sm:$0xf]
  %v20 = vld [vmem:[%s0 + $0x14] sm:$0xf]
  %v21 = vld [vmem:[%s0 + $0x18] sm:$0xf]
  %v22 = vld [vmem:[%s0 + $0x1c] sm:$0xf]
  %v23 = vld [vmem:[%s0 + $0x20] sm:$0xf]
  %v24 = vld [vmem:[%s0 + $0x24] sm:$0xf]
  %v25 = vld [vmem:[%s0 + $0x28] sm:$0xf]
  %v26 = vld [vmem:[%s0 + $0x2c] sm:$0xf]
  %v27 = vld [vmem:[%s0 + $0x30] sm:$0xf]
  %v28 = vld [vmem:[%s0 + $0x34] sm:$0xf]
  %v29 = vld [vmem:[%s0 + $0x38] sm:$0xf]
  %v30 = vld [vmem:[%s0 + $0x3c] sm:$0xf]
  %v31 = vld [vmem:[%s1] sm:$0xf]
  %v32 = vld [vmem:[%s1 + $0x4] sm:$0xf]
  %v33 = vld [vmem:[%s1 + $0x8] sm:$0xf]
  %v34 = vld [vmem:[%s1 + $0xc] sm:$0xf]
  %v35 = vld [vmem:[%s1 + $0x10] sm:$0xf]
  %v36 = vld [vmem:[%s1 + $0x14] sm:$0xf]
  %v37 = vld [vmem:[%s1 + $0x18] sm:$0xf]
  %v38 = vld [vmem:[%s1 + $0x1c] sm:$0xf]
  %v39 = vld [vmem:[%s1 + $0x20] sm:$0xf]
  %v40 = vld [vmem:[%s1 + $0x24] sm:$0xf]
  %v41 = vld [vmem:[%s1 + $0x28] sm:$0xf]
  %v42 = vld [vmem:[%s1 + $0x2c] sm:$0xf]
  %v43 = vld [vmem:[%s1 + $0x30] sm:$0xf]
  %v44 = vld [vmem:[%s1 + $0x34] sm:$0xf]
  %v45 = vld [vmem:[%s1 + $0x38] sm:$0xf]
  %v46 = vld [vmem:[%s1 + $0x3c] sm:$0xf]
  %v63 = vunpack.c.l.b16 %v15
  %v64 = vunpack.c.l.b16 %v16
  %v65 = vunpack.c.l.b16 %v17
  %v66 = vunpack.c.l.b16 %v18
  %v67 = vunpack.c.l.b16 %v19
  %v68 = vunpack.c.l.b16 %v20
  %v69 = vunpack.c.l.b16 %v21
  %v70 = vunpack.c.l.b16 %v22
  %v71 = vunpack.c.l.b16 %v23
  %v72 = vunpack.c.l.b16 %v24
  %v73 = vunpack.c.l.b16 %v25
  %v74 = vunpack.c.l.b16 %v26
  %v75 = vunpack.c.l.b16 %v27
  %v76 = vunpack.c.l.b16 %v28
  %v77 = vunpack.c.l.b16 %v29
  %v78 = vunpack.c.l.b16 %v30
  %v79 = vpack.c.b16 %v64, %v63
  %v80 = vpack.c.b16 %v66, %v65
  %v81 = vpack.c.b16 %v68, %v67
  %v82 = vpack.c.b16 %v70, %v69
  %v83 = vpack.c.b16 %v72, %v71
  %v84 = vpack.c.b16 %v74, %v73
  %v85 = vpack.c.b16 %v76, %v75
  %v86 = vpack.c.b16 %v78, %v77
  %v111 = vunpack.c.l.b16 %v31
  %v112 = vunpack.c.l.b16 %v32
  %v113 = vunpack.c.l.b16 %v33
  %v114 = vunpack.c.l.b16 %v34
  %v115 = vunpack.c.l.b16 %v35
  %v116 = vunpack.c.l.b16 %v36
  %v117 = vunpack.c.l.b16 %v37
  %v118 = vunpack.c.l.b16 %v38
  %v119 = vunpack.c.l.b16 %v39
  %v120 = vunpack.c.l.b16 %v40
  %v121 = vunpack.c.l.b16 %v41
  %v122 = vunpack.c.l.b16 %v42
  %v123 = vunpack.c.l.b16 %v43
  %v124 = vunpack.c.l.b16 %v44
  %v125 = vunpack.c.l.b16 %v45
  %v126 = vunpack.c.l.b16 %v46
  %v127 = vpack.c.b16 %v112, %v111
  %v128 = vpack.c.b16 %v114, %v113
  %v129 = vpack.c.b16 %v116, %v115
  %v130 = vpack.c.b16 %v118, %v117
  %v131 = vpack.c.b16 %v120, %v119
  %v132 = vpack.c.b16 %v122, %v121
  %v133 = vpack.c.b16 %v124, %v123
  %v134 = vpack.c.b16 %v126, %v125
  %143 = vmatprep.subr.bf16.mxu0 0
  %144 = vmatpush1.bf16.msra.mxu0 %v134
  %145 = vmatprep.subr.bf16.mxu0 0
  %146 = vmatpush1.bf16.msra.mxu0 %v133
  %147 = vmatprep.subr.bf16.mxu0 0
  %148 = vmatpush1.bf16.msra.mxu0 %v132
  %149 = vmatprep.subr.bf16.mxu0 0
  %150 = vmatpush1.bf16.msra.mxu0 %v131
  %151 = vmatprep.subr.bf16.mxu0 0
  %152 = vmatpush1.bf16.msra.mxu0 %v130
  %153 = vmatprep.subr.bf16.mxu0 0
  %154 = vmatpush1.bf16.msra.mxu0 %v129
  %155 = vmatprep.subr.bf16.mxu0 0
  %156 = vmatpush1.bf16.msra.mxu0 %v128
  %157 = vmatprep.subr.bf16.mxu0 0
  %158 = vmatpush1.bf16.msra.mxu0 %v127
  %159 = vmatprep.subr.bf16.mxu0 0
  %160 = vmatpush2.bf16.msra.mxu0 0
  %161 = vmatprep.subr.bf16.mxu0 0
  %162 = vmatpush2.bf16.msra.mxu0 0
  %163 = vmatprep.subr.bf16.mxu0 0
  %164 = vmatpush2.bf16.msra.mxu0 0
  %165 = vmatprep.subr.bf16.mxu0 0
  %166 = vmatpush2.bf16.msra.mxu0 0
  %167 = vmatprep.subr.bf16.mxu0 0
  %168 = vmatpush2.bf16.msra.mxu0 0
  %169 = vmatprep.subr.bf16.mxu0 0
  %170 = vmatpush2.bf16.msra.mxu0 0
  %171 = vmatprep.subr.bf16.mxu0 0
  %172 = vmatpush2.bf16.msra.mxu0 0
  %173 = vmatprep.subr.bf16.mxu0 0
  %174 = vmatpush2.bf16.msra.mxu0 0
  %175 = vmatprep.mubr.bf16.mxu0 0
  %176 = vmatmul.mubr.bf16.gmra.mxu0 %v79
  %v177 = vpop.f32.mrf.mxu0
  %v178 = vadd.f32 0.0, %v177
  %v179 = vpop.f32.mrf.mxu0
  %v180 = vpop.f32.mrf.mxu0
  %v181 = vadd.f32 0.0, %v180
  %v182 = vpop.f32.mrf.mxu0
  %183 = vmatprep.mubr.bf16.mxu0 0
  %184 = vmatmul.mubr.bf16.gmra.mxu0 %v80
  %v185 = vpop.f32.mrf.mxu0
  %v186 = vadd.f32 0.0, %v185
  %v187 = vpop.f32.mrf.mxu0
  %v188 = vpop.f32.mrf.mxu0
  %v189 = vadd.f32 0.0, %v188
  %v190 = vpop.f32.mrf.mxu0
  %191 = vmatprep.mubr.bf16.mxu0 0
  %192 = vmatmul.mubr.bf16.gmra.mxu0 %v81
  %v193 = vpop.f32.mrf.mxu0
  %v194 = vadd.f32 0.0, %v193
  %v195 = vpop.f32.mrf.mxu0
  %v196 = vpop.f32.mrf.mxu0
  %v197 = vadd.f32 0.0, %v196
  %v198 = vpop.f32.mrf.mxu0
  %199 = vmatprep.mubr.bf16.mxu0 0
  %200 = vmatmul.mubr.bf16.gmra.mxu0 %v82
  %v201 = vpop.f32.mrf.mxu0
  %v202 = vadd.f32 0.0, %v201
  %v203 = vpop.f32.mrf.mxu0
  %v204 = vpop.f32.mrf.mxu0
  %v205 = vadd.f32 0.0, %v204
  %v206 = vpop.f32.mrf.mxu0
  %207 = vmatprep.mubr.bf16.mxu0 0
  %208 = vmatmul.mubr.bf16.gmra.mxu0 %v83
  %v209 = vpop.f32.mrf.mxu0
  %v210 = vadd.f32 0.0, %v209
  %v211 = vpop.f32.mrf.mxu0
  %v212 = vpop.f32.mrf.mxu0
  %v213 = vadd.f32 0.0, %v212
  %v214 = vpop.f32.mrf.mxu0
  %215 = vmatprep.mubr.bf16.mxu0 0
  %216 = vmatmul.mubr.bf16.gmra.mxu0 %v84
  %v217 = vpop.f32.mrf.mxu0
  %v218 = vadd.f32 0.0, %v217
  %v219 = vpop.f32.mrf.mxu0
  %v220 = vpop.f32.mrf.mxu0
  %v221 = vadd.f32 0.0, %v220
  %v222 = vpop.f32.mrf.mxu0
  %223 = vmatprep.mubr.bf16.mxu0 0
  %224 = vmatmul.mubr.bf16.gmra.mxu0 %v85
  %v225 = vpop.f32.mrf.mxu0
  %v226 = vadd.f32 0.0, %v225
  %v227 = vpop.f32.mrf.mxu0
  %v228 = vpop.f32.mrf.mxu0
  %v229 = vadd.f32 0.0, %v228
  %v230 = vpop.f32.mrf.mxu0
  %231 = vmatprep.mubr.bf16.mxu0 0
  %232 = vmatmul.mubr.bf16.gmra.mxu0 %v86
  %v233 = vpop.f32.mrf.mxu0
  %v234 = vadd.f32 0.0, %v233
  %v235 = vpop.f32.mrf.mxu0
  %v236 = vpop.f32.mrf.mxu0
  %v237 = vadd.f32 0.0, %v236
  %v238 = vpop.f32.mrf.mxu0
  %239 = vdwg.mxu0
  %v240 = vpack.c.bf16 %v181, %v178
  %v241 = vpack.c.bf16 %v189, %v186
  %v242 = vpack.c.bf16 %v197, %v194
  %v243 = vpack.c.bf16 %v205, %v202
  %v244 = vpack.c.bf16 %v213, %v210
  %v245 = vpack.c.bf16 %v221, %v218
  %v246 = vpack.c.bf16 %v229, %v226
  %v247 = vpack.c.bf16 %v237, %v234
  %v256 = vunpack.c.l.b16 %v240
  %v257 = vunpack.c.h.b16 %v240
  %v258 = vunpack.c.l.b16 %v241
  %v259 = vunpack.c.h.b16 %v241
  %v260 = vunpack.c.l.b16 %v242
  %v261 = vunpack.c.h.b16 %v242
  %v262 = vunpack.c.l.b16 %v243
  %v263 = vunpack.c.h.b16 %v243
  %v264 = vunpack.c.l.b16 %v244
  %v265 = vunpack.c.h.b16 %v244
  %v266 = vunpack.c.l.b16 %v245
  %v267 = vunpack.c.h.b16 %v245
  %v268 = vunpack.c.l.b16 %v246
  %v269 = vunpack.c.h.b16 %v246
  %v270 = vunpack.c.l.b16 %v247
  %v271 = vunpack.c.h.b16 %v247
  %v272 = vpack.c.b16 %v256, %v256
  %v273 = vpack.c.b16 %v257, %v257
  %v274 = vpack.c.b16 %v258, %v258
  %v275 = vpack.c.b16 %v259, %v259
  %v276 = vpack.c.b16 %v260, %v260
  %v277 = vpack.c.b16 %v261, %v261
  %v278 = vpack.c.b16 %v262, %v262
  %v279 = vpack.c.b16 %v263, %v263
  %v280 = vpack.c.b16 %v264, %v264
  %v281 = vpack.c.b16 %v265, %v265
  %v282 = vpack.c.b16 %v266, %v266
  %v283 = vpack.c.b16 %v267, %v267
  %v284 = vpack.c.b16 %v268, %v268
  %v285 = vpack.c.b16 %v269, %v269
  %v286 = vpack.c.b16 %v270, %v270
  %v287 = vpack.c.b16 %v271, %v271
  %304 = vst [vmem:[%s2] sm:$0xf] %v272
  %305 = vst [vmem:[%s2 + $0x4] sm:$0xf] %v273
  %306 = vst [vmem:[%s2 + $0x8] sm:$0xf] %v274
  %307 = vst [vmem:[%s2 + $0xc] sm:$0xf] %v275
  %308 = vst [vmem:[%s2 + $0x10] sm:$0xf] %v276
  %309 = vst [vmem:[%s2 + $0x14] sm:$0xf] %v277
  %310 = vst [vmem:[%s2 + $0x18] sm:$0xf] %v278
  %311 = vst [vmem:[%s2 + $0x1c] sm:$0xf] %v279
  %312 = vst [vmem:[%s2 + $0x20] sm:$0xf] %v280
  %313 = vst [vmem:[%s2 + $0x24] sm:$0xf] %v281
  %314 = vst [vmem:[%s2 + $0x28] sm:$0xf] %v282
  %315 = vst [vmem:[%s2 + $0x2c] sm:$0xf] %v283
  %316 = vst [vmem:[%s2 + $0x30] sm:$0xf] %v284
  %317 = vst [vmem:[%s2 + $0x34] sm:$0xf] %v285
  %318 = vst [vmem:[%s2 + $0x38] sm:$0xf] %v286
  %319 = vst [vmem:[%s2 + $0x3c] sm:$0xf] %v287
  %s320 = smul.u32 0, 128
  %v321 = vlaneseq
  %v322 = vshrl.u32 %v321, 7
  %v323 = vadd.s32 %v322, 8
  %v324 = vadd.s32 %v322, 16
  %v325 = vadd.s32 %v322, 24
  %v326 = vadd.s32 %v322, 32
  %v327 = vadd.s32 %v322, 40
  %v328 = vadd.s32 %v322, 48
  %v329 = vadd.s32 %v322, 56
  %v330 = vadd.s32 %v322, 64
  %v331 = vadd.s32 %v322, 72
  %v332 = vadd.s32 %v322, 80
  %v333 = vadd.s32 %v322, 88
  %v334 = vadd.s32 %v322, 96
  %v335 = vadd.s32 %v322, 104
  %v336 = vadd.s32 %v322, 112
  %v337 = vadd.s32 %v322, 120
  %v338 = vstv %s320
  %v339 = vadd.s32 %v338, %v322
  %v340 = vadd.s32 %v338, %v323
  %v341 = vadd.s32 %v338, %v324
  %v342 = vadd.s32 %v338, %v325
  %v343 = vadd.s32 %v338, %v326
  %v344 = vadd.s32 %v338, %v327
  %v345 = vadd.s32 %v338, %v328
  %v346 = vadd.s32 %v338, %v329
  %v347 = vadd.s32 %v338, %v330
  %v348 = vadd.s32 %v338, %v331
  %v349 = vadd.s32 %v338, %v332
  %v350 = vadd.s32 %v338, %v333
  %v351 = vadd.s32 %v338, %v334
  %v352 = vadd.s32 %v338, %v335
  %v353 = vadd.s32 %v338, %v336
  %v354 = vadd.s32 %v338, %v337
  %vm355 = vcmp.lt.s32.totalorder %v339, 128
  %vm356 = vcmp.lt.s32.totalorder %v340, 128
  %vm357 = vcmp.lt.s32.totalorder %v341, 128
  %vm358 = vcmp.lt.s32.totalorder %v342, 128
  %vm359 = vcmp.lt.s32.totalorder %v343, 128
  %vm360 = vcmp.lt.s32.totalorder %v344, 128
  %vm361 = vcmp.lt.s32.totalorder %v345, 128
  %vm362 = vcmp.lt.s32.totalorder %v346, 128
  %vm363 = vcmp.lt.s32.totalorder %v347, 128
  %vm364 = vcmp.lt.s32.totalorder %v348, 128
  %vm365 = vcmp.lt.s32.totalorder %v349, 128
  %vm366 = vcmp.lt.s32.totalorder %v350, 128
  %vm367 = vcmp.lt.s32.totalorder %v351, 128
  %vm368 = vcmp.lt.s32.totalorder %v352, 128
  %vm369 = vcmp.lt.s32.totalorder %v353, 128
  %vm370 = vcmp.lt.s32.totalorder %v354, 128
  %v371 = vsel %vm355, %v178, 0.0
  %v372 = vsel %vm356, %v181, 0.0
  %v373 = vsel %vm357, %v186, 0.0
  %v374 = vsel %vm358, %v189, 0.0
  %v375 = vsel %vm359, %v194, 0.0
  %v376 = vsel %vm360, %v197, 0.0
  %v377 = vsel %vm361, %v202, 0.0
  %v378 = vsel %vm362, %v205, 0.0
  %v379 = vsel %vm363, %v210, 0.0
  %v380 = vsel %vm364, %v213, 0.0
  %v381 = vsel %vm365, %v218, 0.0
  %v382 = vsel %vm366, %v221, 0.0
  %v383 = vsel %vm367, %v226, 0.0
  %v384 = vsel %vm368, %v229, 0.0
  %v385 = vsel %vm369, %v234, 0.0
  %v386 = vsel %vm370, %v237, 0.0
  %v387 = vadd.f32 %v371, %v372
  %v388 = vadd.f32 %v387, %v373
  %v389 = vadd.f32 %v388, %v374
  %v390 = vadd.f32 %v389, %v375
  %v391 = vadd.f32 %v390, %v376
  %v392 = vadd.f32 %v391, %v377
  %v393 = vadd.f32 %v392, %v378
  %v394 = vadd.f32 %v393, %v379
  %v395 = vadd.f32 %v394, %v380
  %v396 = vadd.f32 %v395, %v381
  %v397 = vadd.f32 %v396, %v382
  %v398 = vadd.f32 %v397, %v383
  %v399 = vadd.f32 %v398, %v384
  %v400 = vadd.f32 %v399, %v385
  %v401 = vadd.f32 %v400, %v386
  %v402 = vrot.slane %v401, 4
  %v403 = vadd.f32 %v401, %v402
  %v404 = vrot.slane %v403, 2
  %v405 = vadd.f32 %v403, %v404
  %v406 = vrot.slane %v405, 1
  %v407 = vadd.f32 %v405, %v406
  %408 = vst [vmem:[%s3] sm:$0x1] %v407
  %v409 = vmul.f32 %v371, %v178
  %v410 = vmul.f32 %v372, %v181
  %v411 = vmul.f32 %v373, %v186
  %v412 = vmul.f32 %v374, %v189
  %v413 = vmul.f32 %v375, %v194
  %v414 = vmul.f32 %v376, %v197
  %v415 = vmul.f32 %v377, %v202
  %v416 = vmul.f32 %v378, %v205
  %v417 = vmul.f32 %v379, %v210
  %v418 = vmul.f32 %v380, %v213
  %v419 = vmul.f32 %v381, %v218
  %v420 = vmul.f32 %v382, %v221
  %v421 = vmul.f32 %v383, %v226
  %v422 = vmul.f32 %v384, %v229
  %v423 = vmul.f32 %v385, %v234
  %v424 = vmul.f32 %v386, %v237
  %v425 = vadd.f32 %v409, %v410
  %v426 = vadd.f32 %v425, %v411
  %v427 = vadd.f32 %v426, %v412
  %v428 = vadd.f32 %v427, %v413
  %v429 = vadd.f32 %v428, %v414
  %v430 = vadd.f32 %v429, %v415
  %v431 = vadd.f32 %v430, %v416
  %v432 = vadd.f32 %v431, %v417
  %v433 = vadd.f32 %v432, %v418
  %v434 = vadd.f32 %v433, %v419
  %v435 = vadd.f32 %v434, %v420
  %v436 = vadd.f32 %v435, %v421
  %v437 = vadd.f32 %v436, %v422
  %v438 = vadd.f32 %v437, %v423
  %v439 = vadd.f32 %v438, %v424
  %v440 = vrot.slane %v439, 4
  %v441 = vadd.f32 %v439, %v440
  %v442 = vrot.slane %v441, 2
  %v443 = vadd.f32 %v441, %v442
  %v444 = vrot.slane %v443, 1
  %v445 = vadd.f32 %v443, %v444
  %446 = vst [vmem:[%s4] sm:$0x1] %v445
  // Predicated region
  $region10: #{discriminator_forward.11} parent=0 // pred_check
    _
  $region11: #{discriminator_forward.11} parent=0 // pred_check_branch
    %448 = sbr.rel (0) target = $region13
  $region12: #{discriminator_forward.11} parent=0 // pred_region
    _
  $region13: #{discriminator_forward.11} parent=0 // pred_fallthru
    _
  // Predicated region
  $region14: #{discriminator_forward.11} parent=0 // pred_check
    _
  $region15: #{discriminator_forward.11} parent=0 // pred_check_branch
    %450 = sbr.rel (0) target = $region17
  $region16: #{discriminator_forward.11} parent=0 // pred_region
    _
  $region17: #{discriminator_forward.11} parent=0 // pred_fallthru
    _
  // Predicated region
  $region18: #{discriminator_forward.11} parent=0 // pred_check
    _
  $region19: #{discriminator_forward.11} parent=0 // pred_check_branch
    %452 = sbr.rel (0) target = $region21
  $region20: #{discriminator_forward.11} parent=0 // pred_region
    _
  $region21: #{discriminator_forward.11} parent=0 // pred_fallthru
    _
  // Predicated region
  $region22: #{discriminator_forward.11} parent=0 // pred_check
    _
  $region23: #{discriminator_forward.11} parent=0 // pred_check_branch
    %454 = sbr.rel (0) target = $region25
  $region24: #{discriminator_forward.11} parent=0 // pred_region
    _
  $region25: #{discriminator_forward.11} parent=0 // pred_fallthru
    _
  // Predicated region
  $region26: #{discriminator_forward.11} parent=0 // pred_check
    _
  $region27: #{discriminator_forward.11} parent=0 // pred_check_branch
    %456 = sbr.rel (0) target = $region29
  $region28: #{discriminator_forward.11} parent=0 // pred_region
    _
  $region29: #{discriminator_forward.11} parent=0 // pred_fallthru
    _
  // Predicated region
  $region30: #{discriminator_forward.11} parent=0 // pred_check
    _
  $region31: #{discriminator_forward.11} parent=0 // pred_check_branch
    %458 = sbr.rel (0) target = $region33
  $region32: #{discriminator_forward.11} parent=0 // pred_region
    _
  $region33: #{discriminator_forward.11} parent=0 // pred_fallthru
    _

// kernel: discriminator_forward.12
$region0: #{discriminator_forward.12}
  #allocation0 [shape = 'u32[]', space=smem, size = 0x4, offset = 0x4, fixed_abs, tag = 'smem constant byte address 0x4 - core index']
  #allocation1 [shape = 'u32[144,128]{1,0:T(1,128)}', space=vmem, size = 0x12000, scoped, tag = 'internal scratch']
  %s0 = inlined_call_operand.vmem [shape: bf16[128,128], index: 0, kind: input, shape index: {}]
  %s1 = inlined_call_operand.vmem [shape: f32[1,128], index: 1, kind: input, shape index: {}]
  %s2 = inlined_call_operand.vmem [shape: f32[1,128], index: 2, kind: input, shape index: {}]
  %s3 = inlined_call_operand.vmem [shape: bf16[128,128], index: 3, kind: output, shape index: {}]
  %s4 = sld [smem:[#allocation0]]
  $region22: #{discriminator_forward.12} parent=0
    _
  %s6 = ssub.s32 1, %s4
  %s7 = scalar_select 0, %s6, %s4
  // Predicated region
  $region2: #{discriminator_forward.12} parent=0 // pred_check
    _
  $region3: #{discriminator_forward.12} parent=0 // pred_check_branch
    %9 = sbr.rel (0) target = $region5
  $region4: #{discriminator_forward.12} parent=0 // pred_region
    _
  $region5: #{discriminator_forward.12} parent=0 // pred_fallthru
    _
  // Predicated region
  $region6: #{discriminator_forward.12} parent=0 // pred_check
    _
  $region7: #{discriminator_forward.12} parent=0 // pred_check_branch
    %11 = sbr.rel (0) target = $region9
  $region8: #{discriminator_forward.12} parent=0 // pred_region
    _
  $region9: #{discriminator_forward.12} parent=0 // pred_fallthru
    _
  // Predicated region
  $region10: #{discriminator_forward.12} parent=0 // pred_check
    _
  $region11: #{discriminator_forward.12} parent=0 // pred_check_branch
    %13 = sbr.rel (0) target = $region13
  $region12: #{discriminator_forward.12} parent=0 // pred_region
    _
  $region13: #{discriminator_forward.12} parent=0 // pred_fallthru
    _
  %v14 = vld [vmem:[%s0] sm:$0xf]
  %v15 = vld [vmem:[%s0 + $0x4] sm:$0xf]
  %v16 = vld [vmem:[%s0 + $0x8] sm:$0xf]
  %v17 = vld [vmem:[%s0 + $0xc] sm:$0xf]
  %v18 = vld [vmem:[%s0 + $0x10] sm:$0xf]
  %v19 = vld [vmem:[%s0 + $0x14] sm:$0xf]
  %v20 = vld [vmem:[%s0 + $0x18] sm:$0xf]
  %v21 = vld [vmem:[%s0 + $0x1c] sm:$0xf]
  %v22 = vld [vmem:[%s0 + $0x20] sm:$0xf]
  %v23 = vld [vmem:[%s0 + $0x24] sm:$0xf]
  %v24 = vld [vmem:[%s0 + $0x28] sm:$0xf]
  %v25 = vld [vmem:[%s0 + $0x2c] sm:$0xf]
  %v26 = vld [vmem:[%s0 + $0x30] sm:$0xf]
  %v27 = vld [vmem:[%s0 + $0x34] sm:$0xf]
  %v28 = vld [vmem:[%s0 + $0x38] sm:$0xf]
  %v29 = vld [vmem:[%s0 + $0x3c] sm:$0xf]
  %v30 = vunpack.c.l.bf16 %v14
  %v31 = vunpack.c.l.bf16 %v15
  %v32 = vunpack.c.l.bf16 %v16
  %v33 = vunpack.c.l.bf16 %v17
  %v34 = vunpack.c.l.bf16 %v18
  %v35 = vunpack.c.l.bf16 %v19
  %v36 = vunpack.c.l.bf16 %v20
  %v37 = vunpack.c.l.bf16 %v21
  %v38 = vunpack.c.l.bf16 %v22
  %v39 = vunpack.c.l.bf16 %v23
  %v40 = vunpack.c.l.bf16 %v24
  %v41 = vunpack.c.l.bf16 %v25
  %v42 = vunpack.c.l.bf16 %v26
  %v43 = vunpack.c.l.bf16 %v27
  %v44 = vunpack.c.l.bf16 %v28
  %v45 = vunpack.c.l.bf16 %v29
  %v46 = vld [vmem:[%s1] sm:$0x1]
  %v48 = vlaneseq
  %v49 = vshrl.u32 %v48, 7
  %v50 = vsub.s32 0, %v49
  %v51 = vrot.slane %v46, %v50
  %v53 = vmul.f32 %v30, %v51
  %v54 = vmul.f32 %v31, %v51
  %v55 = vmul.f32 %v32, %v51
  %v56 = vmul.f32 %v33, %v51
  %v57 = vmul.f32 %v34, %v51
  %v58 = vmul.f32 %v35, %v51
  %v59 = vmul.f32 %v36, %v51
  %v60 = vmul.f32 %v37, %v51
  %v61 = vmul.f32 %v38, %v51
  %v62 = vmul.f32 %v39, %v51
  %v63 = vmul.f32 %v40, %v51
  %v64 = vmul.f32 %v41, %v51
  %v65 = vmul.f32 %v42, %v51
  %v66 = vmul.f32 %v43, %v51
  %v67 = vmul.f32 %v44, %v51
  %v68 = vmul.f32 %v45, %v51
  %v69 = vld [vmem:[%s2] sm:$0x1]
  %v71 = vlaneseq
  %v72 = vshrl.u32 %v71, 7
  %v73 = vsub.s32 0, %v72
  %v74 = vrot.slane %v69, %v73
  %v76 = vadd.f32 %v53, %v74
  %v77 = vadd.f32 %v54, %v74
  %v78 = vadd.f32 %v55, %v74
  %v79 = vadd.f32 %v56, %v74
  %v80 = vadd.f32 %v57, %v74
  %v81 = vadd.f32 %v58, %v74
  %v82 = vadd.f32 %v59, %v74
  %v83 = vadd.f32 %v60, %v74
  %v84 = vadd.f32 %v61, %v74
  %v85 = vadd.f32 %v62, %v74
  %v86 = vadd.f32 %v63, %v74
  %v87 = vadd.f32 %v64, %v74
  %v88 = vadd.f32 %v65, %v74
  %v89 = vadd.f32 %v66, %v74
  %v90 = vadd.f32 %v67, %v74
  %v91 = vadd.f32 %v68, %v74
  %v92 = vmax.f32 %v76, 0.0
  %v93 = vmax.f32 %v77, 0.0
  %v94 = vmax.f32 %v78, 0.0
  %v95 = vmax.f32 %v79, 0.0
  %v96 = vmax.f32 %v80, 0.0
  %v97 = vmax.f32 %v81, 0.0
  %v98 = vmax.f32 %v82, 0.0
  %v99 = vmax.f32 %v83, 0.0
  %v100 = vmax.f32 %v84, 0.0
  %v101 = vmax.f32 %v85, 0.0
  %v102 = vmax.f32 %v86, 0.0
  %v103 = vmax.f32 %v87, 0.0
  %v104 = vmax.f32 %v88, 0.0
  %v105 = vmax.f32 %v89, 0.0
  %v106 = vmax.f32 %v90, 0.0
  %v107 = vmax.f32 %v91, 0.0
  %v108 = vpack.c.bf16 %v93, %v92
  %v109 = vpack.c.bf16 %v95, %v94
  %v110 = vpack.c.bf16 %v97, %v96
  %v111 = vpack.c.bf16 %v99, %v98
  %v112 = vpack.c.bf16 %v101, %v100
  %v113 = vpack.c.bf16 %v103, %v102
  %v114 = vpack.c.bf16 %v105, %v104
  %v115 = vpack.c.bf16 %v107, %v106
  %v124 = vunpack.c.l.b16 %v108
  %v125 = vunpack.c.h.b16 %v108
  %v126 = vunpack.c.l.b16 %v109
  %v127 = vunpack.c.h.b16 %v109
  %v128 = vunpack.c.l.b16 %v110
  %v129 = vunpack.c.h.b16 %v110
  %v130 = vunpack.c.l.b16 %v111
  %v131 = vunpack.c.h.b16 %v111
  %v132 = vunpack.c.l.b16 %v112
  %v133 = vunpack.c.h.b16 %v112
  %v134 = vunpack.c.l.b16 %v113
  %v135 = vunpack.c.h.b16 %v113
  %v136 = vunpack.c.l.b16 %v114
  %v137 = vunpack.c.h.b16 %v114
  %v138 = vunpack.c.l.b16 %v115
  %v139 = vunpack.c.h.b16 %v115
  %v140 = vpack.c.b16 %v124, %v124
  %v141 = vpack.c.b16 %v125, %v125
  %v142 = vpack.c.b16 %v126, %v126
  %v143 = vpack.c.b16 %v127, %v127
  %v144 = vpack.c.b16 %v128, %v128
  %v145 = vpack.c.b16 %v129, %v129
  %v146 = vpack.c.b16 %v130, %v130
  %v147 = vpack.c.b16 %v131, %v131
  %v148 = vpack.c.b16 %v132, %v132
  %v149 = vpack.c.b16 %v133, %v133
  %v150 = vpack.c.b16 %v134, %v134
  %v151 = vpack.c.b16 %v135, %v135
  %v152 = vpack.c.b16 %v136, %v136
  %v153 = vpack.c.b16 %v137, %v137
  %v154 = vpack.c.b16 %v138, %v138
  %v155 = vpack.c.b16 %v139, %v139
  %172 = vst [vmem:[%s3] sm:$0xf] %v140
  %173 = vst [vmem:[%s3 + $0x4] sm:$0xf] %v141
  %174 = vst [vmem:[%s3 + $0x8] sm:$0xf] %v142
  %175 = vst [vmem:[%s3 + $0xc] sm:$0xf] %v143
  %176 = vst [vmem:[%s3 + $0x10] sm:$0xf] %v144
  %177 = vst [vmem:[%s3 + $0x14] sm:$0xf] %v145
  %178 = vst [vmem:[%s3 + $0x18] sm:$0xf] %v146
  %179 = vst [vmem:[%s3 + $0x1c] sm:$0xf] %v147
  %180 = vst [vmem:[%s3 + $0x20] sm:$0xf] %v148
  %181 = vst [vmem:[%s3 + $0x24] sm:$0xf] %v149
  %182 = vst [vmem:[%s3 + $0x28] sm:$0xf] %v150
  %183 = vst [vmem:[%s3 + $0x2c] sm:$0xf] %v151
  %184 = vst [vmem:[%s3 + $0x30] sm:$0xf] %v152
  %185 = vst [vmem:[%s3 + $0x34] sm:$0xf] %v153
  %186 = vst [vmem:[%s3 + $0x38] sm:$0xf] %v154
  %187 = vst [vmem:[%s3 + $0x3c] sm:$0xf] %v155
  // Predicated region
  $region14: #{discriminator_forward.12} parent=0 // pred_check
    _
  $region15: #{discriminator_forward.12} parent=0 // pred_check_branch
    %189 = sbr.rel (0) target = $region17
  $region16: #{discriminator_forward.12} parent=0 // pred_region
    _
  $region17: #{discriminator_forward.12} parent=0 // pred_fallthru
    _
  // Predicated region
  $region18: #{discriminator_forward.12} parent=0 // pred_check
    _
  $region19: #{discriminator_forward.12} parent=0 // pred_check_branch
    %191 = sbr.rel (0) target = $region21
  $region20: #{discriminator_forward.12} parent=0 // pred_region
    _
  $region21: #{discriminator_forward.12} parent=0 // pred_fallthru
    _

// kernel: discriminator_forward.13
$region0: #{discriminator_forward.13}
  #allocation0 [shape = 'u32[]', space=smem, size = 0x4, offset = 0x4, fixed_abs, tag = 'smem constant byte address 0x4 - core index']
  #allocation1 [shape = 'u32[144,128]{1,0:T(1,128)}', space=vmem, size = 0x12000, scoped, tag = 'internal scratch']
  %s0 = inlined_call_operand.vmem [shape: bf16[32,256], index: 0, kind: input, shape index: {}]
  %s1 = inlined_call_operand.vmem [shape: bf16[256,128], index: 1, kind: input, shape index: {}]
  %s2 = inlined_call_operand.vmem [shape: bf16[32,128], index: 2, kind: output, shape index: {0}]
  %s3 = inlined_call_operand.vmem [shape: f32[1,1,128], index: 3, kind: output, shape index: {1}]
  %s4 = inlined_call_operand.vmem [shape: f32[1,1,128], index: 4, kind: output, shape index: {2}]
  %5 = xla_tuple %s2, %s3, %s4
  %s6 = sld [smem:[#allocation0]]
  $region34: #{discriminator_forward.13} parent=0
    _
  %s8 = ssub.s32 1, %s6
  %s9 = scalar_select 0, %s8, %s6
  // Predicated region
  $region2: #{discriminator_forward.13} parent=0 // pred_check
    _
  $region3: #{discriminator_forward.13} parent=0 // pred_check_branch
    %11 = sbr.rel (0) target = $region5
  $region4: #{discriminator_forward.13} parent=0 // pred_region
    _
  $region5: #{discriminator_forward.13} parent=0 // pred_fallthru
    _
  // Predicated region
  $region6: #{discriminator_forward.13} parent=0 // pred_check
    _
  $region7: #{discriminator_forward.13} parent=0 // pred_check_branch
    %13 = sbr.rel (0) target = $region9
  $region8: #{discriminator_forward.13} parent=0 // pred_region
    _
  $region9: #{discriminator_forward.13} parent=0 // pred_fallthru
    _
  %v15 = vld [vmem:[%s0] sm:$0xff]
  %v16 = vld [vmem:[%s0 + $0x8] sm:$0xff]
  %v17 = vld [vmem:[%s0 + $0x10] sm:$0xff]
  %v18 = vld [vmem:[%s0 + $0x18] sm:$0xff]
  %v19 = vld [vmem:[%s1] sm:$0xf]
  %v20 = vld [vmem:[%s1 + $0x4] sm:$0xf]
  %v21 = vld [vmem:[%s1 + $0x8] sm:$0xf]
  %v22 = vld [vmem:[%s1 + $0xc] sm:$0xf]
  %v23 = vld [vmem:[%s1 + $0x10] sm:$0xf]
  %v24 = vld [vmem:[%s1 + $0x14] sm:$0xf]
  %v25 = vld [vmem:[%s1 + $0x18] sm:$0xf]
  %v26 = vld [vmem:[%s1 + $0x1c] sm:$0xf]
  %v27 = vld [vmem:[%s1 + $0x20] sm:$0xf]
  %v28 = vld [vmem:[%s1 + $0x24] sm:$0xf]
  %v29 = vld [vmem:[%s1 + $0x28] sm:$0xf]
  %v30 = vld [vmem:[%s1 + $0x2c] sm:$0xf]
  %v31 = vld [vmem:[%s1 + $0x30] sm:$0xf]
  %v32 = vld [vmem:[%s1 + $0x34] sm:$0xf]
  %v33 = vld [vmem:[%s1 + $0x38] sm:$0xf]
  %v34 = vld [vmem:[%s1 + $0x3c] sm:$0xf]
  %v35 = vld [vmem:[%s1 + $0x40] sm:$0xf]
  %v36 = vld [vmem:[%s1 + $0x44] sm:$0xf]
  %v37 = vld [vmem:[%s1 + $0x48] sm:$0xf]
  %v38 = vld [vmem:[%s1 + $0x4c] sm:$0xf]
  %v39 = vld [vmem:[%s1 + $0x50] sm:$0xf]
  %v40 = vld [vmem:[%s1 + $0x54] sm:$0xf]
  %v41 = vld [vmem:[%s1 + $0x58] sm:$0xf]
  %v42 = vld [vmem:[%s1 + $0x5c] sm:$0xf]
  %v43 = vld [vmem:[%s1 + $0x60] sm:$0xf]
  %v44 = vld [vmem:[%s1 + $0x64] sm:$0xf]
  %v45 = vld [vmem:[%s1 + $0x68] sm:$0xf]
  %v46 = vld [vmem:[%s1 + $0x6c] sm:$0xf]
  %v47 = vld [vmem:[%s1 + $0x70] sm:$0xf]
  %v48 = vld [vmem:[%s1 + $0x74] sm:$0xf]
  %v49 = vld [vmem:[%s1 + $0x78] sm:$0xf]
  %v50 = vld [vmem:[%s1 + $0x7c] sm:$0xf]
  %v55 = vunpack.c.l.b16 %v15
  %v56 = vunpack.c.h.b16 %v15
  %v57 = vunpack.c.l.b16 %v16
  %v58 = vunpack.c.h.b16 %v16
  %v59 = vunpack.c.l.b16 %v17
  %v60 = vunpack.c.h.b16 %v17
  %v61 = vunpack.c.l.b16 %v18
  %v62 = vunpack.c.h.b16 %v18
  %v63 = vpack.c.b16 %v57, %v55
  %v64 = vpack.c.b16 %v58, %v56
  %v65 = vpack.c.b16 %v61, %v59
  %v66 = vpack.c.b16 %v62, %v60
  %v103 = vunpack.c.l.b16 %v19
  %v104 = vunpack.c.l.b16 %v20
  %v105 = vunpack.c.l.b16 %v21
  %v106 = vunpack.c.l.b16 %v22
  %v107 = vunpack.c.l.b16 %v23
  %v108 = vunpack.c.l.b16 %v24
  %v109 = vunpack.c.l.b16 %v25
  %v110 = vunpack.c.l.b16 %v26
  %v111 = vunpack.c.l.b16 %v27
  %v112 = vunpack.c.l.b16 %v28
  %v113 = vunpack.c.l.b16 %v29
  %v114 = vunpack.c.l.b16 %v30
  %v115 = vunpack.c.l.b16 %v31
  %v116 = vunpack.c.l.b16 %v32
  %v117 = vunpack.c.l.b16 %v33
  %v118 = vunpack.c.l.b16 %v34
  %v119 = vunpack.c.l.b16 %v35
  %v120 = vunpack.c.l.b16 %v36
  %v121 = vunpack.c.l.b16 %v37
  %v122 = vunpack.c.l.b16 %v38
  %v123 = vunpack.c.l.b16 %v39
  %v124 = vunpack.c.l.b16 %v40
  %v125 = vunpack.c.l.b16 %v41
  %v126 = vunpack.c.l.b16 %v42
  %v127 = vunpack.c.l.b16 %v43
  %v128 = vunpack.c.l.b16 %v44
  %v129 = vunpack.c.l.b16 %v45
  %v130 = vunpack.c.l.b16 %v46
  %v131 = vunpack.c.l.b16 %v47
  %v132 = vunpack.c.l.b16 %v48
  %v133 = vunpack.c.l.b16 %v49
  %v134 = vunpack.c.l.b16 %v50
  %v135 = vpack.c.b16 %v104, %v103
  %v136 = vpack.c.b16 %v106, %v105
  %v137 = vpack.c.b16 %v108, %v107
  %v138 = vpack.c.b16 %v110, %v109
  %v139 = vpack.c.b16 %v112, %v111
  %v140 = vpack.c.b16 %v114, %v113
  %v141 = vpack.c.b16 %v116, %v115
  %v142 = vpack.c.b16 %v118, %v117
  %v143 = vpack.c.b16 %v120, %v119
  %v144 = vpack.c.b16 %v122, %v121
  %v145 = vpack.c.b16 %v124, %v123
  %v146 = vpack.c.b16 %v126, %v125
  %v147 = vpack.c.b16 %v128, %v127
  %v148 = vpack.c.b16 %v130, %v129
  %v149 = vpack.c.b16 %v132, %v131
  %v150 = vpack.c.b16 %v134, %v133
  %167 = vmatprep.subr.bf16.mxu0 0
  %168 = vmatpush1.bf16.msra.mxu0 %v142
  %169 = vmatprep.subr.bf16.mxu0 0
  %170 = vmatpush1.bf16.msra.mxu0 %v141
  %171 = vmatprep.subr.bf16.mxu0 0
  %172 = vmatpush1.bf16.msra.mxu0 %v140
  %173 = vmatprep.subr.bf16.mxu0 0
  %174 = vmatpush1.bf16.msra.mxu0 %v139
  %175 = vmatprep.subr.bf16.mxu0 0
  %176 = vmatpush1.bf16.msra.mxu0 %v138
  %177 = vmatprep.subr.bf16.mxu0 0
  %178 = vmatpush1.bf16.msra.mxu0 %v137
  %179 = vmatprep.subr.bf16.mxu0 0
  %180 = vmatpush1.bf16.msra.mxu0 %v136
  %181 = vmatprep.subr.bf16.mxu0 0
  %182 = vmatpush1.bf16.msra.mxu0 %v135
  %183 = vmatprep.subr.bf16.mxu0 0
  %184 = vmatpush2.bf16.msra.mxu0 %v150
  %185 = vmatprep.subr.bf16.mxu0 0
  %186 = vmatpush2.bf16.msra.mxu0 %v149
  %187 = vmatprep.subr.bf16.mxu0 0
  %188 = vmatpush2.bf16.msra.mxu0 %v148
  %189 = vmatprep.subr.bf16.mxu0 0
  %190 = vmatpush2.bf16.msra.mxu0 %v147
  %191 = vmatprep.subr.bf16.mxu0 0
  %192 = vmatpush2.bf16.msra.mxu0 %v146
  %193 = vmatprep.subr.bf16.mxu0 0
  %194 = vmatpush2.bf16.msra.mxu0 %v145
  %195 = vmatprep.subr.bf16.mxu0 0
  %196 = vmatpush2.bf16.msra.mxu0 %v144
  %197 = vmatprep.subr.bf16.mxu0 0
  %198 = vmatpush2.bf16.msra.mxu0 %v143
  %199 = vmatprep.mubr.bf16.mxu0 %v64
  %200 = vmatmul.mubr.bf16.gmra.mxu0 %v63
  %v201 = vpop.f32.mrf.mxu0
  %v202 = vadd.f32 0.0, %v201
  %v203 = vpop.f32.mrf.mxu0
  %v204 = vpop.f32.mrf.mxu0
  %v205 = vadd.f32 0.0, %v204
  %v206 = vpop.f32.mrf.mxu0
  %207 = vmatprep.mubr.bf16.mxu0 %v66
  %208 = vmatmul.mubr.bf16.gmra.mxu0 %v65
  %v209 = vpop.f32.mrf.mxu0
  %v210 = vadd.f32 0.0, %v209
  %v211 = vpop.f32.mrf.mxu0
  %v212 = vpop.f32.mrf.mxu0
  %v213 = vadd.f32 0.0, %v212
  %v214 = vpop.f32.mrf.mxu0
  %215 = vdwg.mxu0
  %v216 = vpack.c.bf16 %v205, %v202
  %v217 = vpack.c.bf16 %v213, %v210
  %v220 = vunpack.c.l.b16 %v216
  %v221 = vunpack.c.h.b16 %v216
  %v222 = vunpack.c.l.b16 %v217
  %v223 = vunpack.c.h.b16 %v217
  %v224 = vpack.c.b16 %v220, %v220
  %v225 = vpack.c.b16 %v221, %v221
  %v226 = vpack.c.b16 %v222, %v222
  %v227 = vpack.c.b16 %v223, %v223
  %232 = vst [vmem:[%s2] sm:$0xf] %v224
  %233 = vst [vmem:[%s2 + $0x4] sm:$0xf] %v225
  %234 = vst [vmem:[%s2 + $0x8] sm:$0xf] %v226
  %235 = vst [vmem:[%s2 + $0xc] sm:$0xf] %v227
  %s236 = smul.u32 0, 32
  %v237 = vlaneseq
  %v238 = vshrl.u32 %v237, 7
  %v239 = vadd.s32 %v238, 8
  %v240 = vadd.s32 %v238, 16
  %v241 = vadd.s32 %v238, 24
  %v242 = vstv %s236
  %v243 = vadd.s32 %v242, %v238
  %v244 = vadd.s32 %v242, %v239
  %v245 = vadd.s32 %v242, %v240
  %v246 = vadd.s32 %v242, %v241
  %vm247 = vcmp.lt.s32.totalorder %v243, 32
  %vm248 = vcmp.lt.s32.totalorder %v244, 32
  %vm249 = vcmp.lt.s32.totalorder %v245, 32
  %vm250 = vcmp.lt.s32.totalorder %v246, 32
  %v251 = vsel %vm247, %v202, 0.0
  %v252 = vsel %vm248, %v205, 0.0
  %v253 = vsel %vm249, %v210, 0.0
  %v254 = vsel %vm250, %v213, 0.0
  %v255 = vadd.f32 %v251, %v252
  %v256 = vadd.f32 %v255, %v253
  %v257 = vadd.f32 %v256, %v254
  %v258 = vrot.slane %v257, 4
  %v259 = vadd.f32 %v257, %v258
  %v260 = vrot.slane %v259, 2
  %v261 = vadd.f32 %v259, %v260
  %v262 = vrot.slane %v261, 1
  %v263 = vadd.f32 %v261, %v262
  %264 = vst [vmem:[%s3] sm:$0x1] %v263
  %v265 = vmul.f32 %v251, %v202
  %v266 = vmul.f32 %v252, %v205
  %v267 = vmul.f32 %v253, %v210
  %v268 = vmul.f32 %v254, %v213
  %v269 = vadd.f32 %v265, %v266
  %v270 = vadd.f32 %v269, %v267
  %v271 = vadd.f32 %v270, %v268
  %v272 = vrot.slane %v271, 4
  %v273 = vadd.f32 %v271, %v272
  %v274 = vrot.slane %v273, 2
  %v275 = vadd.f32 %v273, %v274
  %v276 = vrot.slane %v275, 1
  %v277 = vadd.f32 %v275, %v276
  %278 = vst [vmem:[%s4] sm:$0x1] %v277
  // Predicated region
  $region10: #{discriminator_forward.13} parent=0 // pred_check
    _
  $region11: #{discriminator_forward.13} parent=0 // pred_check_branch
    %280 = sbr.rel (0) target = $region13
  $region12: #{discriminator_forward.13} parent=0 // pred_region
    _
  $region13: #{discriminator_forward.13} parent=0 // pred_fallthru
    _
  // Predicated region
  $region14: #{discriminator_forward.13} parent=0 // pred_check
    _
  $region15: #{discriminator_forward.13} parent=0 // pred_check_branch
    %282 = sbr.rel (0) target = $region17
  $region16: #{discriminator_forward.13} parent=0 // pred_region
    _
  $region17: #{discriminator_forward.13} parent=0 // pred_fallthru
    _
  // Predicated region
  $region18: #{discriminator_forward.13} parent=0 // pred_check
    _
  $region19: #{discriminator_forward.13} parent=0 // pred_check_branch
    %284 = sbr.rel (0) target = $region21
  $region20: #{discriminator_forward.13} parent=0 // pred_region
    _
  $region21: #{discriminator_forward.13} parent=0 // pred_fallthru
    _
  // Predicated region
  $region22: #{discriminator_forward.13} parent=0 // pred_check
    _
  $region23: #{discriminator_forward.13} parent=0 // pred_check_branch
    %286 = sbr.rel (0) target = $region25
  $region24: #{discriminator_forward.13} parent=0 // pred_region
    _
  $region25: #{discriminator_forward.13} parent=0 // pred_fallthru
    _
  // Predicated region
  $region26: #{discriminator_forward.13} parent=0 // pred_check
    _
  $region27: #{discriminator_forward.13} parent=0 // pred_check_branch
    %288 = sbr.rel (0) target = $region29
  $region28: #{discriminator_forward.13} parent=0 // pred_region
    _
  $region29: #{discriminator_forward.13} parent=0 // pred_fallthru
    _
  // Predicated region
  $region30: #{discriminator_forward.13} parent=0 // pred_check
    _
  $region31: #{discriminator_forward.13} parent=0 // pred_check_branch
    %290 = sbr.rel (0) target = $region33
  $region32: #{discriminator_forward.13} parent=0 // pred_region
    _
  $region33: #{discriminator_forward.13} parent=0 // pred_fallthru
    _

// kernel: discriminator_forward.14
$region0: #{discriminator_forward.14}
  #allocation0 [shape = 'u32[]', space=smem, size = 0x4, offset = 0x4, fixed_abs, tag = 'smem constant byte address 0x4 - core index']
  #allocation1 [shape = 'u32[144,128]{1,0:T(1,128)}', space=vmem, size = 0x12000, scoped, tag = 'internal scratch']
  %s0 = inlined_call_operand.vmem [shape: bf16[32,128], index: 0, kind: input, shape index: {}]
  %s1 = inlined_call_operand.vmem [shape: f32[1,128], index: 1, kind: input, shape index: {}]
  %s2 = inlined_call_operand.vmem [shape: f32[1,128], index: 2, kind: input, shape index: {}]
  %s3 = inlined_call_operand.vmem [shape: bf16[32,128], index: 3, kind: output, shape index: {}]
  %s4 = sld [smem:[#allocation0]]
  $region22: #{discriminator_forward.14} parent=0
    _
  %s6 = ssub.s32 1, %s4
  %s7 = scalar_select 0, %s6, %s4
  // Predicated region
  $region2: #{discriminator_forward.14} parent=0 // pred_check
    _
  $region3: #{discriminator_forward.14} parent=0 // pred_check_branch
    %9 = sbr.rel (0) target = $region5
  $region4: #{discriminator_forward.14} parent=0 // pred_region
    _
  $region5: #{discriminator_forward.14} parent=0 // pred_fallthru
    _
  // Predicated region
  $region6: #{discriminator_forward.14} parent=0 // pred_check
    _
  $region7: #{discriminator_forward.14} parent=0 // pred_check_branch
    %11 = sbr.rel (0) target = $region9
  $region8: #{discriminator_forward.14} parent=0 // pred_region
    _
  $region9: #{discriminator_forward.14} parent=0 // pred_fallthru
    _
  // Predicated region
  $region10: #{discriminator_forward.14} parent=0 // pred_check
    _
  $region11: #{discriminator_forward.14} parent=0 // pred_check_branch
    %13 = sbr.rel (0) target = $region13
  $region12: #{discriminator_forward.14} parent=0 // pred_region
    _
  $region13: #{discriminator_forward.14} parent=0 // pred_fallthru
    _
  %v14 = vld [vmem:[%s0] sm:$0xf]
  %v15 = vld [vmem:[%s0 + $0x4] sm:$0xf]
  %v16 = vld [vmem:[%s0 + $0x8] sm:$0xf]
  %v17 = vld [vmem:[%s0 + $0xc] sm:$0xf]
  %v18 = vunpack.c.l.bf16 %v14
  %v19 = vunpack.c.l.bf16 %v15
  %v20 = vunpack.c.l.bf16 %v16
  %v21 = vunpack.c.l.bf16 %v17
  %v22 = vld [vmem:[%s1] sm:$0x1]
  %v24 = vlaneseq
  %v25 = vshrl.u32 %v24, 7
  %v26 = vsub.s32 0, %v25
  %v27 = vrot.slane %v22, %v26
  %v29 = vmul.f32 %v18, %v27
  %v30 = vmul.f32 %v19, %v27
  %v31 = vmul.f32 %v20, %v27
  %v32 = vmul.f32 %v21, %v27
  %v33 = vld [vmem:[%s2] sm:$0x1]
  %v35 = vlaneseq
  %v36 = vshrl.u32 %v35, 7
  %v37 = vsub.s32 0, %v36
  %v38 = vrot.slane %v33, %v37
  %v40 = vadd.f32 %v29, %v38
  %v41 = vadd.f32 %v30, %v38
  %v42 = vadd.f32 %v31, %v38
  %v43 = vadd.f32 %v32, %v38
  %v44 = vmax.f32 %v40, 0.0
  %v45 = vmax.f32 %v41, 0.0
  %v46 = vmax.f32 %v42, 0.0
  %v47 = vmax.f32 %v43, 0.0
  %v48 = vpack.c.bf16 %v45, %v44
  %v49 = vpack.c.bf16 %v47, %v46
  %v52 = vunpack.c.l.b16 %v48
  %v53 = vunpack.c.h.b16 %v48
  %v54 = vunpack.c.l.b16 %v49
  %v55 = vunpack.c.h.b16 %v49
  %v56 = vpack.c.b16 %v52, %v52
  %v57 = vpack.c.b16 %v53, %v53
  %v58 = vpack.c.b16 %v54, %v54
  %v59 = vpack.c.b16 %v55, %v55
  %64 = vst [vmem:[%s3] sm:$0xf] %v56
  %65 = vst [vmem:[%s3 + $0x4] sm:$0xf] %v57
  %66 = vst [vmem:[%s3 + $0x8] sm:$0xf] %v58
  %67 = vst [vmem:[%s3 + $0xc] sm:$0xf] %v59
  // Predicated region
  $region14: #{discriminator_forward.14} parent=0 // pred_check
    _
  $region15: #{discriminator_forward.14} parent=0 // pred_check_branch
    %69 = sbr.rel (0) target = $region17
  $region16: #{discriminator_forward.14} parent=0 // pred_region
    _
  $region17: #{discriminator_forward.14} parent=0 // pred_fallthru
    _
  // Predicated region
  $region18: #{discriminator_forward.14} parent=0 // pred_check
    _
  $region19: #{discriminator_forward.14} parent=0 // pred_check_branch
    %71 = sbr.rel (0) target = $region21
  $region20: #{discriminator_forward.14} parent=0 // pred_region
    _
  $region21: #{discriminator_forward.14} parent=0 // pred_fallthru
    _

// kernel: discriminator_forward.15
$region0: #{discriminator_forward.15}
  #allocation0 [shape = 'u32[]', space=smem, size = 0x4, offset = 0x4, fixed_abs, tag = 'smem constant byte address 0x4 - core index']
  #allocation1 [shape = 'u32[144,128]{1,0:T(1,128)}', space=vmem, size = 0x12000, scoped, tag = 'internal scratch']
  %s0 = inlined_call_operand.vmem [shape: bf16[2,512], index: 0, kind: input, shape index: {}]
  %s1 = inlined_call_operand.vmem [shape: bf16[512,128], index: 1, kind: input, shape index: {}]
  %s2 = inlined_call_operand.vmem [shape: f32[1,128], index: 2, kind: input, shape index: {}]
  %s3 = inlined_call_operand.vmem [shape: f32[2,128], index: 3, kind: output, shape index: {}]
  %s4 = sld [smem:[#allocation0]]
  $region22: #{discriminator_forward.15} parent=0
    _
  %s6 = ssub.s32 1, %s4
  %s7 = scalar_select 0, %s6, %s4
  // Predicated region
  $region2: #{discriminator_forward.15} parent=0 // pred_check
    _
  $region3: #{discriminator_forward.15} parent=0 // pred_check_branch
    %9 = sbr.rel (0) target = $region5
  $region4: #{discriminator_forward.15} parent=0 // pred_region
    _
  $region5: #{discriminator_forward.15} parent=0 // pred_fallthru
    _
  // Predicated region
  $region6: #{discriminator_forward.15} parent=0 // pred_check
    _
  $region7: #{discriminator_forward.15} parent=0 // pred_check_branch
    %11 = sbr.rel (0) target = $region9
  $region8: #{discriminator_forward.15} parent=0 // pred_region
    _
  $region9: #{discriminator_forward.15} parent=0 // pred_fallthru
    _
  // Predicated region
  $region10: #{discriminator_forward.15} parent=0 // pred_check
    _
  $region11: #{discriminator_forward.15} parent=0 // pred_check_branch
    %13 = sbr.rel (0) target = $region13
  $region12: #{discriminator_forward.15} parent=0 // pred_region
    _
  $region13: #{discriminator_forward.15} parent=0 // pred_fallthru
    _
  %v15 = vld [vmem:[%s0] sm:$0xf]
  %v16 = vld [vmem:[%s1] sm:$0xf]
  %v17 = vld [vmem:[%s1 + $0x4] sm:$0xf]
  %v18 = vld [vmem:[%s1 + $0x8] sm:$0xf]
  %v19 = vld [vmem:[%s1 + $0xc] sm:$0xf]
  %v20 = vld [vmem:[%s1 + $0x10] sm:$0xf]
  %v21 = vld [vmem:[%s1 + $0x14] sm:$0xf]
  %v22 = vld [vmem:[%s1 + $0x18] sm:$0xf]
  %v23 = vld [vmem:[%s1 + $0x1c] sm:$0xf]
  %v24 = vld [vmem:[%s1 + $0x20] sm:$0xf]
  %v25 = vld [vmem:[%s1 + $0x24] sm:$0xf]
  %v26 = vld [vmem:[%s1 + $0x28] sm:$0xf]
  %v27 = vld [vmem:[%s1 + $0x2c] sm:$0xf]
  %v28 = vld [vmem:[%s1 + $0x30] sm:$0xf]
  %v29 = vld [vmem:[%s1 + $0x34] sm:$0xf]
  %v30 = vld [vmem:[%s1 + $0x38] sm:$0xf]
  %v31 = vld [vmem:[%s1 + $0x3c] sm:$0xf]
  %v32 = vld [vmem:[%s1 + $0x40] sm:$0xf]
  %v33 = vld [vmem:[%s1 + $0x44] sm:$0xf]
  %v34 = vld [vmem:[%s1 + $0x48] sm:$0xf]
  %v35 = vld [vmem:[%s1 + $0x4c] sm:$0xf]
  %v36 = vld [vmem:[%s1 + $0x50] sm:$0xf]
  %v37 = vld [vmem:[%s1 + $0x54] sm:$0xf]
  %v38 = vld [vmem:[%s1 + $0x58] sm:$0xf]
  %v39 = vld [vmem:[%s1 + $0x5c] sm:$0xf]
  %v40 = vld [vmem:[%s1 + $0x60] sm:$0xf]
  %v41 = vld [vmem:[%s1 + $0x64] sm:$0xf]
  %v42 = vld [vmem:[%s1 + $0x68] sm:$0xf]
  %v43 = vld [vmem:[%s1 + $0x6c] sm:$0xf]
  %v44 = vld [vmem:[%s1 + $0x70] sm:$0xf]
  %v45 = vld [vmem:[%s1 + $0x74] sm:$0xf]
  %v46 = vld [vmem:[%s1 + $0x78] sm:$0xf]
  %v47 = vld [vmem:[%s1 + $0x7c] sm:$0xf]
  %v48 = vld [vmem:[%s1 + $0x80] sm:$0xf]
  %v49 = vld [vmem:[%s1 + $0x84] sm:$0xf]
  %v50 = vld [vmem:[%s1 + $0x88] sm:$0xf]
  %v51 = vld [vmem:[%s1 + $0x8c] sm:$0xf]
  %v52 = vld [vmem:[%s1 + $0x90] sm:$0xf]
  %v53 = vld [vmem:[%s1 + $0x94] sm:$0xf]
  %v54 = vld [vmem:[%s1 + $0x98] sm:$0xf]
  %v55 = vld [vmem:[%s1 + $0x9c] sm:$0xf]
  %v56 = vld [vmem:[%s1 + $0xa0] sm:$0xf]
  %v57 = vld [vmem:[%s1 + $0xa4] sm:$0xf]
  %v58 = vld [vmem:[%s1 + $0xa8] sm:$0xf]
  %v59 = vld [vmem:[%s1 + $0xac] sm:$0xf]
  %v60 = vld [vmem:[%s1 + $0xb0] sm:$0xf]
  %v61 = vld [vmem:[%s1 + $0xb4] sm:$0xf]
  %v62 = vld [vmem:[%s1 + $0xb8] sm:$0xf]
  %v63 = vld [vmem:[%s1 + $0xbc] sm:$0xf]
  %v64 = vld [vmem:[%s1 + $0xc0] sm:$0xf]
  %v65 = vld [vmem:[%s1 + $0xc4] sm:$0xf]
  %v66 = vld [vmem:[%s1 + $0xc8] sm:$0xf]
  %v67 = vld [vmem:[%s1 + $0xcc] sm:$0xf]
  %v68 = vld [vmem:[%s1 + $0xd0] sm:$0xf]
  %v69 = vld [vmem:[%s1 + $0xd4] sm:$0xf]
  %v70 = vld [vmem:[%s1 + $0xd8] sm:$0xf]
  %v71 = vld [vmem:[%s1 + $0xdc] sm:$0xf]
  %v72 = vld [vmem:[%s1 + $0xe0] sm:$0xf]
  %v73 = vld [vmem:[%s1 + $0xe4] sm:$0xf]
  %v74 = vld [vmem:[%s1 + $0xe8] sm:$0xf]
  %v75 = vld [vmem:[%s1 + $0xec] sm:$0xf]
  %v76 = vld [vmem:[%s1 + $0xf0] sm:$0xf]
  %v77 = vld [vmem:[%s1 + $0xf4] sm:$0xf]
  %v78 = vld [vmem:[%s1 + $0xf8] sm:$0xf]
  %v79 = vld [vmem:[%s1 + $0xfc] sm:$0xf]
  %v80 = vld [vmem:[%s2] sm:$0x1]
  %v82 = vlaneseq
  %v83 = vshrl.u32 %v82, 7
  %v84 = vsub.s32 0, %v83
  %v85 = vrot.slane %v80, %v84
  %v89 = vunpack.c.l.s4 1966171168
  %v90 = vunpack.c.0.s8 %v89
  %v91 = vlaneseq
  %v92 = vshrl.u32 %v91, 7
  %v93 = vsub.s32 %v90, %v92
  %v94 = vrot.slane %v15, %v93
  %v95 = vcombine.high %v94, %v94
  %v97 = vunpack.c.l.s4 1966171168
  %v98 = vunpack.c.0.s8 %v97
  %v99 = vlaneseq
  %v100 = vshrl.u32 %v99, 7
  %v101 = vsub.s32 %v98, %v100
  %v102 = vrot.slane %v94, %v101
  %v104 = vunpack.c.l.s4 1966171168
  %v105 = vunpack.c.0.s8 %v104
  %v106 = vlaneseq
  %v107 = vshrl.u32 %v106, 7
  %v108 = vsub.s32 %v105, %v107
  %v109 = vrot.slane %v95, %v108
  %v110 = vcombine.high %v102, %v102
  %v111 = vcombine.high %v109, %v109
  %v180 = vunpack.c.l.b16 %v16
  %v181 = vunpack.c.l.b16 %v17
  %v182 = vunpack.c.l.b16 %v18
  %v183 = vunpack.c.l.b16 %v19
  %v184 = vunpack.c.l.b16 %v20
  %v185 = vunpack.c.l.b16 %v21
  %v186 = vunpack.c.l.b16 %v22
  %v187 = vunpack.c.l.b16 %v23
  %v188 = vunpack.c.l.b16 %v24
  %v189 = vunpack.c.l.b16 %v25
  %v190 = vunpack.c.l.b16 %v26
  %v191 = vunpack.c.l.b16 %v27
  %v192 = vunpack.c.l.b16 %v28
  %v193 = vunpack.c.l.b16 %v29
  %v194 = vunpack.c.l.b16 %v30
  %v195 = vunpack.c.l.b16 %v31
  %v196 = vunpack.c.l.b16 %v32
  %v197 = vunpack.c.l.b16 %v33
  %v198 = vunpack.c.l.b16 %v34
  %v199 = vunpack.c.l.b16 %v35
  %v200 = vunpack.c.l.b16 %v36
  %v201 = vunpack.c.l.b16 %v37
  %v202 = vunpack.c.l.b16 %v38
  %v203 = vunpack.c.l.b16 %v39
  %v204 = vunpack.c.l.b16 %v40
  %v205 = vunpack.c.l.b16 %v41
  %v206 = vunpack.c.l.b16 %v42
  %v207 = vunpack.c.l.b16 %v43
  %v208 = vunpack.c.l.b16 %v44
  %v209 = vunpack.c.l.b16 %v45
  %v210 = vunpack.c.l.b16 %v46
  %v211 = vunpack.c.l.b16 %v47
  %v212 = vunpack.c.l.b16 %v48
  %v213 = vunpack.c.l.b16 %v49
  %v214 = vunpack.c.l.b16 %v50
  %v215 = vunpack.c.l.b16 %v51
  %v216 = vunpack.c.l.b16 %v52
  %v217 = vunpack.c.l.b16 %v53
  %v218 = vunpack.c.l.b16 %v54
  %v219 = vunpack.c.l.b16 %v55
  %v220 = vunpack.c.l.b16 %v56
  %v221 = vunpack.c.l.b16 %v57
  %v222 = vunpack.c.l.b16 %v58
  %v223 = vunpack.c.l.b16 %v59
  %v224 = vunpack.c.l.b16 %v60
  %v225 = vunpack.c.l.b16 %v61
  %v226 = vunpack.c.l.b16 %v62
  %v227 = vunpack.c.l.b16 %v63
  %v228 = vunpack.c.l.b16 %v64
  %v229 = vunpack.c.l.b16 %v65
  %v230 = vunpack.c.l.b16 %v66
  %v231 = vunpack.c.l.b16 %v67
  %v232 = vunpack.c.l.b16 %v68
  %v233 = vunpack.c.l.b16 %v69
  %v234 = vunpack.c.l.b16 %v70
  %v235 = vunpack.c.l.b16 %v71
  %v236 = vunpack.c.l.b16 %v72
  %v237 = vunpack.c.l.b16 %v73
  %v238 = vunpack.c.l.b16 %v74
  %v239 = vunpack.c.l.b16 %v75
  %v240 = vunpack.c.l.b16 %v76
  %v241 = vunpack.c.l.b16 %v77
  %v242 = vunpack.c.l.b16 %v78
  %v243 = vunpack.c.l.b16 %v79
  %v244 = vpack.c.b16 %v181, %v180
  %v245 = vpack.c.b16 %v183, %v182
  %v246 = vpack.c.b16 %v185, %v184
  %v247 = vpack.c.b16 %v187, %v186
  %v248 = vpack.c.b16 %v189, %v188
  %v249 = vpack.c.b16 %v191, %v190
  %v250 = vpack.c.b16 %v193, %v192
  %v251 = vpack.c.b16 %v195, %v194
  %v252 = vpack.c.b16 %v197, %v196
  %v253 = vpack.c.b16 %v199, %v198
  %v254 = vpack.c.b16 %v201, %v200
  %v255 = vpack.c.b16 %v203, %v202
  %v256 = vpack.c.b16 %v205, %v204
  %v257 = vpack.c.b16 %v207, %v206
  %v258 = vpack.c.b16 %v209, %v208
  %v259 = vpack.c.b16 %v211, %v210
  %v260 = vpack.c.b16 %v213, %v212
  %v261 = vpack.c.b16 %v215, %v214
  %v262 = vpack.c.b16 %v217, %v216
  %v263 = vpack.c.b16 %v219, %v218
  %v264 = vpack.c.b16 %v221, %v220
  %v265 = vpack.c.b16 %v223, %v222
  %v266 = vpack.c.b16 %v225, %v224
  %v267 = vpack.c.b16 %v227, %v226
  %v268 = vpack.c.b16 %v229, %v228
  %v269 = vpack.c.b16 %v231, %v230
  %v270 = vpack.c.b16 %v233, %v232
  %v271 = vpack.c.b16 %v235, %v234
  %v272 = vpack.c.b16 %v237, %v236
  %v273 = vpack.c.b16 %v239, %v238
  %v274 = vpack.c.b16 %v241, %v240
  %v275 = vpack.c.b16 %v243, %v242
  %308 = vmatprep.subr.bf16.mxu0 0
  %309 = vmatpush1.bf16.msra.mxu0 %v251
  %310 = vmatprep.subr.bf16.mxu0 0
  %311 = vmatpush1.bf16.msra.mxu0 %v250
  %312 = vmatprep.subr.bf16.mxu0 0
  %313 = vmatpush1.bf16.msra.mxu0 %v249
  %314 = vmatprep.subr.bf16.mxu0 0
  %315 = vmatpush1.bf16.msra.mxu0 %v248
  %316 = vmatprep.subr.bf16.mxu0 0
  %317 = vmatpush1.bf16.msra.mxu0 %v247
  %318 = vmatprep.subr.bf16.mxu0 0
  %319 = vmatpush1.bf16.msra.mxu0 %v246
  %320 = vmatprep.subr.bf16.mxu0 0
  %321 = vmatpush1.bf16.msra.mxu0 %v245
  %322 = vmatprep.subr.bf16.mxu0 0
  %323 = vmatpush1.bf16.msra.mxu0 %v244
  %324 = vmatprep.subr.bf16.mxu0 0
  %325 = vmatpush2.bf16.msra.mxu0 %v259
  %326 = vmatprep.subr.bf16.mxu0 0
  %327 = vmatpush2.bf16.msra.mxu0 %v258
  %328 = vmatprep.subr.bf16.mxu0 0
  %329 = vmatpush2.bf16.msra.mxu0 %v257
  %330 = vmatprep.subr.bf16.mxu0 0
  %331 = vmatpush2.bf16.msra.mxu0 %v256
  %332 = vmatprep.subr.bf16.mxu0 0
  %333 = vmatpush2.bf16.msra.mxu0 %v255
  %334 = vmatprep.subr.bf16.mxu0 0
  %335 = vmatpush2.bf16.msra.mxu0 %v254
  %336 = vmatprep.subr.bf16.mxu0 0
  %337 = vmatpush2.bf16.msra.mxu0 %v253
  %338 = vmatprep.subr.bf16.mxu0 0
  %339 = vmatpush2.bf16.msra.mxu0 %v252
  %340 = vmatprep.mubr.bf16.mxu0 %v109
  %341 = vmatmul.mubr.bf16.gmra.mxu0 %v102
  %v342 = vpop.f32.mrf.mxu0
  %v343 = vadd.f32 %v85, %v342
  %v344 = vpop.f32.mrf.mxu0
  %v345 = vpop.f32.mrf.mxu0
  %v346 = vpop.f32.mrf.mxu0
  %347 = vdwg.mxu0
  %348 = vmatprep.subr.bf16.mxu0 0
  %349 = vmatpush1.bf16.msra.mxu0 %v267
  %350 = vmatprep.subr.bf16.mxu0 0
  %351 = vmatpush1.bf16.msra.mxu0 %v266
  %352 = vmatprep.subr.bf16.mxu0 0
  %353 = vmatpush1.bf16.msra.mxu0 %v265
  %354 = vmatprep.subr.bf16.mxu0 0
  %355 = vmatpush1.bf16.msra.mxu0 %v264
  %356 = vmatprep.subr.bf16.mxu0 0
  %357 = vmatpush1.bf16.msra.mxu0 %v263
  %358 = vmatprep.subr.bf16.mxu0 0
  %359 = vmatpush1.bf16.msra.mxu0 %v262
  %360 = vmatprep.subr.bf16.mxu0 0
  %361 = vmatpush1.bf16.msra.mxu0 %v261
  %362 = vmatprep.subr.bf16.mxu0 0
  %363 = vmatpush1.bf16.msra.mxu0 %v260
  %364 = vmatprep.subr.bf16.mxu0 0
  %365 = vmatpush2.bf16.msra.mxu0 %v275
  %366 = vmatprep.subr.bf16.mxu0 0
  %367 = vmatpush2.bf16.msra.mxu0 %v274
  %368 = vmatprep.subr.bf16.mxu0 0
  %369 = vmatpush2.bf16.msra.mxu0 %v273
  %370 = vmatprep.subr.bf16.mxu0 0
  %371 = vmatpush2.bf16.msra.mxu0 %v272
  %372 = vmatprep.subr.bf16.mxu0 0
  %373 = vmatpush2.bf16.msra.mxu0 %v271
  %374 = vmatprep.subr.bf16.mxu0 0
  %375 = vmatpush2.bf16.msra.mxu0 %v270
  %376 = vmatprep.subr.bf16.mxu0 0
  %377 = vmatpush2.bf16.msra.mxu0 %v269
  %378 = vmatprep.subr.bf16.mxu0 0
  %379 = vmatpush2.bf16.msra.mxu0 %v268
  %380 = vmatprep.mubr.bf16.mxu0 %v111
  %381 = vmatmul.mubr.bf16.gmra.mxu0 %v110
  %v382 = vpop.f32.mrf.mxu0
  %v383 = vadd.f32 %v343, %v382
  %v384 = vpop.f32.mrf.mxu0
  %v385 = vpop.f32.mrf.mxu0
  %v386 = vpop.f32.mrf.mxu0
  %387 = vdwg.mxu0
  %v388 = vtanh.pop %v383
  %389 = vst [vmem:[%s3] sm:$0x3] %v388
  // Predicated region
  $region14: #{discriminator_forward.15} parent=0 // pred_check
    _
  $region15: #{discriminator_forward.15} parent=0 // pred_check_branch
    %391 = sbr.rel (0) target = $region17
  $region16: #{discriminator_forward.15} parent=0 // pred_region
    _
  $region17: #{discriminator_forward.15} parent=0 // pred_fallthru
    _
  // Predicated region
  $region18: #{discriminator_forward.15} parent=0 // pred_check
    _
  $region19: #{discriminator_forward.15} parent=0 // pred_check_branch
    %393 = sbr.rel (0) target = $region21
  $region20: #{discriminator_forward.15} parent=0 // pred_region
    _
  $region21: #{discriminator_forward.15} parent=0 // pred_fallthru
    _

</llo_original>
